<compile_context>
chip_gen: v7x
topology: tpu7x:2x2x1
jax: 0.10.0
libtpu: 0.0.40
codegen_flags: <defaults>
</compile_context>

<pallas_src>
import jax
import jax.numpy as jnp
from jax.experimental import pallas as pl
from jax.experimental.pallas import tpu as pltpu

EPS = 1e-5
LP = 8   # left padding (in W) of the pad scratch -> aligned interior stores


def _pick_vmem_limit():
    """Per-generation scoped-VMEM limit (review: raise on v5e/v6e, cap on v7x)."""
    try:
        cap = pltpu.get_tpu_info().vmem_capacity_bytes
        return int(min(100 * 1024 * 1024, (cap * 3) // 4))
    except Exception:
        return 48 * 1024 * 1024


_VMEM_LIMIT = _pick_vmem_limit()


# --------------------------------------------------------------------------------------
# In-kernel helpers
# --------------------------------------------------------------------------------------
def _pad_and_conv3x3(pad_ref, img, w_ref):
    """Zero-pad `img` into the scratch and run 3x3 conv as 9 accumulating dots.

    pad_ref: VMEM scratch (H+2, W+LP+1, C)
    img:     (H, W, C) value
    w_ref:   (9, C, Cout) ref, tap k = dh*3 + dw
    returns: (H*W, Cout) f32 accumulator
    """
    H, W, C = img.shape

    # Border zeroing (rows 0/H+1 and columns LP-1 / LP+W of the used window).
    # Kept unconditional: per-core scratch under megacore partitioning makes a
    # program_id==0-gated init unsafe; these four stores are tiny.
    pad_ref[0:1, LP - 1:LP + W + 1, :] = jnp.zeros((1, W + 2, C), jnp.float32)
    pad_ref[H + 1:H + 2, LP - 1:LP + W + 1, :] = jnp.zeros((1, W + 2, C), jnp.float32)
    pad_ref[:, LP - 1:LP, :] = jnp.zeros((H + 2, 1, C), jnp.float32)
    pad_ref[:, LP + W:LP + W + 1, :] = jnp.zeros((H + 2, 1, C), jnp.float32)

    # Bulk interior write starts at sublane offset LP=8 -> unmasked stores.
    pad_ref[1:H + 1, LP:LP + W, :] = img

    # 9 accumulating MXU dots of K=C (no lane-axis im2col concatenate).
    acc = None
    for dh in range(3):
        for dw in range(3):
            c0 = LP - 1 + dw
            tap = pad_ref[dh:dh + H, c0:c0 + W, :].reshape(H * W, C)
            part = jnp.dot(tap, w_ref[dh * 3 + dw],
                           preferred_element_type=jnp.float32)
            acc = part if acc is None else acc + part
    return acc


def _write_image_stats(st_ref, acc):
    """Per-image sum and *centered* sum-of-squares (stable, Chan-combinable)."""
    c = acc.shape[1]
    s = jnp.sum(acc, axis=0, keepdims=True)                    # (1, C)
    d = acc - s * (1.0 / acc.shape[0])
    m2 = jnp.sum(d * d, axis=0, keepdims=True)                 # (1, C)
    st_ref[0:1, 0:1, :] = s.reshape(1, 1, c)
    st_ref[0:1, 1:2, :] = m2.reshape(1, 1, c)


# --------------------------------------------------------------------------------------
# Kernels
# --------------------------------------------------------------------------------------
def _conv1_kernel(x_ref, w1_ref, y1_ref, st1_ref, xpad):
    """conv1 (3x3, pad=1, stride=1) for one image + per-image BN1 partial stats."""
    H, W = x_ref.shape[1], x_ref.shape[2]
    Cmid = w1_ref.shape[2]
    acc = _pad_and_conv3x3(xpad, x_ref[0], w1_ref)             # (H*W, Cmid)
    # conv1 bias omitted: cancelled exactly by train-mode BN1 mean subtraction.
    _write_image_stats(st1_ref, acc)
    y1_ref[0] = acc.reshape(H, W, Cmid)


def _conv2_kernel(y1_ref, sc1_ref, sh1_ref, w2_ref, y2_ref, st2_ref, mpad):
    """Folded BN1 + ReLU + conv2 for one image + per-image BN2 partial stats."""
    H, W = y1_ref.shape[1], y1_ref.shape[2]
    Cout = w2_ref.shape[2]
    # Folded BN1 (scale/shift) + ReLU fused into conv2's input.
    a1 = jnp.maximum(y1_ref[0] * sc1_ref[...] + sh1_ref[...], 0.0)
    acc = _pad_and_conv3x3(mpad, a1, w2_ref)                   # (H*W, Cout)
    # conv2 bias also omitted (cancelled by train-mode BN2).
    _write_image_stats(st2_ref, acc)
    y2_ref[0] = acc.reshape(H, W, Cout)


def _bn2_relu_kernel(y2_ref, sc2_ref, sh2_ref, o_ref):
    """BN2 folded scale/shift + ReLU on whole-image (1, H, W, Cout) blocks."""
    o_ref[0] = jnp.maximum(y2_ref[0] * sc2_ref[...] + sh2_ref[...], 0.0)


# --------------------------------------------------------------------------------------
# Wrapper
# --------------------------------------------------------------------------------------
def _bn_fold(stats, gamma, beta, hw):
    """Combine per-image (sum, centered sumsq) -> folded train-mode BN scale/shift."""
    n = stats.shape[0]
    count = n * hw
    s = stats[:, 0, :]                                         # (N, C)
    m2 = stats[:, 1, :]                                        # (N, C)
    mean_i = s / hw
    mean = jnp.sum(s, axis=0) / count
    # Chan et al. parallel-variance combine (biased variance, as PyTorch BN uses).
    var = (jnp.sum(m2, axis=0) + hw * jnp.sum((mean_i - mean) ** 2, axis=0)) / count
    scale = gamma * jax.lax.rsqrt(var + EPS)
    shift = beta - mean * scale
    return scale, shift


def double_conv_block(x_nchw, params):
    """Forward of DoubleConvBlock (stride=1, use_act=True). x_nchw: (N, Cin, H, W) f32."""
    w1, _b1, g1, be1, w2, _b2, g2, be2 = params   # conv biases cancel under train-mode BN
    x = jnp.transpose(x_nchw, (0, 2, 3, 1))       # NCHW -> NHWC (channels on lanes)
    N, H, W, Cin = x.shape
    Cmid = w1.shape[2]
    Cout = w2.shape[2]
    hw = float(H * W)

    cparams = pltpu.CompilerParams(
        dimension_semantics=("parallel",),        # megacore sharding of the batch axis
        vmem_limit_bytes=_VMEM_LIMIT)

    # ---- pass 1: conv1 + per-image BN1 partial stats ---------------------------------
    y1raw, st1 = pl.pallas_call(
        _conv1_kernel,
        out_shape=(jax.ShapeDtypeStruct((N, H, W, Cmid), jnp.float32),
                   jax.ShapeDtypeStruct((N, 2, Cmid), jnp.float32)),
        grid_spec=pltpu.PrefetchScalarGridSpec(
            num_scalar_prefetch=0,
            grid=(N,),
            in_specs=[pl.BlockSpec((1, H, W, Cin), lambda n: (n, 0, 0, 0)),
                      pl.BlockSpec((9, Cin, Cmid), lambda n: (0, 0, 0))],
            out_specs=(pl.BlockSpec((1, H, W, Cmid), lambda n: (n, 0, 0, 0)),
                       pl.BlockSpec((1, 2, Cmid), lambda n: (n, 0, 0))),
            scratch_shapes=[pltpu.VMEM((H + 2, W + LP + 1, Cin), jnp.float32)]),
        compiler_params=cparams,
        cost_estimate=pl.CostEstimate(
            flops=2 * N * H * W * 9 * Cin * Cmid,
            transcendentals=0,
            bytes_accessed=4 * (N * H * W * (Cin + Cmid) + 9 * Cin * Cmid)),
    )(x, w1)

    scale1, shift1 = _bn_fold(st1, g1, be1, hw)

    # ---- pass 2: folded BN1 + ReLU + conv2 + per-image BN2 partial stats -------------
    y2raw, st2 = pl.pallas_call(
        _conv2_kernel,
        out_shape=(jax.ShapeDtypeStruct((N, H, W, Cout), jnp.float32),
                   jax.ShapeDtypeStruct((N, 2, Cout), jnp.float32)),
        grid_spec=pltpu.PrefetchScalarGridSpec(
            num_scalar_prefetch=0,
            grid=(N,),
            in_specs=[pl.BlockSpec((1, H, W, Cmid), lambda n: (n, 0, 0, 0)),
                      pl.BlockSpec((1, Cmid), lambda n: (0, 0)),
                      pl.BlockSpec((1, Cmid), lambda n: (0, 0)),
                      pl.BlockSpec((9, Cmid, Cout), lambda n: (0, 0, 0))],
            out_specs=(pl.BlockSpec((1, H, W, Cout), lambda n: (n, 0, 0, 0)),
                       pl.BlockSpec((1, 2, Cout), lambda n: (n, 0, 0))),
            scratch_shapes=[pltpu.VMEM((H + 2, W + LP + 1, Cmid), jnp.float32)]),
        compiler_params=cparams,
        cost_estimate=pl.CostEstimate(
            flops=2 * N * H * W * 9 * Cmid * Cout,
            transcendentals=0,
            bytes_accessed=4 * (N * H * W * (Cmid + Cout) + 9 * Cmid * Cout)),
    )(y1raw, scale1.reshape(1, Cmid), shift1.reshape(1, Cmid), w2)

    scale2, shift2 = _bn_fold(st2, g2, be2, hw)

    # ---- pass 3: BN2 + ReLU on (1,H,W,Cout) blocks (no wrapper reshape of y2) --------
    out_nhwc = pl.pallas_call(
        _bn2_relu_kernel,
        out_shape=jax.ShapeDtypeStruct((N, H, W, Cout), jnp.float32),
        grid_spec=pltpu.PrefetchScalarGridSpec(
            num_scalar_prefetch=0,
            grid=(N,),
            in_specs=[pl.BlockSpec((1, H, W, Cout), lambda n: (n, 0, 0, 0)),
                      pl.BlockSpec((1, Cout), lambda n: (0, 0)),
                      pl.BlockSpec((1, Cout), lambda n: (0, 0))],
            out_specs=pl.BlockSpec((1, H, W, Cout), lambda n: (n, 0, 0, 0))),
        compiler_params=cparams,
        cost_estimate=pl.CostEstimate(
            flops=2 * N * H * W * Cout,
            transcendentals=0,
            bytes_accessed=4 * 2 * N * H * W * Cout),
    )(y2raw, scale2.reshape(1, Cout), shift2.reshape(1, Cout))

    return jnp.transpose(out_nhwc, (0, 3, 1, 2))               # NHWC -> NCHW


# --------------------------------------------------------------------------------------
# Pure-JAX reference (with conv biases, two-pass BN) used only for correctness checking.
# --------------------------------------------------------------------------------------
def _reference_forward(x_nchw, params):
    w1, b1, g1, be1, w2, b2, g2, be2 = params
    x = jnp.transpose(x_nchw, (0, 2, 3, 1))

    def conv(y, w9):
        cin, cout = w9.shape[1], w9.shape[2]
        w_hwio = w9.reshape(3, 3, cin, cout)
        return jax.lax.conv_general_dilated(
            y, w_hwio, (1, 1), 'SAME',
            dimension_numbers=('NHWC', 'HWIO', 'NHWC'),
            precision=jax.lax.Precision.HIGHEST)

    def bn(y, g, b):
        m = jnp.mean(y, axis=(0, 1, 2), keepdims=True)
        v = jnp.mean((y - m) ** 2, axis=(0, 1, 2), keepdims=True)
        return (y - m) * jax.lax.rsqrt(v + EPS) * g + b

    y = jnp.maximum(bn(conv(x, w1) + b1, g1, be1), 0.0)
    y = jnp.maximum(bn(conv(y, w2) + b2, g2, be2), 0.0)
    return jnp.transpose(y, (0, 3, 1, 2))


def make_params(key, in_features, mid_features, out_features):
    """Deterministic synthetic parameters.

    Conv weights are stored as (9, Cin, Cout): PyTorch (Cout, Cin, 3, 3) ->
    (kh, kw, Cin, Cout) -> flatten the 3x3 taps (k = kh*3 + kw), matching the
    kernels' per-(dh,dw) accumulating dots.
    """
    k1, k2, k3, k4, k5, k6, k7, k8 = jax.random.split(key, 8)
    w1_oihw = jax.random.normal(k1, (mid_features, in_features, 3, 3), jnp.float32) * 0.1
    b1 = jax.random.normal(k2, (mid_features,), jnp.float32) * 0.1
    w2_oihw = jax.random.normal(k3, (out_features, mid_features, 3, 3), jnp.float32) * 0.1
    b2 = jax.random.normal(k4, (out_features,), jnp.float32) * 0.1

    w1 = jnp.transpose(w1_oihw, (2, 3, 1, 0)).reshape(9, in_features, mid_features)
    w2 = jnp.transpose(w2_oihw, (2, 3, 1, 0)).reshape(9, mid_features, out_features)
    g1 = 1.0 + 0.1 * jax.random.normal(k5, (mid_features,), jnp.float32)
    be1 = 0.1 * jax.random.normal(k6, (mid_features,), jnp.float32)
    g2 = 1.0 + 0.1 * jax.random.normal(k7, (out_features,), jnp.float32)
    be2 = 0.1 * jax.random.normal(k8, (out_features,), jnp.float32)
    return (w1, b1, g1, be1, w2, b2, g2, be2)


if __name__ == "__main__":
    key = jax.random.PRNGKey(0)
    kx, kp = jax.random.split(key)

    N, Cin, H, W = 2, 4, 16, 16
    Cmid, Cout = 8, 8                     # mid_features=8, out_features defaults to mid

    x = jax.random.normal(kx, (N, Cin, H, W), jnp.float32)
    params = make_params(kp, Cin, Cmid, Cout)

    out = jax.jit(double_conv_block)(x, params)
    out = jax.block_until_ready(out)

    ref = _reference_forward(x, params)
    assert out.shape == (N, Cout, H, W), out.shape
    err = float(jnp.max(jnp.abs(out - ref)))
    assert jnp.allclose(out, ref, rtol=1e-4, atol=1e-4), err

    print("KERNEL_OK")
</pallas_src>

<mosaic_0001>
module attributes {stable_mosaic.version = 11 : i64} {
  func.func @_conv1_kernel(%arg0: i32, %arg1: memref<1x16x16x4xf32, #tpu.memory_space<vmem>>, %arg2: memref<9x4x8xf32, #tpu.memory_space<vmem>>, %arg3: memref<1x16x16x8xf32, #tpu.memory_space<vmem>>, %arg4: memref<1x2x8xf32, #tpu.memory_space<vmem>>, %arg5: memref<18x25x4xf32, #tpu.memory_space<vmem>>) attributes {dimension_semantics = [#tpu.dimension_semantics<parallel>], iteration_bounds = array<i64: 2>, scalar_prefetch = 0 : i64, scratch_operands = 1 : i64, tpu.core_type = #tpu.core_type<tc>, window_params = [{transform_indices = @transform_0, window_bounds = array<i64: 1, 16, 16, 4>}, {pipeline_mode = #tpu.pipeline_mode<synchronous>, transform_indices = @transform_1, window_bounds = array<i64: 9, 4, 8>}, {transform_indices = @transform_2, window_bounds = array<i64: 1, 16, 16, 8>}, {transform_indices = @transform_3, window_bounds = array<i64: 1, 2, 8>}]} {
    %c0 = arith.constant 0 : index
    %c0_0 = arith.constant 0 : index
    %c0_1 = arith.constant 0 : index
    %c0_2 = arith.constant 0 : index
    %0 = vector.load %arg1[%c0, %c0_0, %c0_1, %c0_2] : memref<1x16x16x4xf32, #tpu.memory_space<vmem>>, vector<1x16x16x4xf32>
    %1 = vector.shape_cast %0 : vector<1x16x16x4xf32> to vector<16x16x4xf32>
    %cst = arith.constant 0.000000e+00 : f32
    %2 = vector.broadcast %cst : f32 to vector<1x18x4xf32>
    %c0_3 = arith.constant 0 : index
    %c7 = arith.constant 7 : index
    %c0_4 = arith.constant 0 : index
    %3 = vector.load %arg5[%c0_3, %c7, %c0_4] : memref<18x25x4xf32, #tpu.memory_space<vmem>>, vector<1x18x4xf32>
    tpu.vector_store %arg5[%c0_3, %c7, %c0_4], %2 {strides = array<i32>} : memref<18x25x4xf32, #tpu.memory_space<vmem>>, vector<1x18x4xf32>,
    %cst_5 = arith.constant 0.000000e+00 : f32
    %4 = vector.broadcast %cst_5 : f32 to vector<1x18x4xf32>
    %c17 = arith.constant 17 : index
    %c7_6 = arith.constant 7 : index
    %c0_7 = arith.constant 0 : index
    %5 = vector.load %arg5[%c17, %c7_6, %c0_7] : memref<18x25x4xf32, #tpu.memory_space<vmem>>, vector<1x18x4xf32>
    tpu.vector_store %arg5[%c17, %c7_6, %c0_7], %4 {strides = array<i32>} : memref<18x25x4xf32, #tpu.memory_space<vmem>>, vector<1x18x4xf32>,
    %cst_8 = arith.constant 0.000000e+00 : f32
    %6 = vector.broadcast %cst_8 : f32 to vector<18x1x4xf32>
    %c0_9 = arith.constant 0 : index
    %c7_10 = arith.constant 7 : index
    %c0_11 = arith.constant 0 : index
    %7 = vector.load %arg5[%c0_9, %c7_10, %c0_11] : memref<18x25x4xf32, #tpu.memory_space<vmem>>, vector<18x1x4xf32>
    tpu.vector_store %arg5[%c0_9, %c7_10, %c0_11], %6 {strides = array<i32>} : memref<18x25x4xf32, #tpu.memory_space<vmem>>, vector<18x1x4xf32>,
    %cst_12 = arith.constant 0.000000e+00 : f32
    %8 = vector.broadcast %cst_12 : f32 to vector<18x1x4xf32>
    %c0_13 = arith.constant 0 : index
    %c24 = arith.constant 24 : index
    %c0_14 = arith.constant 0 : index
    %9 = vector.load %arg5[%c0_13, %c24, %c0_14] : memref<18x25x4xf32, #tpu.memory_space<vmem>>, vector<18x1x4xf32>
    tpu.vector_store %arg5[%c0_13, %c24, %c0_14], %8 {strides = array<i32>} : memref<18x25x4xf32, #tpu.memory_space<vmem>>, vector<18x1x4xf32>,
    %c1 = arith.constant 1 : index
    %c8 = arith.constant 8 : index
    %c0_15 = arith.constant 0 : index
    %10 = vector.load %arg5[%c1, %c8, %c0_15] : memref<18x25x4xf32, #tpu.memory_space<vmem>>, vector<16x16x4xf32>
    tpu.vector_store %arg5[%c1, %c8, %c0_15], %1 {strides = array<i32>} : memref<18x25x4xf32, #tpu.memory_space<vmem>>, vector<16x16x4xf32>,
    %c0_16 = arith.constant 0 : index
    %c7_17 = arith.constant 7 : index
    %c0_18 = arith.constant 0 : index
    %11 = vector.load %arg5[%c0_16, %c7_17, %c0_18] : memref<18x25x4xf32, #tpu.memory_space<vmem>>, vector<16x16x4xf32>
    %12 = vector.shape_cast %11 : vector<16x16x4xf32> to vector<256x4xf32>
    %c0_19 = arith.constant 0 : index
    %c0_20 = arith.constant 0 : index
    %c0_21 = arith.constant 0 : index
    %13 = vector.load %arg2[%c0_19, %c0_20, %c0_21] : memref<9x4x8xf32, #tpu.memory_space<vmem>>, vector<1x4x8xf32>
    %14 = vector.shape_cast %13 : vector<1x4x8xf32> to vector<4x8xf32>
    %cst_22 = arith.constant dense<0.000000e+00> : vector<256x8xf32>
    %15 = tpu.matmul %12, %14, %cst_22 {dimension_numbers = #tpu.dot_dimension_numbers<[1], [0], [0], [1], [0, 0, 1, 1], [], []>} : vector<256x4xf32>, vector<4x8xf32>, vector<256x8xf32> -> vector<256x8xf32>
    %c0_23 = arith.constant 0 : index
    %c8_24 = arith.constant 8 : index
    %c0_25 = arith.constant 0 : index
    %16 = vector.load %arg5[%c0_23, %c8_24, %c0_25] : memref<18x25x4xf32, #tpu.memory_space<vmem>>, vector<16x16x4xf32>
    %17 = vector.shape_cast %16 : vector<16x16x4xf32> to vector<256x4xf32>
    %c1_26 = arith.constant 1 : index
    %c0_27 = arith.constant 0 : index
    %c0_28 = arith.constant 0 : index
    %18 = vector.load %arg2[%c1_26, %c0_27, %c0_28] : memref<9x4x8xf32, #tpu.memory_space<vmem>>, vector<1x4x8xf32>
    %19 = vector.shape_cast %18 : vector<1x4x8xf32> to vector<4x8xf32>
    %cst_29 = arith.constant dense<0.000000e+00> : vector<256x8xf32>
    %20 = tpu.matmul %17, %19, %cst_29 {dimension_numbers = #tpu.dot_dimension_numbers<[1], [0], [0], [1], [0, 0, 1, 1], [], []>} : vector<256x4xf32>, vector<4x8xf32>, vector<256x8xf32> -> vector<256x8xf32>
    %21 = arith.addf %15, %20 : vector<256x8xf32>
    %c0_30 = arith.constant 0 : index
    %c9 = arith.constant 9 : index
    %c0_31 = arith.constant 0 : index
    %22 = vector.load %arg5[%c0_30, %c9, %c0_31] : memref<18x25x4xf32, #tpu.memory_space<vmem>>, vector<16x16x4xf32>
    %23 = vector.shape_cast %22 : vector<16x16x4xf32> to vector<256x4xf32>
    %c2 = arith.constant 2 : index
    %c0_32 = arith.constant 0 : index
    %c0_33 = arith.constant 0 : index
    %24 = vector.load %arg2[%c2, %c0_32, %c0_33] : memref<9x4x8xf32, #tpu.memory_space<vmem>>, vector<1x4x8xf32>
    %25 = vector.shape_cast %24 : vector<1x4x8xf32> to vector<4x8xf32>
    %cst_34 = arith.constant dense<0.000000e+00> : vector<256x8xf32>
    %26 = tpu.matmul %23, %25, %cst_34 {dimension_numbers = #tpu.dot_dimension_numbers<[1], [0], [0], [1], [0, 0, 1, 1], [], []>} : vector<256x4xf32>, vector<4x8xf32>, vector<256x8xf32> -> vector<256x8xf32>
    %27 = arith.addf %21, %26 : vector<256x8xf32>
    %c1_35 = arith.constant 1 : index
    %c7_36 = arith.constant 7 : index
    %c0_37 = arith.constant 0 : index
    %28 = vector.load %arg5[%c1_35, %c7_36, %c0_37] : memref<18x25x4xf32, #tpu.memory_space<vmem>>, vector<16x16x4xf32>
    %29 = vector.shape_cast %28 : vector<16x16x4xf32> to vector<256x4xf32>
    %c3 = arith.constant 3 : index
    %c0_38 = arith.constant 0 : index
    %c0_39 = arith.constant 0 : index
    %30 = vector.load %arg2[%c3, %c0_38, %c0_39] : memref<9x4x8xf32, #tpu.memory_space<vmem>>, vector<1x4x8xf32>
    %31 = vector.shape_cast %30 : vector<1x4x8xf32> to vector<4x8xf32>
    %cst_40 = arith.constant dense<0.000000e+00> : vector<256x8xf32>
    %32 = tpu.matmul %29, %31, %cst_40 {dimension_numbers = #tpu.dot_dimension_numbers<[1], [0], [0], [1], [0, 0, 1, 1], [], []>} : vector<256x4xf32>, vector<4x8xf32>, vector<256x8xf32> -> vector<256x8xf32>
    %33 = arith.addf %27, %32 : vector<256x8xf32>
    %c1_41 = arith.constant 1 : index
    %c8_42 = arith.constant 8 : index
    %c0_43 = arith.constant 0 : index
    %34 = vector.load %arg5[%c1_41, %c8_42, %c0_43] : memref<18x25x4xf32, #tpu.memory_space<vmem>>, vector<16x16x4xf32>
    %35 = vector.shape_cast %34 : vector<16x16x4xf32> to vector<256x4xf32>
    %c4 = arith.constant 4 : index
    %c0_44 = arith.constant 0 : index
    %c0_45 = arith.constant 0 : index
    %36 = vector.load %arg2[%c4, %c0_44, %c0_45] : memref<9x4x8xf32, #tpu.memory_space<vmem>>, vector<1x4x8xf32>
    %37 = vector.shape_cast %36 : vector<1x4x8xf32> to vector<4x8xf32>
    %cst_46 = arith.constant dense<0.000000e+00> : vector<256x8xf32>
    %38 = tpu.matmul %35, %37, %cst_46 {dimension_numbers = #tpu.dot_dimension_numbers<[1], [0], [0], [1], [0, 0, 1, 1], [], []>} : vector<256x4xf32>, vector<4x8xf32>, vector<256x8xf32> -> vector<256x8xf32>
    %39 = arith.addf %33, %38 : vector<256x8xf32>
    %c1_47 = arith.constant 1 : index
    %c9_48 = arith.constant 9 : index
    %c0_49 = arith.constant 0 : index
    %40 = vector.load %arg5[%c1_47, %c9_48, %c0_49] : memref<18x25x4xf32, #tpu.memory_space<vmem>>, vector<16x16x4xf32>
    %41 = vector.shape_cast %40 : vector<16x16x4xf32> to vector<256x4xf32>
    %c5 = arith.constant 5 : index
    %c0_50 = arith.constant 0 : index
    %c0_51 = arith.constant 0 : index
    %42 = vector.load %arg2[%c5, %c0_50, %c0_51] : memref<9x4x8xf32, #tpu.memory_space<vmem>>, vector<1x4x8xf32>
    %43 = vector.shape_cast %42 : vector<1x4x8xf32> to vector<4x8xf32>
    %cst_52 = arith.constant dense<0.000000e+00> : vector<256x8xf32>
    %44 = tpu.matmul %41, %43, %cst_52 {dimension_numbers = #tpu.dot_dimension_numbers<[1], [0], [0], [1], [0, 0, 1, 1], [], []>} : vector<256x4xf32>, vector<4x8xf32>, vector<256x8xf32> -> vector<256x8xf32>
    %45 = arith.addf %39, %44 : vector<256x8xf32>
    %c2_53 = arith.constant 2 : index
    %c7_54 = arith.constant 7 : index
    %c0_55 = arith.constant 0 : index
    %46 = vector.load %arg5[%c2_53, %c7_54, %c0_55] : memref<18x25x4xf32, #tpu.memory_space<vmem>>, vector<16x16x4xf32>
    %47 = vector.shape_cast %46 : vector<16x16x4xf32> to vector<256x4xf32>
    %c6 = arith.constant 6 : index
    %c0_56 = arith.constant 0 : index
    %c0_57 = arith.constant 0 : index
    %48 = vector.load %arg2[%c6, %c0_56, %c0_57] : memref<9x4x8xf32, #tpu.memory_space<vmem>>, vector<1x4x8xf32>
    %49 = vector.shape_cast %48 : vector<1x4x8xf32> to vector<4x8xf32>
    %cst_58 = arith.constant dense<0.000000e+00> : vector<256x8xf32>
    %50 = tpu.matmul %47, %49, %cst_58 {dimension_numbers = #tpu.dot_dimension_numbers<[1], [0], [0], [1], [0, 0, 1, 1], [], []>} : vector<256x4xf32>, vector<4x8xf32>, vector<256x8xf32> -> vector<256x8xf32>
    %51 = arith.addf %45, %50 : vector<256x8xf32>
    %c2_59 = arith.constant 2 : index
    %c8_60 = arith.constant 8 : index
    %c0_61 = arith.constant 0 : index
    %52 = vector.load %arg5[%c2_59, %c8_60, %c0_61] : memref<18x25x4xf32, #tpu.memory_space<vmem>>, vector<16x16x4xf32>
    %53 = vector.shape_cast %52 : vector<16x16x4xf32> to vector<256x4xf32>
    %c7_62 = arith.constant 7 : index
    %c0_63 = arith.constant 0 : index
    %c0_64 = arith.constant 0 : index
    %54 = vector.load %arg2[%c7_62, %c0_63, %c0_64] : memref<9x4x8xf32, #tpu.memory_space<vmem>>, vector<1x4x8xf32>
    %55 = vector.shape_cast %54 : vector<1x4x8xf32> to vector<4x8xf32>
    %cst_65 = arith.constant dense<0.000000e+00> : vector<256x8xf32>
    %56 = tpu.matmul %53, %55, %cst_65 {dimension_numbers = #tpu.dot_dimension_numbers<[1], [0], [0], [1], [0, 0, 1, 1], [], []>} : vector<256x4xf32>, vector<4x8xf32>, vector<256x8xf32> -> vector<256x8xf32>
    %57 = arith.addf %51, %56 : vector<256x8xf32>
    %c2_66 = arith.constant 2 : index
    %c9_67 = arith.constant 9 : index
    %c0_68 = arith.constant 0 : index
    %58 = vector.load %arg5[%c2_66, %c9_67, %c0_68] : memref<18x25x4xf32, #tpu.memory_space<vmem>>, vector<16x16x4xf32>
    %59 = vector.shape_cast %58 : vector<16x16x4xf32> to vector<256x4xf32>
    %c8_69 = arith.constant 8 : index
    %c0_70 = arith.constant 0 : index
    %c0_71 = arith.constant 0 : index
    %60 = vector.load %arg2[%c8_69, %c0_70, %c0_71] : memref<9x4x8xf32, #tpu.memory_space<vmem>>, vector<1x4x8xf32>
    %61 = vector.shape_cast %60 : vector<1x4x8xf32> to vector<4x8xf32>
    %cst_72 = arith.constant dense<0.000000e+00> : vector<256x8xf32>
    %62 = tpu.matmul %59, %61, %cst_72 {dimension_numbers = #tpu.dot_dimension_numbers<[1], [0], [0], [1], [0, 0, 1, 1], [], []>} : vector<256x4xf32>, vector<4x8xf32>, vector<256x8xf32> -> vector<256x8xf32>
    %63 = arith.addf %57, %62 : vector<256x8xf32>
    %cst_73 = arith.constant dense<0.000000e+00> : vector<8xf32>
    %64 = vector.multi_reduction <add>, %63, %cst_73 [0] : vector<256x8xf32> to vector<8xf32>
    %65 = vector.shape_cast %64 : vector<8xf32> to vector<1x8xf32>
    %cst_74 = arith.constant 3.906250e-03 : f32
    %66 = vector.broadcast %cst_74 : f32 to vector<1x8xf32>
    %67 = arith.mulf %65, %66 : vector<1x8xf32>
    %68 = vector.broadcast %67 : vector<1x8xf32> to vector<256x8xf32>
    %69 = arith.subf %63, %68 : vector<256x8xf32>
    %70 = arith.mulf %69, %69 : vector<256x8xf32>
    %cst_75 = arith.constant dense<0.000000e+00> : vector<8xf32>
    %71 = vector.multi_reduction <add>, %70, %cst_75 [0] : vector<256x8xf32> to vector<8xf32>
    %72 = vector.shape_cast %71 : vector<8xf32> to vector<1x8xf32>
    %73 = vector.shape_cast %65 : vector<1x8xf32> to vector<1x1x8xf32>
    %c0_76 = arith.constant 0 : index
    %c0_77 = arith.constant 0 : index
    %c0_78 = arith.constant 0 : index
    %74 = vector.load %arg4[%c0_76, %c0_77, %c0_78] : memref<1x2x8xf32, #tpu.memory_space<vmem>>, vector<1x1x8xf32>
    tpu.vector_store %arg4[%c0_76, %c0_77, %c0_78], %73 {strides = array<i32>} : memref<1x2x8xf32, #tpu.memory_space<vmem>>, vector<1x1x8xf32>,
    %75 = vector.shape_cast %72 : vector<1x8xf32> to vector<1x1x8xf32>
    %c0_79 = arith.constant 0 : index
    %c1_80 = arith.constant 1 : index
    %c0_81 = arith.constant 0 : index
    %76 = vector.load %arg4[%c0_79, %c1_80, %c0_81] : memref<1x2x8xf32, #tpu.memory_space<vmem>>, vector<1x1x8xf32>
    tpu.vector_store %arg4[%c0_79, %c1_80, %c0_81], %75 {strides = array<i32>} : memref<1x2x8xf32, #tpu.memory_space<vmem>>, vector<1x1x8xf32>,
    %77 = vector.shape_cast %63 : vector<256x8xf32> to vector<16x16x8xf32>
    %c0_82 = arith.constant 0 : index
    %c0_83 = arith.constant 0 : index
    %c0_84 = arith.constant 0 : index
    %c0_85 = arith.constant 0 : index
    %78 = vector.load %arg3[%c0_82, %c0_83, %c0_84, %c0_85] : memref<1x16x16x8xf32, #tpu.memory_space<vmem>>, vector<1x16x16x8xf32>
    %79 = vector.shape_cast %78 : vector<1x16x16x8xf32> to vector<16x16x8xf32>
    %80 = vector.shape_cast %77 : vector<16x16x8xf32> to vector<1x16x16x8xf32>
    tpu.vector_store %arg3[%c0_82, %c0_83, %c0_84, %c0_85], %80 {strides = array<i32>} : memref<1x16x16x8xf32, #tpu.memory_space<vmem>>, vector<1x16x16x8xf32>,
    return
  }
  func.func @transform_0(%arg0: i32) -> (i32, i32, i32, i32) {
    %c0_i32 = arith.constant 0 : i32
    %c0_i32_0 = arith.constant 0 : i32
    %c0_i32_1 = arith.constant 0 : i32
    %c0_i32_2 = arith.constant 0 : i32
    return %arg0, %c0_i32, %c0_i32_0, %c0_i32_1 : i32, i32, i32, i32
  }
  func.func @transform_1(%arg0: i32) -> (i32, i32, i32) {
    %c0_i32 = arith.constant 0 : i32
    %c0_i32_0 = arith.constant 0 : i32
    %c0_i32_1 = arith.constant 0 : i32
    %c0_i32_2 = arith.constant 0 : i32
    return %c0_i32, %c0_i32_0, %c0_i32_1 : i32, i32, i32
  }
  func.func @transform_2(%arg0: i32) -> (i32, i32, i32, i32) {
    %c0_i32 = arith.constant 0 : i32
    %c0_i32_0 = arith.constant 0 : i32
    %c0_i32_1 = arith.constant 0 : i32
    %c0_i32_2 = arith.constant 0 : i32
    return %arg0, %c0_i32, %c0_i32_0, %c0_i32_1 : i32, i32, i32, i32
  }
  func.func @transform_3(%arg0: i32) -> (i32, i32, i32) {
    %c0_i32 = arith.constant 0 : i32
    %c0_i32_0 = arith.constant 0 : i32
    %c0_i32_1 = arith.constant 0 : i32
    return %arg0, %c0_i32, %c0_i32_0 : i32, i32, i32
  }
}

module attributes {stable_mosaic.version = 11 : i64} {
  func.func @_conv2_kernel(%arg0: i32, %arg1: memref<1x16x16x8xf32, #tpu.memory_space<vmem>>, %arg2: memref<1x8xf32, #tpu.memory_space<vmem>>, %arg3: memref<1x8xf32, #tpu.memory_space<vmem>>, %arg4: memref<9x8x8xf32, #tpu.memory_space<vmem>>, %arg5: memref<1x16x16x8xf32, #tpu.memory_space<vmem>>, %arg6: memref<1x2x8xf32, #tpu.memory_space<vmem>>, %arg7: memref<18x25x8xf32, #tpu.memory_space<vmem>>) attributes {dimension_semantics = [#tpu.dimension_semantics<parallel>], iteration_bounds = array<i64: 2>, scalar_prefetch = 0 : i64, scratch_operands = 1 : i64, tpu.core_type = #tpu.core_type<tc>, window_params = [{transform_indices = @transform_0, window_bounds = array<i64: 1, 16, 16, 8>}, {pipeline_mode = #tpu.pipeline_mode<synchronous>, transform_indices = @transform_1, window_bounds = array<i64: 1, 8>}, {pipeline_mode = #tpu.pipeline_mode<synchronous>, transform_indices = @transform_2, window_bounds = array<i64: 1, 8>}, {pipeline_mode = #tpu.pipeline_mode<synchronous>, transform_indices = @transform_3, window_bounds = array<i64: 9, 8, 8>}, {transform_indices = @transform_4, window_bounds = array<i64: 1, 16, 16, 8>}, {transform_indices = @transform_5, window_bounds = array<i64: 1, 2, 8>}]} {
    %c0 = arith.constant 0 : index
    %c0_0 = arith.constant 0 : index
    %c0_1 = arith.constant 0 : index
    %c0_2 = arith.constant 0 : index
    %0 = vector.load %arg1[%c0, %c0_0, %c0_1, %c0_2] : memref<1x16x16x8xf32, #tpu.memory_space<vmem>>, vector<1x16x16x8xf32>
    %1 = vector.shape_cast %0 : vector<1x16x16x8xf32> to vector<16x16x8xf32>
    %c0_3 = arith.constant 0 : index
    %c0_4 = arith.constant 0 : index
    %2 = vector.load %arg2[%c0_3, %c0_4] : memref<1x8xf32, #tpu.memory_space<vmem>>, vector<1x8xf32>
    %3 = vector.shape_cast %2 : vector<1x8xf32> to vector<1x1x8xf32>
    %4 = vector.broadcast %3 : vector<1x1x8xf32> to vector<16x16x8xf32>
    %5 = arith.mulf %1, %4 : vector<16x16x8xf32>
    %c0_5 = arith.constant 0 : index
    %c0_6 = arith.constant 0 : index
    %6 = vector.load %arg3[%c0_5, %c0_6] : memref<1x8xf32, #tpu.memory_space<vmem>>, vector<1x8xf32>
    %7 = vector.shape_cast %6 : vector<1x8xf32> to vector<1x1x8xf32>
    %8 = vector.broadcast %7 : vector<1x1x8xf32> to vector<16x16x8xf32>
    %9 = arith.addf %5, %8 : vector<16x16x8xf32>
    %cst = arith.constant 0.000000e+00 : f32
    %10 = vector.broadcast %cst : f32 to vector<16x16x8xf32>
    %11 = arith.maximumf %9, %10 : vector<16x16x8xf32>
    %cst_7 = arith.constant 0.000000e+00 : f32
    %12 = vector.broadcast %cst_7 : f32 to vector<1x18x8xf32>
    %c0_8 = arith.constant 0 : index
    %c7 = arith.constant 7 : index
    %c0_9 = arith.constant 0 : index
    %13 = vector.load %arg7[%c0_8, %c7, %c0_9] : memref<18x25x8xf32, #tpu.memory_space<vmem>>, vector<1x18x8xf32>
    tpu.vector_store %arg7[%c0_8, %c7, %c0_9], %12 {strides = array<i32>} : memref<18x25x8xf32, #tpu.memory_space<vmem>>, vector<1x18x8xf32>,
    %cst_10 = arith.constant 0.000000e+00 : f32
    %14 = vector.broadcast %cst_10 : f32 to vector<1x18x8xf32>
    %c17 = arith.constant 17 : index
    %c7_11 = arith.constant 7 : index
    %c0_12 = arith.constant 0 : index
    %15 = vector.load %arg7[%c17, %c7_11, %c0_12] : memref<18x25x8xf32, #tpu.memory_space<vmem>>, vector<1x18x8xf32>
    tpu.vector_store %arg7[%c17, %c7_11, %c0_12], %14 {strides = array<i32>} : memref<18x25x8xf32, #tpu.memory_space<vmem>>, vector<1x18x8xf32>,
    %cst_13 = arith.constant 0.000000e+00 : f32
    %16 = vector.broadcast %cst_13 : f32 to vector<18x1x8xf32>
    %c0_14 = arith.constant 0 : index
    %c7_15 = arith.constant 7 : index
    %c0_16 = arith.constant 0 : index
    %17 = vector.load %arg7[%c0_14, %c7_15, %c0_16] : memref<18x25x8xf32, #tpu.memory_space<vmem>>, vector<18x1x8xf32>
    tpu.vector_store %arg7[%c0_14, %c7_15, %c0_16], %16 {strides = array<i32>} : memref<18x25x8xf32, #tpu.memory_space<vmem>>, vector<18x1x8xf32>,
    %cst_17 = arith.constant 0.000000e+00 : f32
    %18 = vector.broadcast %cst_17 : f32 to vector<18x1x8xf32>
    %c0_18 = arith.constant 0 : index
    %c24 = arith.constant 24 : index
    %c0_19 = arith.constant 0 : index
    %19 = vector.load %arg7[%c0_18, %c24, %c0_19] : memref<18x25x8xf32, #tpu.memory_space<vmem>>, vector<18x1x8xf32>
    tpu.vector_store %arg7[%c0_18, %c24, %c0_19], %18 {strides = array<i32>} : memref<18x25x8xf32, #tpu.memory_space<vmem>>, vector<18x1x8xf32>,
    %c1 = arith.constant 1 : index
    %c8 = arith.constant 8 : index
    %c0_20 = arith.constant 0 : index
    %20 = vector.load %arg7[%c1, %c8, %c0_20] : memref<18x25x8xf32, #tpu.memory_space<vmem>>, vector<16x16x8xf32>
    tpu.vector_store %arg7[%c1, %c8, %c0_20], %11 {strides = array<i32>} : memref<18x25x8xf32, #tpu.memory_space<vmem>>, vector<16x16x8xf32>,
    %c0_21 = arith.constant 0 : index
    %c7_22 = arith.constant 7 : index
    %c0_23 = arith.constant 0 : index
    %21 = vector.load %arg7[%c0_21, %c7_22, %c0_23] : memref<18x25x8xf32, #tpu.memory_space<vmem>>, vector<16x16x8xf32>
    %22 = vector.shape_cast %21 : vector<16x16x8xf32> to vector<256x8xf32>
    %c0_24 = arith.constant 0 : index
    %c0_25 = arith.constant 0 : index
    %c0_26 = arith.constant 0 : index
    %23 = vector.load %arg4[%c0_24, %c0_25, %c0_26] : memref<9x8x8xf32, #tpu.memory_space<vmem>>, vector<1x8x8xf32>
    %24 = vector.shape_cast %23 : vector<1x8x8xf32> to vector<8x8xf32>
    %cst_27 = arith.constant dense<0.000000e+00> : vector<256x8xf32>
    %25 = tpu.matmul %22, %24, %cst_27 {dimension_numbers = #tpu.dot_dimension_numbers<[1], [0], [0], [1], [0, 0, 1, 1], [], []>} : vector<256x8xf32>, vector<8x8xf32>, vector<256x8xf32> -> vector<256x8xf32>
    %c0_28 = arith.constant 0 : index
    %c8_29 = arith.constant 8 : index
    %c0_30 = arith.constant 0 : index
    %26 = vector.load %arg7[%c0_28, %c8_29, %c0_30] : memref<18x25x8xf32, #tpu.memory_space<vmem>>, vector<16x16x8xf32>
    %27 = vector.shape_cast %26 : vector<16x16x8xf32> to vector<256x8xf32>
    %c1_31 = arith.constant 1 : index
    %c0_32 = arith.constant 0 : index
    %c0_33 = arith.constant 0 : index
    %28 = vector.load %arg4[%c1_31, %c0_32, %c0_33] : memref<9x8x8xf32, #tpu.memory_space<vmem>>, vector<1x8x8xf32>
    %29 = vector.shape_cast %28 : vector<1x8x8xf32> to vector<8x8xf32>
    %cst_34 = arith.constant dense<0.000000e+00> : vector<256x8xf32>
    %30 = tpu.matmul %27, %29, %cst_34 {dimension_numbers = #tpu.dot_dimension_numbers<[1], [0], [0], [1], [0, 0, 1, 1], [], []>} : vector<256x8xf32>, vector<8x8xf32>, vector<256x8xf32> -> vector<256x8xf32>
    %31 = arith.addf %25, %30 : vector<256x8xf32>
    %c0_35 = arith.constant 0 : index
    %c9 = arith.constant 9 : index
    %c0_36 = arith.constant 0 : index
    %32 = vector.load %arg7[%c0_35, %c9, %c0_36] : memref<18x25x8xf32, #tpu.memory_space<vmem>>, vector<16x16x8xf32>
    %33 = vector.shape_cast %32 : vector<16x16x8xf32> to vector<256x8xf32>
    %c2 = arith.constant 2 : index
    %c0_37 = arith.constant 0 : index
    %c0_38 = arith.constant 0 : index
    %34 = vector.load %arg4[%c2, %c0_37, %c0_38] : memref<9x8x8xf32, #tpu.memory_space<vmem>>, vector<1x8x8xf32>
    %35 = vector.shape_cast %34 : vector<1x8x8xf32> to vector<8x8xf32>
    %cst_39 = arith.constant dense<0.000000e+00> : vector<256x8xf32>
    %36 = tpu.matmul %33, %35, %cst_39 {dimension_numbers = #tpu.dot_dimension_numbers<[1], [0], [0], [1], [0, 0, 1, 1], [], []>} : vector<256x8xf32>, vector<8x8xf32>, vector<256x8xf32> -> vector<256x8xf32>
    %37 = arith.addf %31, %36 : vector<256x8xf32>
    %c1_40 = arith.constant 1 : index
    %c7_41 = arith.constant 7 : index
    %c0_42 = arith.constant 0 : index
    %38 = vector.load %arg7[%c1_40, %c7_41, %c0_42] : memref<18x25x8xf32, #tpu.memory_space<vmem>>, vector<16x16x8xf32>
    %39 = vector.shape_cast %38 : vector<16x16x8xf32> to vector<256x8xf32>
    %c3 = arith.constant 3 : index
    %c0_43 = arith.constant 0 : index
    %c0_44 = arith.constant 0 : index
    %40 = vector.load %arg4[%c3, %c0_43, %c0_44] : memref<9x8x8xf32, #tpu.memory_space<vmem>>, vector<1x8x8xf32>
    %41 = vector.shape_cast %40 : vector<1x8x8xf32> to vector<8x8xf32>
    %cst_45 = arith.constant dense<0.000000e+00> : vector<256x8xf32>
    %42 = tpu.matmul %39, %41, %cst_45 {dimension_numbers = #tpu.dot_dimension_numbers<[1], [0], [0], [1], [0, 0, 1, 1], [], []>} : vector<256x8xf32>, vector<8x8xf32>, vector<256x8xf32> -> vector<256x8xf32>
    %43 = arith.addf %37, %42 : vector<256x8xf32>
    %c1_46 = arith.constant 1 : index
    %c8_47 = arith.constant 8 : index
    %c0_48 = arith.constant 0 : index
    %44 = vector.load %arg7[%c1_46, %c8_47, %c0_48] : memref<18x25x8xf32, #tpu.memory_space<vmem>>, vector<16x16x8xf32>
    %45 = vector.shape_cast %44 : vector<16x16x8xf32> to vector<256x8xf32>
    %c4 = arith.constant 4 : index
    %c0_49 = arith.constant 0 : index
    %c0_50 = arith.constant 0 : index
    %46 = vector.load %arg4[%c4, %c0_49, %c0_50] : memref<9x8x8xf32, #tpu.memory_space<vmem>>, vector<1x8x8xf32>
    %47 = vector.shape_cast %46 : vector<1x8x8xf32> to vector<8x8xf32>
    %cst_51 = arith.constant dense<0.000000e+00> : vector<256x8xf32>
    %48 = tpu.matmul %45, %47, %cst_51 {dimension_numbers = #tpu.dot_dimension_numbers<[1], [0], [0], [1], [0, 0, 1, 1], [], []>} : vector<256x8xf32>, vector<8x8xf32>, vector<256x8xf32> -> vector<256x8xf32>
    %49 = arith.addf %43, %48 : vector<256x8xf32>
    %c1_52 = arith.constant 1 : index
    %c9_53 = arith.constant 9 : index
    %c0_54 = arith.constant 0 : index
    %50 = vector.load %arg7[%c1_52, %c9_53, %c0_54] : memref<18x25x8xf32, #tpu.memory_space<vmem>>, vector<16x16x8xf32>
    %51 = vector.shape_cast %50 : vector<16x16x8xf32> to vector<256x8xf32>
    %c5 = arith.constant 5 : index
    %c0_55 = arith.constant 0 : index
    %c0_56 = arith.constant 0 : index
    %52 = vector.load %arg4[%c5, %c0_55, %c0_56] : memref<9x8x8xf32, #tpu.memory_space<vmem>>, vector<1x8x8xf32>
    %53 = vector.shape_cast %52 : vector<1x8x8xf32> to vector<8x8xf32>
    %cst_57 = arith.constant dense<0.000000e+00> : vector<256x8xf32>
    %54 = tpu.matmul %51, %53, %cst_57 {dimension_numbers = #tpu.dot_dimension_numbers<[1], [0], [0], [1], [0, 0, 1, 1], [], []>} : vector<256x8xf32>, vector<8x8xf32>, vector<256x8xf32> -> vector<256x8xf32>
    %55 = arith.addf %49, %54 : vector<256x8xf32>
    %c2_58 = arith.constant 2 : index
    %c7_59 = arith.constant 7 : index
    %c0_60 = arith.constant 0 : index
    %56 = vector.load %arg7[%c2_58, %c7_59, %c0_60] : memref<18x25x8xf32, #tpu.memory_space<vmem>>, vector<16x16x8xf32>
    %57 = vector.shape_cast %56 : vector<16x16x8xf32> to vector<256x8xf32>
    %c6 = arith.constant 6 : index
    %c0_61 = arith.constant 0 : index
    %c0_62 = arith.constant 0 : index
    %58 = vector.load %arg4[%c6, %c0_61, %c0_62] : memref<9x8x8xf32, #tpu.memory_space<vmem>>, vector<1x8x8xf32>
    %59 = vector.shape_cast %58 : vector<1x8x8xf32> to vector<8x8xf32>
    %cst_63 = arith.constant dense<0.000000e+00> : vector<256x8xf32>
    %60 = tpu.matmul %57, %59, %cst_63 {dimension_numbers = #tpu.dot_dimension_numbers<[1], [0], [0], [1], [0, 0, 1, 1], [], []>} : vector<256x8xf32>, vector<8x8xf32>, vector<256x8xf32> -> vector<256x8xf32>
    %61 = arith.addf %55, %60 : vector<256x8xf32>
    %c2_64 = arith.constant 2 : index
    %c8_65 = arith.constant 8 : index
    %c0_66 = arith.constant 0 : index
    %62 = vector.load %arg7[%c2_64, %c8_65, %c0_66] : memref<18x25x8xf32, #tpu.memory_space<vmem>>, vector<16x16x8xf32>
    %63 = vector.shape_cast %62 : vector<16x16x8xf32> to vector<256x8xf32>
    %c7_67 = arith.constant 7 : index
    %c0_68 = arith.constant 0 : index
    %c0_69 = arith.constant 0 : index
    %64 = vector.load %arg4[%c7_67, %c0_68, %c0_69] : memref<9x8x8xf32, #tpu.memory_space<vmem>>, vector<1x8x8xf32>
    %65 = vector.shape_cast %64 : vector<1x8x8xf32> to vector<8x8xf32>
    %cst_70 = arith.constant dense<0.000000e+00> : vector<256x8xf32>
    %66 = tpu.matmul %63, %65, %cst_70 {dimension_numbers = #tpu.dot_dimension_numbers<[1], [0], [0], [1], [0, 0, 1, 1], [], []>} : vector<256x8xf32>, vector<8x8xf32>, vector<256x8xf32> -> vector<256x8xf32>
    %67 = arith.addf %61, %66 : vector<256x8xf32>
    %c2_71 = arith.constant 2 : index
    %c9_72 = arith.constant 9 : index
    %c0_73 = arith.constant 0 : index
    %68 = vector.load %arg7[%c2_71, %c9_72, %c0_73] : memref<18x25x8xf32, #tpu.memory_space<vmem>>, vector<16x16x8xf32>
    %69 = vector.shape_cast %68 : vector<16x16x8xf32> to vector<256x8xf32>
    %c8_74 = arith.constant 8 : index
    %c0_75 = arith.constant 0 : index
    %c0_76 = arith.constant 0 : index
    %70 = vector.load %arg4[%c8_74, %c0_75, %c0_76] : memref<9x8x8xf32, #tpu.memory_space<vmem>>, vector<1x8x8xf32>
    %71 = vector.shape_cast %70 : vector<1x8x8xf32> to vector<8x8xf32>
    %cst_77 = arith.constant dense<0.000000e+00> : vector<256x8xf32>
    %72 = tpu.matmul %69, %71, %cst_77 {dimension_numbers = #tpu.dot_dimension_numbers<[1], [0], [0], [1], [0, 0, 1, 1], [], []>} : vector<256x8xf32>, vector<8x8xf32>, vector<256x8xf32> -> vector<256x8xf32>
    %73 = arith.addf %67, %72 : vector<256x8xf32>
    %cst_78 = arith.constant dense<0.000000e+00> : vector<8xf32>
    %74 = vector.multi_reduction <add>, %73, %cst_78 [0] : vector<256x8xf32> to vector<8xf32>
    %75 = vector.shape_cast %74 : vector<8xf32> to vector<1x8xf32>
    %cst_79 = arith.constant 3.906250e-03 : f32
    %76 = vector.broadcast %cst_79 : f32 to vector<1x8xf32>
    %77 = arith.mulf %75, %76 : vector<1x8xf32>
    %78 = vector.broadcast %77 : vector<1x8xf32> to vector<256x8xf32>
    %79 = arith.subf %73, %78 : vector<256x8xf32>
    %80 = arith.mulf %79, %79 : vector<256x8xf32>
    %cst_80 = arith.constant dense<0.000000e+00> : vector<8xf32>
    %81 = vector.multi_reduction <add>, %80, %cst_80 [0] : vector<256x8xf32> to vector<8xf32>
    %82 = vector.shape_cast %81 : vector<8xf32> to vector<1x8xf32>
    %83 = vector.shape_cast %75 : vector<1x8xf32> to vector<1x1x8xf32>
    %c0_81 = arith.constant 0 : index
    %c0_82 = arith.constant 0 : index
    %c0_83 = arith.constant 0 : index
    %84 = vector.load %arg6[%c0_81, %c0_82, %c0_83] : memref<1x2x8xf32, #tpu.memory_space<vmem>>, vector<1x1x8xf32>
    tpu.vector_store %arg6[%c0_81, %c0_82, %c0_83], %83 {strides = array<i32>} : memref<1x2x8xf32, #tpu.memory_space<vmem>>, vector<1x1x8xf32>,
    %85 = vector.shape_cast %82 : vector<1x8xf32> to vector<1x1x8xf32>
    %c0_84 = arith.constant 0 : index
    %c1_85 = arith.constant 1 : index
    %c0_86 = arith.constant 0 : index
    %86 = vector.load %arg6[%c0_84, %c1_85, %c0_86] : memref<1x2x8xf32, #tpu.memory_space<vmem>>, vector<1x1x8xf32>
    tpu.vector_store %arg6[%c0_84, %c1_85, %c0_86], %85 {strides = array<i32>} : memref<1x2x8xf32, #tpu.memory_space<vmem>>, vector<1x1x8xf32>,
    %87 = vector.shape_cast %73 : vector<256x8xf32> to vector<16x16x8xf32>
    %c0_87 = arith.constant 0 : index
    %c0_88 = arith.constant 0 : index
    %c0_89 = arith.constant 0 : index
    %c0_90 = arith.constant 0 : index
    %88 = vector.load %arg5[%c0_87, %c0_88, %c0_89, %c0_90] : memref<1x16x16x8xf32, #tpu.memory_space<vmem>>, vector<1x16x16x8xf32>
    %89 = vector.shape_cast %88 : vector<1x16x16x8xf32> to vector<16x16x8xf32>
    %90 = vector.shape_cast %87 : vector<16x16x8xf32> to vector<1x16x16x8xf32>
    tpu.vector_store %arg5[%c0_87, %c0_88, %c0_89, %c0_90], %90 {strides = array<i32>} : memref<1x16x16x8xf32, #tpu.memory_space<vmem>>, vector<1x16x16x8xf32>,
    return
  }
  func.func @transform_0(%arg0: i32) -> (i32, i32, i32, i32) {
    %c0_i32 = arith.constant 0 : i32
    %c0_i32_0 = arith.constant 0 : i32
    %c0_i32_1 = arith.constant 0 : i32
    %c0_i32_2 = arith.constant 0 : i32
    return %arg0, %c0_i32, %c0_i32_0, %c0_i32_1 : i32, i32, i32, i32
  }
  func.func @transform_1(%arg0: i32) -> (i32, i32) {
    %c0_i32 = arith.constant 0 : i32
    %c0_i32_0 = arith.constant 0 : i32
    %c0_i32_1 = arith.constant 0 : i32
    return %c0_i32, %c0_i32_0 : i32, i32
  }
  func.func @transform_2(%arg0: i32) -> (i32, i32) {
    %c0_i32 = arith.constant 0 : i32
    %c0_i32_0 = arith.constant 0 : i32
    %c0_i32_1 = arith.constant 0 : i32
    return %c0_i32, %c0_i32_0 : i32, i32
  }
  func.func @transform_3(%arg0: i32) -> (i32, i32, i32) {
    %c0_i32 = arith.constant 0 : i32
    %c0_i32_0 = arith.constant 0 : i32
    %c0_i32_1 = arith.constant 0 : i32
    %c0_i32_2 = arith.constant 0 : i32
    return %c0_i32, %c0_i32_0, %c0_i32_1 : i32, i32, i32
  }
  func.func @transform_4(%arg0: i32) -> (i32, i32, i32, i32) {
    %c0_i32 = arith.constant 0 : i32
    %c0_i32_0 = arith.constant 0 : i32
    %c0_i32_1 = arith.constant 0 : i32
    %c0_i32_2 = arith.constant 0 : i32
    return %arg0, %c0_i32, %c0_i32_0, %c0_i32_1 : i32, i32, i32, i32
  }
  func.func @transform_5(%arg0: i32) -> (i32, i32, i32) {
    %c0_i32 = arith.constant 0 : i32
    %c0_i32_0 = arith.constant 0 : i32
    %c0_i32_1 = arith.constant 0 : i32
    return %arg0, %c0_i32, %c0_i32_0 : i32, i32, i32
  }
}

module attributes {stable_mosaic.version = 11 : i64} {
  func.func @_bn2_relu_kernel(%arg0: i32, %arg1: memref<1x16x16x8xf32, #tpu.memory_space<vmem>>, %arg2: memref<1x8xf32, #tpu.memory_space<vmem>>, %arg3: memref<1x8xf32, #tpu.memory_space<vmem>>, %arg4: memref<1x16x16x8xf32, #tpu.memory_space<vmem>>) attributes {dimension_semantics = [#tpu.dimension_semantics<parallel>], iteration_bounds = array<i64: 2>, scalar_prefetch = 0 : i64, scratch_operands = 0 : i64, tpu.core_type = #tpu.core_type<tc>, window_params = [{transform_indices = @transform_0, window_bounds = array<i64: 1, 16, 16, 8>}, {pipeline_mode = #tpu.pipeline_mode<synchronous>, transform_indices = @transform_1, window_bounds = array<i64: 1, 8>}, {pipeline_mode = #tpu.pipeline_mode<synchronous>, transform_indices = @transform_2, window_bounds = array<i64: 1, 8>}, {transform_indices = @transform_3, window_bounds = array<i64: 1, 16, 16, 8>}]} {
    %c0 = arith.constant 0 : index
    %c0_0 = arith.constant 0 : index
    %c0_1 = arith.constant 0 : index
    %c0_2 = arith.constant 0 : index
    %0 = vector.load %arg1[%c0, %c0_0, %c0_1, %c0_2] : memref<1x16x16x8xf32, #tpu.memory_space<vmem>>, vector<1x16x16x8xf32>
    %1 = vector.shape_cast %0 : vector<1x16x16x8xf32> to vector<16x16x8xf32>
    %c0_3 = arith.constant 0 : index
    %c0_4 = arith.constant 0 : index
    %2 = vector.load %arg2[%c0_3, %c0_4] : memref<1x8xf32, #tpu.memory_space<vmem>>, vector<1x8xf32>
    %3 = vector.shape_cast %2 : vector<1x8xf32> to vector<1x1x8xf32>
    %4 = vector.broadcast %3 : vector<1x1x8xf32> to vector<16x16x8xf32>
    %5 = arith.mulf %1, %4 : vector<16x16x8xf32>
    %c0_5 = arith.constant 0 : index
    %c0_6 = arith.constant 0 : index
    %6 = vector.load %arg3[%c0_5, %c0_6] : memref<1x8xf32, #tpu.memory_space<vmem>>, vector<1x8xf32>
    %7 = vector.shape_cast %6 : vector<1x8xf32> to vector<1x1x8xf32>
    %8 = vector.broadcast %7 : vector<1x1x8xf32> to vector<16x16x8xf32>
    %9 = arith.addf %5, %8 : vector<16x16x8xf32>
    %cst = arith.constant 0.000000e+00 : f32
    %10 = vector.broadcast %cst : f32 to vector<16x16x8xf32>
    %11 = arith.maximumf %9, %10 : vector<16x16x8xf32>
    %c0_7 = arith.constant 0 : index
    %c0_8 = arith.constant 0 : index
    %c0_9 = arith.constant 0 : index
    %c0_10 = arith.constant 0 : index
    %12 = vector.load %arg4[%c0_7, %c0_8, %c0_9, %c0_10] : memref<1x16x16x8xf32, #tpu.memory_space<vmem>>, vector<1x16x16x8xf32>
    %13 = vector.shape_cast %12 : vector<1x16x16x8xf32> to vector<16x16x8xf32>
    %14 = vector.shape_cast %11 : vector<16x16x8xf32> to vector<1x16x16x8xf32>
    tpu.vector_store %arg4[%c0_7, %c0_8, %c0_9, %c0_10], %14 {strides = array<i32>} : memref<1x16x16x8xf32, #tpu.memory_space<vmem>>, vector<1x16x16x8xf32>,
    return
  }
  func.func @transform_0(%arg0: i32) -> (i32, i32, i32, i32) {
    %c0_i32 = arith.constant 0 : i32
    %c0_i32_0 = arith.constant 0 : i32
    %c0_i32_1 = arith.constant 0 : i32
    %c0_i32_2 = arith.constant 0 : i32
    return %arg0, %c0_i32, %c0_i32_0, %c0_i32_1 : i32, i32, i32, i32
  }
  func.func @transform_1(%arg0: i32) -> (i32, i32) {
    %c0_i32 = arith.constant 0 : i32
    %c0_i32_0 = arith.constant 0 : i32
    %c0_i32_1 = arith.constant 0 : i32
    return %c0_i32, %c0_i32_0 : i32, i32
  }
  func.func @transform_2(%arg0: i32) -> (i32, i32) {
    %c0_i32 = arith.constant 0 : i32
    %c0_i32_0 = arith.constant 0 : i32
    %c0_i32_1 = arith.constant 0 : i32
    return %c0_i32, %c0_i32_0 : i32, i32
  }
  func.func @transform_3(%arg0: i32) -> (i32, i32, i32, i32) {
    %c0_i32 = arith.constant 0 : i32
    %c0_i32_0 = arith.constant 0 : i32
    %c0_i32_1 = arith.constant 0 : i32
    %c0_i32_2 = arith.constant 0 : i32
    return %arg0, %c0_i32, %c0_i32_0, %c0_i32_1 : i32, i32, i32, i32
  }
}

</mosaic_0001>

<llo_original>
// kernel: double_conv_block.5
$region0: #{double_conv_block.5}
  #allocation0 [shape = 'u32[]', space=smem, size = 0x4, offset = 0x4, fixed_abs, tag = 'smem constant byte address 0x4 - core index']
  #allocation1 [shape = 'u32[144,128]{1,0:T(1,128)}', space=vmem, size = 0x12000, scoped, tag = 'internal scratch']
  %s0 = inlined_call_operand.vmem [shape: f32[2,16,16,8], index: 0, kind: input, shape index: {}]
  %s1 = inlined_call_operand.vmem [shape: f32[1,8], index: 1, kind: input, shape index: {}]
  %s2 = inlined_call_operand.vmem [shape: f32[1,8], index: 2, kind: input, shape index: {}]
  %s3 = inlined_call_operand.vmem [shape: f32[2,16,16,8], index: 3, kind: output, shape index: {}]
  %s4 = sld [smem:[#allocation0]]
  $region45: #{double_conv_block.5} parent=0
    _
  %s6 = ssub.s32 1, %s4
  %s7 = scalar_select 0, %s6, %s4
  loop: start=0, step=1, limit=4
  $region2: #{double_conv_block.5} parent=0 // loop_pre_header
    _
  $region3: #{double_conv_block.5} parent=0 // loop_header
    %s9 = sphi 0, %s13
    %p10 = scmp.ge.s32.totalorder %s9, 4
    %s19 = sphi 0, %s21
    %s22 = sphi 0, %s19
    %s23 = sphi 0, %s22
    %s39 = sphi 0, %s23
    %s43 = sphi 0, %s43
    %s45 = sphi 0, %s43
    %s46 = sphi 0, %s45
    %s60 = sphi 0, %s46
    %s64 = sphi 0, %s64
    %s66 = sphi 0, %s64
    %s67 = sphi 0, %s66
    %s81 = sphi 0, %s67
    %s87 = sphi 0, %s89
    %s90 = sphi 0, %s87
    %s91 = sphi 0, %s90
    %s107 = sphi 0, %s91
  $region4: #{double_conv_block.5} parent=0 // loop_header_branch
    %12 = sbr.rel (%p10) target = $region8
  $region5: #{double_conv_block.5} parent=0 // loop_body
    %s14 = ssub.s32 %s9, 1
    %s15 = ssub.s32 %s9, 2
    %s16 = sadd.s32 %s9, 1
    %s17 = ssub.s32 %s9, %s16
    %p18 = scmp.eq.s32.totalorder %s17, 0
    %s20 = sadd.s32 %s19, 1
    %s21 = scalar_select %p18, %s19, %s20
    %p24 = pneg %p18
    %p25 = scmp.eq.s32.totalorder %s9, 1
    %p26 = por %p24, %p25
    %p27 = scmp.ne.s32.totalorder %s19, %s22
    %p28 = scmp.eq.s32.totalorder %s9, 0
    %p29 = por %p27, %p28
    %p30 = scmp.ne.s32.totalorder %s19, %s22
    %p31 = scmp.eq.s32.totalorder %s14, 1
    %p32 = por %p30, %p31
    %p33 = scmp.ne.s32.totalorder %s22, %s23
    %p34 = scmp.eq.s32.totalorder %s14, 0
    %p35 = por %p33, %p34
    %p36 = scmp.ne.s32.totalorder %s22, %s23
    %p37 = scmp.eq.s32.totalorder %s15, 1
    %p38 = por %p36, %p37
    %p40 = scmp.ne.s32.totalorder %s23, %s39
    %p41 = scmp.eq.s32.totalorder %s15, 0
    %p42 = por %p40, %p41
    %s44 = sadd.s32 %s43, 1
    %p47 = scmp.eq.s32.totalorder %s9, 1
    %p48 = scmp.ne.s32.totalorder %s43, %s45
    %p49 = scmp.eq.s32.totalorder %s9, 0
    %p50 = por %p48, %p49
    %p51 = scmp.ne.s32.totalorder %s43, %s45
    %p52 = scmp.eq.s32.totalorder %s14, 1
    %p53 = por %p51, %p52
    %p54 = scmp.ne.s32.totalorder %s45, %s46
    %p55 = scmp.eq.s32.totalorder %s14, 0
    %p56 = por %p54, %p55
    %p57 = scmp.ne.s32.totalorder %s45, %s46
    %p58 = scmp.eq.s32.totalorder %s15, 1
    %p59 = por %p57, %p58
    %p61 = scmp.ne.s32.totalorder %s46, %s60
    %p62 = scmp.eq.s32.totalorder %s15, 0
    %p63 = por %p61, %p62
    %s65 = sadd.s32 %s64, 1
    %p68 = scmp.eq.s32.totalorder %s9, 1
    %p69 = scmp.ne.s32.totalorder %s64, %s66
    %p70 = scmp.eq.s32.totalorder %s9, 0
    %p71 = por %p69, %p70
    %p72 = scmp.ne.s32.totalorder %s64, %s66
    %p73 = scmp.eq.s32.totalorder %s14, 1
    %p74 = por %p72, %p73
    %p75 = scmp.ne.s32.totalorder %s66, %s67
    %p76 = scmp.eq.s32.totalorder %s14, 0
    %p77 = por %p75, %p76
    %p78 = scmp.ne.s32.totalorder %s66, %s67
    %p79 = scmp.eq.s32.totalorder %s15, 1
    %p80 = por %p78, %p79
    %p82 = scmp.ne.s32.totalorder %s67, %s81
    %p83 = scmp.eq.s32.totalorder %s15, 0
    %p84 = por %p82, %p83
    %s85 = ssub.s32 %s9, %s16
    %p86 = scmp.eq.s32.totalorder %s85, 0
    %s88 = sadd.s32 %s87, 1
    %s89 = scalar_select %p86, %s87, %s88
    %p92 = pneg %p86
    %p93 = scmp.eq.s32.totalorder %s9, 1
    %p94 = por %p92, %p93
    %p95 = scmp.ne.s32.totalorder %s87, %s90
    %p96 = scmp.eq.s32.totalorder %s9, 0
    %p97 = por %p95, %p96
    %p98 = scmp.ne.s32.totalorder %s87, %s90
    %p99 = scmp.eq.s32.totalorder %s14, 1
    %p100 = por %p98, %p99
    %p101 = scmp.ne.s32.totalorder %s90, %s91
    %p102 = scmp.eq.s32.totalorder %s14, 0
    %p103 = por %p101, %p102
    %p104 = scmp.ne.s32.totalorder %s90, %s91
    %p105 = scmp.eq.s32.totalorder %s15, 1
    %p106 = por %p104, %p105
    %p108 = scmp.ne.s32.totalorder %s91, %s107
    %p109 = scmp.eq.s32.totalorder %s15, 0
    %p110 = por %p108, %p109
    %p111 = scmp.le.s32.totalorder 1, %s9
    %p112 = scmp.lt.s32.totalorder %s9, 3
    %p113 = pnand %p111, %p112
    %p114 = pneg %p113
    // Predicated region
    $region9: #{double_conv_block.5} parent=5 // pred_check
      _
    $region10: #{double_conv_block.5} parent=5 // pred_check_branch
      %116 = sbr.rel (%p113) target = $region12
    $region11: #{double_conv_block.5} parent=5 // pred_region
      %s117 = ssub.s32 %s9, 1
      // Predicated region
      $region13: #{double_conv_block.5} parent=11 // pred_check
        %p118 = pneg %p56
      $region14: #{double_conv_block.5} parent=11 // pred_check_branch
        %120 = sbr.rel (%p118) target = $region16
      $region15: #{double_conv_block.5} parent=11 // pred_region
        _
      $region16: #{double_conv_block.5} parent=11 // pred_fallthru
        _
      // Predicated region
      $region17: #{double_conv_block.5} parent=11 // pred_check
        %p121 = pneg %p77
      $region18: #{double_conv_block.5} parent=11 // pred_check_branch
        %123 = sbr.rel (%p121) target = $region20
      $region19: #{double_conv_block.5} parent=11 // pred_region
        _
      $region20: #{double_conv_block.5} parent=11 // pred_fallthru
        _
    $region12: #{double_conv_block.5} parent=5 // pred_fallthru
      _
    %p124 = scmp.lt.s32.totalorder %s9, 2
    // Predicated region
    $region21: #{double_conv_block.5} parent=5 // pred_check
      %p125 = pneg %p124
    $region22: #{double_conv_block.5} parent=5 // pred_check_branch
      %127 = sbr.rel (%p125) target = $region24
    $region23: #{double_conv_block.5} parent=5 // pred_region
      // Predicated region
      $region25: #{double_conv_block.5} parent=23 // pred_check
        %p128 = pneg %p29
      $region26: #{double_conv_block.5} parent=23 // pred_check_branch
        %130 = sbr.rel (%p128) target = $region28
      $region27: #{double_conv_block.5} parent=23 // pred_region
        %p131 = scmp.lt.s32.totalorder %s9, 1
        %s132 = scalar_select %p131, %s9, 1
        %s133 = smul.addr %s132, 32
        %s134 = smul.addr %s133, 8
        %s135 = scalar_lea.vmem %s0, %s134
      $region28: #{double_conv_block.5} parent=23 // pred_fallthru
        _
    $region24: #{double_conv_block.5} parent=5 // pred_fallthru
      _
    %p136 = scmp.le.s32.totalorder 1, %s9
    %p137 = scmp.lt.s32.totalorder %s9, 3
    %p138 = pnand %p136, %p137
    %p139 = pneg %p138
    // Predicated region
    $region29: #{double_conv_block.5} parent=5 // pred_check
      _
    $region30: #{double_conv_block.5} parent=5 // pred_check_branch
      %141 = sbr.rel (%p138) target = $region32
    $region31: #{double_conv_block.5} parent=5 // pred_region
      %s142 = ssub.s32 %s9, 1
      %p143 = scmp.lt.s32.totalorder %s14, 1
      %s144 = scalar_select %p143, %s14, 1
      %s145 = smul.addr %s144, 32
      %s146 = smul.addr %s145, 8
      %s147 = scalar_lea.vmem %s0, %s146
      %p148 = pneg %p35
      %p149 = pneg %p32
      %p150 = pneg %p56
      %p151 = pneg %p53
      %p152 = pneg %p77
      %p153 = pneg %p74
      %p154 = pneg %p103
      %p155 = pneg %p100
      %p156 = scmp.lt.s32.totalorder %s14, 1
      %s157 = scalar_select %p156, %s14, 1
      %s158 = smul.addr %s157, 32
      %s159 = smul.addr %s158, 8
      %s160 = scalar_lea.vmem %s3, %s159
      %p161 = scmp.lt.s32.totalorder %s14, 1
      %s162 = scalar_select %p161, %s14, 1
      %s163 = smul.addr %s162, 32
      %s164 = smul.addr %s163, 8
      %s165 = scalar_lea.vmem %s0, %s164
      %p166 = scmp.lt.s32.totalorder %s14, 1
      %s167 = scalar_select %p166, %s14, 1
      %s168 = smul.addr %s167, 32
      %s169 = smul.addr %s168, 8
      %s170 = scalar_lea.vmem %s3, %s169
      %v171 = vld [vmem:[%s165] sm:$0xff]
      %v172 = vld [vmem:[%s165 + $0x8] sm:$0xff]
      %v173 = vld [vmem:[%s165 + $0x10] sm:$0xff]
      %v174 = vld [vmem:[%s165 + $0x18] sm:$0xff]
      %v175 = vld [vmem:[%s165 + $0x20] sm:$0xff]
      %v176 = vld [vmem:[%s165 + $0x28] sm:$0xff]
      %v177 = vld [vmem:[%s165 + $0x30] sm:$0xff]
      %v178 = vld [vmem:[%s165 + $0x38] sm:$0xff]
      %v179 = vld [vmem:[%s165 + $0x40] sm:$0xff]
      %v180 = vld [vmem:[%s165 + $0x48] sm:$0xff]
      %v181 = vld [vmem:[%s165 + $0x50] sm:$0xff]
      %v182 = vld [vmem:[%s165 + $0x58] sm:$0xff]
      %v183 = vld [vmem:[%s165 + $0x60] sm:$0xff]
      %v184 = vld [vmem:[%s165 + $0x68] sm:$0xff]
      %v185 = vld [vmem:[%s165 + $0x70] sm:$0xff]
      %v186 = vld [vmem:[%s165 + $0x78] sm:$0xff]
      %v187 = vld [vmem:[%s165 + $0x80] sm:$0xff]
      %v188 = vld [vmem:[%s165 + $0x88] sm:$0xff]
      %v189 = vld [vmem:[%s165 + $0x90] sm:$0xff]
      %v190 = vld [vmem:[%s165 + $0x98] sm:$0xff]
      %v191 = vld [vmem:[%s165 + $0xa0] sm:$0xff]
      %v192 = vld [vmem:[%s165 + $0xa8] sm:$0xff]
      %v193 = vld [vmem:[%s165 + $0xb0] sm:$0xff]
      %v194 = vld [vmem:[%s165 + $0xb8] sm:$0xff]
      %v195 = vld [vmem:[%s165 + $0xc0] sm:$0xff]
      %v196 = vld [vmem:[%s165 + $0xc8] sm:$0xff]
      %v197 = vld [vmem:[%s165 + $0xd0] sm:$0xff]
      %v198 = vld [vmem:[%s165 + $0xd8] sm:$0xff]
      %v199 = vld [vmem:[%s165 + $0xe0] sm:$0xff]
      %v200 = vld [vmem:[%s165 + $0xe8] sm:$0xff]
      %v201 = vld [vmem:[%s165 + $0xf0] sm:$0xff]
      %v202 = vld [vmem:[%s165 + $0xf8] sm:$0xff]
      %v203 = vld [vmem:[%s1] sm:$0x1]
      %v205 = vlaneseq
      %v206 = vshrl.u32 %v205, 7
      %v207 = vsub.s32 0, %v206
      %v208 = vrot.slane %v203, %v207
      %v210 = vmul.f32 %v171, %v208
      %v211 = vmul.f32 %v172, %v208
      %v212 = vmul.f32 %v173, %v208
      %v213 = vmul.f32 %v174, %v208
      %v214 = vmul.f32 %v175, %v208
      %v215 = vmul.f32 %v176, %v208
      %v216 = vmul.f32 %v177, %v208
      %v217 = vmul.f32 %v178, %v208
      %v218 = vmul.f32 %v179, %v208
      %v219 = vmul.f32 %v180, %v208
      %v220 = vmul.f32 %v181, %v208
      %v221 = vmul.f32 %v182, %v208
      %v222 = vmul.f32 %v183, %v208
      %v223 = vmul.f32 %v184, %v208
      %v224 = vmul.f32 %v185, %v208
      %v225 = vmul.f32 %v186, %v208
      %v226 = vmul.f32 %v187, %v208
      %v227 = vmul.f32 %v188, %v208
      %v228 = vmul.f32 %v189, %v208
      %v229 = vmul.f32 %v190, %v208
      %v230 = vmul.f32 %v191, %v208
      %v231 = vmul.f32 %v192, %v208
      %v232 = vmul.f32 %v193, %v208
      %v233 = vmul.f32 %v194, %v208
      %v234 = vmul.f32 %v195, %v208
      %v235 = vmul.f32 %v196, %v208
      %v236 = vmul.f32 %v197, %v208
      %v237 = vmul.f32 %v198, %v208
      %v238 = vmul.f32 %v199, %v208
      %v239 = vmul.f32 %v200, %v208
      %v240 = vmul.f32 %v201, %v208
      %v241 = vmul.f32 %v202, %v208
      %v242 = vld [vmem:[%s2] sm:$0x1]
      %v244 = vlaneseq
      %v245 = vshrl.u32 %v244, 7
      %v246 = vsub.s32 0, %v245
      %v247 = vrot.slane %v242, %v246
      %v249 = vadd.f32 %v210, %v247
      %v250 = vadd.f32 %v211, %v247
      %v251 = vadd.f32 %v212, %v247
      %v252 = vadd.f32 %v213, %v247
      %v253 = vadd.f32 %v214, %v247
      %v254 = vadd.f32 %v215, %v247
      %v255 = vadd.f32 %v216, %v247
      %v256 = vadd.f32 %v217, %v247
      %v257 = vadd.f32 %v218, %v247
      %v258 = vadd.f32 %v219, %v247
      %v259 = vadd.f32 %v220, %v247
      %v260 = vadd.f32 %v221, %v247
      %v261 = vadd.f32 %v222, %v247
      %v262 = vadd.f32 %v223, %v247
      %v263 = vadd.f32 %v224, %v247
      %v264 = vadd.f32 %v225, %v247
      %v265 = vadd.f32 %v226, %v247
      %v266 = vadd.f32 %v227, %v247
      %v267 = vadd.f32 %v228, %v247
      %v268 = vadd.f32 %v229, %v247
      %v269 = vadd.f32 %v230, %v247
      %v270 = vadd.f32 %v231, %v247
      %v271 = vadd.f32 %v232, %v247
      %v272 = vadd.f32 %v233, %v247
      %v273 = vadd.f32 %v234, %v247
      %v274 = vadd.f32 %v235, %v247
      %v275 = vadd.f32 %v236, %v247
      %v276 = vadd.f32 %v237, %v247
      %v277 = vadd.f32 %v238, %v247
      %v278 = vadd.f32 %v239, %v247
      %v279 = vadd.f32 %v240, %v247
      %v280 = vadd.f32 %v241, %v247
      %v281 = vmax.f32 %v249, 0.0
      %v282 = vmax.f32 %v250, 0.0
      %v283 = vmax.f32 %v251, 0.0
      %v284 = vmax.f32 %v252, 0.0
      %v285 = vmax.f32 %v253, 0.0
      %v286 = vmax.f32 %v254, 0.0
      %v287 = vmax.f32 %v255, 0.0
      %v288 = vmax.f32 %v256, 0.0
      %v289 = vmax.f32 %v257, 0.0
      %v290 = vmax.f32 %v258, 0.0
      %v291 = vmax.f32 %v259, 0.0
      %v292 = vmax.f32 %v260, 0.0
      %v293 = vmax.f32 %v261, 0.0
      %v294 = vmax.f32 %v262, 0.0
      %v295 = vmax.f32 %v263, 0.0
      %v296 = vmax.f32 %v264, 0.0
      %v297 = vmax.f32 %v265, 0.0
      %v298 = vmax.f32 %v266, 0.0
      %v299 = vmax.f32 %v267, 0.0
      %v300 = vmax.f32 %v268, 0.0
      %v301 = vmax.f32 %v269, 0.0
      %v302 = vmax.f32 %v270, 0.0
      %v303 = vmax.f32 %v271, 0.0
      %v304 = vmax.f32 %v272, 0.0
      %v305 = vmax.f32 %v273, 0.0
      %v306 = vmax.f32 %v274, 0.0
      %v307 = vmax.f32 %v275, 0.0
      %v308 = vmax.f32 %v276, 0.0
      %v309 = vmax.f32 %v277, 0.0
      %v310 = vmax.f32 %v278, 0.0
      %v311 = vmax.f32 %v279, 0.0
      %v312 = vmax.f32 %v280, 0.0
      %vm313 = vcmask 64512
      %314 = vst.msk [vmem:[%s170] sm:$0xff] %vm313, %v281
      %315 = vst.msk [vmem:[%s170 + $0x8] sm:$0xff] %vm313, %v282
      %316 = vst.msk [vmem:[%s170 + $0x10] sm:$0xff] %vm313, %v283
      %317 = vst.msk [vmem:[%s170 + $0x18] sm:$0xff] %vm313, %v284
      %318 = vst.msk [vmem:[%s170 + $0x20] sm:$0xff] %vm313, %v285
      %319 = vst.msk [vmem:[%s170 + $0x28] sm:$0xff] %vm313, %v286
      %320 = vst.msk [vmem:[%s170 + $0x30] sm:$0xff] %vm313, %v287
      %321 = vst.msk [vmem:[%s170 + $0x38] sm:$0xff] %vm313, %v288
      %322 = vst.msk [vmem:[%s170 + $0x40] sm:$0xff] %vm313, %v289
      %323 = vst.msk [vmem:[%s170 + $0x48] sm:$0xff] %vm313, %v290
      %324 = vst.msk [vmem:[%s170 + $0x50] sm:$0xff] %vm313, %v291
      %325 = vst.msk [vmem:[%s170 + $0x58] sm:$0xff] %vm313, %v292
      %326 = vst.msk [vmem:[%s170 + $0x60] sm:$0xff] %vm313, %v293
      %327 = vst.msk [vmem:[%s170 + $0x68] sm:$0xff] %vm313, %v294
      %328 = vst.msk [vmem:[%s170 + $0x70] sm:$0xff] %vm313, %v295
      %329 = vst.msk [vmem:[%s170 + $0x78] sm:$0xff] %vm313, %v296
      %330 = vst.msk [vmem:[%s170 + $0x80] sm:$0xff] %vm313, %v297
      %331 = vst.msk [vmem:[%s170 + $0x88] sm:$0xff] %vm313, %v298
      %332 = vst.msk [vmem:[%s170 + $0x90] sm:$0xff] %vm313, %v299
      %333 = vst.msk [vmem:[%s170 + $0x98] sm:$0xff] %vm313, %v300
      %334 = vst.msk [vmem:[%s170 + $0xa0] sm:$0xff] %vm313, %v301
      %335 = vst.msk [vmem:[%s170 + $0xa8] sm:$0xff] %vm313, %v302
      %336 = vst.msk [vmem:[%s170 + $0xb0] sm:$0xff] %vm313, %v303
      %337 = vst.msk [vmem:[%s170 + $0xb8] sm:$0xff] %vm313, %v304
      %338 = vst.msk [vmem:[%s170 + $0xc0] sm:$0xff] %vm313, %v305
      %339 = vst.msk [vmem:[%s170 + $0xc8] sm:$0xff] %vm313, %v306
      %340 = vst.msk [vmem:[%s170 + $0xd0] sm:$0xff] %vm313, %v307
      %341 = vst.msk [vmem:[%s170 + $0xd8] sm:$0xff] %vm313, %v308
      %342 = vst.msk [vmem:[%s170 + $0xe0] sm:$0xff] %vm313, %v309
      %343 = vst.msk [vmem:[%s170 + $0xe8] sm:$0xff] %vm313, %v310
      %344 = vst.msk [vmem:[%s170 + $0xf0] sm:$0xff] %vm313, %v311
      %345 = vst.msk [vmem:[%s170 + $0xf8] sm:$0xff] %vm313, %v312
      %p346 = scmp.lt.s32.totalorder %s14, 1
      %s347 = scalar_select %p346, %s14, 1
      %s348 = smul.addr %s347, 32
      %s349 = smul.addr %s348, 8
      %s350 = scalar_lea.vmem %s3, %s349
      // Predicated region
      $region33: #{double_conv_block.5} parent=31 // pred_check
        %p351 = pneg %p100
      $region34: #{double_conv_block.5} parent=31 // pred_check_branch
        %353 = sbr.rel (%p351) target = $region36
      $region35: #{double_conv_block.5} parent=31 // pred_region
        _
      $region36: #{double_conv_block.5} parent=31 // pred_fallthru
        _
    $region32: #{double_conv_block.5} parent=5 // pred_fallthru
      _
    %p354 = scmp.le.s32.totalorder 2, %s9
    // Predicated region
    $region37: #{double_conv_block.5} parent=5 // pred_check
      %p355 = pneg %p354
    $region38: #{double_conv_block.5} parent=5 // pred_check_branch
      %357 = sbr.rel (%p355) target = $region40
    $region39: #{double_conv_block.5} parent=5 // pred_region
      %s358 = ssub.s32 %s9, 2
      // Predicated region
      $region41: #{double_conv_block.5} parent=39 // pred_check
        %p359 = pneg %p106
      $region42: #{double_conv_block.5} parent=39 // pred_check_branch
        %361 = sbr.rel (%p359) target = $region44
      $region43: #{double_conv_block.5} parent=39 // pred_region
        %p362 = scmp.lt.s32.totalorder %s15, 1
        %s363 = scalar_select %p362, %s15, 1
        %s364 = smul.addr %s363, 32
        %s365 = smul.addr %s364, 8
        %s366 = scalar_lea.vmem %s3, %s365
      $region44: #{double_conv_block.5} parent=39 // pred_fallthru
        _
    $region40: #{double_conv_block.5} parent=5 // pred_fallthru
      _
  $region6: #{double_conv_block.5} parent=0 // loop_footer
    %s13 = sadd.s32 1, %s9
  $region7: #{double_conv_block.5} parent=0 // loop_footer_branch
    %8 = sbr.rel target = $region3
  $region8: #{double_conv_block.5} parent=0 // loop_exit
    _

// kernel: double_conv_block.3
$region0: #{double_conv_block.3}
  #allocation0 [shape = 'u32[]', space=smem, size = 0x4, offset = 0x4, fixed_abs, tag = 'smem constant byte address 0x4 - core index']
  #allocation1 [shape = 'u32[144,128]{1,0:T(1,128)}', space=vmem, size = 0x12000, scoped, tag = 'internal scratch']
  #allocation2 [shape = 'f32[18,25,4]{2,1,0:T(8,128)}', space=vmem, size = 0x48000, scoped, tag = 'scratch operand']
  %s0 = inlined_call_operand.vmem [shape: f32[2,16,16,4], index: 0, kind: input, shape index: {}]
  %s1 = inlined_call_operand.vmem [shape: f32[9,4,8], index: 1, kind: input, shape index: {}]
  %s2 = inlined_call_operand.vmem [shape: f32[2,16,16,8], index: 2, kind: output, shape index: {0}]
  %s3 = inlined_call_operand.vmem [shape: f32[2,2,8], index: 3, kind: output, shape index: {1}]
  %4 = xla_tuple %s2, %s3
  %s5 = sld [smem:[#allocation0]]
  $region49: #{double_conv_block.3} parent=0
    _
  %s7 = ssub.s32 1, %s5
  %s8 = scalar_select 0, %s7, %s5
  loop: start=0, step=1, limit=4
  $region2: #{double_conv_block.3} parent=0 // loop_pre_header
    _
  $region3: #{double_conv_block.3} parent=0 // loop_header
    %s10 = sphi 0, %s14
    %p11 = scmp.ge.s32.totalorder %s10, 4
    %s20 = sphi 0, %s22
    %s23 = sphi 0, %s20
    %s24 = sphi 0, %s23
    %s40 = sphi 0, %s24
    %s44 = sphi 0, %s44
    %s46 = sphi 0, %s44
    %s47 = sphi 0, %s46
    %s61 = sphi 0, %s47
    %s67 = sphi 0, %s69
    %s70 = sphi 0, %s67
    %s71 = sphi 0, %s70
    %s87 = sphi 0, %s71
    %s93 = sphi 0, %s95
    %s96 = sphi 0, %s93
    %s97 = sphi 0, %s96
    %s113 = sphi 0, %s97
  $region4: #{double_conv_block.3} parent=0 // loop_header_branch
    %13 = sbr.rel (%p11) target = $region8
  $region5: #{double_conv_block.3} parent=0 // loop_body
    %s15 = ssub.s32 %s10, 1
    %s16 = ssub.s32 %s10, 2
    %s17 = sadd.s32 %s10, 1
    %s18 = ssub.s32 %s10, %s17
    %p19 = scmp.eq.s32.totalorder %s18, 0
    %s21 = sadd.s32 %s20, 1
    %s22 = scalar_select %p19, %s20, %s21
    %p25 = pneg %p19
    %p26 = scmp.eq.s32.totalorder %s10, 1
    %p27 = por %p25, %p26
    %p28 = scmp.ne.s32.totalorder %s20, %s23
    %p29 = scmp.eq.s32.totalorder %s10, 0
    %p30 = por %p28, %p29
    %p31 = scmp.ne.s32.totalorder %s20, %s23
    %p32 = scmp.eq.s32.totalorder %s15, 1
    %p33 = por %p31, %p32
    %p34 = scmp.ne.s32.totalorder %s23, %s24
    %p35 = scmp.eq.s32.totalorder %s15, 0
    %p36 = por %p34, %p35
    %p37 = scmp.ne.s32.totalorder %s23, %s24
    %p38 = scmp.eq.s32.totalorder %s16, 1
    %p39 = por %p37, %p38
    %p41 = scmp.ne.s32.totalorder %s24, %s40
    %p42 = scmp.eq.s32.totalorder %s16, 0
    %p43 = por %p41, %p42
    %s45 = sadd.s32 %s44, 1
    %p48 = scmp.eq.s32.totalorder %s10, 1
    %p49 = scmp.ne.s32.totalorder %s44, %s46
    %p50 = scmp.eq.s32.totalorder %s10, 0
    %p51 = por %p49, %p50
    %p52 = scmp.ne.s32.totalorder %s44, %s46
    %p53 = scmp.eq.s32.totalorder %s15, 1
    %p54 = por %p52, %p53
    %p55 = scmp.ne.s32.totalorder %s46, %s47
    %p56 = scmp.eq.s32.totalorder %s15, 0
    %p57 = por %p55, %p56
    %p58 = scmp.ne.s32.totalorder %s46, %s47
    %p59 = scmp.eq.s32.totalorder %s16, 1
    %p60 = por %p58, %p59
    %p62 = scmp.ne.s32.totalorder %s47, %s61
    %p63 = scmp.eq.s32.totalorder %s16, 0
    %p64 = por %p62, %p63
    %s65 = ssub.s32 %s10, %s17
    %p66 = scmp.eq.s32.totalorder %s65, 0
    %s68 = sadd.s32 %s67, 1
    %s69 = scalar_select %p66, %s67, %s68
    %p72 = pneg %p66
    %p73 = scmp.eq.s32.totalorder %s10, 1
    %p74 = por %p72, %p73
    %p75 = scmp.ne.s32.totalorder %s67, %s70
    %p76 = scmp.eq.s32.totalorder %s10, 0
    %p77 = por %p75, %p76
    %p78 = scmp.ne.s32.totalorder %s67, %s70
    %p79 = scmp.eq.s32.totalorder %s15, 1
    %p80 = por %p78, %p79
    %p81 = scmp.ne.s32.totalorder %s70, %s71
    %p82 = scmp.eq.s32.totalorder %s15, 0
    %p83 = por %p81, %p82
    %p84 = scmp.ne.s32.totalorder %s70, %s71
    %p85 = scmp.eq.s32.totalorder %s16, 1
    %p86 = por %p84, %p85
    %p88 = scmp.ne.s32.totalorder %s71, %s87
    %p89 = scmp.eq.s32.totalorder %s16, 0
    %p90 = por %p88, %p89
    %s91 = ssub.s32 %s10, %s17
    %p92 = scmp.eq.s32.totalorder %s91, 0
    %s94 = sadd.s32 %s93, 1
    %s95 = scalar_select %p92, %s93, %s94
    %p98 = pneg %p92
    %p99 = scmp.eq.s32.totalorder %s10, 1
    %p100 = por %p98, %p99
    %p101 = scmp.ne.s32.totalorder %s93, %s96
    %p102 = scmp.eq.s32.totalorder %s10, 0
    %p103 = por %p101, %p102
    %p104 = scmp.ne.s32.totalorder %s93, %s96
    %p105 = scmp.eq.s32.totalorder %s15, 1
    %p106 = por %p104, %p105
    %p107 = scmp.ne.s32.totalorder %s96, %s97
    %p108 = scmp.eq.s32.totalorder %s15, 0
    %p109 = por %p107, %p108
    %p110 = scmp.ne.s32.totalorder %s96, %s97
    %p111 = scmp.eq.s32.totalorder %s16, 1
    %p112 = por %p110, %p111
    %p114 = scmp.ne.s32.totalorder %s97, %s113
    %p115 = scmp.eq.s32.totalorder %s16, 0
    %p116 = por %p114, %p115
    %p117 = scmp.le.s32.totalorder 1, %s10
    %p118 = scmp.lt.s32.totalorder %s10, 3
    %p119 = pnand %p117, %p118
    %p120 = pneg %p119
    // Predicated region
    $region9: #{double_conv_block.3} parent=5 // pred_check
      _
    $region10: #{double_conv_block.3} parent=5 // pred_check_branch
      %122 = sbr.rel (%p119) target = $region12
    $region11: #{double_conv_block.3} parent=5 // pred_region
      %s123 = ssub.s32 %s10, 1
      // Predicated region
      $region13: #{double_conv_block.3} parent=11 // pred_check
        %p124 = pneg %p57
      $region14: #{double_conv_block.3} parent=11 // pred_check_branch
        %126 = sbr.rel (%p124) target = $region16
      $region15: #{double_conv_block.3} parent=11 // pred_region
        _
      $region16: #{double_conv_block.3} parent=11 // pred_fallthru
        _
    $region12: #{double_conv_block.3} parent=5 // pred_fallthru
      _
    %p127 = scmp.lt.s32.totalorder %s10, 2
    // Predicated region
    $region17: #{double_conv_block.3} parent=5 // pred_check
      %p128 = pneg %p127
    $region18: #{double_conv_block.3} parent=5 // pred_check_branch
      %130 = sbr.rel (%p128) target = $region20
    $region19: #{double_conv_block.3} parent=5 // pred_region
      // Predicated region
      $region21: #{double_conv_block.3} parent=19 // pred_check
        %p131 = pneg %p30
      $region22: #{double_conv_block.3} parent=19 // pred_check_branch
        %133 = sbr.rel (%p131) target = $region24
      $region23: #{double_conv_block.3} parent=19 // pred_region
        %p134 = scmp.lt.s32.totalorder %s10, 1
        %s135 = scalar_select %p134, %s10, 1
        %s136 = smul.addr %s135, 32
        %s137 = smul.addr %s136, 8
        %s138 = scalar_lea.vmem %s0, %s137
      $region24: #{double_conv_block.3} parent=19 // pred_fallthru
        _
    $region20: #{double_conv_block.3} parent=5 // pred_fallthru
      _
    %p139 = scmp.le.s32.totalorder 1, %s10
    %p140 = scmp.lt.s32.totalorder %s10, 3
    %p141 = pnand %p139, %p140
    %p142 = pneg %p141
    // Predicated region
    $region25: #{double_conv_block.3} parent=5 // pred_check
      _
    $region26: #{double_conv_block.3} parent=5 // pred_check_branch
      %144 = sbr.rel (%p141) target = $region28
    $region27: #{double_conv_block.3} parent=5 // pred_region
      %s145 = ssub.s32 %s10, 1
      %p146 = scmp.lt.s32.totalorder %s15, 1
      %s147 = scalar_select %p146, %s15, 1
      %s148 = smul.addr %s147, 32
      %s149 = smul.addr %s148, 8
      %s150 = scalar_lea.vmem %s0, %s149
      %p151 = pneg %p36
      %p152 = pneg %p33
      %p153 = pneg %p57
      %p154 = pneg %p54
      %p155 = pneg %p83
      %p156 = pneg %p80
      %p157 = scmp.lt.s32.totalorder %s15, 1
      %s158 = scalar_select %p157, %s15, 1
      %s159 = smul.addr %s158, 32
      %s160 = smul.addr %s159, 8
      %s161 = scalar_lea.vmem %s2, %s160
      %p162 = pneg %p109
      %p163 = pneg %p106
      %p164 = scmp.lt.s32.totalorder %s15, 1
      %s165 = scalar_select %p164, %s15, 1
      %s166 = smul.addr %s165, 2
      %s167 = scalar_lea.vmem %s3, %s166
      %p168 = scmp.lt.s32.totalorder %s15, 1
      %s169 = scalar_select %p168, %s15, 1
      %s170 = smul.addr %s169, 32
      %s171 = smul.addr %s170, 8
      %s172 = scalar_lea.vmem %s0, %s171
      %p173 = scmp.lt.s32.totalorder %s15, 1
      %s174 = scalar_select %p173, %s15, 1
      %s175 = smul.addr %s174, 32
      %s176 = smul.addr %s175, 8
      %s177 = scalar_lea.vmem %s2, %s176
      %p178 = scmp.lt.s32.totalorder %s15, 1
      %s179 = scalar_select %p178, %s15, 1
      %s180 = smul.addr %s179, 2
      %s181 = scalar_lea.vmem %s3, %s180
      %v182 = vld [vmem:[%s172] sm:$0xff]
      %v183 = vld [vmem:[%s172 + $0x8] sm:$0xff]
      %v184 = vld [vmem:[%s172 + $0x10] sm:$0xff]
      %v185 = vld [vmem:[%s172 + $0x18] sm:$0xff]
      %v186 = vld [vmem:[%s172 + $0x20] sm:$0xff]
      %v187 = vld [vmem:[%s172 + $0x28] sm:$0xff]
      %v188 = vld [vmem:[%s172 + $0x30] sm:$0xff]
      %v189 = vld [vmem:[%s172 + $0x38] sm:$0xff]
      %v190 = vld [vmem:[%s172 + $0x40] sm:$0xff]
      %v191 = vld [vmem:[%s172 + $0x48] sm:$0xff]
      %v192 = vld [vmem:[%s172 + $0x50] sm:$0xff]
      %v193 = vld [vmem:[%s172 + $0x58] sm:$0xff]
      %v194 = vld [vmem:[%s172 + $0x60] sm:$0xff]
      %v195 = vld [vmem:[%s172 + $0x68] sm:$0xff]
      %v196 = vld [vmem:[%s172 + $0x70] sm:$0xff]
      %v197 = vld [vmem:[%s172 + $0x78] sm:$0xff]
      %v198 = vld [vmem:[%s172 + $0x80] sm:$0xff]
      %v199 = vld [vmem:[%s172 + $0x88] sm:$0xff]
      %v200 = vld [vmem:[%s172 + $0x90] sm:$0xff]
      %v201 = vld [vmem:[%s172 + $0x98] sm:$0xff]
      %v202 = vld [vmem:[%s172 + $0xa0] sm:$0xff]
      %v203 = vld [vmem:[%s172 + $0xa8] sm:$0xff]
      %v204 = vld [vmem:[%s172 + $0xb0] sm:$0xff]
      %v205 = vld [vmem:[%s172 + $0xb8] sm:$0xff]
      %v206 = vld [vmem:[%s172 + $0xc0] sm:$0xff]
      %v207 = vld [vmem:[%s172 + $0xc8] sm:$0xff]
      %v208 = vld [vmem:[%s172 + $0xd0] sm:$0xff]
      %v209 = vld [vmem:[%s172 + $0xd8] sm:$0xff]
      %v210 = vld [vmem:[%s172 + $0xe0] sm:$0xff]
      %v211 = vld [vmem:[%s172 + $0xe8] sm:$0xff]
      %v212 = vld [vmem:[%s172 + $0xf0] sm:$0xff]
      %v213 = vld [vmem:[%s172 + $0xf8] sm:$0xff]
      %vm214 = vcmask 31744
      %215 = vst.msk [vmem:[#allocation2 + $0x7] sm:$0xff] %vm214, 0.0
      %216 = vst.msk [vmem:[#allocation2 + $0xf] sm:$0xff] %vm214, 0.0
      %vm217 = vcmask 25600
      %218 = vst.msk [vmem:[#allocation2 + $0x17] sm:$0x3] %vm217, 0.0
      %s219 = scalar_lea.vmem [#allocation2], 544
      %220 = vst.msk [vmem:[%s219 + $0x7] sm:$0xff] %vm214, 0.0
      %221 = vst.msk [vmem:[%s219 + $0xf] sm:$0xff] %vm214, 0.0
      %222 = vst.msk [vmem:[%s219 + $0x17] sm:$0x3] %vm217, 0.0
      %vm223 = vcmask 24576
      %224 = vst.msk [vmem:[#allocation2 + $0x7] sm:$0x1] %vm223, 0.0
      %225 = vst.msk [vmem:[#allocation2 + $0x27] sm:$0x1] %vm223, 0.0
      %226 = vst.msk [vmem:[#allocation2 + $0x47] sm:$0x1] %vm223, 0.0
      %227 = vst.msk [vmem:[#allocation2 + $0x67] sm:$0x1] %vm223, 0.0
      %228 = vst.msk [vmem:[#allocation2 + $0x87] sm:$0x1] %vm223, 0.0
      %229 = vst.msk [vmem:[#allocation2 + $0xa7] sm:$0x1] %vm223, 0.0
      %230 = vst.msk [vmem:[#allocation2 + $0xc7] sm:$0x1] %vm223, 0.0
      %231 = vst.msk [vmem:[#allocation2 + $0xe7] sm:$0x1] %vm223, 0.0
      %232 = vst.msk [vmem:[#allocation2 + $0x107] sm:$0x1] %vm223, 0.0
      %233 = vst.msk [vmem:[#allocation2 + $0x127] sm:$0x1] %vm223, 0.0
      %234 = vst.msk [vmem:[#allocation2 + $0x147] sm:$0x1] %vm223, 0.0
      %235 = vst.msk [vmem:[#allocation2 + $0x167] sm:$0x1] %vm223, 0.0
      %236 = vst.msk [vmem:[#allocation2 + $0x187] sm:$0x1] %vm223, 0.0
      %237 = vst.msk [vmem:[#allocation2 + $0x1a7] sm:$0x1] %vm223, 0.0
      %238 = vst.msk [vmem:[#allocation2 + $0x1c7] sm:$0x1] %vm223, 0.0
      %239 = vst.msk [vmem:[#allocation2 + $0x1e7] sm:$0x1] %vm223, 0.0
      %240 = vst.msk [vmem:[#allocation2 + $0x207] sm:$0x1] %vm223, 0.0
      %241 = vst.msk [vmem:[#allocation2 + $0x227] sm:$0x1] %vm223, 0.0
      %242 = vst.msk [vmem:[#allocation2 + $0x18] sm:$0x1] %vm223, 0.0
      %243 = vst.msk [vmem:[#allocation2 + $0x38] sm:$0x1] %vm223, 0.0
      %244 = vst.msk [vmem:[#allocation2 + $0x58] sm:$0x1] %vm223, 0.0
      %245 = vst.msk [vmem:[#allocation2 + $0x78] sm:$0x1] %vm223, 0.0
      %246 = vst.msk [vmem:[#allocation2 + $0x98] sm:$0x1] %vm223, 0.0
      %247 = vst.msk [vmem:[#allocation2 + $0xb8] sm:$0x1] %vm223, 0.0
      %248 = vst.msk [vmem:[#allocation2 + $0xd8] sm:$0x1] %vm223, 0.0
      %249 = vst.msk [vmem:[#allocation2 + $0xf8] sm:$0x1] %vm223, 0.0
      %250 = vst.msk [vmem:[#allocation2 + $0x118] sm:$0x1] %vm223, 0.0
      %251 = vst.msk [vmem:[#allocation2 + $0x138] sm:$0x1] %vm223, 0.0
      %252 = vst.msk [vmem:[#allocation2 + $0x158] sm:$0x1] %vm223, 0.0
      %253 = vst.msk [vmem:[#allocation2 + $0x178] sm:$0x1] %vm223, 0.0
      %254 = vst.msk [vmem:[#allocation2 + $0x198] sm:$0x1] %vm223, 0.0
      %255 = vst.msk [vmem:[#allocation2 + $0x1b8] sm:$0x1] %vm223, 0.0
      %256 = vst.msk [vmem:[#allocation2 + $0x1d8] sm:$0x1] %vm223, 0.0
      %257 = vst.msk [vmem:[#allocation2 + $0x1f8] sm:$0x1] %vm223, 0.0
      %258 = vst.msk [vmem:[#allocation2 + $0x218] sm:$0x1] %vm223, 0.0
      %259 = vst.msk [vmem:[#allocation2 + $0x238] sm:$0x1] %vm223, 0.0
      %s260 = scalar_lea.vmem [#allocation2], 32
      %261 = vst.msk [vmem:[%s260 + $0x8] sm:$0xff] %vm214, %v182
      %262 = vst.msk [vmem:[%s260 + $0x10] sm:$0xff] %vm214, %v183
      %263 = vst.msk [vmem:[%s260 + $0x28] sm:$0xff] %vm214, %v184
      %264 = vst.msk [vmem:[%s260 + $0x30] sm:$0xff] %vm214, %v185
      %265 = vst.msk [vmem:[%s260 + $0x48] sm:$0xff] %vm214, %v186
      %266 = vst.msk [vmem:[%s260 + $0x50] sm:$0xff] %vm214, %v187
      %267 = vst.msk [vmem:[%s260 + $0x68] sm:$0xff] %vm214, %v188
      %268 = vst.msk [vmem:[%s260 + $0x70] sm:$0xff] %vm214, %v189
      %269 = vst.msk [vmem:[%s260 + $0x88] sm:$0xff] %vm214, %v190
      %270 = vst.msk [vmem:[%s260 + $0x90] sm:$0xff] %vm214, %v191
      %271 = vst.msk [vmem:[%s260 + $0xa8] sm:$0xff] %vm214, %v192
      %272 = vst.msk [vmem:[%s260 + $0xb0] sm:$0xff] %vm214, %v193
      %273 = vst.msk [vmem:[%s260 + $0xc8] sm:$0xff] %vm214, %v194
      %274 = vst.msk [vmem:[%s260 + $0xd0] sm:$0xff] %vm214, %v195
      %275 = vst.msk [vmem:[%s260 + $0xe8] sm:$0xff] %vm214, %v196
      %276 = vst.msk [vmem:[%s260 + $0xf0] sm:$0xff] %vm214, %v197
      %277 = vst.msk [vmem:[%s260 + $0x108] sm:$0xff] %vm214, %v198
      %278 = vst.msk [vmem:[%s260 + $0x110] sm:$0xff] %vm214, %v199
      %279 = vst.msk [vmem:[%s260 + $0x128] sm:$0xff] %vm214, %v200
      %280 = vst.msk [vmem:[%s260 + $0x130] sm:$0xff] %vm214, %v201
      %281 = vst.msk [vmem:[%s260 + $0x148] sm:$0xff] %vm214, %v202
      %282 = vst.msk [vmem:[%s260 + $0x150] sm:$0xff] %vm214, %v203
      %283 = vst.msk [vmem:[%s260 + $0x168] sm:$0xff] %vm214, %v204
      %284 = vst.msk [vmem:[%s260 + $0x170] sm:$0xff] %vm214, %v205
      %285 = vst.msk [vmem:[%s260 + $0x188] sm:$0xff] %vm214, %v206
      %286 = vst.msk [vmem:[%s260 + $0x190] sm:$0xff] %vm214, %v207
      %287 = vst.msk [vmem:[%s260 + $0x1a8] sm:$0xff] %vm214, %v208
      %288 = vst.msk [vmem:[%s260 + $0x1b0] sm:$0xff] %vm214, %v209
      %289 = vst.msk [vmem:[%s260 + $0x1c8] sm:$0xff] %vm214, %v210
      %290 = vst.msk [vmem:[%s260 + $0x1d0] sm:$0xff] %vm214, %v211
      %291 = vst.msk [vmem:[%s260 + $0x1e8] sm:$0xff] %vm214, %v212
      %292 = vst.msk [vmem:[%s260 + $0x1f0] sm:$0xff] %vm214, %v213
      %v293 = vld [vmem:[#allocation2 + $0x7] sm:$0xff]
      %v294 = vld [vmem:[#allocation2 + $0xf] sm:$0xff]
      %v295 = vld [vmem:[#allocation2 + $0x27] sm:$0xff]
      %v296 = vld [vmem:[#allocation2 + $0x2f] sm:$0xff]
      %v297 = vld [vmem:[#allocation2 + $0x47] sm:$0xff]
      %v298 = vld [vmem:[#allocation2 + $0x4f] sm:$0xff]
      %v299 = vld [vmem:[#allocation2 + $0x67] sm:$0xff]
      %v300 = vld [vmem:[#allocation2 + $0x6f] sm:$0xff]
      %v301 = vld [vmem:[#allocation2 + $0x87] sm:$0xff]
      %v302 = vld [vmem:[#allocation2 + $0x8f] sm:$0xff]
      %v303 = vld [vmem:[#allocation2 + $0xa7] sm:$0xff]
      %v304 = vld [vmem:[#allocation2 + $0xaf] sm:$0xff]
      %v305 = vld [vmem:[#allocation2 + $0xc7] sm:$0xff]
      %v306 = vld [vmem:[#allocation2 + $0xcf] sm:$0xff]
      %v307 = vld [vmem:[#allocation2 + $0xe7] sm:$0xff]
      %v308 = vld [vmem:[#allocation2 + $0xef] sm:$0xff]
      %v309 = vld [vmem:[#allocation2 + $0x107] sm:$0xff]
      %v310 = vld [vmem:[#allocation2 + $0x10f] sm:$0xff]
      %v311 = vld [vmem:[#allocation2 + $0x127] sm:$0xff]
      %v312 = vld [vmem:[#allocation2 + $0x12f] sm:$0xff]
      %v313 = vld [vmem:[#allocation2 + $0x147] sm:$0xff]
      %v314 = vld [vmem:[#allocation2 + $0x14f] sm:$0xff]
      %v315 = vld [vmem:[#allocation2 + $0x167] sm:$0xff]
      %v316 = vld [vmem:[#allocation2 + $0x16f] sm:$0xff]
      %v317 = vld [vmem:[#allocation2 + $0x187] sm:$0xff]
      %v318 = vld [vmem:[#allocation2 + $0x18f] sm:$0xff]
      %v319 = vld [vmem:[#allocation2 + $0x1a7] sm:$0xff]
      %v320 = vld [vmem:[#allocation2 + $0x1af] sm:$0xff]
      %v321 = vld [vmem:[#allocation2 + $0x1c7] sm:$0xff]
      %v322 = vld [vmem:[#allocation2 + $0x1cf] sm:$0xff]
      %v323 = vld [vmem:[#allocation2 + $0x1e7] sm:$0xff]
      %v324 = vld [vmem:[#allocation2 + $0x1ef] sm:$0xff]
      %v325 = vld [vmem:[%s1] sm:$0xf]
      %v326 = vld [vmem:[#allocation2 + $0x8] sm:$0xff]
      %v327 = vld [vmem:[#allocation2 + $0x10] sm:$0xff]
      %v328 = vld [vmem:[#allocation2 + $0x28] sm:$0xff]
      %v329 = vld [vmem:[#allocation2 + $0x30] sm:$0xff]
      %v330 = vld [vmem:[#allocation2 + $0x48] sm:$0xff]
      %v331 = vld [vmem:[#allocation2 + $0x50] sm:$0xff]
      %v332 = vld [vmem:[#allocation2 + $0x68] sm:$0xff]
      %v333 = vld [vmem:[#allocation2 + $0x70] sm:$0xff]
      %v334 = vld [vmem:[#allocation2 + $0x88] sm:$0xff]
      %v335 = vld [vmem:[#allocation2 + $0x90] sm:$0xff]
      %v336 = vld [vmem:[#allocation2 + $0xa8] sm:$0xff]
      %v337 = vld [vmem:[#allocation2 + $0xb0] sm:$0xff]
      %v338 = vld [vmem:[#allocation2 + $0xc8] sm:$0xff]
      %v339 = vld [vmem:[#allocation2 + $0xd0] sm:$0xff]
      %v340 = vld [vmem:[#allocation2 + $0xe8] sm:$0xff]
      %v341 = vld [vmem:[#allocation2 + $0xf0] sm:$0xff]
      %v342 = vld [vmem:[#allocation2 + $0x108] sm:$0xff]
      %v343 = vld [vmem:[#allocation2 + $0x110] sm:$0xff]
      %v344 = vld [vmem:[#allocation2 + $0x128] sm:$0xff]
      %v345 = vld [vmem:[#allocation2 + $0x130] sm:$0xff]
      %v346 = vld [vmem:[#allocation2 + $0x148] sm:$0xff]
      %v347 = vld [vmem:[#allocation2 + $0x150] sm:$0xff]
      %v348 = vld [vmem:[#allocation2 + $0x168] sm:$0xff]
      %v349 = vld [vmem:[#allocation2 + $0x170] sm:$0xff]
      %v350 = vld [vmem:[#allocation2 + $0x188] sm:$0xff]
      %v351 = vld [vmem:[#allocation2 + $0x190] sm:$0xff]
      %v352 = vld [vmem:[#allocation2 + $0x1a8] sm:$0xff]
      %v353 = vld [vmem:[#allocation2 + $0x1b0] sm:$0xff]
      %v354 = vld [vmem:[#allocation2 + $0x1c8] sm:$0xff]
      %v355 = vld [vmem:[#allocation2 + $0x1d0] sm:$0xff]
      %v356 = vld [vmem:[#allocation2 + $0x1e8] sm:$0xff]
      %v357 = vld [vmem:[#allocation2 + $0x1f0] sm:$0xff]
      %s358 = scalar_lea.vmem %s1, 4
      %v359 = vld [vmem:[%s358] sm:$0xf]
      %v361 = vsel %vm214, %v326, 0
      %v364 = vsel %vm214, %v327, 0
      %v367 = vsel %vm214, %v328, 0
      %v370 = vsel %vm214, %v329, 0
      %v373 = vsel %vm214, %v330, 0
      %v376 = vsel %vm214, %v331, 0
      %v379 = vsel %vm214, %v332, 0
      %v382 = vsel %vm214, %v333, 0
      %v385 = vsel %vm214, %v334, 0
      %v388 = vsel %vm214, %v335, 0
      %v391 = vsel %vm214, %v336, 0
      %v394 = vsel %vm214, %v337, 0
      %v397 = vsel %vm214, %v338, 0
      %v400 = vsel %vm214, %v339, 0
      %v403 = vsel %vm214, %v340, 0
      %v406 = vsel %vm214, %v341, 0
      %v409 = vsel %vm214, %v342, 0
      %v412 = vsel %vm214, %v343, 0
      %v415 = vsel %vm214, %v344, 0
      %v418 = vsel %vm214, %v345, 0
      %v421 = vsel %vm214, %v346, 0
      %v424 = vsel %vm214, %v347, 0
      %v427 = vsel %vm214, %v348, 0
      %v430 = vsel %vm214, %v349, 0
      %v433 = vsel %vm214, %v350, 0
      %v436 = vsel %vm214, %v351, 0
      %v439 = vsel %vm214, %v352, 0
      %v442 = vsel %vm214, %v353, 0
      %v445 = vsel %vm214, %v354, 0
      %v448 = vsel %vm214, %v355, 0
      %v451 = vsel %vm214, %v356, 0
      %v454 = vsel %vm214, %v357, 0
      %vm456 = vcmask 1043456
      %v458 = vsel %vm456, %v359, 0
      %460 = vmatprep.subr.mxu0 0.0
      %461 = vmatpush1.msra.mxu0 %v458
      %462 = vmatprep.subr.mxu0 0.0
      %463 = vmatpush1.msra.mxu0 0.0
      %464 = vmatprep.subr.mxu0 0.0
      %465 = vmatpush1.msra.mxu0 0.0
      %466 = vmatprep.subr.mxu0 0.0
      %467 = vmatpush1.msra.mxu0 0.0
      %468 = vmatprep.subr.mxu0 0.0
      %469 = vmatpush1.msra.mxu0 0.0
      %470 = vmatprep.subr.mxu0 0.0
      %471 = vmatpush1.msra.mxu0 0.0
      %472 = vmatprep.subr.mxu0 0.0
      %473 = vmatpush1.msra.mxu0 0.0
      %474 = vmatprep.subr.mxu0 0.0
      %475 = vmatpush1.msra.mxu0 0.0
      %476 = vmatprep.subr.mxu0 0.0
      %477 = vmatpush1.msra.mxu0 0.0
      %478 = vmatprep.subr.mxu0 0.0
      %479 = vmatpush1.msra.mxu0 0.0
      %480 = vmatprep.subr.mxu0 0.0
      %481 = vmatpush1.msra.mxu0 0.0
      %482 = vmatprep.subr.mxu0 0.0
      %483 = vmatpush1.msra.mxu0 0.0
      %484 = vmatprep.subr.mxu0 0.0
      %485 = vmatpush1.msra.mxu0 0.0
      %486 = vmatprep.subr.mxu0 0.0
      %487 = vmatpush1.msra.mxu0 0.0
      %488 = vmatprep.subr.mxu0 0.0
      %489 = vmatpush1.msra.mxu0 0.0
      %490 = vmatprep.subr.mxu0 0.0
      %491 = vmatpush1.msra.mxu0 0.0
      %492 = vmatprep.subr.mxu0 0.0
      %493 = vmatpush1.msra.mxu0 0.0
      %494 = vmatprep.subr.mxu0 0.0
      %495 = vmatpush1.msra.mxu0 0.0
      %496 = vmatprep.subr.mxu0 0.0
      %497 = vmatpush1.msra.mxu0 0.0
      %498 = vmatprep.subr.mxu0 0.0
      %499 = vmatpush1.msra.mxu0 0.0
      %500 = vmatprep.subr.mxu0 0.0
      %501 = vmatpush1.msra.mxu0 0.0
      %502 = vmatprep.subr.mxu0 0.0
      %503 = vmatpush1.msra.mxu0 0.0
      %504 = vmatprep.subr.mxu0 0.0
      %505 = vmatpush1.msra.mxu0 0.0
      %506 = vmatprep.subr.mxu0 0.0
      %507 = vmatpush1.msra.mxu0 0.0
      %508 = vmatprep.subr.mxu0 0.0
      %509 = vmatpush1.msra.mxu0 0.0
      %510 = vmatprep.subr.mxu0 0.0
      %511 = vmatpush1.msra.mxu0 0.0
      %512 = vmatprep.subr.mxu0 0.0
      %513 = vmatpush1.msra.mxu0 0.0
      %514 = vmatprep.subr.mxu0 0.0
      %515 = vmatpush1.msra.mxu0 0.0
      %516 = vmatprep.subr.mxu0 0.0
      %517 = vmatpush1.msra.mxu0 0.0
      %518 = vmatprep.subr.mxu0 0.0
      %519 = vmatpush1.msra.mxu0 0.0
      %520 = vmatprep.subr.mxu0 0.0
      %521 = vmatpush1.msra.mxu0 0.0
      %522 = vmatprep.subr.mxu0 0.0
      %523 = vmatpush1.msra.mxu0 0.0
      %524 = vmatprep.mubr.f32.mxu0 0.0
      %525 = vmatmul.mubr.f32.gmra.mrb[0].mxu0 %v361
      %v526 = vpop.f32.mrb[0].mxu0
      %v527 = vadd.f32 0.0, %v526
      %v528 = vpop.f32.mrb[0].mxu0
      %529 = vmatprep.mubr.f32.mxu0 0.0
      %530 = vmatmul.mubr.f32.gmra.mrb[0].mxu0 %v364
      %v531 = vpop.f32.mrb[0].mxu0
      %v532 = vadd.f32 0.0, %v531
      %v533 = vpop.f32.mrb[0].mxu0
      %534 = vmatprep.mubr.f32.mxu0 0.0
      %535 = vmatmul.mubr.f32.gmra.mrb[0].mxu0 %v367
      %v536 = vpop.f32.mrb[0].mxu0
      %v537 = vadd.f32 0.0, %v536
      %v538 = vpop.f32.mrb[0].mxu0
      %539 = vmatprep.mubr.f32.mxu0 0.0
      %540 = vmatmul.mubr.f32.gmra.mrb[0].mxu0 %v370
      %v541 = vpop.f32.mrb[0].mxu0
      %v542 = vadd.f32 0.0, %v541
      %v543 = vpop.f32.mrb[0].mxu0
      %544 = vmatprep.mubr.f32.mxu0 0.0
      %545 = vmatmul.mubr.f32.gmra.mrb[0].mxu0 %v373
      %v546 = vpop.f32.mrb[0].mxu0
      %v547 = vadd.f32 0.0, %v546
      %v548 = vpop.f32.mrb[0].mxu0
      %549 = vmatprep.mubr.f32.mxu0 0.0
      %550 = vmatmul.mubr.f32.gmra.mrb[0].mxu0 %v376
      %v551 = vpop.f32.mrb[0].mxu0
      %v552 = vadd.f32 0.0, %v551
      %v553 = vpop.f32.mrb[0].mxu0
      %554 = vmatprep.mubr.f32.mxu0 0.0
      %555 = vmatmul.mubr.f32.gmra.mrb[0].mxu0 %v379
      %v556 = vpop.f32.mrb[0].mxu0
      %v557 = vadd.f32 0.0, %v556
      %v558 = vpop.f32.mrb[0].mxu0
      %559 = vmatprep.mubr.f32.mxu0 0.0
      %560 = vmatmul.mubr.f32.gmra.mrb[0].mxu0 %v382
      %v561 = vpop.f32.mrb[0].mxu0
      %v562 = vadd.f32 0.0, %v561
      %v563 = vpop.f32.mrb[0].mxu0
      %564 = vmatprep.mubr.f32.mxu0 0.0
      %565 = vmatmul.mubr.f32.gmra.mrb[0].mxu0 %v385
      %v566 = vpop.f32.mrb[0].mxu0
      %v567 = vadd.f32 0.0, %v566
      %v568 = vpop.f32.mrb[0].mxu0
      %569 = vmatprep.mubr.f32.mxu0 0.0
      %570 = vmatmul.mubr.f32.gmra.mrb[0].mxu0 %v388
      %v571 = vpop.f32.mrb[0].mxu0
      %v572 = vadd.f32 0.0, %v571
      %v573 = vpop.f32.mrb[0].mxu0
      %574 = vmatprep.mubr.f32.mxu0 0.0
      %575 = vmatmul.mubr.f32.gmra.mrb[0].mxu0 %v391
      %v576 = vpop.f32.mrb[0].mxu0
      %v577 = vadd.f32 0.0, %v576
      %v578 = vpop.f32.mrb[0].mxu0
      %579 = vmatprep.mubr.f32.mxu0 0.0
      %580 = vmatmul.mubr.f32.gmra.mrb[0].mxu0 %v394
      %v581 = vpop.f32.mrb[0].mxu0
      %v582 = vadd.f32 0.0, %v581
      %v583 = vpop.f32.mrb[0].mxu0
      %584 = vmatprep.mubr.f32.mxu0 0.0
      %585 = vmatmul.mubr.f32.gmra.mrb[0].mxu0 %v397
      %v586 = vpop.f32.mrb[0].mxu0
      %v587 = vadd.f32 0.0, %v586
      %v588 = vpop.f32.mrb[0].mxu0
      %589 = vmatprep.mubr.f32.mxu0 0.0
      %590 = vmatmul.mubr.f32.gmra.mrb[0].mxu0 %v400
      %v591 = vpop.f32.mrb[0].mxu0
      %v592 = vadd.f32 0.0, %v591
      %v593 = vpop.f32.mrb[0].mxu0
      %594 = vmatprep.mubr.f32.mxu0 0.0
      %595 = vmatmul.mubr.f32.gmra.mrb[0].mxu0 %v403
      %v596 = vpop.f32.mrb[0].mxu0
      %v597 = vadd.f32 0.0, %v596
      %v598 = vpop.f32.mrb[0].mxu0
      %599 = vmatprep.mubr.f32.mxu0 0.0
      %600 = vmatmul.mubr.f32.gmra.mrb[0].mxu0 %v406
      %v601 = vpop.f32.mrb[0].mxu0
      %v602 = vadd.f32 0.0, %v601
      %v603 = vpop.f32.mrb[0].mxu0
      %604 = vmatprep.mubr.f32.mxu0 0.0
      %605 = vmatmul.mubr.f32.gmra.mrb[0].mxu0 %v409
      %v606 = vpop.f32.mrb[0].mxu0
      %v607 = vadd.f32 0.0, %v606
      %v608 = vpop.f32.mrb[0].mxu0
      %609 = vmatprep.mubr.f32.mxu0 0.0
      %610 = vmatmul.mubr.f32.gmra.mrb[0].mxu0 %v412
      %v611 = vpop.f32.mrb[0].mxu0
      %v612 = vadd.f32 0.0, %v611
      %v613 = vpop.f32.mrb[0].mxu0
      %614 = vmatprep.mubr.f32.mxu0 0.0
      %615 = vmatmul.mubr.f32.gmra.mrb[0].mxu0 %v415
      %v616 = vpop.f32.mrb[0].mxu0
      %v617 = vadd.f32 0.0, %v616
      %v618 = vpop.f32.mrb[0].mxu0
      %619 = vmatprep.mubr.f32.mxu0 0.0
      %620 = vmatmul.mubr.f32.gmra.mrb[0].mxu0 %v418
      %v621 = vpop.f32.mrb[0].mxu0
      %v622 = vadd.f32 0.0, %v621
      %v623 = vpop.f32.mrb[0].mxu0
      %624 = vmatprep.mubr.f32.mxu0 0.0
      %625 = vmatmul.mubr.f32.gmra.mrb[0].mxu0 %v421
      %v626 = vpop.f32.mrb[0].mxu0
      %v627 = vadd.f32 0.0, %v626
      %v628 = vpop.f32.mrb[0].mxu0
      %629 = vmatprep.mubr.f32.mxu0 0.0
      %630 = vmatmul.mubr.f32.gmra.mrb[0].mxu0 %v424
      %v631 = vpop.f32.mrb[0].mxu0
      %v632 = vadd.f32 0.0, %v631
      %v633 = vpop.f32.mrb[0].mxu0
      %634 = vmatprep.mubr.f32.mxu0 0.0
      %635 = vmatmul.mubr.f32.gmra.mrb[0].mxu0 %v427
      %v636 = vpop.f32.mrb[0].mxu0
      %v637 = vadd.f32 0.0, %v636
      %v638 = vpop.f32.mrb[0].mxu0
      %639 = vmatprep.mubr.f32.mxu0 0.0
      %640 = vmatmul.mubr.f32.gmra.mrb[0].mxu0 %v430
      %v641 = vpop.f32.mrb[0].mxu0
      %v642 = vadd.f32 0.0, %v641
      %v643 = vpop.f32.mrb[0].mxu0
      %644 = vmatprep.mubr.f32.mxu0 0.0
      %645 = vmatmul.mubr.f32.gmra.mrb[0].mxu0 %v433
      %v646 = vpop.f32.mrb[0].mxu0
      %v647 = vadd.f32 0.0, %v646
      %v648 = vpop.f32.mrb[0].mxu0
      %649 = vmatprep.mubr.f32.mxu0 0.0
      %650 = vmatmul.mubr.f32.gmra.mrb[0].mxu0 %v436
      %v651 = vpop.f32.mrb[0].mxu0
      %v652 = vadd.f32 0.0, %v651
      %v653 = vpop.f32.mrb[0].mxu0
      %654 = vmatprep.mubr.f32.mxu0 0.0
      %655 = vmatmul.mubr.f32.gmra.mrb[0].mxu0 %v439
      %v656 = vpop.f32.mrb[0].mxu0
      %v657 = vadd.f32 0.0, %v656
      %v658 = vpop.f32.mrb[0].mxu0
      %659 = vmatprep.mubr.f32.mxu0 0.0
      %660 = vmatmul.mubr.f32.gmra.mrb[0].mxu0 %v442
      %v661 = vpop.f32.mrb[0].mxu0
      %v662 = vadd.f32 0.0, %v661
      %v663 = vpop.f32.mrb[0].mxu0
      %664 = vmatprep.mubr.f32.mxu0 0.0
      %665 = vmatmul.mubr.f32.gmra.mrb[0].mxu0 %v445
      %v666 = vpop.f32.mrb[0].mxu0
      %v667 = vadd.f32 0.0, %v666
      %v668 = vpop.f32.mrb[0].mxu0
      %669 = vmatprep.mubr.f32.mxu0 0.0
      %670 = vmatmul.mubr.f32.gmra.mrb[0].mxu0 %v448
      %v671 = vpop.f32.mrb[0].mxu0
      %v672 = vadd.f32 0.0, %v671
      %v673 = vpop.f32.mrb[0].mxu0
      %674 = vmatprep.mubr.f32.mxu0 0.0
      %675 = vmatmul.mubr.f32.gmra.mrb[0].mxu0 %v451
      %v676 = vpop.f32.mrb[0].mxu0
      %v677 = vadd.f32 0.0, %v676
      %v678 = vpop.f32.mrb[0].mxu0
      %679 = vmatprep.mubr.f32.mxu0 0.0
      %680 = vmatmul.mubr.f32.gmra.mrb[0].mxu0 %v454
      %v681 = vpop.f32.mrb[0].mxu0
      %v682 = vadd.f32 0.0, %v681
      %v683 = vpop.f32.mrb[0].mxu0
      %684 = vdwg.mxu0
      %v686 = vsel %vm214, %v293, 0
      %v689 = vsel %vm214, %v294, 0
      %v692 = vsel %vm214, %v295, 0
      %v695 = vsel %vm214, %v296, 0
      %v698 = vsel %vm214, %v297, 0
      %v701 = vsel %vm214, %v298, 0
      %v704 = vsel %vm214, %v299, 0
      %v707 = vsel %vm214, %v300, 0
      %v710 = vsel %vm214, %v301, 0
      %v713 = vsel %vm214, %v302, 0
      %v716 = vsel %vm214, %v303, 0
      %v719 = vsel %vm214, %v304, 0
      %v722 = vsel %vm214, %v305, 0
      %v725 = vsel %vm214, %v306, 0
      %v728 = vsel %vm214, %v307, 0
      %v731 = vsel %vm214, %v308, 0
      %v734 = vsel %vm214, %v309, 0
      %v737 = vsel %vm214, %v310, 0
      %v740 = vsel %vm214, %v311, 0
      %v743 = vsel %vm214, %v312, 0
      %v746 = vsel %vm214, %v313, 0
      %v749 = vsel %vm214, %v314, 0
      %v752 = vsel %vm214, %v315, 0
      %v755 = vsel %vm214, %v316, 0
      %v758 = vsel %vm214, %v317, 0
      %v761 = vsel %vm214, %v318, 0
      %v764 = vsel %vm214, %v319, 0
      %v767 = vsel %vm214, %v320, 0
      %v770 = vsel %vm214, %v321, 0
      %v773 = vsel %vm214, %v322, 0
      %v776 = vsel %vm214, %v323, 0
      %v779 = vsel %vm214, %v324, 0
      %v782 = vsel %vm456, %v325, 0
      %784 = vmatprep.subr.mxu0 0.0
      %785 = vmatpush1.msra.mxu0 %v782
      %786 = vmatprep.subr.mxu0 0.0
      %787 = vmatpush1.msra.mxu0 0.0
      %788 = vmatprep.subr.mxu0 0.0
      %789 = vmatpush1.msra.mxu0 0.0
      %790 = vmatprep.subr.mxu0 0.0
      %791 = vmatpush1.msra.mxu0 0.0
      %792 = vmatprep.subr.mxu0 0.0
      %793 = vmatpush1.msra.mxu0 0.0
      %794 = vmatprep.subr.mxu0 0.0
      %795 = vmatpush1.msra.mxu0 0.0
      %796 = vmatprep.subr.mxu0 0.0
      %797 = vmatpush1.msra.mxu0 0.0
      %798 = vmatprep.subr.mxu0 0.0
      %799 = vmatpush1.msra.mxu0 0.0
      %800 = vmatprep.subr.mxu0 0.0
      %801 = vmatpush1.msra.mxu0 0.0
      %802 = vmatprep.subr.mxu0 0.0
      %803 = vmatpush1.msra.mxu0 0.0
      %804 = vmatprep.subr.mxu0 0.0
      %805 = vmatpush1.msra.mxu0 0.0
      %806 = vmatprep.subr.mxu0 0.0
      %807 = vmatpush1.msra.mxu0 0.0
      %808 = vmatprep.subr.mxu0 0.0
      %809 = vmatpush1.msra.mxu0 0.0
      %810 = vmatprep.subr.mxu0 0.0
      %811 = vmatpush1.msra.mxu0 0.0
      %812 = vmatprep.subr.mxu0 0.0
      %813 = vmatpush1.msra.mxu0 0.0
      %814 = vmatprep.subr.mxu0 0.0
      %815 = vmatpush1.msra.mxu0 0.0
      %816 = vmatprep.subr.mxu0 0.0
      %817 = vmatpush1.msra.mxu0 0.0
      %818 = vmatprep.subr.mxu0 0.0
      %819 = vmatpush1.msra.mxu0 0.0
      %820 = vmatprep.subr.mxu0 0.0
      %821 = vmatpush1.msra.mxu0 0.0
      %822 = vmatprep.subr.mxu0 0.0
      %823 = vmatpush1.msra.mxu0 0.0
      %824 = vmatprep.subr.mxu0 0.0
      %825 = vmatpush1.msra.mxu0 0.0
      %826 = vmatprep.subr.mxu0 0.0
      %827 = vmatpush1.msra.mxu0 0.0
      %828 = vmatprep.subr.mxu0 0.0
      %829 = vmatpush1.msra.mxu0 0.0
      %830 = vmatprep.subr.mxu0 0.0
      %831 = vmatpush1.msra.mxu0 0.0
      %832 = vmatprep.subr.mxu0 0.0
      %833 = vmatpush1.msra.mxu0 0.0
      %834 = vmatprep.subr.mxu0 0.0
      %835 = vmatpush1.msra.mxu0 0.0
      %836 = vmatprep.subr.mxu0 0.0
      %837 = vmatpush1.msra.mxu0 0.0
      %838 = vmatprep.subr.mxu0 0.0
      %839 = vmatpush1.msra.mxu0 0.0
      %840 = vmatprep.subr.mxu0 0.0
      %841 = vmatpush1.msra.mxu0 0.0
      %842 = vmatprep.subr.mxu0 0.0
      %843 = vmatpush1.msra.mxu0 0.0
      %844 = vmatprep.subr.mxu0 0.0
      %845 = vmatpush1.msra.mxu0 0.0
      %846 = vmatprep.subr.mxu0 0.0
      %847 = vmatpush1.msra.mxu0 0.0
      %848 = vmatprep.mubr.f32.mxu0 0.0
      %849 = vmatmul.mubr.f32.gmra.mrb[0].mxu0 %v686
      %v850 = vpop.f32.mrb[0].mxu0
      %v851 = vadd.f32 %v527, %v850
      %v852 = vpop.f32.mrb[0].mxu0
      %853 = vmatprep.mubr.f32.mxu0 0.0
      %854 = vmatmul.mubr.f32.gmra.mrb[0].mxu0 %v689
      %v855 = vpop.f32.mrb[0].mxu0
      %v856 = vadd.f32 %v532, %v855
      %v857 = vpop.f32.mrb[0].mxu0
      %858 = vmatprep.mubr.f32.mxu0 0.0
      %859 = vmatmul.mubr.f32.gmra.mrb[0].mxu0 %v692
      %v860 = vpop.f32.mrb[0].mxu0
      %v861 = vadd.f32 %v537, %v860
      %v862 = vpop.f32.mrb[0].mxu0
      %863 = vmatprep.mubr.f32.mxu0 0.0
      %864 = vmatmul.mubr.f32.gmra.mrb[0].mxu0 %v695
      %v865 = vpop.f32.mrb[0].mxu0
      %v866 = vadd.f32 %v542, %v865
      %v867 = vpop.f32.mrb[0].mxu0
      %868 = vmatprep.mubr.f32.mxu0 0.0
      %869 = vmatmul.mubr.f32.gmra.mrb[0].mxu0 %v698
      %v870 = vpop.f32.mrb[0].mxu0
      %v871 = vadd.f32 %v547, %v870
      %v872 = vpop.f32.mrb[0].mxu0
      %873 = vmatprep.mubr.f32.mxu0 0.0
      %874 = vmatmul.mubr.f32.gmra.mrb[0].mxu0 %v701
      %v875 = vpop.f32.mrb[0].mxu0
      %v876 = vadd.f32 %v552, %v875
      %v877 = vpop.f32.mrb[0].mxu0
      %878 = vmatprep.mubr.f32.mxu0 0.0
      %879 = vmatmul.mubr.f32.gmra.mrb[0].mxu0 %v704
      %v880 = vpop.f32.mrb[0].mxu0
      %v881 = vadd.f32 %v557, %v880
      %v882 = vpop.f32.mrb[0].mxu0
      %883 = vmatprep.mubr.f32.mxu0 0.0
      %884 = vmatmul.mubr.f32.gmra.mrb[0].mxu0 %v707
      %v885 = vpop.f32.mrb[0].mxu0
      %v886 = vadd.f32 %v562, %v885
      %v887 = vpop.f32.mrb[0].mxu0
      %888 = vmatprep.mubr.f32.mxu0 0.0
      %889 = vmatmul.mubr.f32.gmra.mrb[0].mxu0 %v710
      %v890 = vpop.f32.mrb[0].mxu0
      %v891 = vadd.f32 %v567, %v890
      %v892 = vpop.f32.mrb[0].mxu0
      %893 = vmatprep.mubr.f32.mxu0 0.0
      %894 = vmatmul.mubr.f32.gmra.mrb[0].mxu0 %v713
      %v895 = vpop.f32.mrb[0].mxu0
      %v896 = vadd.f32 %v572, %v895
      %v897 = vpop.f32.mrb[0].mxu0
      %898 = vmatprep.mubr.f32.mxu0 0.0
      %899 = vmatmul.mubr.f32.gmra.mrb[0].mxu0 %v716
      %v900 = vpop.f32.mrb[0].mxu0
      %v901 = vadd.f32 %v577, %v900
      %v902 = vpop.f32.mrb[0].mxu0
      %903 = vmatprep.mubr.f32.mxu0 0.0
      %904 = vmatmul.mubr.f32.gmra.mrb[0].mxu0 %v719
      %v905 = vpop.f32.mrb[0].mxu0
      %v906 = vadd.f32 %v582, %v905
      %v907 = vpop.f32.mrb[0].mxu0
      %908 = vmatprep.mubr.f32.mxu0 0.0
      %909 = vmatmul.mubr.f32.gmra.mrb[0].mxu0 %v722
      %v910 = vpop.f32.mrb[0].mxu0
      %v911 = vadd.f32 %v587, %v910
      %v912 = vpop.f32.mrb[0].mxu0
      %913 = vmatprep.mubr.f32.mxu0 0.0
      %914 = vmatmul.mubr.f32.gmra.mrb[0].mxu0 %v725
      %v915 = vpop.f32.mrb[0].mxu0
      %v916 = vadd.f32 %v592, %v915
      %v917 = vpop.f32.mrb[0].mxu0
      %918 = vmatprep.mubr.f32.mxu0 0.0
      %919 = vmatmul.mubr.f32.gmra.mrb[0].mxu0 %v728
      %v920 = vpop.f32.mrb[0].mxu0
      %v921 = vadd.f32 %v597, %v920
      %v922 = vpop.f32.mrb[0].mxu0
      %923 = vmatprep.mubr.f32.mxu0 0.0
      %924 = vmatmul.mubr.f32.gmra.mrb[0].mxu0 %v731
      %v925 = vpop.f32.mrb[0].mxu0
      %v926 = vadd.f32 %v602, %v925
      %v927 = vpop.f32.mrb[0].mxu0
      %928 = vmatprep.mubr.f32.mxu0 0.0
      %929 = vmatmul.mubr.f32.gmra.mrb[0].mxu0 %v734
      %v930 = vpop.f32.mrb[0].mxu0
      %v931 = vadd.f32 %v607, %v930
      %v932 = vpop.f32.mrb[0].mxu0
      %933 = vmatprep.mubr.f32.mxu0 0.0
      %934 = vmatmul.mubr.f32.gmra.mrb[0].mxu0 %v737
      %v935 = vpop.f32.mrb[0].mxu0
      %v936 = vadd.f32 %v612, %v935
      %v937 = vpop.f32.mrb[0].mxu0
      %938 = vmatprep.mubr.f32.mxu0 0.0
      %939 = vmatmul.mubr.f32.gmra.mrb[0].mxu0 %v740
      %v940 = vpop.f32.mrb[0].mxu0
      %v941 = vadd.f32 %v617, %v940
      %v942 = vpop.f32.mrb[0].mxu0
      %943 = vmatprep.mubr.f32.mxu0 0.0
      %944 = vmatmul.mubr.f32.gmra.mrb[0].mxu0 %v743
      %v945 = vpop.f32.mrb[0].mxu0
      %v946 = vadd.f32 %v622, %v945
      %v947 = vpop.f32.mrb[0].mxu0
      %948 = vmatprep.mubr.f32.mxu0 0.0
      %949 = vmatmul.mubr.f32.gmra.mrb[0].mxu0 %v746
      %v950 = vpop.f32.mrb[0].mxu0
      %v951 = vadd.f32 %v627, %v950
      %v952 = vpop.f32.mrb[0].mxu0
      %953 = vmatprep.mubr.f32.mxu0 0.0
      %954 = vmatmul.mubr.f32.gmra.mrb[0].mxu0 %v749
      %v955 = vpop.f32.mrb[0].mxu0
      %v956 = vadd.f32 %v632, %v955
      %v957 = vpop.f32.mrb[0].mxu0
      %958 = vmatprep.mubr.f32.mxu0 0.0
      %959 = vmatmul.mubr.f32.gmra.mrb[0].mxu0 %v752
      %v960 = vpop.f32.mrb[0].mxu0
      %v961 = vadd.f32 %v637, %v960
      %v962 = vpop.f32.mrb[0].mxu0
      %963 = vmatprep.mubr.f32.mxu0 0.0
      %964 = vmatmul.mubr.f32.gmra.mrb[0].mxu0 %v755
      %v965 = vpop.f32.mrb[0].mxu0
      %v966 = vadd.f32 %v642, %v965
      %v967 = vpop.f32.mrb[0].mxu0
      %968 = vmatprep.mubr.f32.mxu0 0.0
      %969 = vmatmul.mubr.f32.gmra.mrb[0].mxu0 %v758
      %v970 = vpop.f32.mrb[0].mxu0
      %v971 = vadd.f32 %v647, %v970
      %v972 = vpop.f32.mrb[0].mxu0
      %973 = vmatprep.mubr.f32.mxu0 0.0
      %974 = vmatmul.mubr.f32.gmra.mrb[0].mxu0 %v761
      %v975 = vpop.f32.mrb[0].mxu0
      %v976 = vadd.f32 %v652, %v975
      %v977 = vpop.f32.mrb[0].mxu0
      %978 = vmatprep.mubr.f32.mxu0 0.0
      %979 = vmatmul.mubr.f32.gmra.mrb[0].mxu0 %v764
      %v980 = vpop.f32.mrb[0].mxu0
      %v981 = vadd.f32 %v657, %v980
      %v982 = vpop.f32.mrb[0].mxu0
      %983 = vmatprep.mubr.f32.mxu0 0.0
      %984 = vmatmul.mubr.f32.gmra.mrb[0].mxu0 %v767
      %v985 = vpop.f32.mrb[0].mxu0
      %v986 = vadd.f32 %v662, %v985
      %v987 = vpop.f32.mrb[0].mxu0
      %988 = vmatprep.mubr.f32.mxu0 0.0
      %989 = vmatmul.mubr.f32.gmra.mrb[0].mxu0 %v770
      %v990 = vpop.f32.mrb[0].mxu0
      %v991 = vadd.f32 %v667, %v990
      %v992 = vpop.f32.mrb[0].mxu0
      %993 = vmatprep.mubr.f32.mxu0 0.0
      %994 = vmatmul.mubr.f32.gmra.mrb[0].mxu0 %v773
      %v995 = vpop.f32.mrb[0].mxu0
      %v996 = vadd.f32 %v672, %v995
      %v997 = vpop.f32.mrb[0].mxu0
      %998 = vmatprep.mubr.f32.mxu0 0.0
      %999 = vmatmul.mubr.f32.gmra.mrb[0].mxu0 %v776
      %v1000 = vpop.f32.mrb[0].mxu0
      %v1001 = vadd.f32 %v677, %v1000
      %v1002 = vpop.f32.mrb[0].mxu0
      %1003 = vmatprep.mubr.f32.mxu0 0.0
      %1004 = vmatmul.mubr.f32.gmra.mrb[0].mxu0 %v779
      %v1005 = vpop.f32.mrb[0].mxu0
      %v1006 = vadd.f32 %v682, %v1005
      %v1007 = vpop.f32.mrb[0].mxu0
      %1008 = vdwg.mxu0
      %v1009 = vld [vmem:[#allocation2 + $0x9] sm:$0xff]
      %v1010 = vld [vmem:[#allocation2 + $0x11] sm:$0xff]
      %v1011 = vld [vmem:[#allocation2 + $0x29] sm:$0xff]
      %v1012 = vld [vmem:[#allocation2 + $0x31] sm:$0xff]
      %v1013 = vld [vmem:[#allocation2 + $0x49] sm:$0xff]
      %v1014 = vld [vmem:[#allocation2 + $0x51] sm:$0xff]
      %v1015 = vld [vmem:[#allocation2 + $0x69] sm:$0xff]
      %v1016 = vld [vmem:[#allocation2 + $0x71] sm:$0xff]
      %v1017 = vld [vmem:[#allocation2 + $0x89] sm:$0xff]
      %v1018 = vld [vmem:[#allocation2 + $0x91] sm:$0xff]
      %v1019 = vld [vmem:[#allocation2 + $0xa9] sm:$0xff]
      %v1020 = vld [vmem:[#allocation2 + $0xb1] sm:$0xff]
      %v1021 = vld [vmem:[#allocation2 + $0xc9] sm:$0xff]
      %v1022 = vld [vmem:[#allocation2 + $0xd1] sm:$0xff]
      %v1023 = vld [vmem:[#allocation2 + $0xe9] sm:$0xff]
      %v1024 = vld [vmem:[#allocation2 + $0xf1] sm:$0xff]
      %v1025 = vld [vmem:[#allocation2 + $0x109] sm:$0xff]
      %v1026 = vld [vmem:[#allocation2 + $0x111] sm:$0xff]
      %v1027 = vld [vmem:[#allocation2 + $0x129] sm:$0xff]
      %v1028 = vld [vmem:[#allocation2 + $0x131] sm:$0xff]
      %v1029 = vld [vmem:[#allocation2 + $0x149] sm:$0xff]
      %v1030 = vld [vmem:[#allocation2 + $0x151] sm:$0xff]
      %v1031 = vld [vmem:[#allocation2 + $0x169] sm:$0xff]
      %v1032 = vld [vmem:[#allocation2 + $0x171] sm:$0xff]
      %v1033 = vld [vmem:[#allocation2 + $0x189] sm:$0xff]
      %v1034 = vld [vmem:[#allocation2 + $0x191] sm:$0xff]
      %v1035 = vld [vmem:[#allocation2 + $0x1a9] sm:$0xff]
      %v1036 = vld [vmem:[#allocation2 + $0x1b1] sm:$0xff]
      %v1037 = vld [vmem:[#allocation2 + $0x1c9] sm:$0xff]
      %v1038 = vld [vmem:[#allocation2 + $0x1d1] sm:$0xff]
      %v1039 = vld [vmem:[#allocation2 + $0x1e9] sm:$0xff]
      %v1040 = vld [vmem:[#allocation2 + $0x1f1] sm:$0xff]
      %s1041 = scalar_lea.vmem %s1, 8
      %v1042 = vld [vmem:[%s1041] sm:$0xf]
      %v1044 = vsel %vm214, %v1009, 0
      %v1047 = vsel %vm214, %v1010, 0
      %v1050 = vsel %vm214, %v1011, 0
      %v1053 = vsel %vm214, %v1012, 0
      %v1056 = vsel %vm214, %v1013, 0
      %v1059 = vsel %vm214, %v1014, 0
      %v1062 = vsel %vm214, %v1015, 0
      %v1065 = vsel %vm214, %v1016, 0
      %v1068 = vsel %vm214, %v1017, 0
      %v1071 = vsel %vm214, %v1018, 0
      %v1074 = vsel %vm214, %v1019, 0
      %v1077 = vsel %vm214, %v1020, 0
      %v1080 = vsel %vm214, %v1021, 0
      %v1083 = vsel %vm214, %v1022, 0
      %v1086 = vsel %vm214, %v1023, 0
      %v1089 = vsel %vm214, %v1024, 0
      %v1092 = vsel %vm214, %v1025, 0
      %v1095 = vsel %vm214, %v1026, 0
      %v1098 = vsel %vm214, %v1027, 0
      %v1101 = vsel %vm214, %v1028, 0
      %v1104 = vsel %vm214, %v1029, 0
      %v1107 = vsel %vm214, %v1030, 0
      %v1110 = vsel %vm214, %v1031, 0
      %v1113 = vsel %vm214, %v1032, 0
      %v1116 = vsel %vm214, %v1033, 0
      %v1119 = vsel %vm214, %v1034, 0
      %v1122 = vsel %vm214, %v1035, 0
      %v1125 = vsel %vm214, %v1036, 0
      %v1128 = vsel %vm214, %v1037, 0
      %v1131 = vsel %vm214, %v1038, 0
      %v1134 = vsel %vm214, %v1039, 0
      %v1137 = vsel %vm214, %v1040, 0
      %v1140 = vsel %vm456, %v1042, 0
      %1142 = vmatprep.subr.mxu0 0.0
      %1143 = vmatpush1.msra.mxu0 %v1140
      %1144 = vmatprep.subr.mxu0 0.0
      %1145 = vmatpush1.msra.mxu0 0.0
      %1146 = vmatprep.subr.mxu0 0.0
      %1147 = vmatpush1.msra.mxu0 0.0
      %1148 = vmatprep.subr.mxu0 0.0
      %1149 = vmatpush1.msra.mxu0 0.0
      %1150 = vmatprep.subr.mxu0 0.0
      %1151 = vmatpush1.msra.mxu0 0.0
      %1152 = vmatprep.subr.mxu0 0.0
      %1153 = vmatpush1.msra.mxu0 0.0
      %1154 = vmatprep.subr.mxu0 0.0
      %1155 = vmatpush1.msra.mxu0 0.0
      %1156 = vmatprep.subr.mxu0 0.0
      %1157 = vmatpush1.msra.mxu0 0.0
      %1158 = vmatprep.subr.mxu0 0.0
      %1159 = vmatpush1.msra.mxu0 0.0
      %1160 = vmatprep.subr.mxu0 0.0
      %1161 = vmatpush1.msra.mxu0 0.0
      %1162 = vmatprep.subr.mxu0 0.0
      %1163 = vmatpush1.msra.mxu0 0.0
      %1164 = vmatprep.subr.mxu0 0.0
      %1165 = vmatpush1.msra.mxu0 0.0
      %1166 = vmatprep.subr.mxu0 0.0
      %1167 = vmatpush1.msra.mxu0 0.0
      %1168 = vmatprep.subr.mxu0 0.0
      %1169 = vmatpush1.msra.mxu0 0.0
      %1170 = vmatprep.subr.mxu0 0.0
      %1171 = vmatpush1.msra.mxu0 0.0
      %1172 = vmatprep.subr.mxu0 0.0
      %1173 = vmatpush1.msra.mxu0 0.0
      %1174 = vmatprep.subr.mxu0 0.0
      %1175 = vmatpush1.msra.mxu0 0.0
      %1176 = vmatprep.subr.mxu0 0.0
      %1177 = vmatpush1.msra.mxu0 0.0
      %1178 = vmatprep.subr.mxu0 0.0
      %1179 = vmatpush1.msra.mxu0 0.0
      %1180 = vmatprep.subr.mxu0 0.0
      %1181 = vmatpush1.msra.mxu0 0.0
      %1182 = vmatprep.subr.mxu0 0.0
      %1183 = vmatpush1.msra.mxu0 0.0
      %1184 = vmatprep.subr.mxu0 0.0
      %1185 = vmatpush1.msra.mxu0 0.0
      %1186 = vmatprep.subr.mxu0 0.0
      %1187 = vmatpush1.msra.mxu0 0.0
      %1188 = vmatprep.subr.mxu0 0.0
      %1189 = vmatpush1.msra.mxu0 0.0
      %1190 = vmatprep.subr.mxu0 0.0
      %1191 = vmatpush1.msra.mxu0 0.0
      %1192 = vmatprep.subr.mxu0 0.0
      %1193 = vmatpush1.msra.mxu0 0.0
      %1194 = vmatprep.subr.mxu0 0.0
      %1195 = vmatpush1.msra.mxu0 0.0
      %1196 = vmatprep.subr.mxu0 0.0
      %1197 = vmatpush1.msra.mxu0 0.0
      %1198 = vmatprep.subr.mxu0 0.0
      %1199 = vmatpush1.msra.mxu0 0.0
      %1200 = vmatprep.subr.mxu0 0.0
      %1201 = vmatpush1.msra.mxu0 0.0
      %1202 = vmatprep.subr.mxu0 0.0
      %1203 = vmatpush1.msra.mxu0 0.0
      %1204 = vmatprep.subr.mxu0 0.0
      %1205 = vmatpush1.msra.mxu0 0.0
      %1206 = vmatprep.mubr.f32.mxu0 0.0
      %1207 = vmatmul.mubr.f32.gmra.mrb[0].mxu0 %v1044
      %v1208 = vpop.f32.mrb[0].mxu0
      %v1209 = vadd.f32 0.0, %v1208
      %v1210 = vpop.f32.mrb[0].mxu0
      %1211 = vmatprep.mubr.f32.mxu0 0.0
      %1212 = vmatmul.mubr.f32.gmra.mrb[0].mxu0 %v1047
      %v1213 = vpop.f32.mrb[0].mxu0
      %v1214 = vadd.f32 0.0, %v1213
      %v1215 = vpop.f32.mrb[0].mxu0
      %1216 = vmatprep.mubr.f32.mxu0 0.0
      %1217 = vmatmul.mubr.f32.gmra.mrb[0].mxu0 %v1050
      %v1218 = vpop.f32.mrb[0].mxu0
      %v1219 = vadd.f32 0.0, %v1218
      %v1220 = vpop.f32.mrb[0].mxu0
      %1221 = vmatprep.mubr.f32.mxu0 0.0
      %1222 = vmatmul.mubr.f32.gmra.mrb[0].mxu0 %v1053
      %v1223 = vpop.f32.mrb[0].mxu0
      %v1224 = vadd.f32 0.0, %v1223
      %v1225 = vpop.f32.mrb[0].mxu0
      %1226 = vmatprep.mubr.f32.mxu0 0.0
      %1227 = vmatmul.mubr.f32.gmra.mrb[0].mxu0 %v1056
      %v1228 = vpop.f32.mrb[0].mxu0
      %v1229 = vadd.f32 0.0, %v1228
      %v1230 = vpop.f32.mrb[0].mxu0
      %1231 = vmatprep.mubr.f32.mxu0 0.0
      %1232 = vmatmul.mubr.f32.gmra.mrb[0].mxu0 %v1059
      %v1233 = vpop.f32.mrb[0].mxu0
      %v1234 = vadd.f32 0.0, %v1233
      %v1235 = vpop.f32.mrb[0].mxu0
      %1236 = vmatprep.mubr.f32.mxu0 0.0
      %1237 = vmatmul.mubr.f32.gmra.mrb[0].mxu0 %v1062
      %v1238 = vpop.f32.mrb[0].mxu0
      %v1239 = vadd.f32 0.0, %v1238
      %v1240 = vpop.f32.mrb[0].mxu0
      %1241 = vmatprep.mubr.f32.mxu0 0.0
      %1242 = vmatmul.mubr.f32.gmra.mrb[0].mxu0 %v1065
      %v1243 = vpop.f32.mrb[0].mxu0
      %v1244 = vadd.f32 0.0, %v1243
      %v1245 = vpop.f32.mrb[0].mxu0
      %1246 = vmatprep.mubr.f32.mxu0 0.0
      %1247 = vmatmul.mubr.f32.gmra.mrb[0].mxu0 %v1068
      %v1248 = vpop.f32.mrb[0].mxu0
      %v1249 = vadd.f32 0.0, %v1248
      %v1250 = vpop.f32.mrb[0].mxu0
      %1251 = vmatprep.mubr.f32.mxu0 0.0
      %1252 = vmatmul.mubr.f32.gmra.mrb[0].mxu0 %v1071
      %v1253 = vpop.f32.mrb[0].mxu0
      %v1254 = vadd.f32 0.0, %v1253
      %v1255 = vpop.f32.mrb[0].mxu0
      %1256 = vmatprep.mubr.f32.mxu0 0.0
      %1257 = vmatmul.mubr.f32.gmra.mrb[0].mxu0 %v1074
      %v1258 = vpop.f32.mrb[0].mxu0
      %v1259 = vadd.f32 0.0, %v1258
      %v1260 = vpop.f32.mrb[0].mxu0
      %1261 = vmatprep.mubr.f32.mxu0 0.0
      %1262 = vmatmul.mubr.f32.gmra.mrb[0].mxu0 %v1077
      %v1263 = vpop.f32.mrb[0].mxu0
      %v1264 = vadd.f32 0.0, %v1263
      %v1265 = vpop.f32.mrb[0].mxu0
      %1266 = vmatprep.mubr.f32.mxu0 0.0
      %1267 = vmatmul.mubr.f32.gmra.mrb[0].mxu0 %v1080
      %v1268 = vpop.f32.mrb[0].mxu0
      %v1269 = vadd.f32 0.0, %v1268
      %v1270 = vpop.f32.mrb[0].mxu0
      %1271 = vmatprep.mubr.f32.mxu0 0.0
      %1272 = vmatmul.mubr.f32.gmra.mrb[0].mxu0 %v1083
      %v1273 = vpop.f32.mrb[0].mxu0
      %v1274 = vadd.f32 0.0, %v1273
      %v1275 = vpop.f32.mrb[0].mxu0
      %1276 = vmatprep.mubr.f32.mxu0 0.0
      %1277 = vmatmul.mubr.f32.gmra.mrb[0].mxu0 %v1086
      %v1278 = vpop.f32.mrb[0].mxu0
      %v1279 = vadd.f32 0.0, %v1278
      %v1280 = vpop.f32.mrb[0].mxu0
      %1281 = vmatprep.mubr.f32.mxu0 0.0
      %1282 = vmatmul.mubr.f32.gmra.mrb[0].mxu0 %v1089
      %v1283 = vpop.f32.mrb[0].mxu0
      %v1284 = vadd.f32 0.0, %v1283
      %v1285 = vpop.f32.mrb[0].mxu0
      %1286 = vmatprep.mubr.f32.mxu0 0.0
      %1287 = vmatmul.mubr.f32.gmra.mrb[0].mxu0 %v1092
      %v1288 = vpop.f32.mrb[0].mxu0
      %v1289 = vadd.f32 0.0, %v1288
      %v1290 = vpop.f32.mrb[0].mxu0
      %1291 = vmatprep.mubr.f32.mxu0 0.0
      %1292 = vmatmul.mubr.f32.gmra.mrb[0].mxu0 %v1095
      %v1293 = vpop.f32.mrb[0].mxu0
      %v1294 = vadd.f32 0.0, %v1293
      %v1295 = vpop.f32.mrb[0].mxu0
      %1296 = vmatprep.mubr.f32.mxu0 0.0
      %1297 = vmatmul.mubr.f32.gmra.mrb[0].mxu0 %v1098
      %v1298 = vpop.f32.mrb[0].mxu0
      %v1299 = vadd.f32 0.0, %v1298
      %v1300 = vpop.f32.mrb[0].mxu0
      %1301 = vmatprep.mubr.f32.mxu0 0.0
      %1302 = vmatmul.mubr.f32.gmra.mrb[0].mxu0 %v1101
      %v1303 = vpop.f32.mrb[0].mxu0
      %v1304 = vadd.f32 0.0, %v1303
      %v1305 = vpop.f32.mrb[0].mxu0
      %1306 = vmatprep.mubr.f32.mxu0 0.0
      %1307 = vmatmul.mubr.f32.gmra.mrb[0].mxu0 %v1104
      %v1308 = vpop.f32.mrb[0].mxu0
      %v1309 = vadd.f32 0.0, %v1308
      %v1310 = vpop.f32.mrb[0].mxu0
      %1311 = vmatprep.mubr.f32.mxu0 0.0
      %1312 = vmatmul.mubr.f32.gmra.mrb[0].mxu0 %v1107
      %v1313 = vpop.f32.mrb[0].mxu0
      %v1314 = vadd.f32 0.0, %v1313
      %v1315 = vpop.f32.mrb[0].mxu0
      %1316 = vmatprep.mubr.f32.mxu0 0.0
      %1317 = vmatmul.mubr.f32.gmra.mrb[0].mxu0 %v1110
      %v1318 = vpop.f32.mrb[0].mxu0
      %v1319 = vadd.f32 0.0, %v1318
      %v1320 = vpop.f32.mrb[0].mxu0
      %1321 = vmatprep.mubr.f32.mxu0 0.0
      %1322 = vmatmul.mubr.f32.gmra.mrb[0].mxu0 %v1113
      %v1323 = vpop.f32.mrb[0].mxu0
      %v1324 = vadd.f32 0.0, %v1323
      %v1325 = vpop.f32.mrb[0].mxu0
      %1326 = vmatprep.mubr.f32.mxu0 0.0
      %1327 = vmatmul.mubr.f32.gmra.mrb[0].mxu0 %v1116
      %v1328 = vpop.f32.mrb[0].mxu0
      %v1329 = vadd.f32 0.0, %v1328
      %v1330 = vpop.f32.mrb[0].mxu0
      %1331 = vmatprep.mubr.f32.mxu0 0.0
      %1332 = vmatmul.mubr.f32.gmra.mrb[0].mxu0 %v1119
      %v1333 = vpop.f32.mrb[0].mxu0
      %v1334 = vadd.f32 0.0, %v1333
      %v1335 = vpop.f32.mrb[0].mxu0
      %1336 = vmatprep.mubr.f32.mxu0 0.0
      %1337 = vmatmul.mubr.f32.gmra.mrb[0].mxu0 %v1122
      %v1338 = vpop.f32.mrb[0].mxu0
      %v1339 = vadd.f32 0.0, %v1338
      %v1340 = vpop.f32.mrb[0].mxu0
      %1341 = vmatprep.mubr.f32.mxu0 0.0
      %1342 = vmatmul.mubr.f32.gmra.mrb[0].mxu0 %v1125
      %v1343 = vpop.f32.mrb[0].mxu0
      %v1344 = vadd.f32 0.0, %v1343
      %v1345 = vpop.f32.mrb[0].mxu0
      %1346 = vmatprep.mubr.f32.mxu0 0.0
      %1347 = vmatmul.mubr.f32.gmra.mrb[0].mxu0 %v1128
      %v1348 = vpop.f32.mrb[0].mxu0
      %v1349 = vadd.f32 0.0, %v1348
      %v1350 = vpop.f32.mrb[0].mxu0
      %1351 = vmatprep.mubr.f32.mxu0 0.0
      %1352 = vmatmul.mubr.f32.gmra.mrb[0].mxu0 %v1131
      %v1353 = vpop.f32.mrb[0].mxu0
      %v1354 = vadd.f32 0.0, %v1353
      %v1355 = vpop.f32.mrb[0].mxu0
      %1356 = vmatprep.mubr.f32.mxu0 0.0
      %1357 = vmatmul.mubr.f32.gmra.mrb[0].mxu0 %v1134
      %v1358 = vpop.f32.mrb[0].mxu0
      %v1359 = vadd.f32 0.0, %v1358
      %v1360 = vpop.f32.mrb[0].mxu0
      %1361 = vmatprep.mubr.f32.mxu0 0.0
      %1362 = vmatmul.mubr.f32.gmra.mrb[0].mxu0 %v1137
      %v1363 = vpop.f32.mrb[0].mxu0
      %v1364 = vadd.f32 0.0, %v1363
      %v1365 = vpop.f32.mrb[0].mxu0
      %1366 = vdwg.mxu0
      %v1367 = vadd.f32 %v851, %v1209
      %v1368 = vadd.f32 %v856, %v1214
      %v1369 = vadd.f32 %v861, %v1219
      %v1370 = vadd.f32 %v866, %v1224
      %v1371 = vadd.f32 %v871, %v1229
      %v1372 = vadd.f32 %v876, %v1234
      %v1373 = vadd.f32 %v881, %v1239
      %v1374 = vadd.f32 %v886, %v1244
      %v1375 = vadd.f32 %v891, %v1249
      %v1376 = vadd.f32 %v896, %v1254
      %v1377 = vadd.f32 %v901, %v1259
      %v1378 = vadd.f32 %v906, %v1264
      %v1379 = vadd.f32 %v911, %v1269
      %v1380 = vadd.f32 %v916, %v1274
      %v1381 = vadd.f32 %v921, %v1279
      %v1382 = vadd.f32 %v926, %v1284
      %v1383 = vadd.f32 %v931, %v1289
      %v1384 = vadd.f32 %v936, %v1294
      %v1385 = vadd.f32 %v941, %v1299
      %v1386 = vadd.f32 %v946, %v1304
      %v1387 = vadd.f32 %v951, %v1309
      %v1388 = vadd.f32 %v956, %v1314
      %v1389 = vadd.f32 %v961, %v1319
      %v1390 = vadd.f32 %v966, %v1324
      %v1391 = vadd.f32 %v971, %v1329
      %v1392 = vadd.f32 %v976, %v1334
      %v1393 = vadd.f32 %v981, %v1339
      %v1394 = vadd.f32 %v986, %v1344
      %v1395 = vadd.f32 %v991, %v1349
      %v1396 = vadd.f32 %v996, %v1354
      %v1397 = vadd.f32 %v1001, %v1359
      %v1398 = vadd.f32 %v1006, %v1364
      %v1399 = vld [vmem:[%s260 + $0x7] sm:$0xff]
      %v1400 = vld [vmem:[%s260 + $0xf] sm:$0xff]
      %v1401 = vld [vmem:[%s260 + $0x27] sm:$0xff]
      %v1402 = vld [vmem:[%s260 + $0x2f] sm:$0xff]
      %v1403 = vld [vmem:[%s260 + $0x47] sm:$0xff]
      %v1404 = vld [vmem:[%s260 + $0x4f] sm:$0xff]
      %v1405 = vld [vmem:[%s260 + $0x67] sm:$0xff]
      %v1406 = vld [vmem:[%s260 + $0x6f] sm:$0xff]
      %v1407 = vld [vmem:[%s260 + $0x87] sm:$0xff]
      %v1408 = vld [vmem:[%s260 + $0x8f] sm:$0xff]
      %v1409 = vld [vmem:[%s260 + $0xa7] sm:$0xff]
      %v1410 = vld [vmem:[%s260 + $0xaf] sm:$0xff]
      %v1411 = vld [vmem:[%s260 + $0xc7] sm:$0xff]
      %v1412 = vld [vmem:[%s260 + $0xcf] sm:$0xff]
      %v1413 = vld [vmem:[%s260 + $0xe7] sm:$0xff]
      %v1414 = vld [vmem:[%s260 + $0xef] sm:$0xff]
      %v1415 = vld [vmem:[%s260 + $0x107] sm:$0xff]
      %v1416 = vld [vmem:[%s260 + $0x10f] sm:$0xff]
      %v1417 = vld [vmem:[%s260 + $0x127] sm:$0xff]
      %v1418 = vld [vmem:[%s260 + $0x12f] sm:$0xff]
      %v1419 = vld [vmem:[%s260 + $0x147] sm:$0xff]
      %v1420 = vld [vmem:[%s260 + $0x14f] sm:$0xff]
      %v1421 = vld [vmem:[%s260 + $0x167] sm:$0xff]
      %v1422 = vld [vmem:[%s260 + $0x16f] sm:$0xff]
      %v1423 = vld [vmem:[%s260 + $0x187] sm:$0xff]
      %v1424 = vld [vmem:[%s260 + $0x18f] sm:$0xff]
      %v1425 = vld [vmem:[%s260 + $0x1a7] sm:$0xff]
      %v1426 = vld [vmem:[%s260 + $0x1af] sm:$0xff]
      %v1427 = vld [vmem:[%s260 + $0x1c7] sm:$0xff]
      %v1428 = vld [vmem:[%s260 + $0x1cf] sm:$0xff]
      %v1429 = vld [vmem:[%s260 + $0x1e7] sm:$0xff]
      %v1430 = vld [vmem:[%s260 + $0x1ef] sm:$0xff]
      %s1431 = scalar_lea.vmem %s1, 12
      %v1432 = vld [vmem:[%s1431] sm:$0xf]
      %v1434 = vsel %vm214, %v1399, 0
      %v1437 = vsel %vm214, %v1400, 0
      %v1440 = vsel %vm214, %v1401, 0
      %v1443 = vsel %vm214, %v1402, 0
      %v1446 = vsel %vm214, %v1403, 0
      %v1449 = vsel %vm214, %v1404, 0
      %v1452 = vsel %vm214, %v1405, 0
      %v1455 = vsel %vm214, %v1406, 0
      %v1458 = vsel %vm214, %v1407, 0
      %v1461 = vsel %vm214, %v1408, 0
      %v1464 = vsel %vm214, %v1409, 0
      %v1467 = vsel %vm214, %v1410, 0
      %v1470 = vsel %vm214, %v1411, 0
      %v1473 = vsel %vm214, %v1412, 0
      %v1476 = vsel %vm214, %v1413, 0
      %v1479 = vsel %vm214, %v1414, 0
      %v1482 = vsel %vm214, %v1415, 0
      %v1485 = vsel %vm214, %v1416, 0
      %v1488 = vsel %vm214, %v1417, 0
      %v1491 = vsel %vm214, %v1418, 0
      %v1494 = vsel %vm214, %v1419, 0
      %v1497 = vsel %vm214, %v1420, 0
      %v1500 = vsel %vm214, %v1421, 0
      %v1503 = vsel %vm214, %v1422, 0
      %v1506 = vsel %vm214, %v1423, 0
      %v1509 = vsel %vm214, %v1424, 0
      %v1512 = vsel %vm214, %v1425, 0
      %v1515 = vsel %vm214, %v1426, 0
      %v1518 = vsel %vm214, %v1427, 0
      %v1521 = vsel %vm214, %v1428, 0
      %v1524 = vsel %vm214, %v1429, 0
      %v1527 = vsel %vm214, %v1430, 0
      %v1530 = vsel %vm456, %v1432, 0
      %1532 = vmatprep.subr.mxu0 0.0
      %1533 = vmatpush1.msra.mxu0 %v1530
      %1534 = vmatprep.subr.mxu0 0.0
      %1535 = vmatpush1.msra.mxu0 0.0
      %1536 = vmatprep.subr.mxu0 0.0
      %1537 = vmatpush1.msra.mxu0 0.0
      %1538 = vmatprep.subr.mxu0 0.0
      %1539 = vmatpush1.msra.mxu0 0.0
      %1540 = vmatprep.subr.mxu0 0.0
      %1541 = vmatpush1.msra.mxu0 0.0
      %1542 = vmatprep.subr.mxu0 0.0
      %1543 = vmatpush1.msra.mxu0 0.0
      %1544 = vmatprep.subr.mxu0 0.0
      %1545 = vmatpush1.msra.mxu0 0.0
      %1546 = vmatprep.subr.mxu0 0.0
      %1547 = vmatpush1.msra.mxu0 0.0
      %1548 = vmatprep.subr.mxu0 0.0
      %1549 = vmatpush1.msra.mxu0 0.0
      %1550 = vmatprep.subr.mxu0 0.0
      %1551 = vmatpush1.msra.mxu0 0.0
      %1552 = vmatprep.subr.mxu0 0.0
      %1553 = vmatpush1.msra.mxu0 0.0
      %1554 = vmatprep.subr.mxu0 0.0
      %1555 = vmatpush1.msra.mxu0 0.0
      %1556 = vmatprep.subr.mxu0 0.0
      %1557 = vmatpush1.msra.mxu0 0.0
      %1558 = vmatprep.subr.mxu0 0.0
      %1559 = vmatpush1.msra.mxu0 0.0
      %1560 = vmatprep.subr.mxu0 0.0
      %1561 = vmatpush1.msra.mxu0 0.0
      %1562 = vmatprep.subr.mxu0 0.0
      %1563 = vmatpush1.msra.mxu0 0.0
      %1564 = vmatprep.subr.mxu0 0.0
      %1565 = vmatpush1.msra.mxu0 0.0
      %1566 = vmatprep.subr.mxu0 0.0
      %1567 = vmatpush1.msra.mxu0 0.0
      %1568 = vmatprep.subr.mxu0 0.0
      %1569 = vmatpush1.msra.mxu0 0.0
      %1570 = vmatprep.subr.mxu0 0.0
      %1571 = vmatpush1.msra.mxu0 0.0
      %1572 = vmatprep.subr.mxu0 0.0
      %1573 = vmatpush1.msra.mxu0 0.0
      %1574 = vmatprep.subr.mxu0 0.0
      %1575 = vmatpush1.msra.mxu0 0.0
      %1576 = vmatprep.subr.mxu0 0.0
      %1577 = vmatpush1.msra.mxu0 0.0
      %1578 = vmatprep.subr.mxu0 0.0
      %1579 = vmatpush1.msra.mxu0 0.0
      %1580 = vmatprep.subr.mxu0 0.0
      %1581 = vmatpush1.msra.mxu0 0.0
      %1582 = vmatprep.subr.mxu0 0.0
      %1583 = vmatpush1.msra.mxu0 0.0
      %1584 = vmatprep.subr.mxu0 0.0
      %1585 = vmatpush1.msra.mxu0 0.0
      %1586 = vmatprep.subr.mxu0 0.0
      %1587 = vmatpush1.msra.mxu0 0.0
      %1588 = vmatprep.subr.mxu0 0.0
      %1589 = vmatpush1.msra.mxu0 0.0
      %1590 = vmatprep.subr.mxu0 0.0
      %1591 = vmatpush1.msra.mxu0 0.0
      %1592 = vmatprep.subr.mxu0 0.0
      %1593 = vmatpush1.msra.mxu0 0.0
      %1594 = vmatprep.subr.mxu0 0.0
      %1595 = vmatpush1.msra.mxu0 0.0
      %1596 = vmatprep.mubr.f32.mxu0 0.0
      %1597 = vmatmul.mubr.f32.gmra.mrb[0].mxu0 %v1434
      %v1598 = vpop.f32.mrb[0].mxu0
      %v1599 = vadd.f32 0.0, %v1598
      %v1600 = vpop.f32.mrb[0].mxu0
      %1601 = vmatprep.mubr.f32.mxu0 0.0
      %1602 = vmatmul.mubr.f32.gmra.mrb[0].mxu0 %v1437
      %v1603 = vpop.f32.mrb[0].mxu0
      %v1604 = vadd.f32 0.0, %v1603
      %v1605 = vpop.f32.mrb[0].mxu0
      %1606 = vmatprep.mubr.f32.mxu0 0.0
      %1607 = vmatmul.mubr.f32.gmra.mrb[0].mxu0 %v1440
      %v1608 = vpop.f32.mrb[0].mxu0
      %v1609 = vadd.f32 0.0, %v1608
      %v1610 = vpop.f32.mrb[0].mxu0
      %1611 = vmatprep.mubr.f32.mxu0 0.0
      %1612 = vmatmul.mubr.f32.gmra.mrb[0].mxu0 %v1443
      %v1613 = vpop.f32.mrb[0].mxu0
      %v1614 = vadd.f32 0.0, %v1613
      %v1615 = vpop.f32.mrb[0].mxu0
      %1616 = vmatprep.mubr.f32.mxu0 0.0
      %1617 = vmatmul.mubr.f32.gmra.mrb[0].mxu0 %v1446
      %v1618 = vpop.f32.mrb[0].mxu0
      %v1619 = vadd.f32 0.0, %v1618
      %v1620 = vpop.f32.mrb[0].mxu0
      %1621 = vmatprep.mubr.f32.mxu0 0.0
      %1622 = vmatmul.mubr.f32.gmra.mrb[0].mxu0 %v1449
      %v1623 = vpop.f32.mrb[0].mxu0
      %v1624 = vadd.f32 0.0, %v1623
      %v1625 = vpop.f32.mrb[0].mxu0
      %1626 = vmatprep.mubr.f32.mxu0 0.0
      %1627 = vmatmul.mubr.f32.gmra.mrb[0].mxu0 %v1452
      %v1628 = vpop.f32.mrb[0].mxu0
      %v1629 = vadd.f32 0.0, %v1628
      %v1630 = vpop.f32.mrb[0].mxu0
      %1631 = vmatprep.mubr.f32.mxu0 0.0
      %1632 = vmatmul.mubr.f32.gmra.mrb[0].mxu0 %v1455
      %v1633 = vpop.f32.mrb[0].mxu0
      %v1634 = vadd.f32 0.0, %v1633
      %v1635 = vpop.f32.mrb[0].mxu0
      %1636 = vmatprep.mubr.f32.mxu0 0.0
      %1637 = vmatmul.mubr.f32.gmra.mrb[0].mxu0 %v1458
      %v1638 = vpop.f32.mrb[0].mxu0
      %v1639 = vadd.f32 0.0, %v1638
      %v1640 = vpop.f32.mrb[0].mxu0
      %1641 = vmatprep.mubr.f32.mxu0 0.0
      %1642 = vmatmul.mubr.f32.gmra.mrb[0].mxu0 %v1461
      %v1643 = vpop.f32.mrb[0].mxu0
      %v1644 = vadd.f32 0.0, %v1643
      %v1645 = vpop.f32.mrb[0].mxu0
      %1646 = vmatprep.mubr.f32.mxu0 0.0
      %1647 = vmatmul.mubr.f32.gmra.mrb[0].mxu0 %v1464
      %v1648 = vpop.f32.mrb[0].mxu0
      %v1649 = vadd.f32 0.0, %v1648
      %v1650 = vpop.f32.mrb[0].mxu0
      %1651 = vmatprep.mubr.f32.mxu0 0.0
      %1652 = vmatmul.mubr.f32.gmra.mrb[0].mxu0 %v1467
      %v1653 = vpop.f32.mrb[0].mxu0
      %v1654 = vadd.f32 0.0, %v1653
      %v1655 = vpop.f32.mrb[0].mxu0
      %1656 = vmatprep.mubr.f32.mxu0 0.0
      %1657 = vmatmul.mubr.f32.gmra.mrb[0].mxu0 %v1470
      %v1658 = vpop.f32.mrb[0].mxu0
      %v1659 = vadd.f32 0.0, %v1658
      %v1660 = vpop.f32.mrb[0].mxu0
      %1661 = vmatprep.mubr.f32.mxu0 0.0
      %1662 = vmatmul.mubr.f32.gmra.mrb[0].mxu0 %v1473
      %v1663 = vpop.f32.mrb[0].mxu0
      %v1664 = vadd.f32 0.0, %v1663
      %v1665 = vpop.f32.mrb[0].mxu0
      %1666 = vmatprep.mubr.f32.mxu0 0.0
      %1667 = vmatmul.mubr.f32.gmra.mrb[0].mxu0 %v1476
      %v1668 = vpop.f32.mrb[0].mxu0
      %v1669 = vadd.f32 0.0, %v1668
      %v1670 = vpop.f32.mrb[0].mxu0
      %1671 = vmatprep.mubr.f32.mxu0 0.0
      %1672 = vmatmul.mubr.f32.gmra.mrb[0].mxu0 %v1479
      %v1673 = vpop.f32.mrb[0].mxu0
      %v1674 = vadd.f32 0.0, %v1673
      %v1675 = vpop.f32.mrb[0].mxu0
      %1676 = vmatprep.mubr.f32.mxu0 0.0
      %1677 = vmatmul.mubr.f32.gmra.mrb[0].mxu0 %v1482
      %v1678 = vpop.f32.mrb[0].mxu0
      %v1679 = vadd.f32 0.0, %v1678
      %v1680 = vpop.f32.mrb[0].mxu0
      %1681 = vmatprep.mubr.f32.mxu0 0.0
      %1682 = vmatmul.mubr.f32.gmra.mrb[0].mxu0 %v1485
      %v1683 = vpop.f32.mrb[0].mxu0
      %v1684 = vadd.f32 0.0, %v1683
      %v1685 = vpop.f32.mrb[0].mxu0
      %1686 = vmatprep.mubr.f32.mxu0 0.0
      %1687 = vmatmul.mubr.f32.gmra.mrb[0].mxu0 %v1488
      %v1688 = vpop.f32.mrb[0].mxu0
      %v1689 = vadd.f32 0.0, %v1688
      %v1690 = vpop.f32.mrb[0].mxu0
      %1691 = vmatprep.mubr.f32.mxu0 0.0
      %1692 = vmatmul.mubr.f32.gmra.mrb[0].mxu0 %v1491
      %v1693 = vpop.f32.mrb[0].mxu0
      %v1694 = vadd.f32 0.0, %v1693
      %v1695 = vpop.f32.mrb[0].mxu0
      %1696 = vmatprep.mubr.f32.mxu0 0.0
      %1697 = vmatmul.mubr.f32.gmra.mrb[0].mxu0 %v1494
      %v1698 = vpop.f32.mrb[0].mxu0
      %v1699 = vadd.f32 0.0, %v1698
      %v1700 = vpop.f32.mrb[0].mxu0
      %1701 = vmatprep.mubr.f32.mxu0 0.0
      %1702 = vmatmul.mubr.f32.gmra.mrb[0].mxu0 %v1497
      %v1703 = vpop.f32.mrb[0].mxu0
      %v1704 = vadd.f32 0.0, %v1703
      %v1705 = vpop.f32.mrb[0].mxu0
      %1706 = vmatprep.mubr.f32.mxu0 0.0
      %1707 = vmatmul.mubr.f32.gmra.mrb[0].mxu0 %v1500
      %v1708 = vpop.f32.mrb[0].mxu0
      %v1709 = vadd.f32 0.0, %v1708
      %v1710 = vpop.f32.mrb[0].mxu0
      %1711 = vmatprep.mubr.f32.mxu0 0.0
      %1712 = vmatmul.mubr.f32.gmra.mrb[0].mxu0 %v1503
      %v1713 = vpop.f32.mrb[0].mxu0
      %v1714 = vadd.f32 0.0, %v1713
      %v1715 = vpop.f32.mrb[0].mxu0
      %1716 = vmatprep.mubr.f32.mxu0 0.0
      %1717 = vmatmul.mubr.f32.gmra.mrb[0].mxu0 %v1506
      %v1718 = vpop.f32.mrb[0].mxu0
      %v1719 = vadd.f32 0.0, %v1718
      %v1720 = vpop.f32.mrb[0].mxu0
      %1721 = vmatprep.mubr.f32.mxu0 0.0
      %1722 = vmatmul.mubr.f32.gmra.mrb[0].mxu0 %v1509
      %v1723 = vpop.f32.mrb[0].mxu0
      %v1724 = vadd.f32 0.0, %v1723
      %v1725 = vpop.f32.mrb[0].mxu0
      %1726 = vmatprep.mubr.f32.mxu0 0.0
      %1727 = vmatmul.mubr.f32.gmra.mrb[0].mxu0 %v1512
      %v1728 = vpop.f32.mrb[0].mxu0
      %v1729 = vadd.f32 0.0, %v1728
      %v1730 = vpop.f32.mrb[0].mxu0
      %1731 = vmatprep.mubr.f32.mxu0 0.0
      %1732 = vmatmul.mubr.f32.gmra.mrb[0].mxu0 %v1515
      %v1733 = vpop.f32.mrb[0].mxu0
      %v1734 = vadd.f32 0.0, %v1733
      %v1735 = vpop.f32.mrb[0].mxu0
      %1736 = vmatprep.mubr.f32.mxu0 0.0
      %1737 = vmatmul.mubr.f32.gmra.mrb[0].mxu0 %v1518
      %v1738 = vpop.f32.mrb[0].mxu0
      %v1739 = vadd.f32 0.0, %v1738
      %v1740 = vpop.f32.mrb[0].mxu0
      %1741 = vmatprep.mubr.f32.mxu0 0.0
      %1742 = vmatmul.mubr.f32.gmra.mrb[0].mxu0 %v1521
      %v1743 = vpop.f32.mrb[0].mxu0
      %v1744 = vadd.f32 0.0, %v1743
      %v1745 = vpop.f32.mrb[0].mxu0
      %1746 = vmatprep.mubr.f32.mxu0 0.0
      %1747 = vmatmul.mubr.f32.gmra.mrb[0].mxu0 %v1524
      %v1748 = vpop.f32.mrb[0].mxu0
      %v1749 = vadd.f32 0.0, %v1748
      %v1750 = vpop.f32.mrb[0].mxu0
      %1751 = vmatprep.mubr.f32.mxu0 0.0
      %1752 = vmatmul.mubr.f32.gmra.mrb[0].mxu0 %v1527
      %v1753 = vpop.f32.mrb[0].mxu0
      %v1754 = vadd.f32 0.0, %v1753
      %v1755 = vpop.f32.mrb[0].mxu0
      %1756 = vdwg.mxu0
      %v1757 = vadd.f32 %v1367, %v1599
      %v1758 = vadd.f32 %v1368, %v1604
      %v1759 = vadd.f32 %v1369, %v1609
      %v1760 = vadd.f32 %v1370, %v1614
      %v1761 = vadd.f32 %v1371, %v1619
      %v1762 = vadd.f32 %v1372, %v1624
      %v1763 = vadd.f32 %v1373, %v1629
      %v1764 = vadd.f32 %v1374, %v1634
      %v1765 = vadd.f32 %v1375, %v1639
      %v1766 = vadd.f32 %v1376, %v1644
      %v1767 = vadd.f32 %v1377, %v1649
      %v1768 = vadd.f32 %v1378, %v1654
      %v1769 = vadd.f32 %v1379, %v1659
      %v1770 = vadd.f32 %v1380, %v1664
      %v1771 = vadd.f32 %v1381, %v1669
      %v1772 = vadd.f32 %v1382, %v1674
      %v1773 = vadd.f32 %v1383, %v1679
      %v1774 = vadd.f32 %v1384, %v1684
      %v1775 = vadd.f32 %v1385, %v1689
      %v1776 = vadd.f32 %v1386, %v1694
      %v1777 = vadd.f32 %v1387, %v1699
      %v1778 = vadd.f32 %v1388, %v1704
      %v1779 = vadd.f32 %v1389, %v1709
      %v1780 = vadd.f32 %v1390, %v1714
      %v1781 = vadd.f32 %v1391, %v1719
      %v1782 = vadd.f32 %v1392, %v1724
      %v1783 = vadd.f32 %v1393, %v1729
      %v1784 = vadd.f32 %v1394, %v1734
      %v1785 = vadd.f32 %v1395, %v1739
      %v1786 = vadd.f32 %v1396, %v1744
      %v1787 = vadd.f32 %v1397, %v1749
      %v1788 = vadd.f32 %v1398, %v1754
      %v1789 = vld [vmem:[%s260 + $0x8] sm:$0xff]
      %v1790 = vld [vmem:[%s260 + $0x10] sm:$0xff]
      %v1791 = vld [vmem:[%s260 + $0x28] sm:$0xff]
      %v1792 = vld [vmem:[%s260 + $0x30] sm:$0xff]
      %v1793 = vld [vmem:[%s260 + $0x48] sm:$0xff]
      %v1794 = vld [vmem:[%s260 + $0x50] sm:$0xff]
      %v1795 = vld [vmem:[%s260 + $0x68] sm:$0xff]
      %v1796 = vld [vmem:[%s260 + $0x70] sm:$0xff]
      %v1797 = vld [vmem:[%s260 + $0x88] sm:$0xff]
      %v1798 = vld [vmem:[%s260 + $0x90] sm:$0xff]
      %v1799 = vld [vmem:[%s260 + $0xa8] sm:$0xff]
      %v1800 = vld [vmem:[%s260 + $0xb0] sm:$0xff]
      %v1801 = vld [vmem:[%s260 + $0xc8] sm:$0xff]
      %v1802 = vld [vmem:[%s260 + $0xd0] sm:$0xff]
      %v1803 = vld [vmem:[%s260 + $0xe8] sm:$0xff]
      %v1804 = vld [vmem:[%s260 + $0xf0] sm:$0xff]
      %v1805 = vld [vmem:[%s260 + $0x108] sm:$0xff]
      %v1806 = vld [vmem:[%s260 + $0x110] sm:$0xff]
      %v1807 = vld [vmem:[%s260 + $0x128] sm:$0xff]
      %v1808 = vld [vmem:[%s260 + $0x130] sm:$0xff]
      %v1809 = vld [vmem:[%s260 + $0x148] sm:$0xff]
      %v1810 = vld [vmem:[%s260 + $0x150] sm:$0xff]
      %v1811 = vld [vmem:[%s260 + $0x168] sm:$0xff]
      %v1812 = vld [vmem:[%s260 + $0x170] sm:$0xff]
      %v1813 = vld [vmem:[%s260 + $0x188] sm:$0xff]
      %v1814 = vld [vmem:[%s260 + $0x190] sm:$0xff]
      %v1815 = vld [vmem:[%s260 + $0x1a8] sm:$0xff]
      %v1816 = vld [vmem:[%s260 + $0x1b0] sm:$0xff]
      %v1817 = vld [vmem:[%s260 + $0x1c8] sm:$0xff]
      %v1818 = vld [vmem:[%s260 + $0x1d0] sm:$0xff]
      %v1819 = vld [vmem:[%s260 + $0x1e8] sm:$0xff]
      %v1820 = vld [vmem:[%s260 + $0x1f0] sm:$0xff]
      %s1821 = scalar_lea.vmem %s1, 16
      %v1822 = vld [vmem:[%s1821] sm:$0xf]
      %v1824 = vsel %vm214, %v1789, 0
      %v1827 = vsel %vm214, %v1790, 0
      %v1830 = vsel %vm214, %v1791, 0
      %v1833 = vsel %vm214, %v1792, 0
      %v1836 = vsel %vm214, %v1793, 0
      %v1839 = vsel %vm214, %v1794, 0
      %v1842 = vsel %vm214, %v1795, 0
      %v1845 = vsel %vm214, %v1796, 0
      %v1848 = vsel %vm214, %v1797, 0
      %v1851 = vsel %vm214, %v1798, 0
      %v1854 = vsel %vm214, %v1799, 0
      %v1857 = vsel %vm214, %v1800, 0
      %v1860 = vsel %vm214, %v1801, 0
      %v1863 = vsel %vm214, %v1802, 0
      %v1866 = vsel %vm214, %v1803, 0
      %v1869 = vsel %vm214, %v1804, 0
      %v1872 = vsel %vm214, %v1805, 0
      %v1875 = vsel %vm214, %v1806, 0
      %v1878 = vsel %vm214, %v1807, 0
      %v1881 = vsel %vm214, %v1808, 0
      %v1884 = vsel %vm214, %v1809, 0
      %v1887 = vsel %vm214, %v1810, 0
      %v1890 = vsel %vm214, %v1811, 0
      %v1893 = vsel %vm214, %v1812, 0
      %v1896 = vsel %vm214, %v1813, 0
      %v1899 = vsel %vm214, %v1814, 0
      %v1902 = vsel %vm214, %v1815, 0
      %v1905 = vsel %vm214, %v1816, 0
      %v1908 = vsel %vm214, %v1817, 0
      %v1911 = vsel %vm214, %v1818, 0
      %v1914 = vsel %vm214, %v1819, 0
      %v1917 = vsel %vm214, %v1820, 0
      %v1920 = vsel %vm456, %v1822, 0
      %1922 = vmatprep.subr.mxu0 0.0
      %1923 = vmatpush1.msra.mxu0 %v1920
      %1924 = vmatprep.subr.mxu0 0.0
      %1925 = vmatpush1.msra.mxu0 0.0
      %1926 = vmatprep.subr.mxu0 0.0
      %1927 = vmatpush1.msra.mxu0 0.0
      %1928 = vmatprep.subr.mxu0 0.0
      %1929 = vmatpush1.msra.mxu0 0.0
      %1930 = vmatprep.subr.mxu0 0.0
      %1931 = vmatpush1.msra.mxu0 0.0
      %1932 = vmatprep.subr.mxu0 0.0
      %1933 = vmatpush1.msra.mxu0 0.0
      %1934 = vmatprep.subr.mxu0 0.0
      %1935 = vmatpush1.msra.mxu0 0.0
      %1936 = vmatprep.subr.mxu0 0.0
      %1937 = vmatpush1.msra.mxu0 0.0
      %1938 = vmatprep.subr.mxu0 0.0
      %1939 = vmatpush1.msra.mxu0 0.0
      %1940 = vmatprep.subr.mxu0 0.0
      %1941 = vmatpush1.msra.mxu0 0.0
      %1942 = vmatprep.subr.mxu0 0.0
      %1943 = vmatpush1.msra.mxu0 0.0
      %1944 = vmatprep.subr.mxu0 0.0
      %1945 = vmatpush1.msra.mxu0 0.0
      %1946 = vmatprep.subr.mxu0 0.0
      %1947 = vmatpush1.msra.mxu0 0.0
      %1948 = vmatprep.subr.mxu0 0.0
      %1949 = vmatpush1.msra.mxu0 0.0
      %1950 = vmatprep.subr.mxu0 0.0
      %1951 = vmatpush1.msra.mxu0 0.0
      %1952 = vmatprep.subr.mxu0 0.0
      %1953 = vmatpush1.msra.mxu0 0.0
      %1954 = vmatprep.subr.mxu0 0.0
      %1955 = vmatpush1.msra.mxu0 0.0
      %1956 = vmatprep.subr.mxu0 0.0
      %1957 = vmatpush1.msra.mxu0 0.0
      %1958 = vmatprep.subr.mxu0 0.0
      %1959 = vmatpush1.msra.mxu0 0.0
      %1960 = vmatprep.subr.mxu0 0.0
      %1961 = vmatpush1.msra.mxu0 0.0
      %1962 = vmatprep.subr.mxu0 0.0
      %1963 = vmatpush1.msra.mxu0 0.0
      %1964 = vmatprep.subr.mxu0 0.0
      %1965 = vmatpush1.msra.mxu0 0.0
      %1966 = vmatprep.subr.mxu0 0.0
      %1967 = vmatpush1.msra.mxu0 0.0
      %1968 = vmatprep.subr.mxu0 0.0
      %1969 = vmatpush1.msra.mxu0 0.0
      %1970 = vmatprep.subr.mxu0 0.0
      %1971 = vmatpush1.msra.mxu0 0.0
      %1972 = vmatprep.subr.mxu0 0.0
      %1973 = vmatpush1.msra.mxu0 0.0
      %1974 = vmatprep.subr.mxu0 0.0
      %1975 = vmatpush1.msra.mxu0 0.0
      %1976 = vmatprep.subr.mxu0 0.0
      %1977 = vmatpush1.msra.mxu0 0.0
      %1978 = vmatprep.subr.mxu0 0.0
      %1979 = vmatpush1.msra.mxu0 0.0
      %1980 = vmatprep.subr.mxu0 0.0
      %1981 = vmatpush1.msra.mxu0 0.0
      %1982 = vmatprep.subr.mxu0 0.0
      %1983 = vmatpush1.msra.mxu0 0.0
      %1984 = vmatprep.subr.mxu0 0.0
      %1985 = vmatpush1.msra.mxu0 0.0
      %1986 = vmatprep.mubr.f32.mxu0 0.0
      %1987 = vmatmul.mubr.f32.gmra.mrb[0].mxu0 %v1824
      %v1988 = vpop.f32.mrb[0].mxu0
      %v1989 = vadd.f32 0.0, %v1988
      %v1990 = vpop.f32.mrb[0].mxu0
      %1991 = vmatprep.mubr.f32.mxu0 0.0
      %1992 = vmatmul.mubr.f32.gmra.mrb[0].mxu0 %v1827
      %v1993 = vpop.f32.mrb[0].mxu0
      %v1994 = vadd.f32 0.0, %v1993
      %v1995 = vpop.f32.mrb[0].mxu0
      %1996 = vmatprep.mubr.f32.mxu0 0.0
      %1997 = vmatmul.mubr.f32.gmra.mrb[0].mxu0 %v1830
      %v1998 = vpop.f32.mrb[0].mxu0
      %v1999 = vadd.f32 0.0, %v1998
      %v2000 = vpop.f32.mrb[0].mxu0
      %2001 = vmatprep.mubr.f32.mxu0 0.0
      %2002 = vmatmul.mubr.f32.gmra.mrb[0].mxu0 %v1833
      %v2003 = vpop.f32.mrb[0].mxu0
      %v2004 = vadd.f32 0.0, %v2003
      %v2005 = vpop.f32.mrb[0].mxu0
      %2006 = vmatprep.mubr.f32.mxu0 0.0
      %2007 = vmatmul.mubr.f32.gmra.mrb[0].mxu0 %v1836
      %v2008 = vpop.f32.mrb[0].mxu0
      %v2009 = vadd.f32 0.0, %v2008
      %v2010 = vpop.f32.mrb[0].mxu0
      %2011 = vmatprep.mubr.f32.mxu0 0.0
      %2012 = vmatmul.mubr.f32.gmra.mrb[0].mxu0 %v1839
      %v2013 = vpop.f32.mrb[0].mxu0
      %v2014 = vadd.f32 0.0, %v2013
      %v2015 = vpop.f32.mrb[0].mxu0
      %2016 = vmatprep.mubr.f32.mxu0 0.0
      %2017 = vmatmul.mubr.f32.gmra.mrb[0].mxu0 %v1842
      %v2018 = vpop.f32.mrb[0].mxu0
      %v2019 = vadd.f32 0.0, %v2018
      %v2020 = vpop.f32.mrb[0].mxu0
      %2021 = vmatprep.mubr.f32.mxu0 0.0
      %2022 = vmatmul.mubr.f32.gmra.mrb[0].mxu0 %v1845
      %v2023 = vpop.f32.mrb[0].mxu0
      %v2024 = vadd.f32 0.0, %v2023
      %v2025 = vpop.f32.mrb[0].mxu0
      %2026 = vmatprep.mubr.f32.mxu0 0.0
      %2027 = vmatmul.mubr.f32.gmra.mrb[0].mxu0 %v1848
      %v2028 = vpop.f32.mrb[0].mxu0
      %v2029 = vadd.f32 0.0, %v2028
      %v2030 = vpop.f32.mrb[0].mxu0
      %2031 = vmatprep.mubr.f32.mxu0 0.0
      %2032 = vmatmul.mubr.f32.gmra.mrb[0].mxu0 %v1851
      %v2033 = vpop.f32.mrb[0].mxu0
      %v2034 = vadd.f32 0.0, %v2033
      %v2035 = vpop.f32.mrb[0].mxu0
      %2036 = vmatprep.mubr.f32.mxu0 0.0
      %2037 = vmatmul.mubr.f32.gmra.mrb[0].mxu0 %v1854
      %v2038 = vpop.f32.mrb[0].mxu0
      %v2039 = vadd.f32 0.0, %v2038
      %v2040 = vpop.f32.mrb[0].mxu0
      %2041 = vmatprep.mubr.f32.mxu0 0.0
      %2042 = vmatmul.mubr.f32.gmra.mrb[0].mxu0 %v1857
      %v2043 = vpop.f32.mrb[0].mxu0
      %v2044 = vadd.f32 0.0, %v2043
      %v2045 = vpop.f32.mrb[0].mxu0
      %2046 = vmatprep.mubr.f32.mxu0 0.0
      %2047 = vmatmul.mubr.f32.gmra.mrb[0].mxu0 %v1860
      %v2048 = vpop.f32.mrb[0].mxu0
      %v2049 = vadd.f32 0.0, %v2048
      %v2050 = vpop.f32.mrb[0].mxu0
      %2051 = vmatprep.mubr.f32.mxu0 0.0
      %2052 = vmatmul.mubr.f32.gmra.mrb[0].mxu0 %v1863
      %v2053 = vpop.f32.mrb[0].mxu0
      %v2054 = vadd.f32 0.0, %v2053
      %v2055 = vpop.f32.mrb[0].mxu0
      %2056 = vmatprep.mubr.f32.mxu0 0.0
      %2057 = vmatmul.mubr.f32.gmra.mrb[0].mxu0 %v1866
      %v2058 = vpop.f32.mrb[0].mxu0
      %v2059 = vadd.f32 0.0, %v2058
      %v2060 = vpop.f32.mrb[0].mxu0
      %2061 = vmatprep.mubr.f32.mxu0 0.0
      %2062 = vmatmul.mubr.f32.gmra.mrb[0].mxu0 %v1869
      %v2063 = vpop.f32.mrb[0].mxu0
      %v2064 = vadd.f32 0.0, %v2063
      %v2065 = vpop.f32.mrb[0].mxu0
      %2066 = vmatprep.mubr.f32.mxu0 0.0
      %2067 = vmatmul.mubr.f32.gmra.mrb[0].mxu0 %v1872
      %v2068 = vpop.f32.mrb[0].mxu0
      %v2069 = vadd.f32 0.0, %v2068
      %v2070 = vpop.f32.mrb[0].mxu0
      %2071 = vmatprep.mubr.f32.mxu0 0.0
      %2072 = vmatmul.mubr.f32.gmra.mrb[0].mxu0 %v1875
      %v2073 = vpop.f32.mrb[0].mxu0
      %v2074 = vadd.f32 0.0, %v2073
      %v2075 = vpop.f32.mrb[0].mxu0
      %2076 = vmatprep.mubr.f32.mxu0 0.0
      %2077 = vmatmul.mubr.f32.gmra.mrb[0].mxu0 %v1878
      %v2078 = vpop.f32.mrb[0].mxu0
      %v2079 = vadd.f32 0.0, %v2078
      %v2080 = vpop.f32.mrb[0].mxu0
      %2081 = vmatprep.mubr.f32.mxu0 0.0
      %2082 = vmatmul.mubr.f32.gmra.mrb[0].mxu0 %v1881
      %v2083 = vpop.f32.mrb[0].mxu0
      %v2084 = vadd.f32 0.0, %v2083
      %v2085 = vpop.f32.mrb[0].mxu0
      %2086 = vmatprep.mubr.f32.mxu0 0.0
      %2087 = vmatmul.mubr.f32.gmra.mrb[0].mxu0 %v1884
      %v2088 = vpop.f32.mrb[0].mxu0
      %v2089 = vadd.f32 0.0, %v2088
      %v2090 = vpop.f32.mrb[0].mxu0
      %2091 = vmatprep.mubr.f32.mxu0 0.0
      %2092 = vmatmul.mubr.f32.gmra.mrb[0].mxu0 %v1887
      %v2093 = vpop.f32.mrb[0].mxu0
      %v2094 = vadd.f32 0.0, %v2093
      %v2095 = vpop.f32.mrb[0].mxu0
      %2096 = vmatprep.mubr.f32.mxu0 0.0
      %2097 = vmatmul.mubr.f32.gmra.mrb[0].mxu0 %v1890
      %v2098 = vpop.f32.mrb[0].mxu0
      %v2099 = vadd.f32 0.0, %v2098
      %v2100 = vpop.f32.mrb[0].mxu0
      %2101 = vmatprep.mubr.f32.mxu0 0.0
      %2102 = vmatmul.mubr.f32.gmra.mrb[0].mxu0 %v1893
      %v2103 = vpop.f32.mrb[0].mxu0
      %v2104 = vadd.f32 0.0, %v2103
      %v2105 = vpop.f32.mrb[0].mxu0
      %2106 = vmatprep.mubr.f32.mxu0 0.0
      %2107 = vmatmul.mubr.f32.gmra.mrb[0].mxu0 %v1896
      %v2108 = vpop.f32.mrb[0].mxu0
      %v2109 = vadd.f32 0.0, %v2108
      %v2110 = vpop.f32.mrb[0].mxu0
      %2111 = vmatprep.mubr.f32.mxu0 0.0
      %2112 = vmatmul.mubr.f32.gmra.mrb[0].mxu0 %v1899
      %v2113 = vpop.f32.mrb[0].mxu0
      %v2114 = vadd.f32 0.0, %v2113
      %v2115 = vpop.f32.mrb[0].mxu0
      %2116 = vmatprep.mubr.f32.mxu0 0.0
      %2117 = vmatmul.mubr.f32.gmra.mrb[0].mxu0 %v1902
      %v2118 = vpop.f32.mrb[0].mxu0
      %v2119 = vadd.f32 0.0, %v2118
      %v2120 = vpop.f32.mrb[0].mxu0
      %2121 = vmatprep.mubr.f32.mxu0 0.0
      %2122 = vmatmul.mubr.f32.gmra.mrb[0].mxu0 %v1905
      %v2123 = vpop.f32.mrb[0].mxu0
      %v2124 = vadd.f32 0.0, %v2123
      %v2125 = vpop.f32.mrb[0].mxu0
      %2126 = vmatprep.mubr.f32.mxu0 0.0
      %2127 = vmatmul.mubr.f32.gmra.mrb[0].mxu0 %v1908
      %v2128 = vpop.f32.mrb[0].mxu0
      %v2129 = vadd.f32 0.0, %v2128
      %v2130 = vpop.f32.mrb[0].mxu0
      %2131 = vmatprep.mubr.f32.mxu0 0.0
      %2132 = vmatmul.mubr.f32.gmra.mrb[0].mxu0 %v1911
      %v2133 = vpop.f32.mrb[0].mxu0
      %v2134 = vadd.f32 0.0, %v2133
      %v2135 = vpop.f32.mrb[0].mxu0
      %2136 = vmatprep.mubr.f32.mxu0 0.0
      %2137 = vmatmul.mubr.f32.gmra.mrb[0].mxu0 %v1914
      %v2138 = vpop.f32.mrb[0].mxu0
      %v2139 = vadd.f32 0.0, %v2138
      %v2140 = vpop.f32.mrb[0].mxu0
      %2141 = vmatprep.mubr.f32.mxu0 0.0
      %2142 = vmatmul.mubr.f32.gmra.mrb[0].mxu0 %v1917
      %v2143 = vpop.f32.mrb[0].mxu0
      %v2144 = vadd.f32 0.0, %v2143
      %v2145 = vpop.f32.mrb[0].mxu0
      %2146 = vdwg.mxu0
      %v2147 = vadd.f32 %v1757, %v1989
      %v2148 = vadd.f32 %v1758, %v1994
      %v2149 = vadd.f32 %v1759, %v1999
      %v2150 = vadd.f32 %v1760, %v2004
      %v2151 = vadd.f32 %v1761, %v2009
      %v2152 = vadd.f32 %v1762, %v2014
      %v2153 = vadd.f32 %v1763, %v2019
      %v2154 = vadd.f32 %v1764, %v2024
      %v2155 = vadd.f32 %v1765, %v2029
      %v2156 = vadd.f32 %v1766, %v2034
      %v2157 = vadd.f32 %v1767, %v2039
      %v2158 = vadd.f32 %v1768, %v2044
      %v2159 = vadd.f32 %v1769, %v2049
      %v2160 = vadd.f32 %v1770, %v2054
      %v2161 = vadd.f32 %v1771, %v2059
      %v2162 = vadd.f32 %v1772, %v2064
      %v2163 = vadd.f32 %v1773, %v2069
      %v2164 = vadd.f32 %v1774, %v2074
      %v2165 = vadd.f32 %v1775, %v2079
      %v2166 = vadd.f32 %v1776, %v2084
      %v2167 = vadd.f32 %v1777, %v2089
      %v2168 = vadd.f32 %v1778, %v2094
      %v2169 = vadd.f32 %v1779, %v2099
      %v2170 = vadd.f32 %v1780, %v2104
      %v2171 = vadd.f32 %v1781, %v2109
      %v2172 = vadd.f32 %v1782, %v2114
      %v2173 = vadd.f32 %v1783, %v2119
      %v2174 = vadd.f32 %v1784, %v2124
      %v2175 = vadd.f32 %v1785, %v2129
      %v2176 = vadd.f32 %v1786, %v2134
      %v2177 = vadd.f32 %v1787, %v2139
      %v2178 = vadd.f32 %v1788, %v2144
      %v2179 = vld [vmem:[%s260 + $0x9] sm:$0xff]
      %v2180 = vld [vmem:[%s260 + $0x11] sm:$0xff]
      %v2181 = vld [vmem:[%s260 + $0x29] sm:$0xff]
      %v2182 = vld [vmem:[%s260 + $0x31] sm:$0xff]
      %v2183 = vld [vmem:[%s260 + $0x49] sm:$0xff]
      %v2184 = vld [vmem:[%s260 + $0x51] sm:$0xff]
      %v2185 = vld [vmem:[%s260 + $0x69] sm:$0xff]
      %v2186 = vld [vmem:[%s260 + $0x71] sm:$0xff]
      %v2187 = vld [vmem:[%s260 + $0x89] sm:$0xff]
      %v2188 = vld [vmem:[%s260 + $0x91] sm:$0xff]
      %v2189 = vld [vmem:[%s260 + $0xa9] sm:$0xff]
      %v2190 = vld [vmem:[%s260 + $0xb1] sm:$0xff]
      %v2191 = vld [vmem:[%s260 + $0xc9] sm:$0xff]
      %v2192 = vld [vmem:[%s260 + $0xd1] sm:$0xff]
      %v2193 = vld [vmem:[%s260 + $0xe9] sm:$0xff]
      %v2194 = vld [vmem:[%s260 + $0xf1] sm:$0xff]
      %v2195 = vld [vmem:[%s260 + $0x109] sm:$0xff]
      %v2196 = vld [vmem:[%s260 + $0x111] sm:$0xff]
      %v2197 = vld [vmem:[%s260 + $0x129] sm:$0xff]
      %v2198 = vld [vmem:[%s260 + $0x131] sm:$0xff]
      %v2199 = vld [vmem:[%s260 + $0x149] sm:$0xff]
      %v2200 = vld [vmem:[%s260 + $0x151] sm:$0xff]
      %v2201 = vld [vmem:[%s260 + $0x169] sm:$0xff]
      %v2202 = vld [vmem:[%s260 + $0x171] sm:$0xff]
      %v2203 = vld [vmem:[%s260 + $0x189] sm:$0xff]
      %v2204 = vld [vmem:[%s260 + $0x191] sm:$0xff]
      %v2205 = vld [vmem:[%s260 + $0x1a9] sm:$0xff]
      %v2206 = vld [vmem:[%s260 + $0x1b1] sm:$0xff]
      %v2207 = vld [vmem:[%s260 + $0x1c9] sm:$0xff]
      %v2208 = vld [vmem:[%s260 + $0x1d1] sm:$0xff]
      %v2209 = vld [vmem:[%s260 + $0x1e9] sm:$0xff]
      %v2210 = vld [vmem:[%s260 + $0x1f1] sm:$0xff]
      %s2211 = scalar_lea.vmem %s1, 20
      %v2212 = vld [vmem:[%s2211] sm:$0xf]
      %v2214 = vsel %vm214, %v2179, 0
      %v2217 = vsel %vm214, %v2180, 0
      %v2220 = vsel %vm214, %v2181, 0
      %v2223 = vsel %vm214, %v2182, 0
      %v2226 = vsel %vm214, %v2183, 0
      %v2229 = vsel %vm214, %v2184, 0
      %v2232 = vsel %vm214, %v2185, 0
      %v2235 = vsel %vm214, %v2186, 0
      %v2238 = vsel %vm214, %v2187, 0
      %v2241 = vsel %vm214, %v2188, 0
      %v2244 = vsel %vm214, %v2189, 0
      %v2247 = vsel %vm214, %v2190, 0
      %v2250 = vsel %vm214, %v2191, 0
      %v2253 = vsel %vm214, %v2192, 0
      %v2256 = vsel %vm214, %v2193, 0
      %v2259 = vsel %vm214, %v2194, 0
      %v2262 = vsel %vm214, %v2195, 0
      %v2265 = vsel %vm214, %v2196, 0
      %v2268 = vsel %vm214, %v2197, 0
      %v2271 = vsel %vm214, %v2198, 0
      %v2274 = vsel %vm214, %v2199, 0
      %v2277 = vsel %vm214, %v2200, 0
      %v2280 = vsel %vm214, %v2201, 0
      %v2283 = vsel %vm214, %v2202, 0
      %v2286 = vsel %vm214, %v2203, 0
      %v2289 = vsel %vm214, %v2204, 0
      %v2292 = vsel %vm214, %v2205, 0
      %v2295 = vsel %vm214, %v2206, 0
      %v2298 = vsel %vm214, %v2207, 0
      %v2301 = vsel %vm214, %v2208, 0
      %v2304 = vsel %vm214, %v2209, 0
      %v2307 = vsel %vm214, %v2210, 0
      %v2310 = vsel %vm456, %v2212, 0
      %2312 = vmatprep.subr.mxu0 0.0
      %2313 = vmatpush1.msra.mxu0 %v2310
      %2314 = vmatprep.subr.mxu0 0.0
      %2315 = vmatpush1.msra.mxu0 0.0
      %2316 = vmatprep.subr.mxu0 0.0
      %2317 = vmatpush1.msra.mxu0 0.0
      %2318 = vmatprep.subr.mxu0 0.0
      %2319 = vmatpush1.msra.mxu0 0.0
      %2320 = vmatprep.subr.mxu0 0.0
      %2321 = vmatpush1.msra.mxu0 0.0
      %2322 = vmatprep.subr.mxu0 0.0
      %2323 = vmatpush1.msra.mxu0 0.0
      %2324 = vmatprep.subr.mxu0 0.0
      %2325 = vmatpush1.msra.mxu0 0.0
      %2326 = vmatprep.subr.mxu0 0.0
      %2327 = vmatpush1.msra.mxu0 0.0
      %2328 = vmatprep.subr.mxu0 0.0
      %2329 = vmatpush1.msra.mxu0 0.0
      %2330 = vmatprep.subr.mxu0 0.0
      %2331 = vmatpush1.msra.mxu0 0.0
      %2332 = vmatprep.subr.mxu0 0.0
      %2333 = vmatpush1.msra.mxu0 0.0
      %2334 = vmatprep.subr.mxu0 0.0
      %2335 = vmatpush1.msra.mxu0 0.0
      %2336 = vmatprep.subr.mxu0 0.0
      %2337 = vmatpush1.msra.mxu0 0.0
      %2338 = vmatprep.subr.mxu0 0.0
      %2339 = vmatpush1.msra.mxu0 0.0
      %2340 = vmatprep.subr.mxu0 0.0
      %2341 = vmatpush1.msra.mxu0 0.0
      %2342 = vmatprep.subr.mxu0 0.0
      %2343 = vmatpush1.msra.mxu0 0.0
      %2344 = vmatprep.subr.mxu0 0.0
      %2345 = vmatpush1.msra.mxu0 0.0
      %2346 = vmatprep.subr.mxu0 0.0
      %2347 = vmatpush1.msra.mxu0 0.0
      %2348 = vmatprep.subr.mxu0 0.0
      %2349 = vmatpush1.msra.mxu0 0.0
      %2350 = vmatprep.subr.mxu0 0.0
      %2351 = vmatpush1.msra.mxu0 0.0
      %2352 = vmatprep.subr.mxu0 0.0
      %2353 = vmatpush1.msra.mxu0 0.0
      %2354 = vmatprep.subr.mxu0 0.0
      %2355 = vmatpush1.msra.mxu0 0.0
      %2356 = vmatprep.subr.mxu0 0.0
      %2357 = vmatpush1.msra.mxu0 0.0
      %2358 = vmatprep.subr.mxu0 0.0
      %2359 = vmatpush1.msra.mxu0 0.0
      %2360 = vmatprep.subr.mxu0 0.0
      %2361 = vmatpush1.msra.mxu0 0.0
      %2362 = vmatprep.subr.mxu0 0.0
      %2363 = vmatpush1.msra.mxu0 0.0
      %2364 = vmatprep.subr.mxu0 0.0
      %2365 = vmatpush1.msra.mxu0 0.0
      %2366 = vmatprep.subr.mxu0 0.0
      %2367 = vmatpush1.msra.mxu0 0.0
      %2368 = vmatprep.subr.mxu0 0.0
      %2369 = vmatpush1.msra.mxu0 0.0
      %2370 = vmatprep.subr.mxu0 0.0
      %2371 = vmatpush1.msra.mxu0 0.0
      %2372 = vmatprep.subr.mxu0 0.0
      %2373 = vmatpush1.msra.mxu0 0.0
      %2374 = vmatprep.subr.mxu0 0.0
      %2375 = vmatpush1.msra.mxu0 0.0
      %2376 = vmatprep.mubr.f32.mxu0 0.0
      %2377 = vmatmul.mubr.f32.gmra.mrb[0].mxu0 %v2214
      %v2378 = vpop.f32.mrb[0].mxu0
      %v2379 = vadd.f32 0.0, %v2378
      %v2380 = vpop.f32.mrb[0].mxu0
      %2381 = vmatprep.mubr.f32.mxu0 0.0
      %2382 = vmatmul.mubr.f32.gmra.mrb[0].mxu0 %v2217
      %v2383 = vpop.f32.mrb[0].mxu0
      %v2384 = vadd.f32 0.0, %v2383
      %v2385 = vpop.f32.mrb[0].mxu0
      %2386 = vmatprep.mubr.f32.mxu0 0.0
      %2387 = vmatmul.mubr.f32.gmra.mrb[0].mxu0 %v2220
      %v2388 = vpop.f32.mrb[0].mxu0
      %v2389 = vadd.f32 0.0, %v2388
      %v2390 = vpop.f32.mrb[0].mxu0
      %2391 = vmatprep.mubr.f32.mxu0 0.0
      %2392 = vmatmul.mubr.f32.gmra.mrb[0].mxu0 %v2223
      %v2393 = vpop.f32.mrb[0].mxu0
      %v2394 = vadd.f32 0.0, %v2393
      %v2395 = vpop.f32.mrb[0].mxu0
      %2396 = vmatprep.mubr.f32.mxu0 0.0
      %2397 = vmatmul.mubr.f32.gmra.mrb[0].mxu0 %v2226
      %v2398 = vpop.f32.mrb[0].mxu0
      %v2399 = vadd.f32 0.0, %v2398
      %v2400 = vpop.f32.mrb[0].mxu0
      %2401 = vmatprep.mubr.f32.mxu0 0.0
      %2402 = vmatmul.mubr.f32.gmra.mrb[0].mxu0 %v2229
      %v2403 = vpop.f32.mrb[0].mxu0
      %v2404 = vadd.f32 0.0, %v2403
      %v2405 = vpop.f32.mrb[0].mxu0
      %2406 = vmatprep.mubr.f32.mxu0 0.0
      %2407 = vmatmul.mubr.f32.gmra.mrb[0].mxu0 %v2232
      %v2408 = vpop.f32.mrb[0].mxu0
      %v2409 = vadd.f32 0.0, %v2408
      %v2410 = vpop.f32.mrb[0].mxu0
      %2411 = vmatprep.mubr.f32.mxu0 0.0
      %2412 = vmatmul.mubr.f32.gmra.mrb[0].mxu0 %v2235
      %v2413 = vpop.f32.mrb[0].mxu0
      %v2414 = vadd.f32 0.0, %v2413
      %v2415 = vpop.f32.mrb[0].mxu0
      %2416 = vmatprep.mubr.f32.mxu0 0.0
      %2417 = vmatmul.mubr.f32.gmra.mrb[0].mxu0 %v2238
      %v2418 = vpop.f32.mrb[0].mxu0
      %v2419 = vadd.f32 0.0, %v2418
      %v2420 = vpop.f32.mrb[0].mxu0
      %2421 = vmatprep.mubr.f32.mxu0 0.0
      %2422 = vmatmul.mubr.f32.gmra.mrb[0].mxu0 %v2241
      %v2423 = vpop.f32.mrb[0].mxu0
      %v2424 = vadd.f32 0.0, %v2423
      %v2425 = vpop.f32.mrb[0].mxu0
      %2426 = vmatprep.mubr.f32.mxu0 0.0
      %2427 = vmatmul.mubr.f32.gmra.mrb[0].mxu0 %v2244
      %v2428 = vpop.f32.mrb[0].mxu0
      %v2429 = vadd.f32 0.0, %v2428
      %v2430 = vpop.f32.mrb[0].mxu0
      %2431 = vmatprep.mubr.f32.mxu0 0.0
      %2432 = vmatmul.mubr.f32.gmra.mrb[0].mxu0 %v2247
      %v2433 = vpop.f32.mrb[0].mxu0
      %v2434 = vadd.f32 0.0, %v2433
      %v2435 = vpop.f32.mrb[0].mxu0
      %2436 = vmatprep.mubr.f32.mxu0 0.0
      %2437 = vmatmul.mubr.f32.gmra.mrb[0].mxu0 %v2250
      %v2438 = vpop.f32.mrb[0].mxu0
      %v2439 = vadd.f32 0.0, %v2438
      %v2440 = vpop.f32.mrb[0].mxu0
      %2441 = vmatprep.mubr.f32.mxu0 0.0
      %2442 = vmatmul.mubr.f32.gmra.mrb[0].mxu0 %v2253
      %v2443 = vpop.f32.mrb[0].mxu0
      %v2444 = vadd.f32 0.0, %v2443
      %v2445 = vpop.f32.mrb[0].mxu0
      %2446 = vmatprep.mubr.f32.mxu0 0.0
      %2447 = vmatmul.mubr.f32.gmra.mrb[0].mxu0 %v2256
      %v2448 = vpop.f32.mrb[0].mxu0
      %v2449 = vadd.f32 0.0, %v2448
      %v2450 = vpop.f32.mrb[0].mxu0
      %2451 = vmatprep.mubr.f32.mxu0 0.0
      %2452 = vmatmul.mubr.f32.gmra.mrb[0].mxu0 %v2259
      %v2453 = vpop.f32.mrb[0].mxu0
      %v2454 = vadd.f32 0.0, %v2453
      %v2455 = vpop.f32.mrb[0].mxu0
      %2456 = vmatprep.mubr.f32.mxu0 0.0
      %2457 = vmatmul.mubr.f32.gmra.mrb[0].mxu0 %v2262
      %v2458 = vpop.f32.mrb[0].mxu0
      %v2459 = vadd.f32 0.0, %v2458
      %v2460 = vpop.f32.mrb[0].mxu0
      %2461 = vmatprep.mubr.f32.mxu0 0.0
      %2462 = vmatmul.mubr.f32.gmra.mrb[0].mxu0 %v2265
      %v2463 = vpop.f32.mrb[0].mxu0
      %v2464 = vadd.f32 0.0, %v2463
      %v2465 = vpop.f32.mrb[0].mxu0
      %2466 = vmatprep.mubr.f32.mxu0 0.0
      %2467 = vmatmul.mubr.f32.gmra.mrb[0].mxu0 %v2268
      %v2468 = vpop.f32.mrb[0].mxu0
      %v2469 = vadd.f32 0.0, %v2468
      %v2470 = vpop.f32.mrb[0].mxu0
      %2471 = vmatprep.mubr.f32.mxu0 0.0
      %2472 = vmatmul.mubr.f32.gmra.mrb[0].mxu0 %v2271
      %v2473 = vpop.f32.mrb[0].mxu0
      %v2474 = vadd.f32 0.0, %v2473
      %v2475 = vpop.f32.mrb[0].mxu0
      %2476 = vmatprep.mubr.f32.mxu0 0.0
      %2477 = vmatmul.mubr.f32.gmra.mrb[0].mxu0 %v2274
      %v2478 = vpop.f32.mrb[0].mxu0
      %v2479 = vadd.f32 0.0, %v2478
      %v2480 = vpop.f32.mrb[0].mxu0
      %2481 = vmatprep.mubr.f32.mxu0 0.0
      %2482 = vmatmul.mubr.f32.gmra.mrb[0].mxu0 %v2277
      %v2483 = vpop.f32.mrb[0].mxu0
      %v2484 = vadd.f32 0.0, %v2483
      %v2485 = vpop.f32.mrb[0].mxu0
      %2486 = vmatprep.mubr.f32.mxu0 0.0
      %2487 = vmatmul.mubr.f32.gmra.mrb[0].mxu0 %v2280
      %v2488 = vpop.f32.mrb[0].mxu0
      %v2489 = vadd.f32 0.0, %v2488
      %v2490 = vpop.f32.mrb[0].mxu0
      %2491 = vmatprep.mubr.f32.mxu0 0.0
      %2492 = vmatmul.mubr.f32.gmra.mrb[0].mxu0 %v2283
      %v2493 = vpop.f32.mrb[0].mxu0
      %v2494 = vadd.f32 0.0, %v2493
      %v2495 = vpop.f32.mrb[0].mxu0
      %2496 = vmatprep.mubr.f32.mxu0 0.0
      %2497 = vmatmul.mubr.f32.gmra.mrb[0].mxu0 %v2286
      %v2498 = vpop.f32.mrb[0].mxu0
      %v2499 = vadd.f32 0.0, %v2498
      %v2500 = vpop.f32.mrb[0].mxu0
      %2501 = vmatprep.mubr.f32.mxu0 0.0
      %2502 = vmatmul.mubr.f32.gmra.mrb[0].mxu0 %v2289
      %v2503 = vpop.f32.mrb[0].mxu0
      %v2504 = vadd.f32 0.0, %v2503
      %v2505 = vpop.f32.mrb[0].mxu0
      %2506 = vmatprep.mubr.f32.mxu0 0.0
      %2507 = vmatmul.mubr.f32.gmra.mrb[0].mxu0 %v2292
      %v2508 = vpop.f32.mrb[0].mxu0
      %v2509 = vadd.f32 0.0, %v2508
      %v2510 = vpop.f32.mrb[0].mxu0
      %2511 = vmatprep.mubr.f32.mxu0 0.0
      %2512 = vmatmul.mubr.f32.gmra.mrb[0].mxu0 %v2295
      %v2513 = vpop.f32.mrb[0].mxu0
      %v2514 = vadd.f32 0.0, %v2513
      %v2515 = vpop.f32.mrb[0].mxu0
      %2516 = vmatprep.mubr.f32.mxu0 0.0
      %2517 = vmatmul.mubr.f32.gmra.mrb[0].mxu0 %v2298
      %v2518 = vpop.f32.mrb[0].mxu0
      %v2519 = vadd.f32 0.0, %v2518
      %v2520 = vpop.f32.mrb[0].mxu0
      %2521 = vmatprep.mubr.f32.mxu0 0.0
      %2522 = vmatmul.mubr.f32.gmra.mrb[0].mxu0 %v2301
      %v2523 = vpop.f32.mrb[0].mxu0
      %v2524 = vadd.f32 0.0, %v2523
      %v2525 = vpop.f32.mrb[0].mxu0
      %2526 = vmatprep.mubr.f32.mxu0 0.0
      %2527 = vmatmul.mubr.f32.gmra.mrb[0].mxu0 %v2304
      %v2528 = vpop.f32.mrb[0].mxu0
      %v2529 = vadd.f32 0.0, %v2528
      %v2530 = vpop.f32.mrb[0].mxu0
      %2531 = vmatprep.mubr.f32.mxu0 0.0
      %2532 = vmatmul.mubr.f32.gmra.mrb[0].mxu0 %v2307
      %v2533 = vpop.f32.mrb[0].mxu0
      %v2534 = vadd.f32 0.0, %v2533
      %v2535 = vpop.f32.mrb[0].mxu0
      %2536 = vdwg.mxu0
      %v2537 = vadd.f32 %v2147, %v2379
      %v2538 = vadd.f32 %v2148, %v2384
      %v2539 = vadd.f32 %v2149, %v2389
      %v2540 = vadd.f32 %v2150, %v2394
      %v2541 = vadd.f32 %v2151, %v2399
      %v2542 = vadd.f32 %v2152, %v2404
      %v2543 = vadd.f32 %v2153, %v2409
      %v2544 = vadd.f32 %v2154, %v2414
      %v2545 = vadd.f32 %v2155, %v2419
      %v2546 = vadd.f32 %v2156, %v2424
      %v2547 = vadd.f32 %v2157, %v2429
      %v2548 = vadd.f32 %v2158, %v2434
      %v2549 = vadd.f32 %v2159, %v2439
      %v2550 = vadd.f32 %v2160, %v2444
      %v2551 = vadd.f32 %v2161, %v2449
      %v2552 = vadd.f32 %v2162, %v2454
      %v2553 = vadd.f32 %v2163, %v2459
      %v2554 = vadd.f32 %v2164, %v2464
      %v2555 = vadd.f32 %v2165, %v2469
      %v2556 = vadd.f32 %v2166, %v2474
      %v2557 = vadd.f32 %v2167, %v2479
      %v2558 = vadd.f32 %v2168, %v2484
      %v2559 = vadd.f32 %v2169, %v2489
      %v2560 = vadd.f32 %v2170, %v2494
      %v2561 = vadd.f32 %v2171, %v2499
      %v2562 = vadd.f32 %v2172, %v2504
      %v2563 = vadd.f32 %v2173, %v2509
      %v2564 = vadd.f32 %v2174, %v2514
      %v2565 = vadd.f32 %v2175, %v2519
      %v2566 = vadd.f32 %v2176, %v2524
      %v2567 = vadd.f32 %v2177, %v2529
      %v2568 = vadd.f32 %v2178, %v2534
      %s2569 = scalar_lea.vmem [#allocation2], 64
      %v2570 = vld [vmem:[%s2569 + $0x7] sm:$0xff]
      %v2571 = vld [vmem:[%s2569 + $0xf] sm:$0xff]
      %v2572 = vld [vmem:[%s2569 + $0x27] sm:$0xff]
      %v2573 = vld [vmem:[%s2569 + $0x2f] sm:$0xff]
      %v2574 = vld [vmem:[%s2569 + $0x47] sm:$0xff]
      %v2575 = vld [vmem:[%s2569 + $0x4f] sm:$0xff]
      %v2576 = vld [vmem:[%s2569 + $0x67] sm:$0xff]
      %v2577 = vld [vmem:[%s2569 + $0x6f] sm:$0xff]
      %v2578 = vld [vmem:[%s2569 + $0x87] sm:$0xff]
      %v2579 = vld [vmem:[%s2569 + $0x8f] sm:$0xff]
      %v2580 = vld [vmem:[%s2569 + $0xa7] sm:$0xff]
      %v2581 = vld [vmem:[%s2569 + $0xaf] sm:$0xff]
      %v2582 = vld [vmem:[%s2569 + $0xc7] sm:$0xff]
      %v2583 = vld [vmem:[%s2569 + $0xcf] sm:$0xff]
      %v2584 = vld [vmem:[%s2569 + $0xe7] sm:$0xff]
      %v2585 = vld [vmem:[%s2569 + $0xef] sm:$0xff]
      %v2586 = vld [vmem:[%s2569 + $0x107] sm:$0xff]
      %v2587 = vld [vmem:[%s2569 + $0x10f] sm:$0xff]
      %v2588 = vld [vmem:[%s2569 + $0x127] sm:$0xff]
      %v2589 = vld [vmem:[%s2569 + $0x12f] sm:$0xff]
      %v2590 = vld [vmem:[%s2569 + $0x147] sm:$0xff]
      %v2591 = vld [vmem:[%s2569 + $0x14f] sm:$0xff]
      %v2592 = vld [vmem:[%s2569 + $0x167] sm:$0xff]
      %v2593 = vld [vmem:[%s2569 + $0x16f] sm:$0xff]
      %v2594 = vld [vmem:[%s2569 + $0x187] sm:$0xff]
      %v2595 = vld [vmem:[%s2569 + $0x18f] sm:$0xff]
      %v2596 = vld [vmem:[%s2569 + $0x1a7] sm:$0xff]
      %v2597 = vld [vmem:[%s2569 + $0x1af] sm:$0xff]
      %v2598 = vld [vmem:[%s2569 + $0x1c7] sm:$0xff]
      %v2599 = vld [vmem:[%s2569 + $0x1cf] sm:$0xff]
      %v2600 = vld [vmem:[%s2569 + $0x1e7] sm:$0xff]
      %v2601 = vld [vmem:[%s2569 + $0x1ef] sm:$0xff]
      %s2602 = scalar_lea.vmem %s1, 24
      %v2603 = vld [vmem:[%s2602] sm:$0xf]
      %v2605 = vsel %vm214, %v2570, 0
      %v2608 = vsel %vm214, %v2571, 0
      %v2611 = vsel %vm214, %v2572, 0
      %v2614 = vsel %vm214, %v2573, 0
      %v2617 = vsel %vm214, %v2574, 0
      %v2620 = vsel %vm214, %v2575, 0
      %v2623 = vsel %vm214, %v2576, 0
      %v2626 = vsel %vm214, %v2577, 0
      %v2629 = vsel %vm214, %v2578, 0
      %v2632 = vsel %vm214, %v2579, 0
      %v2635 = vsel %vm214, %v2580, 0
      %v2638 = vsel %vm214, %v2581, 0
      %v2641 = vsel %vm214, %v2582, 0
      %v2644 = vsel %vm214, %v2583, 0
      %v2647 = vsel %vm214, %v2584, 0
      %v2650 = vsel %vm214, %v2585, 0
      %v2653 = vsel %vm214, %v2586, 0
      %v2656 = vsel %vm214, %v2587, 0
      %v2659 = vsel %vm214, %v2588, 0
      %v2662 = vsel %vm214, %v2589, 0
      %v2665 = vsel %vm214, %v2590, 0
      %v2668 = vsel %vm214, %v2591, 0
      %v2671 = vsel %vm214, %v2592, 0
      %v2674 = vsel %vm214, %v2593, 0
      %v2677 = vsel %vm214, %v2594, 0
      %v2680 = vsel %vm214, %v2595, 0
      %v2683 = vsel %vm214, %v2596, 0
      %v2686 = vsel %vm214, %v2597, 0
      %v2689 = vsel %vm214, %v2598, 0
      %v2692 = vsel %vm214, %v2599, 0
      %v2695 = vsel %vm214, %v2600, 0
      %v2698 = vsel %vm214, %v2601, 0
      %v2701 = vsel %vm456, %v2603, 0
      %2703 = vmatprep.subr.mxu0 0.0
      %2704 = vmatpush1.msra.mxu0 %v2701
      %2705 = vmatprep.subr.mxu0 0.0
      %2706 = vmatpush1.msra.mxu0 0.0
      %2707 = vmatprep.subr.mxu0 0.0
      %2708 = vmatpush1.msra.mxu0 0.0
      %2709 = vmatprep.subr.mxu0 0.0
      %2710 = vmatpush1.msra.mxu0 0.0
      %2711 = vmatprep.subr.mxu0 0.0
      %2712 = vmatpush1.msra.mxu0 0.0
      %2713 = vmatprep.subr.mxu0 0.0
      %2714 = vmatpush1.msra.mxu0 0.0
      %2715 = vmatprep.subr.mxu0 0.0
      %2716 = vmatpush1.msra.mxu0 0.0
      %2717 = vmatprep.subr.mxu0 0.0
      %2718 = vmatpush1.msra.mxu0 0.0
      %2719 = vmatprep.subr.mxu0 0.0
      %2720 = vmatpush1.msra.mxu0 0.0
      %2721 = vmatprep.subr.mxu0 0.0
      %2722 = vmatpush1.msra.mxu0 0.0
      %2723 = vmatprep.subr.mxu0 0.0
      %2724 = vmatpush1.msra.mxu0 0.0
      %2725 = vmatprep.subr.mxu0 0.0
      %2726 = vmatpush1.msra.mxu0 0.0
      %2727 = vmatprep.subr.mxu0 0.0
      %2728 = vmatpush1.msra.mxu0 0.0
      %2729 = vmatprep.subr.mxu0 0.0
      %2730 = vmatpush1.msra.mxu0 0.0
      %2731 = vmatprep.subr.mxu0 0.0
      %2732 = vmatpush1.msra.mxu0 0.0
      %2733 = vmatprep.subr.mxu0 0.0
      %2734 = vmatpush1.msra.mxu0 0.0
      %2735 = vmatprep.subr.mxu0 0.0
      %2736 = vmatpush1.msra.mxu0 0.0
      %2737 = vmatprep.subr.mxu0 0.0
      %2738 = vmatpush1.msra.mxu0 0.0
      %2739 = vmatprep.subr.mxu0 0.0
      %2740 = vmatpush1.msra.mxu0 0.0
      %2741 = vmatprep.subr.mxu0 0.0
      %2742 = vmatpush1.msra.mxu0 0.0
      %2743 = vmatprep.subr.mxu0 0.0
      %2744 = vmatpush1.msra.mxu0 0.0
      %2745 = vmatprep.subr.mxu0 0.0
      %2746 = vmatpush1.msra.mxu0 0.0
      %2747 = vmatprep.subr.mxu0 0.0
      %2748 = vmatpush1.msra.mxu0 0.0
      %2749 = vmatprep.subr.mxu0 0.0
      %2750 = vmatpush1.msra.mxu0 0.0
      %2751 = vmatprep.subr.mxu0 0.0
      %2752 = vmatpush1.msra.mxu0 0.0
      %2753 = vmatprep.subr.mxu0 0.0
      %2754 = vmatpush1.msra.mxu0 0.0
      %2755 = vmatprep.subr.mxu0 0.0
      %2756 = vmatpush1.msra.mxu0 0.0
      %2757 = vmatprep.subr.mxu0 0.0
      %2758 = vmatpush1.msra.mxu0 0.0
      %2759 = vmatprep.subr.mxu0 0.0
      %2760 = vmatpush1.msra.mxu0 0.0
      %2761 = vmatprep.subr.mxu0 0.0
      %2762 = vmatpush1.msra.mxu0 0.0
      %2763 = vmatprep.subr.mxu0 0.0
      %2764 = vmatpush1.msra.mxu0 0.0
      %2765 = vmatprep.subr.mxu0 0.0
      %2766 = vmatpush1.msra.mxu0 0.0
      %2767 = vmatprep.mubr.f32.mxu0 0.0
      %2768 = vmatmul.mubr.f32.gmra.mrb[0].mxu0 %v2605
      %v2769 = vpop.f32.mrb[0].mxu0
      %v2770 = vadd.f32 0.0, %v2769
      %v2771 = vpop.f32.mrb[0].mxu0
      %2772 = vmatprep.mubr.f32.mxu0 0.0
      %2773 = vmatmul.mubr.f32.gmra.mrb[0].mxu0 %v2608
      %v2774 = vpop.f32.mrb[0].mxu0
      %v2775 = vadd.f32 0.0, %v2774
      %v2776 = vpop.f32.mrb[0].mxu0
      %2777 = vmatprep.mubr.f32.mxu0 0.0
      %2778 = vmatmul.mubr.f32.gmra.mrb[0].mxu0 %v2611
      %v2779 = vpop.f32.mrb[0].mxu0
      %v2780 = vadd.f32 0.0, %v2779
      %v2781 = vpop.f32.mrb[0].mxu0
      %2782 = vmatprep.mubr.f32.mxu0 0.0
      %2783 = vmatmul.mubr.f32.gmra.mrb[0].mxu0 %v2614
      %v2784 = vpop.f32.mrb[0].mxu0
      %v2785 = vadd.f32 0.0, %v2784
      %v2786 = vpop.f32.mrb[0].mxu0
      %2787 = vmatprep.mubr.f32.mxu0 0.0
      %2788 = vmatmul.mubr.f32.gmra.mrb[0].mxu0 %v2617
      %v2789 = vpop.f32.mrb[0].mxu0
      %v2790 = vadd.f32 0.0, %v2789
      %v2791 = vpop.f32.mrb[0].mxu0
      %2792 = vmatprep.mubr.f32.mxu0 0.0
      %2793 = vmatmul.mubr.f32.gmra.mrb[0].mxu0 %v2620
      %v2794 = vpop.f32.mrb[0].mxu0
      %v2795 = vadd.f32 0.0, %v2794
      %v2796 = vpop.f32.mrb[0].mxu0
      %2797 = vmatprep.mubr.f32.mxu0 0.0
      %2798 = vmatmul.mubr.f32.gmra.mrb[0].mxu0 %v2623
      %v2799 = vpop.f32.mrb[0].mxu0
      %v2800 = vadd.f32 0.0, %v2799
      %v2801 = vpop.f32.mrb[0].mxu0
      %2802 = vmatprep.mubr.f32.mxu0 0.0
      %2803 = vmatmul.mubr.f32.gmra.mrb[0].mxu0 %v2626
      %v2804 = vpop.f32.mrb[0].mxu0
      %v2805 = vadd.f32 0.0, %v2804
      %v2806 = vpop.f32.mrb[0].mxu0
      %2807 = vmatprep.mubr.f32.mxu0 0.0
      %2808 = vmatmul.mubr.f32.gmra.mrb[0].mxu0 %v2629
      %v2809 = vpop.f32.mrb[0].mxu0
      %v2810 = vadd.f32 0.0, %v2809
      %v2811 = vpop.f32.mrb[0].mxu0
      %2812 = vmatprep.mubr.f32.mxu0 0.0
      %2813 = vmatmul.mubr.f32.gmra.mrb[0].mxu0 %v2632
      %v2814 = vpop.f32.mrb[0].mxu0
      %v2815 = vadd.f32 0.0, %v2814
      %v2816 = vpop.f32.mrb[0].mxu0
      %2817 = vmatprep.mubr.f32.mxu0 0.0
      %2818 = vmatmul.mubr.f32.gmra.mrb[0].mxu0 %v2635
      %v2819 = vpop.f32.mrb[0].mxu0
      %v2820 = vadd.f32 0.0, %v2819
      %v2821 = vpop.f32.mrb[0].mxu0
      %2822 = vmatprep.mubr.f32.mxu0 0.0
      %2823 = vmatmul.mubr.f32.gmra.mrb[0].mxu0 %v2638
      %v2824 = vpop.f32.mrb[0].mxu0
      %v2825 = vadd.f32 0.0, %v2824
      %v2826 = vpop.f32.mrb[0].mxu0
      %2827 = vmatprep.mubr.f32.mxu0 0.0
      %2828 = vmatmul.mubr.f32.gmra.mrb[0].mxu0 %v2641
      %v2829 = vpop.f32.mrb[0].mxu0
      %v2830 = vadd.f32 0.0, %v2829
      %v2831 = vpop.f32.mrb[0].mxu0
      %2832 = vmatprep.mubr.f32.mxu0 0.0
      %2833 = vmatmul.mubr.f32.gmra.mrb[0].mxu0 %v2644
      %v2834 = vpop.f32.mrb[0].mxu0
      %v2835 = vadd.f32 0.0, %v2834
      %v2836 = vpop.f32.mrb[0].mxu0
      %2837 = vmatprep.mubr.f32.mxu0 0.0
      %2838 = vmatmul.mubr.f32.gmra.mrb[0].mxu0 %v2647
      %v2839 = vpop.f32.mrb[0].mxu0
      %v2840 = vadd.f32 0.0, %v2839
      %v2841 = vpop.f32.mrb[0].mxu0
      %2842 = vmatprep.mubr.f32.mxu0 0.0
      %2843 = vmatmul.mubr.f32.gmra.mrb[0].mxu0 %v2650
      %v2844 = vpop.f32.mrb[0].mxu0
      %v2845 = vadd.f32 0.0, %v2844
      %v2846 = vpop.f32.mrb[0].mxu0
      %2847 = vmatprep.mubr.f32.mxu0 0.0
      %2848 = vmatmul.mubr.f32.gmra.mrb[0].mxu0 %v2653
      %v2849 = vpop.f32.mrb[0].mxu0
      %v2850 = vadd.f32 0.0, %v2849
      %v2851 = vpop.f32.mrb[0].mxu0
      %2852 = vmatprep.mubr.f32.mxu0 0.0
      %2853 = vmatmul.mubr.f32.gmra.mrb[0].mxu0 %v2656
      %v2854 = vpop.f32.mrb[0].mxu0
      %v2855 = vadd.f32 0.0, %v2854
      %v2856 = vpop.f32.mrb[0].mxu0
      %2857 = vmatprep.mubr.f32.mxu0 0.0
      %2858 = vmatmul.mubr.f32.gmra.mrb[0].mxu0 %v2659
      %v2859 = vpop.f32.mrb[0].mxu0
      %v2860 = vadd.f32 0.0, %v2859
      %v2861 = vpop.f32.mrb[0].mxu0
      %2862 = vmatprep.mubr.f32.mxu0 0.0
      %2863 = vmatmul.mubr.f32.gmra.mrb[0].mxu0 %v2662
      %v2864 = vpop.f32.mrb[0].mxu0
      %v2865 = vadd.f32 0.0, %v2864
      %v2866 = vpop.f32.mrb[0].mxu0
      %2867 = vmatprep.mubr.f32.mxu0 0.0
      %2868 = vmatmul.mubr.f32.gmra.mrb[0].mxu0 %v2665
      %v2869 = vpop.f32.mrb[0].mxu0
      %v2870 = vadd.f32 0.0, %v2869
      %v2871 = vpop.f32.mrb[0].mxu0
      %2872 = vmatprep.mubr.f32.mxu0 0.0
      %2873 = vmatmul.mubr.f32.gmra.mrb[0].mxu0 %v2668
      %v2874 = vpop.f32.mrb[0].mxu0
      %v2875 = vadd.f32 0.0, %v2874
      %v2876 = vpop.f32.mrb[0].mxu0
      %2877 = vmatprep.mubr.f32.mxu0 0.0
      %2878 = vmatmul.mubr.f32.gmra.mrb[0].mxu0 %v2671
      %v2879 = vpop.f32.mrb[0].mxu0
      %v2880 = vadd.f32 0.0, %v2879
      %v2881 = vpop.f32.mrb[0].mxu0
      %2882 = vmatprep.mubr.f32.mxu0 0.0
      %2883 = vmatmul.mubr.f32.gmra.mrb[0].mxu0 %v2674
      %v2884 = vpop.f32.mrb[0].mxu0
      %v2885 = vadd.f32 0.0, %v2884
      %v2886 = vpop.f32.mrb[0].mxu0
      %2887 = vmatprep.mubr.f32.mxu0 0.0
      %2888 = vmatmul.mubr.f32.gmra.mrb[0].mxu0 %v2677
      %v2889 = vpop.f32.mrb[0].mxu0
      %v2890 = vadd.f32 0.0, %v2889
      %v2891 = vpop.f32.mrb[0].mxu0
      %2892 = vmatprep.mubr.f32.mxu0 0.0
      %2893 = vmatmul.mubr.f32.gmra.mrb[0].mxu0 %v2680
      %v2894 = vpop.f32.mrb[0].mxu0
      %v2895 = vadd.f32 0.0, %v2894
      %v2896 = vpop.f32.mrb[0].mxu0
      %2897 = vmatprep.mubr.f32.mxu0 0.0
      %2898 = vmatmul.mubr.f32.gmra.mrb[0].mxu0 %v2683
      %v2899 = vpop.f32.mrb[0].mxu0
      %v2900 = vadd.f32 0.0, %v2899
      %v2901 = vpop.f32.mrb[0].mxu0
      %2902 = vmatprep.mubr.f32.mxu0 0.0
      %2903 = vmatmul.mubr.f32.gmra.mrb[0].mxu0 %v2686
      %v2904 = vpop.f32.mrb[0].mxu0
      %v2905 = vadd.f32 0.0, %v2904
      %v2906 = vpop.f32.mrb[0].mxu0
      %2907 = vmatprep.mubr.f32.mxu0 0.0
      %2908 = vmatmul.mubr.f32.gmra.mrb[0].mxu0 %v2689
      %v2909 = vpop.f32.mrb[0].mxu0
      %v2910 = vadd.f32 0.0, %v2909
      %v2911 = vpop.f32.mrb[0].mxu0
      %2912 = vmatprep.mubr.f32.mxu0 0.0
      %2913 = vmatmul.mubr.f32.gmra.mrb[0].mxu0 %v2692
      %v2914 = vpop.f32.mrb[0].mxu0
      %v2915 = vadd.f32 0.0, %v2914
      %v2916 = vpop.f32.mrb[0].mxu0
      %2917 = vmatprep.mubr.f32.mxu0 0.0
      %2918 = vmatmul.mubr.f32.gmra.mrb[0].mxu0 %v2695
      %v2919 = vpop.f32.mrb[0].mxu0
      %v2920 = vadd.f32 0.0, %v2919
      %v2921 = vpop.f32.mrb[0].mxu0
      %2922 = vmatprep.mubr.f32.mxu0 0.0
      %2923 = vmatmul.mubr.f32.gmra.mrb[0].mxu0 %v2698
      %v2924 = vpop.f32.mrb[0].mxu0
      %v2925 = vadd.f32 0.0, %v2924
      %v2926 = vpop.f32.mrb[0].mxu0
      %2927 = vdwg.mxu0
      %v2928 = vadd.f32 %v2537, %v2770
      %v2929 = vadd.f32 %v2538, %v2775
      %v2930 = vadd.f32 %v2539, %v2780
      %v2931 = vadd.f32 %v2540, %v2785
      %v2932 = vadd.f32 %v2541, %v2790
      %v2933 = vadd.f32 %v2542, %v2795
      %v2934 = vadd.f32 %v2543, %v2800
      %v2935 = vadd.f32 %v2544, %v2805
      %v2936 = vadd.f32 %v2545, %v2810
      %v2937 = vadd.f32 %v2546, %v2815
      %v2938 = vadd.f32 %v2547, %v2820
      %v2939 = vadd.f32 %v2548, %v2825
      %v2940 = vadd.f32 %v2549, %v2830
      %v2941 = vadd.f32 %v2550, %v2835
      %v2942 = vadd.f32 %v2551, %v2840
      %v2943 = vadd.f32 %v2552, %v2845
      %v2944 = vadd.f32 %v2553, %v2850
      %v2945 = vadd.f32 %v2554, %v2855
      %v2946 = vadd.f32 %v2555, %v2860
      %v2947 = vadd.f32 %v2556, %v2865
      %v2948 = vadd.f32 %v2557, %v2870
      %v2949 = vadd.f32 %v2558, %v2875
      %v2950 = vadd.f32 %v2559, %v2880
      %v2951 = vadd.f32 %v2560, %v2885
      %v2952 = vadd.f32 %v2561, %v2890
      %v2953 = vadd.f32 %v2562, %v2895
      %v2954 = vadd.f32 %v2563, %v2900
      %v2955 = vadd.f32 %v2564, %v2905
      %v2956 = vadd.f32 %v2565, %v2910
      %v2957 = vadd.f32 %v2566, %v2915
      %v2958 = vadd.f32 %v2567, %v2920
      %v2959 = vadd.f32 %v2568, %v2925
      %v2960 = vld [vmem:[%s2569 + $0x8] sm:$0xff]
      %v2961 = vld [vmem:[%s2569 + $0x10] sm:$0xff]
      %v2962 = vld [vmem:[%s2569 + $0x28] sm:$0xff]
      %v2963 = vld [vmem:[%s2569 + $0x30] sm:$0xff]
      %v2964 = vld [vmem:[%s2569 + $0x48] sm:$0xff]
      %v2965 = vld [vmem:[%s2569 + $0x50] sm:$0xff]
      %v2966 = vld [vmem:[%s2569 + $0x68] sm:$0xff]
      %v2967 = vld [vmem:[%s2569 + $0x70] sm:$0xff]
      %v2968 = vld [vmem:[%s2569 + $0x88] sm:$0xff]
      %v2969 = vld [vmem:[%s2569 + $0x90] sm:$0xff]
      %v2970 = vld [vmem:[%s2569 + $0xa8] sm:$0xff]
      %v2971 = vld [vmem:[%s2569 + $0xb0] sm:$0xff]
      %v2972 = vld [vmem:[%s2569 + $0xc8] sm:$0xff]
      %v2973 = vld [vmem:[%s2569 + $0xd0] sm:$0xff]
      %v2974 = vld [vmem:[%s2569 + $0xe8] sm:$0xff]
      %v2975 = vld [vmem:[%s2569 + $0xf0] sm:$0xff]
      %v2976 = vld [vmem:[%s2569 + $0x108] sm:$0xff]
      %v2977 = vld [vmem:[%s2569 + $0x110] sm:$0xff]
      %v2978 = vld [vmem:[%s2569 + $0x128] sm:$0xff]
      %v2979 = vld [vmem:[%s2569 + $0x130] sm:$0xff]
      %v2980 = vld [vmem:[%s2569 + $0x148] sm:$0xff]
      %v2981 = vld [vmem:[%s2569 + $0x150] sm:$0xff]
      %v2982 = vld [vmem:[%s2569 + $0x168] sm:$0xff]
      %v2983 = vld [vmem:[%s2569 + $0x170] sm:$0xff]
      %v2984 = vld [vmem:[%s2569 + $0x188] sm:$0xff]
      %v2985 = vld [vmem:[%s2569 + $0x190] sm:$0xff]
      %v2986 = vld [vmem:[%s2569 + $0x1a8] sm:$0xff]
      %v2987 = vld [vmem:[%s2569 + $0x1b0] sm:$0xff]
      %v2988 = vld [vmem:[%s2569 + $0x1c8] sm:$0xff]
      %v2989 = vld [vmem:[%s2569 + $0x1d0] sm:$0xff]
      %v2990 = vld [vmem:[%s2569 + $0x1e8] sm:$0xff]
      %v2991 = vld [vmem:[%s2569 + $0x1f0] sm:$0xff]
      %s2992 = scalar_lea.vmem %s1, 28
      %v2993 = vld [vmem:[%s2992] sm:$0xf]
      %v2995 = vsel %vm214, %v2960, 0
      %v2998 = vsel %vm214, %v2961, 0
      %v3001 = vsel %vm214, %v2962, 0
      %v3004 = vsel %vm214, %v2963, 0
      %v3007 = vsel %vm214, %v2964, 0
      %v3010 = vsel %vm214, %v2965, 0
      %v3013 = vsel %vm214, %v2966, 0
      %v3016 = vsel %vm214, %v2967, 0
      %v3019 = vsel %vm214, %v2968, 0
      %v3022 = vsel %vm214, %v2969, 0
      %v3025 = vsel %vm214, %v2970, 0
      %v3028 = vsel %vm214, %v2971, 0
      %v3031 = vsel %vm214, %v2972, 0
      %v3034 = vsel %vm214, %v2973, 0
      %v3037 = vsel %vm214, %v2974, 0
      %v3040 = vsel %vm214, %v2975, 0
      %v3043 = vsel %vm214, %v2976, 0
      %v3046 = vsel %vm214, %v2977, 0
      %v3049 = vsel %vm214, %v2978, 0
      %v3052 = vsel %vm214, %v2979, 0
      %v3055 = vsel %vm214, %v2980, 0
      %v3058 = vsel %vm214, %v2981, 0
      %v3061 = vsel %vm214, %v2982, 0
      %v3064 = vsel %vm214, %v2983, 0
      %v3067 = vsel %vm214, %v2984, 0
      %v3070 = vsel %vm214, %v2985, 0
      %v3073 = vsel %vm214, %v2986, 0
      %v3076 = vsel %vm214, %v2987, 0
      %v3079 = vsel %vm214, %v2988, 0
      %v3082 = vsel %vm214, %v2989, 0
      %v3085 = vsel %vm214, %v2990, 0
      %v3088 = vsel %vm214, %v2991, 0
      %v3091 = vsel %vm456, %v2993, 0
      %3093 = vmatprep.subr.mxu0 0.0
      %3094 = vmatpush1.msra.mxu0 %v3091
      %3095 = vmatprep.subr.mxu0 0.0
      %3096 = vmatpush1.msra.mxu0 0.0
      %3097 = vmatprep.subr.mxu0 0.0
      %3098 = vmatpush1.msra.mxu0 0.0
      %3099 = vmatprep.subr.mxu0 0.0
      %3100 = vmatpush1.msra.mxu0 0.0
      %3101 = vmatprep.subr.mxu0 0.0
      %3102 = vmatpush1.msra.mxu0 0.0
      %3103 = vmatprep.subr.mxu0 0.0
      %3104 = vmatpush1.msra.mxu0 0.0
      %3105 = vmatprep.subr.mxu0 0.0
      %3106 = vmatpush1.msra.mxu0 0.0
      %3107 = vmatprep.subr.mxu0 0.0
      %3108 = vmatpush1.msra.mxu0 0.0
      %3109 = vmatprep.subr.mxu0 0.0
      %3110 = vmatpush1.msra.mxu0 0.0
      %3111 = vmatprep.subr.mxu0 0.0
      %3112 = vmatpush1.msra.mxu0 0.0
      %3113 = vmatprep.subr.mxu0 0.0
      %3114 = vmatpush1.msra.mxu0 0.0
      %3115 = vmatprep.subr.mxu0 0.0
      %3116 = vmatpush1.msra.mxu0 0.0
      %3117 = vmatprep.subr.mxu0 0.0
      %3118 = vmatpush1.msra.mxu0 0.0
      %3119 = vmatprep.subr.mxu0 0.0
      %3120 = vmatpush1.msra.mxu0 0.0
      %3121 = vmatprep.subr.mxu0 0.0
      %3122 = vmatpush1.msra.mxu0 0.0
      %3123 = vmatprep.subr.mxu0 0.0
      %3124 = vmatpush1.msra.mxu0 0.0
      %3125 = vmatprep.subr.mxu0 0.0
      %3126 = vmatpush1.msra.mxu0 0.0
      %3127 = vmatprep.subr.mxu0 0.0
      %3128 = vmatpush1.msra.mxu0 0.0
      %3129 = vmatprep.subr.mxu0 0.0
      %3130 = vmatpush1.msra.mxu0 0.0
      %3131 = vmatprep.subr.mxu0 0.0
      %3132 = vmatpush1.msra.mxu0 0.0
      %3133 = vmatprep.subr.mxu0 0.0
      %3134 = vmatpush1.msra.mxu0 0.0
      %3135 = vmatprep.subr.mxu0 0.0
      %3136 = vmatpush1.msra.mxu0 0.0
      %3137 = vmatprep.subr.mxu0 0.0
      %3138 = vmatpush1.msra.mxu0 0.0
      %3139 = vmatprep.subr.mxu0 0.0
      %3140 = vmatpush1.msra.mxu0 0.0
      %3141 = vmatprep.subr.mxu0 0.0
      %3142 = vmatpush1.msra.mxu0 0.0
      %3143 = vmatprep.subr.mxu0 0.0
      %3144 = vmatpush1.msra.mxu0 0.0
      %3145 = vmatprep.subr.mxu0 0.0
      %3146 = vmatpush1.msra.mxu0 0.0
      %3147 = vmatprep.subr.mxu0 0.0
      %3148 = vmatpush1.msra.mxu0 0.0
      %3149 = vmatprep.subr.mxu0 0.0
      %3150 = vmatpush1.msra.mxu0 0.0
      %3151 = vmatprep.subr.mxu0 0.0
      %3152 = vmatpush1.msra.mxu0 0.0
      %3153 = vmatprep.subr.mxu0 0.0
      %3154 = vmatpush1.msra.mxu0 0.0
      %3155 = vmatprep.subr.mxu0 0.0
      %3156 = vmatpush1.msra.mxu0 0.0
      %3157 = vmatprep.mubr.f32.mxu0 0.0
      %3158 = vmatmul.mubr.f32.gmra.mrb[0].mxu0 %v2995
      %v3159 = vpop.f32.mrb[0].mxu0
      %v3160 = vadd.f32 0.0, %v3159
      %v3161 = vpop.f32.mrb[0].mxu0
      %3162 = vmatprep.mubr.f32.mxu0 0.0
      %3163 = vmatmul.mubr.f32.gmra.mrb[0].mxu0 %v2998
      %v3164 = vpop.f32.mrb[0].mxu0
      %v3165 = vadd.f32 0.0, %v3164
      %v3166 = vpop.f32.mrb[0].mxu0
      %3167 = vmatprep.mubr.f32.mxu0 0.0
      %3168 = vmatmul.mubr.f32.gmra.mrb[0].mxu0 %v3001
      %v3169 = vpop.f32.mrb[0].mxu0
      %v3170 = vadd.f32 0.0, %v3169
      %v3171 = vpop.f32.mrb[0].mxu0
      %3172 = vmatprep.mubr.f32.mxu0 0.0
      %3173 = vmatmul.mubr.f32.gmra.mrb[0].mxu0 %v3004
      %v3174 = vpop.f32.mrb[0].mxu0
      %v3175 = vadd.f32 0.0, %v3174
      %v3176 = vpop.f32.mrb[0].mxu0
      %3177 = vmatprep.mubr.f32.mxu0 0.0
      %3178 = vmatmul.mubr.f32.gmra.mrb[0].mxu0 %v3007
      %v3179 = vpop.f32.mrb[0].mxu0
      %v3180 = vadd.f32 0.0, %v3179
      %v3181 = vpop.f32.mrb[0].mxu0
      %3182 = vmatprep.mubr.f32.mxu0 0.0
      %3183 = vmatmul.mubr.f32.gmra.mrb[0].mxu0 %v3010
      %v3184 = vpop.f32.mrb[0].mxu0
      %v3185 = vadd.f32 0.0, %v3184
      %v3186 = vpop.f32.mrb[0].mxu0
      %3187 = vmatprep.mubr.f32.mxu0 0.0
      %3188 = vmatmul.mubr.f32.gmra.mrb[0].mxu0 %v3013
      %v3189 = vpop.f32.mrb[0].mxu0
      %v3190 = vadd.f32 0.0, %v3189
      %v3191 = vpop.f32.mrb[0].mxu0
      %3192 = vmatprep.mubr.f32.mxu0 0.0
      %3193 = vmatmul.mubr.f32.gmra.mrb[0].mxu0 %v3016
      %v3194 = vpop.f32.mrb[0].mxu0
      %v3195 = vadd.f32 0.0, %v3194
      %v3196 = vpop.f32.mrb[0].mxu0
      %3197 = vmatprep.mubr.f32.mxu0 0.0
      %3198 = vmatmul.mubr.f32.gmra.mrb[0].mxu0 %v3019
      %v3199 = vpop.f32.mrb[0].mxu0
      %v3200 = vadd.f32 0.0, %v3199
      %v3201 = vpop.f32.mrb[0].mxu0
      %3202 = vmatprep.mubr.f32.mxu0 0.0
      %3203 = vmatmul.mubr.f32.gmra.mrb[0].mxu0 %v3022
      %v3204 = vpop.f32.mrb[0].mxu0
      %v3205 = vadd.f32 0.0, %v3204
      %v3206 = vpop.f32.mrb[0].mxu0
      %3207 = vmatprep.mubr.f32.mxu0 0.0
      %3208 = vmatmul.mubr.f32.gmra.mrb[0].mxu0 %v3025
      %v3209 = vpop.f32.mrb[0].mxu0
      %v3210 = vadd.f32 0.0, %v3209
      %v3211 = vpop.f32.mrb[0].mxu0
      %3212 = vmatprep.mubr.f32.mxu0 0.0
      %3213 = vmatmul.mubr.f32.gmra.mrb[0].mxu0 %v3028
      %v3214 = vpop.f32.mrb[0].mxu0
      %v3215 = vadd.f32 0.0, %v3214
      %v3216 = vpop.f32.mrb[0].mxu0
      %3217 = vmatprep.mubr.f32.mxu0 0.0
      %3218 = vmatmul.mubr.f32.gmra.mrb[0].mxu0 %v3031
      %v3219 = vpop.f32.mrb[0].mxu0
      %v3220 = vadd.f32 0.0, %v3219
      %v3221 = vpop.f32.mrb[0].mxu0
      %3222 = vmatprep.mubr.f32.mxu0 0.0
      %3223 = vmatmul.mubr.f32.gmra.mrb[0].mxu0 %v3034
      %v3224 = vpop.f32.mrb[0].mxu0
      %v3225 = vadd.f32 0.0, %v3224
      %v3226 = vpop.f32.mrb[0].mxu0
      %3227 = vmatprep.mubr.f32.mxu0 0.0
      %3228 = vmatmul.mubr.f32.gmra.mrb[0].mxu0 %v3037
      %v3229 = vpop.f32.mrb[0].mxu0
      %v3230 = vadd.f32 0.0, %v3229
      %v3231 = vpop.f32.mrb[0].mxu0
      %3232 = vmatprep.mubr.f32.mxu0 0.0
      %3233 = vmatmul.mubr.f32.gmra.mrb[0].mxu0 %v3040
      %v3234 = vpop.f32.mrb[0].mxu0
      %v3235 = vadd.f32 0.0, %v3234
      %v3236 = vpop.f32.mrb[0].mxu0
      %3237 = vmatprep.mubr.f32.mxu0 0.0
      %3238 = vmatmul.mubr.f32.gmra.mrb[0].mxu0 %v3043
      %v3239 = vpop.f32.mrb[0].mxu0
      %v3240 = vadd.f32 0.0, %v3239
      %v3241 = vpop.f32.mrb[0].mxu0
      %3242 = vmatprep.mubr.f32.mxu0 0.0
      %3243 = vmatmul.mubr.f32.gmra.mrb[0].mxu0 %v3046
      %v3244 = vpop.f32.mrb[0].mxu0
      %v3245 = vadd.f32 0.0, %v3244
      %v3246 = vpop.f32.mrb[0].mxu0
      %3247 = vmatprep.mubr.f32.mxu0 0.0
      %3248 = vmatmul.mubr.f32.gmra.mrb[0].mxu0 %v3049
      %v3249 = vpop.f32.mrb[0].mxu0
      %v3250 = vadd.f32 0.0, %v3249
      %v3251 = vpop.f32.mrb[0].mxu0
      %3252 = vmatprep.mubr.f32.mxu0 0.0
      %3253 = vmatmul.mubr.f32.gmra.mrb[0].mxu0 %v3052
      %v3254 = vpop.f32.mrb[0].mxu0
      %v3255 = vadd.f32 0.0, %v3254
      %v3256 = vpop.f32.mrb[0].mxu0
      %3257 = vmatprep.mubr.f32.mxu0 0.0
      %3258 = vmatmul.mubr.f32.gmra.mrb[0].mxu0 %v3055
      %v3259 = vpop.f32.mrb[0].mxu0
      %v3260 = vadd.f32 0.0, %v3259
      %v3261 = vpop.f32.mrb[0].mxu0
      %3262 = vmatprep.mubr.f32.mxu0 0.0
      %3263 = vmatmul.mubr.f32.gmra.mrb[0].mxu0 %v3058
      %v3264 = vpop.f32.mrb[0].mxu0
      %v3265 = vadd.f32 0.0, %v3264
      %v3266 = vpop.f32.mrb[0].mxu0
      %3267 = vmatprep.mubr.f32.mxu0 0.0
      %3268 = vmatmul.mubr.f32.gmra.mrb[0].mxu0 %v3061
      %v3269 = vpop.f32.mrb[0].mxu0
      %v3270 = vadd.f32 0.0, %v3269
      %v3271 = vpop.f32.mrb[0].mxu0
      %3272 = vmatprep.mubr.f32.mxu0 0.0
      %3273 = vmatmul.mubr.f32.gmra.mrb[0].mxu0 %v3064
      %v3274 = vpop.f32.mrb[0].mxu0
      %v3275 = vadd.f32 0.0, %v3274
      %v3276 = vpop.f32.mrb[0].mxu0
      %3277 = vmatprep.mubr.f32.mxu0 0.0
      %3278 = vmatmul.mubr.f32.gmra.mrb[0].mxu0 %v3067
      %v3279 = vpop.f32.mrb[0].mxu0
      %v3280 = vadd.f32 0.0, %v3279
      %v3281 = vpop.f32.mrb[0].mxu0
      %3282 = vmatprep.mubr.f32.mxu0 0.0
      %3283 = vmatmul.mubr.f32.gmra.mrb[0].mxu0 %v3070
      %v3284 = vpop.f32.mrb[0].mxu0
      %v3285 = vadd.f32 0.0, %v3284
      %v3286 = vpop.f32.mrb[0].mxu0
      %3287 = vmatprep.mubr.f32.mxu0 0.0
      %3288 = vmatmul.mubr.f32.gmra.mrb[0].mxu0 %v3073
      %v3289 = vpop.f32.mrb[0].mxu0
      %v3290 = vadd.f32 0.0, %v3289
      %v3291 = vpop.f32.mrb[0].mxu0
      %3292 = vmatprep.mubr.f32.mxu0 0.0
      %3293 = vmatmul.mubr.f32.gmra.mrb[0].mxu0 %v3076
      %v3294 = vpop.f32.mrb[0].mxu0
      %v3295 = vadd.f32 0.0, %v3294
      %v3296 = vpop.f32.mrb[0].mxu0
      %3297 = vmatprep.mubr.f32.mxu0 0.0
      %3298 = vmatmul.mubr.f32.gmra.mrb[0].mxu0 %v3079
      %v3299 = vpop.f32.mrb[0].mxu0
      %v3300 = vadd.f32 0.0, %v3299
      %v3301 = vpop.f32.mrb[0].mxu0
      %3302 = vmatprep.mubr.f32.mxu0 0.0
      %3303 = vmatmul.mubr.f32.gmra.mrb[0].mxu0 %v3082
      %v3304 = vpop.f32.mrb[0].mxu0
      %v3305 = vadd.f32 0.0, %v3304
      %v3306 = vpop.f32.mrb[0].mxu0
      %3307 = vmatprep.mubr.f32.mxu0 0.0
      %3308 = vmatmul.mubr.f32.gmra.mrb[0].mxu0 %v3085
      %v3309 = vpop.f32.mrb[0].mxu0
      %v3310 = vadd.f32 0.0, %v3309
      %v3311 = vpop.f32.mrb[0].mxu0
      %3312 = vmatprep.mubr.f32.mxu0 0.0
      %3313 = vmatmul.mubr.f32.gmra.mrb[0].mxu0 %v3088
      %v3314 = vpop.f32.mrb[0].mxu0
      %v3315 = vadd.f32 0.0, %v3314
      %v3316 = vpop.f32.mrb[0].mxu0
      %3317 = vdwg.mxu0
      %v3318 = vadd.f32 %v2928, %v3160
      %v3319 = vadd.f32 %v2929, %v3165
      %v3320 = vadd.f32 %v2930, %v3170
      %v3321 = vadd.f32 %v2931, %v3175
      %v3322 = vadd.f32 %v2932, %v3180
      %v3323 = vadd.f32 %v2933, %v3185
      %v3324 = vadd.f32 %v2934, %v3190
      %v3325 = vadd.f32 %v2935, %v3195
      %v3326 = vadd.f32 %v2936, %v3200
      %v3327 = vadd.f32 %v2937, %v3205
      %v3328 = vadd.f32 %v2938, %v3210
      %v3329 = vadd.f32 %v2939, %v3215
      %v3330 = vadd.f32 %v2940, %v3220
      %v3331 = vadd.f32 %v2941, %v3225
      %v3332 = vadd.f32 %v2942, %v3230
      %v3333 = vadd.f32 %v2943, %v3235
      %v3334 = vadd.f32 %v2944, %v3240
      %v3335 = vadd.f32 %v2945, %v3245
      %v3336 = vadd.f32 %v2946, %v3250
      %v3337 = vadd.f32 %v2947, %v3255
      %v3338 = vadd.f32 %v2948, %v3260
      %v3339 = vadd.f32 %v2949, %v3265
      %v3340 = vadd.f32 %v2950, %v3270
      %v3341 = vadd.f32 %v2951, %v3275
      %v3342 = vadd.f32 %v2952, %v3280
      %v3343 = vadd.f32 %v2953, %v3285
      %v3344 = vadd.f32 %v2954, %v3290
      %v3345 = vadd.f32 %v2955, %v3295
      %v3346 = vadd.f32 %v2956, %v3300
      %v3347 = vadd.f32 %v2957, %v3305
      %v3348 = vadd.f32 %v2958, %v3310
      %v3349 = vadd.f32 %v2959, %v3315
      %v3350 = vld [vmem:[%s2569 + $0x9] sm:$0xff]
      %v3351 = vld [vmem:[%s2569 + $0x11] sm:$0xff]
      %v3352 = vld [vmem:[%s2569 + $0x29] sm:$0xff]
      %v3353 = vld [vmem:[%s2569 + $0x31] sm:$0xff]
      %v3354 = vld [vmem:[%s2569 + $0x49] sm:$0xff]
      %v3355 = vld [vmem:[%s2569 + $0x51] sm:$0xff]
      %v3356 = vld [vmem:[%s2569 + $0x69] sm:$0xff]
      %v3357 = vld [vmem:[%s2569 + $0x71] sm:$0xff]
      %v3358 = vld [vmem:[%s2569 + $0x89] sm:$0xff]
      %v3359 = vld [vmem:[%s2569 + $0x91] sm:$0xff]
      %v3360 = vld [vmem:[%s2569 + $0xa9] sm:$0xff]
      %v3361 = vld [vmem:[%s2569 + $0xb1] sm:$0xff]
      %v3362 = vld [vmem:[%s2569 + $0xc9] sm:$0xff]
      %v3363 = vld [vmem:[%s2569 + $0xd1] sm:$0xff]
      %v3364 = vld [vmem:[%s2569 + $0xe9] sm:$0xff]
      %v3365 = vld [vmem:[%s2569 + $0xf1] sm:$0xff]
      %v3366 = vld [vmem:[%s2569 + $0x109] sm:$0xff]
      %v3367 = vld [vmem:[%s2569 + $0x111] sm:$0xff]
      %v3368 = vld [vmem:[%s2569 + $0x129] sm:$0xff]
      %v3369 = vld [vmem:[%s2569 + $0x131] sm:$0xff]
      %v3370 = vld [vmem:[%s2569 + $0x149] sm:$0xff]
      %v3371 = vld [vmem:[%s2569 + $0x151] sm:$0xff]
      %v3372 = vld [vmem:[%s2569 + $0x169] sm:$0xff]
      %v3373 = vld [vmem:[%s2569 + $0x171] sm:$0xff]
      %v3374 = vld [vmem:[%s2569 + $0x189] sm:$0xff]
      %v3375 = vld [vmem:[%s2569 + $0x191] sm:$0xff]
      %v3376 = vld [vmem:[%s2569 + $0x1a9] sm:$0xff]
      %v3377 = vld [vmem:[%s2569 + $0x1b1] sm:$0xff]
      %v3378 = vld [vmem:[%s2569 + $0x1c9] sm:$0xff]
      %v3379 = vld [vmem:[%s2569 + $0x1d1] sm:$0xff]
      %v3380 = vld [vmem:[%s2569 + $0x1e9] sm:$0xff]
      %v3381 = vld [vmem:[%s2569 + $0x1f1] sm:$0xff]
      %s3382 = scalar_lea.vmem %s1, 32
      %v3383 = vld [vmem:[%s3382] sm:$0xf]
      %v3385 = vsel %vm214, %v3350, 0
      %v3388 = vsel %vm214, %v3351, 0
      %v3391 = vsel %vm214, %v3352, 0
      %v3394 = vsel %vm214, %v3353, 0
      %v3397 = vsel %vm214, %v3354, 0
      %v3400 = vsel %vm214, %v3355, 0
      %v3403 = vsel %vm214, %v3356, 0
      %v3406 = vsel %vm214, %v3357, 0
      %v3409 = vsel %vm214, %v3358, 0
      %v3412 = vsel %vm214, %v3359, 0
      %v3415 = vsel %vm214, %v3360, 0
      %v3418 = vsel %vm214, %v3361, 0
      %v3421 = vsel %vm214, %v3362, 0
      %v3424 = vsel %vm214, %v3363, 0
      %v3427 = vsel %vm214, %v3364, 0
      %v3430 = vsel %vm214, %v3365, 0
      %v3433 = vsel %vm214, %v3366, 0
      %v3436 = vsel %vm214, %v3367, 0
      %v3439 = vsel %vm214, %v3368, 0
      %v3442 = vsel %vm214, %v3369, 0
      %v3445 = vsel %vm214, %v3370, 0
      %v3448 = vsel %vm214, %v3371, 0
      %v3451 = vsel %vm214, %v3372, 0
      %v3454 = vsel %vm214, %v3373, 0
      %v3457 = vsel %vm214, %v3374, 0
      %v3460 = vsel %vm214, %v3375, 0
      %v3463 = vsel %vm214, %v3376, 0
      %v3466 = vsel %vm214, %v3377, 0
      %v3469 = vsel %vm214, %v3378, 0
      %v3472 = vsel %vm214, %v3379, 0
      %v3475 = vsel %vm214, %v3380, 0
      %v3478 = vsel %vm214, %v3381, 0
      %v3481 = vsel %vm456, %v3383, 0
      %3483 = vmatprep.subr.mxu0 0.0
      %3484 = vmatpush1.msra.mxu0 %v3481
      %3485 = vmatprep.subr.mxu0 0.0
      %3486 = vmatpush1.msra.mxu0 0.0
      %3487 = vmatprep.subr.mxu0 0.0
      %3488 = vmatpush1.msra.mxu0 0.0
      %3489 = vmatprep.subr.mxu0 0.0
      %3490 = vmatpush1.msra.mxu0 0.0
      %3491 = vmatprep.subr.mxu0 0.0
      %3492 = vmatpush1.msra.mxu0 0.0
      %3493 = vmatprep.subr.mxu0 0.0
      %3494 = vmatpush1.msra.mxu0 0.0
      %3495 = vmatprep.subr.mxu0 0.0
      %3496 = vmatpush1.msra.mxu0 0.0
      %3497 = vmatprep.subr.mxu0 0.0
      %3498 = vmatpush1.msra.mxu0 0.0
      %3499 = vmatprep.subr.mxu0 0.0
      %3500 = vmatpush1.msra.mxu0 0.0
      %3501 = vmatprep.subr.mxu0 0.0
      %3502 = vmatpush1.msra.mxu0 0.0
      %3503 = vmatprep.subr.mxu0 0.0
      %3504 = vmatpush1.msra.mxu0 0.0
      %3505 = vmatprep.subr.mxu0 0.0
      %3506 = vmatpush1.msra.mxu0 0.0
      %3507 = vmatprep.subr.mxu0 0.0
      %3508 = vmatpush1.msra.mxu0 0.0
      %3509 = vmatprep.subr.mxu0 0.0
      %3510 = vmatpush1.msra.mxu0 0.0
      %3511 = vmatprep.subr.mxu0 0.0
      %3512 = vmatpush1.msra.mxu0 0.0
      %3513 = vmatprep.subr.mxu0 0.0
      %3514 = vmatpush1.msra.mxu0 0.0
      %3515 = vmatprep.subr.mxu0 0.0
      %3516 = vmatpush1.msra.mxu0 0.0
      %3517 = vmatprep.subr.mxu0 0.0
      %3518 = vmatpush1.msra.mxu0 0.0
      %3519 = vmatprep.subr.mxu0 0.0
      %3520 = vmatpush1.msra.mxu0 0.0
      %3521 = vmatprep.subr.mxu0 0.0
      %3522 = vmatpush1.msra.mxu0 0.0
      %3523 = vmatprep.subr.mxu0 0.0
      %3524 = vmatpush1.msra.mxu0 0.0
      %3525 = vmatprep.subr.mxu0 0.0
      %3526 = vmatpush1.msra.mxu0 0.0
      %3527 = vmatprep.subr.mxu0 0.0
      %3528 = vmatpush1.msra.mxu0 0.0
      %3529 = vmatprep.subr.mxu0 0.0
      %3530 = vmatpush1.msra.mxu0 0.0
      %3531 = vmatprep.subr.mxu0 0.0
      %3532 = vmatpush1.msra.mxu0 0.0
      %3533 = vmatprep.subr.mxu0 0.0
      %3534 = vmatpush1.msra.mxu0 0.0
      %3535 = vmatprep.subr.mxu0 0.0
      %3536 = vmatpush1.msra.mxu0 0.0
      %3537 = vmatprep.subr.mxu0 0.0
      %3538 = vmatpush1.msra.mxu0 0.0
      %3539 = vmatprep.subr.mxu0 0.0
      %3540 = vmatpush1.msra.mxu0 0.0
      %3541 = vmatprep.subr.mxu0 0.0
      %3542 = vmatpush1.msra.mxu0 0.0
      %3543 = vmatprep.subr.mxu0 0.0
      %3544 = vmatpush1.msra.mxu0 0.0
      %3545 = vmatprep.subr.mxu0 0.0
      %3546 = vmatpush1.msra.mxu0 0.0
      %3547 = vmatprep.mubr.f32.mxu0 0.0
      %3548 = vmatmul.mubr.f32.gmra.mrb[0].mxu0 %v3385
      %v3549 = vpop.f32.mrb[0].mxu0
      %v3550 = vadd.f32 0.0, %v3549
      %v3551 = vpop.f32.mrb[0].mxu0
      %3552 = vmatprep.mubr.f32.mxu0 0.0
      %3553 = vmatmul.mubr.f32.gmra.mrb[0].mxu0 %v3388
      %v3554 = vpop.f32.mrb[0].mxu0
      %v3555 = vadd.f32 0.0, %v3554
      %v3556 = vpop.f32.mrb[0].mxu0
      %3557 = vmatprep.mubr.f32.mxu0 0.0
      %3558 = vmatmul.mubr.f32.gmra.mrb[0].mxu0 %v3391
      %v3559 = vpop.f32.mrb[0].mxu0
      %v3560 = vadd.f32 0.0, %v3559
      %v3561 = vpop.f32.mrb[0].mxu0
      %3562 = vmatprep.mubr.f32.mxu0 0.0
      %3563 = vmatmul.mubr.f32.gmra.mrb[0].mxu0 %v3394
      %v3564 = vpop.f32.mrb[0].mxu0
      %v3565 = vadd.f32 0.0, %v3564
      %v3566 = vpop.f32.mrb[0].mxu0
      %3567 = vmatprep.mubr.f32.mxu0 0.0
      %3568 = vmatmul.mubr.f32.gmra.mrb[0].mxu0 %v3397
      %v3569 = vpop.f32.mrb[0].mxu0
      %v3570 = vadd.f32 0.0, %v3569
      %v3571 = vpop.f32.mrb[0].mxu0
      %3572 = vmatprep.mubr.f32.mxu0 0.0
      %3573 = vmatmul.mubr.f32.gmra.mrb[0].mxu0 %v3400
      %v3574 = vpop.f32.mrb[0].mxu0
      %v3575 = vadd.f32 0.0, %v3574
      %v3576 = vpop.f32.mrb[0].mxu0
      %3577 = vmatprep.mubr.f32.mxu0 0.0
      %3578 = vmatmul.mubr.f32.gmra.mrb[0].mxu0 %v3403
      %v3579 = vpop.f32.mrb[0].mxu0
      %v3580 = vadd.f32 0.0, %v3579
      %v3581 = vpop.f32.mrb[0].mxu0
      %3582 = vmatprep.mubr.f32.mxu0 0.0
      %3583 = vmatmul.mubr.f32.gmra.mrb[0].mxu0 %v3406
      %v3584 = vpop.f32.mrb[0].mxu0
      %v3585 = vadd.f32 0.0, %v3584
      %v3586 = vpop.f32.mrb[0].mxu0
      %3587 = vmatprep.mubr.f32.mxu0 0.0
      %3588 = vmatmul.mubr.f32.gmra.mrb[0].mxu0 %v3409
      %v3589 = vpop.f32.mrb[0].mxu0
      %v3590 = vadd.f32 0.0, %v3589
      %v3591 = vpop.f32.mrb[0].mxu0
      %3592 = vmatprep.mubr.f32.mxu0 0.0
      %3593 = vmatmul.mubr.f32.gmra.mrb[0].mxu0 %v3412
      %v3594 = vpop.f32.mrb[0].mxu0
      %v3595 = vadd.f32 0.0, %v3594
      %v3596 = vpop.f32.mrb[0].mxu0
      %3597 = vmatprep.mubr.f32.mxu0 0.0
      %3598 = vmatmul.mubr.f32.gmra.mrb[0].mxu0 %v3415
      %v3599 = vpop.f32.mrb[0].mxu0
      %v3600 = vadd.f32 0.0, %v3599
      %v3601 = vpop.f32.mrb[0].mxu0
      %3602 = vmatprep.mubr.f32.mxu0 0.0
      %3603 = vmatmul.mubr.f32.gmra.mrb[0].mxu0 %v3418
      %v3604 = vpop.f32.mrb[0].mxu0
      %v3605 = vadd.f32 0.0, %v3604
      %v3606 = vpop.f32.mrb[0].mxu0
      %3607 = vmatprep.mubr.f32.mxu0 0.0
      %3608 = vmatmul.mubr.f32.gmra.mrb[0].mxu0 %v3421
      %v3609 = vpop.f32.mrb[0].mxu0
      %v3610 = vadd.f32 0.0, %v3609
      %v3611 = vpop.f32.mrb[0].mxu0
      %3612 = vmatprep.mubr.f32.mxu0 0.0
      %3613 = vmatmul.mubr.f32.gmra.mrb[0].mxu0 %v3424
      %v3614 = vpop.f32.mrb[0].mxu0
      %v3615 = vadd.f32 0.0, %v3614
      %v3616 = vpop.f32.mrb[0].mxu0
      %3617 = vmatprep.mubr.f32.mxu0 0.0
      %3618 = vmatmul.mubr.f32.gmra.mrb[0].mxu0 %v3427
      %v3619 = vpop.f32.mrb[0].mxu0
      %v3620 = vadd.f32 0.0, %v3619
      %v3621 = vpop.f32.mrb[0].mxu0
      %3622 = vmatprep.mubr.f32.mxu0 0.0
      %3623 = vmatmul.mubr.f32.gmra.mrb[0].mxu0 %v3430
      %v3624 = vpop.f32.mrb[0].mxu0
      %v3625 = vadd.f32 0.0, %v3624
      %v3626 = vpop.f32.mrb[0].mxu0
      %3627 = vmatprep.mubr.f32.mxu0 0.0
      %3628 = vmatmul.mubr.f32.gmra.mrb[0].mxu0 %v3433
      %v3629 = vpop.f32.mrb[0].mxu0
      %v3630 = vadd.f32 0.0, %v3629
      %v3631 = vpop.f32.mrb[0].mxu0
      %3632 = vmatprep.mubr.f32.mxu0 0.0
      %3633 = vmatmul.mubr.f32.gmra.mrb[0].mxu0 %v3436
      %v3634 = vpop.f32.mrb[0].mxu0
      %v3635 = vadd.f32 0.0, %v3634
      %v3636 = vpop.f32.mrb[0].mxu0
      %3637 = vmatprep.mubr.f32.mxu0 0.0
      %3638 = vmatmul.mubr.f32.gmra.mrb[0].mxu0 %v3439
      %v3639 = vpop.f32.mrb[0].mxu0
      %v3640 = vadd.f32 0.0, %v3639
      %v3641 = vpop.f32.mrb[0].mxu0
      %3642 = vmatprep.mubr.f32.mxu0 0.0
      %3643 = vmatmul.mubr.f32.gmra.mrb[0].mxu0 %v3442
      %v3644 = vpop.f32.mrb[0].mxu0
      %v3645 = vadd.f32 0.0, %v3644
      %v3646 = vpop.f32.mrb[0].mxu0
      %3647 = vmatprep.mubr.f32.mxu0 0.0
      %3648 = vmatmul.mubr.f32.gmra.mrb[0].mxu0 %v3445
      %v3649 = vpop.f32.mrb[0].mxu0
      %v3650 = vadd.f32 0.0, %v3649
      %v3651 = vpop.f32.mrb[0].mxu0
      %3652 = vmatprep.mubr.f32.mxu0 0.0
      %3653 = vmatmul.mubr.f32.gmra.mrb[0].mxu0 %v3448
      %v3654 = vpop.f32.mrb[0].mxu0
      %v3655 = vadd.f32 0.0, %v3654
      %v3656 = vpop.f32.mrb[0].mxu0
      %3657 = vmatprep.mubr.f32.mxu0 0.0
      %3658 = vmatmul.mubr.f32.gmra.mrb[0].mxu0 %v3451
      %v3659 = vpop.f32.mrb[0].mxu0
      %v3660 = vadd.f32 0.0, %v3659
      %v3661 = vpop.f32.mrb[0].mxu0
      %3662 = vmatprep.mubr.f32.mxu0 0.0
      %3663 = vmatmul.mubr.f32.gmra.mrb[0].mxu0 %v3454
      %v3664 = vpop.f32.mrb[0].mxu0
      %v3665 = vadd.f32 0.0, %v3664
      %v3666 = vpop.f32.mrb[0].mxu0
      %3667 = vmatprep.mubr.f32.mxu0 0.0
      %3668 = vmatmul.mubr.f32.gmra.mrb[0].mxu0 %v3457
      %v3669 = vpop.f32.mrb[0].mxu0
      %v3670 = vadd.f32 0.0, %v3669
      %v3671 = vpop.f32.mrb[0].mxu0
      %3672 = vmatprep.mubr.f32.mxu0 0.0
      %3673 = vmatmul.mubr.f32.gmra.mrb[0].mxu0 %v3460
      %v3674 = vpop.f32.mrb[0].mxu0
      %v3675 = vadd.f32 0.0, %v3674
      %v3676 = vpop.f32.mrb[0].mxu0
      %3677 = vmatprep.mubr.f32.mxu0 0.0
      %3678 = vmatmul.mubr.f32.gmra.mrb[0].mxu0 %v3463
      %v3679 = vpop.f32.mrb[0].mxu0
      %v3680 = vadd.f32 0.0, %v3679
      %v3681 = vpop.f32.mrb[0].mxu0
      %3682 = vmatprep.mubr.f32.mxu0 0.0
      %3683 = vmatmul.mubr.f32.gmra.mrb[0].mxu0 %v3466
      %v3684 = vpop.f32.mrb[0].mxu0
      %v3685 = vadd.f32 0.0, %v3684
      %v3686 = vpop.f32.mrb[0].mxu0
      %3687 = vmatprep.mubr.f32.mxu0 0.0
      %3688 = vmatmul.mubr.f32.gmra.mrb[0].mxu0 %v3469
      %v3689 = vpop.f32.mrb[0].mxu0
      %v3690 = vadd.f32 0.0, %v3689
      %v3691 = vpop.f32.mrb[0].mxu0
      %3692 = vmatprep.mubr.f32.mxu0 0.0
      %3693 = vmatmul.mubr.f32.gmra.mrb[0].mxu0 %v3472
      %v3694 = vpop.f32.mrb[0].mxu0
      %v3695 = vadd.f32 0.0, %v3694
      %v3696 = vpop.f32.mrb[0].mxu0
      %3697 = vmatprep.mubr.f32.mxu0 0.0
      %3698 = vmatmul.mubr.f32.gmra.mrb[0].mxu0 %v3475
      %v3699 = vpop.f32.mrb[0].mxu0
      %v3700 = vadd.f32 0.0, %v3699
      %v3701 = vpop.f32.mrb[0].mxu0
      %3702 = vmatprep.mubr.f32.mxu0 0.0
      %3703 = vmatmul.mubr.f32.gmra.mrb[0].mxu0 %v3478
      %v3704 = vpop.f32.mrb[0].mxu0
      %v3705 = vadd.f32 0.0, %v3704
      %v3706 = vpop.f32.mrb[0].mxu0
      %3707 = vdwg.mxu0
      %v3708 = vadd.f32 %v3318, %v3550
      %v3709 = vadd.f32 %v3319, %v3555
      %v3710 = vadd.f32 %v3320, %v3560
      %v3711 = vadd.f32 %v3321, %v3565
      %v3712 = vadd.f32 %v3322, %v3570
      %v3713 = vadd.f32 %v3323, %v3575
      %v3714 = vadd.f32 %v3324, %v3580
      %v3715 = vadd.f32 %v3325, %v3585
      %v3716 = vadd.f32 %v3326, %v3590
      %v3717 = vadd.f32 %v3327, %v3595
      %v3718 = vadd.f32 %v3328, %v3600
      %v3719 = vadd.f32 %v3329, %v3605
      %v3720 = vadd.f32 %v3330, %v3610
      %v3721 = vadd.f32 %v3331, %v3615
      %v3722 = vadd.f32 %v3332, %v3620
      %v3723 = vadd.f32 %v3333, %v3625
      %v3724 = vadd.f32 %v3334, %v3630
      %v3725 = vadd.f32 %v3335, %v3635
      %v3726 = vadd.f32 %v3336, %v3640
      %v3727 = vadd.f32 %v3337, %v3645
      %v3728 = vadd.f32 %v3338, %v3650
      %v3729 = vadd.f32 %v3339, %v3655
      %v3730 = vadd.f32 %v3340, %v3660
      %v3731 = vadd.f32 %v3341, %v3665
      %v3732 = vadd.f32 %v3342, %v3670
      %v3733 = vadd.f32 %v3343, %v3675
      %v3734 = vadd.f32 %v3344, %v3680
      %v3735 = vadd.f32 %v3345, %v3685
      %v3736 = vadd.f32 %v3346, %v3690
      %v3737 = vadd.f32 %v3347, %v3695
      %v3738 = vadd.f32 %v3348, %v3700
      %v3739 = vadd.f32 %v3349, %v3705
      %vm3740 = vcmask 64512
      %v3741 = vsel %vm3740, %v3708, 0.0
      %v3742 = vsel %vm3740, %v3709, 0.0
      %v3743 = vadd.f32 %v3741, %v3742
      %v3744 = vsel %vm3740, %v3710, 0.0
      %v3745 = vadd.f32 %v3743, %v3744
      %v3746 = vsel %vm3740, %v3711, 0.0
      %v3747 = vadd.f32 %v3745, %v3746
      %v3748 = vsel %vm3740, %v3712, 0.0
      %v3749 = vadd.f32 %v3747, %v3748
      %v3750 = vsel %vm3740, %v3713, 0.0
      %v3751 = vadd.f32 %v3749, %v3750
      %v3752 = vsel %vm3740, %v3714, 0.0
      %v3753 = vadd.f32 %v3751, %v3752
      %v3754 = vsel %vm3740, %v3715, 0.0
      %v3755 = vadd.f32 %v3753, %v3754
      %v3756 = vsel %vm3740, %v3716, 0.0
      %v3757 = vadd.f32 %v3755, %v3756
      %v3758 = vsel %vm3740, %v3717, 0.0
      %v3759 = vadd.f32 %v3757, %v3758
      %v3760 = vsel %vm3740, %v3718, 0.0
      %v3761 = vadd.f32 %v3759, %v3760
      %v3762 = vsel %vm3740, %v3719, 0.0
      %v3763 = vadd.f32 %v3761, %v3762
      %v3764 = vsel %vm3740, %v3720, 0.0
      %v3765 = vadd.f32 %v3763, %v3764
      %v3766 = vsel %vm3740, %v3721, 0.0
      %v3767 = vadd.f32 %v3765, %v3766
      %v3768 = vsel %vm3740, %v3722, 0.0
      %v3769 = vadd.f32 %v3767, %v3768
      %v3770 = vsel %vm3740, %v3723, 0.0
      %v3771 = vadd.f32 %v3769, %v3770
      %v3772 = vsel %vm3740, %v3724, 0.0
      %v3773 = vadd.f32 %v3771, %v3772
      %v3774 = vsel %vm3740, %v3725, 0.0
      %v3775 = vadd.f32 %v3773, %v3774
      %v3776 = vsel %vm3740, %v3726, 0.0
      %v3777 = vadd.f32 %v3775, %v3776
      %v3778 = vsel %vm3740, %v3727, 0.0
      %v3779 = vadd.f32 %v3777, %v3778
      %v3780 = vsel %vm3740, %v3728, 0.0
      %v3781 = vadd.f32 %v3779, %v3780
      %v3782 = vsel %vm3740, %v3729, 0.0
      %v3783 = vadd.f32 %v3781, %v3782
      %v3784 = vsel %vm3740, %v3730, 0.0
      %v3785 = vadd.f32 %v3783, %v3784
      %v3786 = vsel %vm3740, %v3731, 0.0
      %v3787 = vadd.f32 %v3785, %v3786
      %v3788 = vsel %vm3740, %v3732, 0.0
      %v3789 = vadd.f32 %v3787, %v3788
      %v3790 = vsel %vm3740, %v3733, 0.0
      %v3791 = vadd.f32 %v3789, %v3790
      %v3792 = vsel %vm3740, %v3734, 0.0
      %v3793 = vadd.f32 %v3791, %v3792
      %v3794 = vsel %vm3740, %v3735, 0.0
      %v3795 = vadd.f32 %v3793, %v3794
      %v3796 = vsel %vm3740, %v3736, 0.0
      %v3797 = vadd.f32 %v3795, %v3796
      %v3798 = vsel %vm3740, %v3737, 0.0
      %v3799 = vadd.f32 %v3797, %v3798
      %v3800 = vsel %vm3740, %v3738, 0.0
      %v3801 = vadd.f32 %v3799, %v3800
      %v3802 = vsel %vm3740, %v3739, 0.0
      %v3803 = vadd.f32 %v3801, %v3802
      %v3804 = vrot.slane %v3803, 4
      %v3805 = vadd.f32 %v3803, %v3804
      %v3806 = vrot.slane %v3805, 2
      %v3807 = vadd.f32 %v3805, %v3806
      %v3808 = vrot.slane %v3807, 1
      %v3809 = vadd.f32 %v3807, %v3808
      %v3810 = vmul.f32 %v3809, 0.00390625
      %v3811 = vsub.f32 %v3708, %v3810
      %v3812 = vsub.f32 %v3709, %v3810
      %v3813 = vsub.f32 %v3710, %v3810
      %v3814 = vsub.f32 %v3711, %v3810
      %v3815 = vsub.f32 %v3712, %v3810
      %v3816 = vsub.f32 %v3713, %v3810
      %v3817 = vsub.f32 %v3714, %v3810
      %v3818 = vsub.f32 %v3715, %v3810
      %v3819 = vsub.f32 %v3716, %v3810
      %v3820 = vsub.f32 %v3717, %v3810
      %v3821 = vsub.f32 %v3718, %v3810
      %v3822 = vsub.f32 %v3719, %v3810
      %v3823 = vsub.f32 %v3720, %v3810
      %v3824 = vsub.f32 %v3721, %v3810
      %v3825 = vsub.f32 %v3722, %v3810
      %v3826 = vsub.f32 %v3723, %v3810
      %v3827 = vsub.f32 %v3724, %v3810
      %v3828 = vsub.f32 %v3725, %v3810
      %v3829 = vsub.f32 %v3726, %v3810
      %v3830 = vsub.f32 %v3727, %v3810
      %v3831 = vsub.f32 %v3728, %v3810
      %v3832 = vsub.f32 %v3729, %v3810
      %v3833 = vsub.f32 %v3730, %v3810
      %v3834 = vsub.f32 %v3731, %v3810
      %v3835 = vsub.f32 %v3732, %v3810
      %v3836 = vsub.f32 %v3733, %v3810
      %v3837 = vsub.f32 %v3734, %v3810
      %v3838 = vsub.f32 %v3735, %v3810
      %v3839 = vsub.f32 %v3736, %v3810
      %v3840 = vsub.f32 %v3737, %v3810
      %v3841 = vsub.f32 %v3738, %v3810
      %v3842 = vsub.f32 %v3739, %v3810
      %v3843 = vmul.f32 %v3811, %v3811
      %v3844 = vmul.f32 %v3812, %v3812
      %v3845 = vmul.f32 %v3813, %v3813
      %v3846 = vmul.f32 %v3814, %v3814
      %v3847 = vmul.f32 %v3815, %v3815
      %v3848 = vmul.f32 %v3816, %v3816
      %v3849 = vmul.f32 %v3817, %v3817
      %v3850 = vmul.f32 %v3818, %v3818
      %v3851 = vmul.f32 %v3819, %v3819
      %v3852 = vmul.f32 %v3820, %v3820
      %v3853 = vmul.f32 %v3821, %v3821
      %v3854 = vmul.f32 %v3822, %v3822
      %v3855 = vmul.f32 %v3823, %v3823
      %v3856 = vmul.f32 %v3824, %v3824
      %v3857 = vmul.f32 %v3825, %v3825
      %v3858 = vmul.f32 %v3826, %v3826
      %v3859 = vmul.f32 %v3827, %v3827
      %v3860 = vmul.f32 %v3828, %v3828
      %v3861 = vmul.f32 %v3829, %v3829
      %v3862 = vmul.f32 %v3830, %v3830
      %v3863 = vmul.f32 %v3831, %v3831
      %v3864 = vmul.f32 %v3832, %v3832
      %v3865 = vmul.f32 %v3833, %v3833
      %v3866 = vmul.f32 %v3834, %v3834
      %v3867 = vmul.f32 %v3835, %v3835
      %v3868 = vmul.f32 %v3836, %v3836
      %v3869 = vmul.f32 %v3837, %v3837
      %v3870 = vmul.f32 %v3838, %v3838
      %v3871 = vmul.f32 %v3839, %v3839
      %v3872 = vmul.f32 %v3840, %v3840
      %v3873 = vmul.f32 %v3841, %v3841
      %v3874 = vmul.f32 %v3842, %v3842
      %v3875 = vsel %vm3740, %v3843, 0.0
      %v3876 = vsel %vm3740, %v3844, 0.0
      %v3877 = vadd.f32 %v3875, %v3876
      %v3878 = vsel %vm3740, %v3845, 0.0
      %v3879 = vadd.f32 %v3877, %v3878
      %v3880 = vsel %vm3740, %v3846, 0.0
      %v3881 = vadd.f32 %v3879, %v3880
      %v3882 = vsel %vm3740, %v3847, 0.0
      %v3883 = vadd.f32 %v3881, %v3882
      %v3884 = vsel %vm3740, %v3848, 0.0
      %v3885 = vadd.f32 %v3883, %v3884
      %v3886 = vsel %vm3740, %v3849, 0.0
      %v3887 = vadd.f32 %v3885, %v3886
      %v3888 = vsel %vm3740, %v3850, 0.0
      %v3889 = vadd.f32 %v3887, %v3888
      %v3890 = vsel %vm3740, %v3851, 0.0
      %v3891 = vadd.f32 %v3889, %v3890
      %v3892 = vsel %vm3740, %v3852, 0.0
      %v3893 = vadd.f32 %v3891, %v3892
      %v3894 = vsel %vm3740, %v3853, 0.0
      %v3895 = vadd.f32 %v3893, %v3894
      %v3896 = vsel %vm3740, %v3854, 0.0
      %v3897 = vadd.f32 %v3895, %v3896
      %v3898 = vsel %vm3740, %v3855, 0.0
      %v3899 = vadd.f32 %v3897, %v3898
      %v3900 = vsel %vm3740, %v3856, 0.0
      %v3901 = vadd.f32 %v3899, %v3900
      %v3902 = vsel %vm3740, %v3857, 0.0
      %v3903 = vadd.f32 %v3901, %v3902
      %v3904 = vsel %vm3740, %v3858, 0.0
      %v3905 = vadd.f32 %v3903, %v3904
      %v3906 = vsel %vm3740, %v3859, 0.0
      %v3907 = vadd.f32 %v3905, %v3906
      %v3908 = vsel %vm3740, %v3860, 0.0
      %v3909 = vadd.f32 %v3907, %v3908
      %v3910 = vsel %vm3740, %v3861, 0.0
      %v3911 = vadd.f32 %v3909, %v3910
      %v3912 = vsel %vm3740, %v3862, 0.0
      %v3913 = vadd.f32 %v3911, %v3912
      %v3914 = vsel %vm3740, %v3863, 0.0
      %v3915 = vadd.f32 %v3913, %v3914
      %v3916 = vsel %vm3740, %v3864, 0.0
      %v3917 = vadd.f32 %v3915, %v3916
      %v3918 = vsel %vm3740, %v3865, 0.0
      %v3919 = vadd.f32 %v3917, %v3918
      %v3920 = vsel %vm3740, %v3866, 0.0
      %v3921 = vadd.f32 %v3919, %v3920
      %v3922 = vsel %vm3740, %v3867, 0.0
      %v3923 = vadd.f32 %v3921, %v3922
      %v3924 = vsel %vm3740, %v3868, 0.0
      %v3925 = vadd.f32 %v3923, %v3924
      %v3926 = vsel %vm3740, %v3869, 0.0
      %v3927 = vadd.f32 %v3925, %v3926
      %v3928 = vsel %vm3740, %v3870, 0.0
      %v3929 = vadd.f32 %v3927, %v3928
      %v3930 = vsel %vm3740, %v3871, 0.0
      %v3931 = vadd.f32 %v3929, %v3930
      %v3932 = vsel %vm3740, %v3872, 0.0
      %v3933 = vadd.f32 %v3931, %v3932
      %v3934 = vsel %vm3740, %v3873, 0.0
      %v3935 = vadd.f32 %v3933, %v3934
      %v3936 = vsel %vm3740, %v3874, 0.0
      %v3937 = vadd.f32 %v3935, %v3936
      %v3938 = vrot.slane %v3937, 4
      %v3939 = vadd.f32 %v3937, %v3938
      %v3940 = vrot.slane %v3939, 2
      %v3941 = vadd.f32 %v3939, %v3940
      %v3942 = vrot.slane %v3941, 1
      %v3943 = vadd.f32 %v3941, %v3942
      %vm3944 = vcmask 57344
      %3945 = vst.msk [vmem:[%s181] sm:$0x1] %vm3944, %v3809
      %3946 = vst.msk [vmem:[%s181 + $0x1] sm:$0x1] %vm3944, %v3943
      %3947 = vst.msk [vmem:[%s177] sm:$0xff] %vm3740, %v3708
      %3948 = vst.msk [vmem:[%s177 + $0x8] sm:$0xff] %vm3740, %v3709
      %3949 = vst.msk [vmem:[%s177 + $0x10] sm:$0xff] %vm3740, %v3710
      %3950 = vst.msk [vmem:[%s177 + $0x18] sm:$0xff] %vm3740, %v3711
      %3951 = vst.msk [vmem:[%s177 + $0x20] sm:$0xff] %vm3740, %v3712
      %3952 = vst.msk [vmem:[%s177 + $0x28] sm:$0xff] %vm3740, %v3713
      %3953 = vst.msk [vmem:[%s177 + $0x30] sm:$0xff] %vm3740, %v3714
      %3954 = vst.msk [vmem:[%s177 + $0x38] sm:$0xff] %vm3740, %v3715
      %3955 = vst.msk [vmem:[%s177 + $0x40] sm:$0xff] %vm3740, %v3716
      %3956 = vst.msk [vmem:[%s177 + $0x48] sm:$0xff] %vm3740, %v3717
      %3957 = vst.msk [vmem:[%s177 + $0x50] sm:$0xff] %vm3740, %v3718
      %3958 = vst.msk [vmem:[%s177 + $0x58] sm:$0xff] %vm3740, %v3719
      %3959 = vst.msk [vmem:[%s177 + $0x60] sm:$0xff] %vm3740, %v3720
      %3960 = vst.msk [vmem:[%s177 + $0x68] sm:$0xff] %vm3740, %v3721
      %3961 = vst.msk [vmem:[%s177 + $0x70] sm:$0xff] %vm3740, %v3722
      %3962 = vst.msk [vmem:[%s177 + $0x78] sm:$0xff] %vm3740, %v3723
      %3963 = vst.msk [vmem:[%s177 + $0x80] sm:$0xff] %vm3740, %v3724
      %3964 = vst.msk [vmem:[%s177 + $0x88] sm:$0xff] %vm3740, %v3725
      %3965 = vst.msk [vmem:[%s177 + $0x90] sm:$0xff] %vm3740, %v3726
      %3966 = vst.msk [vmem:[%s177 + $0x98] sm:$0xff] %vm3740, %v3727
      %3967 = vst.msk [vmem:[%s177 + $0xa0] sm:$0xff] %vm3740, %v3728
      %3968 = vst.msk [vmem:[%s177 + $0xa8] sm:$0xff] %vm3740, %v3729
      %3969 = vst.msk [vmem:[%s177 + $0xb0] sm:$0xff] %vm3740, %v3730
      %3970 = vst.msk [vmem:[%s177 + $0xb8] sm:$0xff] %vm3740, %v3731
      %3971 = vst.msk [vmem:[%s177 + $0xc0] sm:$0xff] %vm3740, %v3732
      %3972 = vst.msk [vmem:[%s177 + $0xc8] sm:$0xff] %vm3740, %v3733
      %3973 = vst.msk [vmem:[%s177 + $0xd0] sm:$0xff] %vm3740, %v3734
      %3974 = vst.msk [vmem:[%s177 + $0xd8] sm:$0xff] %vm3740, %v3735
      %3975 = vst.msk [vmem:[%s177 + $0xe0] sm:$0xff] %vm3740, %v3736
      %3976 = vst.msk [vmem:[%s177 + $0xe8] sm:$0xff] %vm3740, %v3737
      %3977 = vst.msk [vmem:[%s177 + $0xf0] sm:$0xff] %vm3740, %v3738
      %3978 = vst.msk [vmem:[%s177 + $0xf8] sm:$0xff] %vm3740, %v3739
      %p3979 = scmp.lt.s32.totalorder %s15, 1
      %s3980 = scalar_select %p3979, %s15, 1
      %s3981 = smul.addr %s3980, 32
      %s3982 = smul.addr %s3981, 8
      %s3983 = scalar_lea.vmem %s2, %s3982
      %p3984 = scmp.lt.s32.totalorder %s15, 1
      %s3985 = scalar_select %p3984, %s15, 1
      %s3986 = smul.addr %s3985, 2
      %s3987 = scalar_lea.vmem %s3, %s3986
      // Predicated region
      $region29: #{double_conv_block.3} parent=27 // pred_check
        %p3988 = pneg %p80
      $region30: #{double_conv_block.3} parent=27 // pred_check_branch
        %3990 = sbr.rel (%p3988) target = $region32
      $region31: #{double_conv_block.3} parent=27 // pred_region
        _
      $region32: #{double_conv_block.3} parent=27 // pred_fallthru
        _
      // Predicated region
      $region33: #{double_conv_block.3} parent=27 // pred_check
        %p3991 = pneg %p106
      $region34: #{double_conv_block.3} parent=27 // pred_check_branch
        %3993 = sbr.rel (%p3991) target = $region36
      $region35: #{double_conv_block.3} parent=27 // pred_region
        _
      $region36: #{double_conv_block.3} parent=27 // pred_fallthru
        _
    $region28: #{double_conv_block.3} parent=5 // pred_fallthru
      _
    %p3994 = scmp.le.s32.totalorder 2, %s10
    // Predicated region
    $region37: #{double_conv_block.3} parent=5 // pred_check
      %p3995 = pneg %p3994
    $region38: #{double_conv_block.3} parent=5 // pred_check_branch
      %3997 = sbr.rel (%p3995) target = $region40
    $region39: #{double_conv_block.3} parent=5 // pred_region
      %s3998 = ssub.s32 %s10, 2
      // Predicated region
      $region41: #{double_conv_block.3} parent=39 // pred_check
        %p3999 = pneg %p86
      $region42: #{double_conv_block.3} parent=39 // pred_check_branch
        %4001 = sbr.rel (%p3999) target = $region44
      $region43: #{double_conv_block.3} parent=39 // pred_region
        %p4002 = scmp.lt.s32.totalorder %s16, 1
        %s4003 = scalar_select %p4002, %s16, 1
        %s4004 = smul.addr %s4003, 32
        %s4005 = smul.addr %s4004, 8
        %s4006 = scalar_lea.vmem %s2, %s4005
      $region44: #{double_conv_block.3} parent=39 // pred_fallthru
        _
      // Predicated region
      $region45: #{double_conv_block.3} parent=39 // pred_check
        %p4007 = pneg %p112
      $region46: #{double_conv_block.3} parent=39 // pred_check_branch
        %4009 = sbr.rel (%p4007) target = $region48
      $region47: #{double_conv_block.3} parent=39 // pred_region
        %p4010 = scmp.lt.s32.totalorder %s16, 1
        %s4011 = scalar_select %p4010, %s16, 1
        %s4012 = smul.addr %s4011, 2
        %s4013 = scalar_lea.vmem %s3, %s4012
      $region48: #{double_conv_block.3} parent=39 // pred_fallthru
        _
    $region40: #{double_conv_block.3} parent=5 // pred_fallthru
      _
  $region6: #{double_conv_block.3} parent=0 // loop_footer
    %s14 = sadd.s32 1, %s10
  $region7: #{double_conv_block.3} parent=0 // loop_footer_branch
    %9 = sbr.rel target = $region3
  $region8: #{double_conv_block.3} parent=0 // loop_exit
    _

// kernel: double_conv_block.4
$region0: #{double_conv_block.4}
  #allocation0 [shape = 'u32[]', space=smem, size = 0x4, offset = 0x4, fixed_abs, tag = 'smem constant byte address 0x4 - core index']
  #allocation1 [shape = 'u32[144,128]{1,0:T(1,128)}', space=vmem, size = 0x12000, scoped, tag = 'internal scratch']
  #allocation2 [shape = 'f32[18,25,8]{2,1,0:T(8,128)}', space=vmem, size = 0x48000, scoped, tag = 'scratch operand']
  %s0 = inlined_call_operand.vmem [shape: f32[2,16,16,8], index: 0, kind: input, shape index: {}]
  %s1 = inlined_call_operand.vmem [shape: f32[1,8], index: 1, kind: input, shape index: {}]
  %s2 = inlined_call_operand.vmem [shape: f32[1,8], index: 2, kind: input, shape index: {}]
  %s3 = inlined_call_operand.vmem [shape: f32[9,8,8], index: 3, kind: input, shape index: {}]
  %s4 = inlined_call_operand.vmem [shape: f32[2,16,16,8], index: 4, kind: output, shape index: {0}]
  %s5 = inlined_call_operand.vmem [shape: f32[2,2,8], index: 5, kind: output, shape index: {1}]
  %6 = xla_tuple %s4, %s5
  %s7 = sld [smem:[#allocation0]]
  $region57: #{double_conv_block.4} parent=0
    _
  %s9 = ssub.s32 1, %s7
  %s10 = scalar_select 0, %s9, %s7
  loop: start=0, step=1, limit=4
  $region2: #{double_conv_block.4} parent=0 // loop_pre_header
    _
  $region3: #{double_conv_block.4} parent=0 // loop_header
    %s12 = sphi 0, %s16
    %p13 = scmp.ge.s32.totalorder %s12, 4
    %s22 = sphi 0, %s24
    %s25 = sphi 0, %s22
    %s26 = sphi 0, %s25
    %s42 = sphi 0, %s26
    %s46 = sphi 0, %s46
    %s48 = sphi 0, %s46
    %s49 = sphi 0, %s48
    %s63 = sphi 0, %s49
    %s67 = sphi 0, %s67
    %s69 = sphi 0, %s67
    %s70 = sphi 0, %s69
    %s84 = sphi 0, %s70
    %s88 = sphi 0, %s88
    %s90 = sphi 0, %s88
    %s91 = sphi 0, %s90
    %s105 = sphi 0, %s91
    %s111 = sphi 0, %s113
    %s114 = sphi 0, %s111
    %s115 = sphi 0, %s114
    %s131 = sphi 0, %s115
    %s137 = sphi 0, %s139
    %s140 = sphi 0, %s137
    %s141 = sphi 0, %s140
    %s157 = sphi 0, %s141
  $region4: #{double_conv_block.4} parent=0 // loop_header_branch
    %15 = sbr.rel (%p13) target = $region8
  $region5: #{double_conv_block.4} parent=0 // loop_body
    %s17 = ssub.s32 %s12, 1
    %s18 = ssub.s32 %s12, 2
    %s19 = sadd.s32 %s12, 1
    %s20 = ssub.s32 %s12, %s19
    %p21 = scmp.eq.s32.totalorder %s20, 0
    %s23 = sadd.s32 %s22, 1
    %s24 = scalar_select %p21, %s22, %s23
    %p27 = pneg %p21
    %p28 = scmp.eq.s32.totalorder %s12, 1
    %p29 = por %p27, %p28
    %p30 = scmp.ne.s32.totalorder %s22, %s25
    %p31 = scmp.eq.s32.totalorder %s12, 0
    %p32 = por %p30, %p31
    %p33 = scmp.ne.s32.totalorder %s22, %s25
    %p34 = scmp.eq.s32.totalorder %s17, 1
    %p35 = por %p33, %p34
    %p36 = scmp.ne.s32.totalorder %s25, %s26
    %p37 = scmp.eq.s32.totalorder %s17, 0
    %p38 = por %p36, %p37
    %p39 = scmp.ne.s32.totalorder %s25, %s26
    %p40 = scmp.eq.s32.totalorder %s18, 1
    %p41 = por %p39, %p40
    %p43 = scmp.ne.s32.totalorder %s26, %s42
    %p44 = scmp.eq.s32.totalorder %s18, 0
    %p45 = por %p43, %p44
    %s47 = sadd.s32 %s46, 1
    %p50 = scmp.eq.s32.totalorder %s12, 1
    %p51 = scmp.ne.s32.totalorder %s46, %s48
    %p52 = scmp.eq.s32.totalorder %s12, 0
    %p53 = por %p51, %p52
    %p54 = scmp.ne.s32.totalorder %s46, %s48
    %p55 = scmp.eq.s32.totalorder %s17, 1
    %p56 = por %p54, %p55
    %p57 = scmp.ne.s32.totalorder %s48, %s49
    %p58 = scmp.eq.s32.totalorder %s17, 0
    %p59 = por %p57, %p58
    %p60 = scmp.ne.s32.totalorder %s48, %s49
    %p61 = scmp.eq.s32.totalorder %s18, 1
    %p62 = por %p60, %p61
    %p64 = scmp.ne.s32.totalorder %s49, %s63
    %p65 = scmp.eq.s32.totalorder %s18, 0
    %p66 = por %p64, %p65
    %s68 = sadd.s32 %s67, 1
    %p71 = scmp.eq.s32.totalorder %s12, 1
    %p72 = scmp.ne.s32.totalorder %s67, %s69
    %p73 = scmp.eq.s32.totalorder %s12, 0
    %p74 = por %p72, %p73
    %p75 = scmp.ne.s32.totalorder %s67, %s69
    %p76 = scmp.eq.s32.totalorder %s17, 1
    %p77 = por %p75, %p76
    %p78 = scmp.ne.s32.totalorder %s69, %s70
    %p79 = scmp.eq.s32.totalorder %s17, 0
    %p80 = por %p78, %p79
    %p81 = scmp.ne.s32.totalorder %s69, %s70
    %p82 = scmp.eq.s32.totalorder %s18, 1
    %p83 = por %p81, %p82
    %p85 = scmp.ne.s32.totalorder %s70, %s84
    %p86 = scmp.eq.s32.totalorder %s18, 0
    %p87 = por %p85, %p86
    %s89 = sadd.s32 %s88, 1
    %p92 = scmp.eq.s32.totalorder %s12, 1
    %p93 = scmp.ne.s32.totalorder %s88, %s90
    %p94 = scmp.eq.s32.totalorder %s12, 0
    %p95 = por %p93, %p94
    %p96 = scmp.ne.s32.totalorder %s88, %s90
    %p97 = scmp.eq.s32.totalorder %s17, 1
    %p98 = por %p96, %p97
    %p99 = scmp.ne.s32.totalorder %s90, %s91
    %p100 = scmp.eq.s32.totalorder %s17, 0
    %p101 = por %p99, %p100
    %p102 = scmp.ne.s32.totalorder %s90, %s91
    %p103 = scmp.eq.s32.totalorder %s18, 1
    %p104 = por %p102, %p103
    %p106 = scmp.ne.s32.totalorder %s91, %s105
    %p107 = scmp.eq.s32.totalorder %s18, 0
    %p108 = por %p106, %p107
    %s109 = ssub.s32 %s12, %s19
    %p110 = scmp.eq.s32.totalorder %s109, 0
    %s112 = sadd.s32 %s111, 1
    %s113 = scalar_select %p110, %s111, %s112
    %p116 = pneg %p110
    %p117 = scmp.eq.s32.totalorder %s12, 1
    %p118 = por %p116, %p117
    %p119 = scmp.ne.s32.totalorder %s111, %s114
    %p120 = scmp.eq.s32.totalorder %s12, 0
    %p121 = por %p119, %p120
    %p122 = scmp.ne.s32.totalorder %s111, %s114
    %p123 = scmp.eq.s32.totalorder %s17, 1
    %p124 = por %p122, %p123
    %p125 = scmp.ne.s32.totalorder %s114, %s115
    %p126 = scmp.eq.s32.totalorder %s17, 0
    %p127 = por %p125, %p126
    %p128 = scmp.ne.s32.totalorder %s114, %s115
    %p129 = scmp.eq.s32.totalorder %s18, 1
    %p130 = por %p128, %p129
    %p132 = scmp.ne.s32.totalorder %s115, %s131
    %p133 = scmp.eq.s32.totalorder %s18, 0
    %p134 = por %p132, %p133
    %s135 = ssub.s32 %s12, %s19
    %p136 = scmp.eq.s32.totalorder %s135, 0
    %s138 = sadd.s32 %s137, 1
    %s139 = scalar_select %p136, %s137, %s138
    %p142 = pneg %p136
    %p143 = scmp.eq.s32.totalorder %s12, 1
    %p144 = por %p142, %p143
    %p145 = scmp.ne.s32.totalorder %s137, %s140
    %p146 = scmp.eq.s32.totalorder %s12, 0
    %p147 = por %p145, %p146
    %p148 = scmp.ne.s32.totalorder %s137, %s140
    %p149 = scmp.eq.s32.totalorder %s17, 1
    %p150 = por %p148, %p149
    %p151 = scmp.ne.s32.totalorder %s140, %s141
    %p152 = scmp.eq.s32.totalorder %s17, 0
    %p153 = por %p151, %p152
    %p154 = scmp.ne.s32.totalorder %s140, %s141
    %p155 = scmp.eq.s32.totalorder %s18, 1
    %p156 = por %p154, %p155
    %p158 = scmp.ne.s32.totalorder %s141, %s157
    %p159 = scmp.eq.s32.totalorder %s18, 0
    %p160 = por %p158, %p159
    %p161 = scmp.le.s32.totalorder 1, %s12
    %p162 = scmp.lt.s32.totalorder %s12, 3
    %p163 = pnand %p161, %p162
    %p164 = pneg %p163
    // Predicated region
    $region9: #{double_conv_block.4} parent=5 // pred_check
      _
    $region10: #{double_conv_block.4} parent=5 // pred_check_branch
      %166 = sbr.rel (%p163) target = $region12
    $region11: #{double_conv_block.4} parent=5 // pred_region
      %s167 = ssub.s32 %s12, 1
      // Predicated region
      $region13: #{double_conv_block.4} parent=11 // pred_check
        %p168 = pneg %p59
      $region14: #{double_conv_block.4} parent=11 // pred_check_branch
        %170 = sbr.rel (%p168) target = $region16
      $region15: #{double_conv_block.4} parent=11 // pred_region
        _
      $region16: #{double_conv_block.4} parent=11 // pred_fallthru
        _
      // Predicated region
      $region17: #{double_conv_block.4} parent=11 // pred_check
        %p171 = pneg %p80
      $region18: #{double_conv_block.4} parent=11 // pred_check_branch
        %173 = sbr.rel (%p171) target = $region20
      $region19: #{double_conv_block.4} parent=11 // pred_region
        _
      $region20: #{double_conv_block.4} parent=11 // pred_fallthru
        _
      // Predicated region
      $region21: #{double_conv_block.4} parent=11 // pred_check
        %p174 = pneg %p101
      $region22: #{double_conv_block.4} parent=11 // pred_check_branch
        %176 = sbr.rel (%p174) target = $region24
      $region23: #{double_conv_block.4} parent=11 // pred_region
        _
      $region24: #{double_conv_block.4} parent=11 // pred_fallthru
        _
    $region12: #{double_conv_block.4} parent=5 // pred_fallthru
      _
    %p177 = scmp.lt.s32.totalorder %s12, 2
    // Predicated region
    $region25: #{double_conv_block.4} parent=5 // pred_check
      %p178 = pneg %p177
    $region26: #{double_conv_block.4} parent=5 // pred_check_branch
      %180 = sbr.rel (%p178) target = $region28
    $region27: #{double_conv_block.4} parent=5 // pred_region
      // Predicated region
      $region29: #{double_conv_block.4} parent=27 // pred_check
        %p181 = pneg %p32
      $region30: #{double_conv_block.4} parent=27 // pred_check_branch
        %183 = sbr.rel (%p181) target = $region32
      $region31: #{double_conv_block.4} parent=27 // pred_region
        %p184 = scmp.lt.s32.totalorder %s12, 1
        %s185 = scalar_select %p184, %s12, 1
        %s186 = smul.addr %s185, 32
        %s187 = smul.addr %s186, 8
        %s188 = scalar_lea.vmem %s0, %s187
      $region32: #{double_conv_block.4} parent=27 // pred_fallthru
        _
    $region28: #{double_conv_block.4} parent=5 // pred_fallthru
      _
    %p189 = scmp.le.s32.totalorder 1, %s12
    %p190 = scmp.lt.s32.totalorder %s12, 3
    %p191 = pnand %p189, %p190
    %p192 = pneg %p191
    // Predicated region
    $region33: #{double_conv_block.4} parent=5 // pred_check
      _
    $region34: #{double_conv_block.4} parent=5 // pred_check_branch
      %194 = sbr.rel (%p191) target = $region36
    $region35: #{double_conv_block.4} parent=5 // pred_region
      %s195 = ssub.s32 %s12, 1
      %p196 = scmp.lt.s32.totalorder %s17, 1
      %s197 = scalar_select %p196, %s17, 1
      %s198 = smul.addr %s197, 32
      %s199 = smul.addr %s198, 8
      %s200 = scalar_lea.vmem %s0, %s199
      %p201 = pneg %p38
      %p202 = pneg %p35
      %p203 = pneg %p59
      %p204 = pneg %p56
      %p205 = pneg %p80
      %p206 = pneg %p77
      %p207 = pneg %p101
      %p208 = pneg %p98
      %p209 = pneg %p127
      %p210 = pneg %p124
      %p211 = scmp.lt.s32.totalorder %s17, 1
      %s212 = scalar_select %p211, %s17, 1
      %s213 = smul.addr %s212, 32
      %s214 = smul.addr %s213, 8
      %s215 = scalar_lea.vmem %s4, %s214
      %p216 = pneg %p153
      %p217 = pneg %p150
      %p218 = scmp.lt.s32.totalorder %s17, 1
      %s219 = scalar_select %p218, %s17, 1
      %s220 = smul.addr %s219, 2
      %s221 = scalar_lea.vmem %s5, %s220
      %p222 = scmp.lt.s32.totalorder %s17, 1
      %s223 = scalar_select %p222, %s17, 1
      %s224 = smul.addr %s223, 32
      %s225 = smul.addr %s224, 8
      %s226 = scalar_lea.vmem %s0, %s225
      %p227 = scmp.lt.s32.totalorder %s17, 1
      %s228 = scalar_select %p227, %s17, 1
      %s229 = smul.addr %s228, 32
      %s230 = smul.addr %s229, 8
      %s231 = scalar_lea.vmem %s4, %s230
      %p232 = scmp.lt.s32.totalorder %s17, 1
      %s233 = scalar_select %p232, %s17, 1
      %s234 = smul.addr %s233, 2
      %s235 = scalar_lea.vmem %s5, %s234
      %v236 = vld [vmem:[%s226] sm:$0xff]
      %v237 = vld [vmem:[%s226 + $0x8] sm:$0xff]
      %v238 = vld [vmem:[%s226 + $0x10] sm:$0xff]
      %v239 = vld [vmem:[%s226 + $0x18] sm:$0xff]
      %v240 = vld [vmem:[%s226 + $0x20] sm:$0xff]
      %v241 = vld [vmem:[%s226 + $0x28] sm:$0xff]
      %v242 = vld [vmem:[%s226 + $0x30] sm:$0xff]
      %v243 = vld [vmem:[%s226 + $0x38] sm:$0xff]
      %v244 = vld [vmem:[%s226 + $0x40] sm:$0xff]
      %v245 = vld [vmem:[%s226 + $0x48] sm:$0xff]
      %v246 = vld [vmem:[%s226 + $0x50] sm:$0xff]
      %v247 = vld [vmem:[%s226 + $0x58] sm:$0xff]
      %v248 = vld [vmem:[%s226 + $0x60] sm:$0xff]
      %v249 = vld [vmem:[%s226 + $0x68] sm:$0xff]
      %v250 = vld [vmem:[%s226 + $0x70] sm:$0xff]
      %v251 = vld [vmem:[%s226 + $0x78] sm:$0xff]
      %v252 = vld [vmem:[%s226 + $0x80] sm:$0xff]
      %v253 = vld [vmem:[%s226 + $0x88] sm:$0xff]
      %v254 = vld [vmem:[%s226 + $0x90] sm:$0xff]
      %v255 = vld [vmem:[%s226 + $0x98] sm:$0xff]
      %v256 = vld [vmem:[%s226 + $0xa0] sm:$0xff]
      %v257 = vld [vmem:[%s226 + $0xa8] sm:$0xff]
      %v258 = vld [vmem:[%s226 + $0xb0] sm:$0xff]
      %v259 = vld [vmem:[%s226 + $0xb8] sm:$0xff]
      %v260 = vld [vmem:[%s226 + $0xc0] sm:$0xff]
      %v261 = vld [vmem:[%s226 + $0xc8] sm:$0xff]
      %v262 = vld [vmem:[%s226 + $0xd0] sm:$0xff]
      %v263 = vld [vmem:[%s226 + $0xd8] sm:$0xff]
      %v264 = vld [vmem:[%s226 + $0xe0] sm:$0xff]
      %v265 = vld [vmem:[%s226 + $0xe8] sm:$0xff]
      %v266 = vld [vmem:[%s226 + $0xf0] sm:$0xff]
      %v267 = vld [vmem:[%s226 + $0xf8] sm:$0xff]
      %v268 = vld [vmem:[%s1] sm:$0x1]
      %v270 = vlaneseq
      %v271 = vshrl.u32 %v270, 7
      %v272 = vsub.s32 0, %v271
      %v273 = vrot.slane %v268, %v272
      %v275 = vmul.f32 %v236, %v273
      %v276 = vmul.f32 %v237, %v273
      %v277 = vmul.f32 %v238, %v273
      %v278 = vmul.f32 %v239, %v273
      %v279 = vmul.f32 %v240, %v273
      %v280 = vmul.f32 %v241, %v273
      %v281 = vmul.f32 %v242, %v273
      %v282 = vmul.f32 %v243, %v273
      %v283 = vmul.f32 %v244, %v273
      %v284 = vmul.f32 %v245, %v273
      %v285 = vmul.f32 %v246, %v273
      %v286 = vmul.f32 %v247, %v273
      %v287 = vmul.f32 %v248, %v273
      %v288 = vmul.f32 %v249, %v273
      %v289 = vmul.f32 %v250, %v273
      %v290 = vmul.f32 %v251, %v273
      %v291 = vmul.f32 %v252, %v273
      %v292 = vmul.f32 %v253, %v273
      %v293 = vmul.f32 %v254, %v273
      %v294 = vmul.f32 %v255, %v273
      %v295 = vmul.f32 %v256, %v273
      %v296 = vmul.f32 %v257, %v273
      %v297 = vmul.f32 %v258, %v273
      %v298 = vmul.f32 %v259, %v273
      %v299 = vmul.f32 %v260, %v273
      %v300 = vmul.f32 %v261, %v273
      %v301 = vmul.f32 %v262, %v273
      %v302 = vmul.f32 %v263, %v273
      %v303 = vmul.f32 %v264, %v273
      %v304 = vmul.f32 %v265, %v273
      %v305 = vmul.f32 %v266, %v273
      %v306 = vmul.f32 %v267, %v273
      %v307 = vld [vmem:[%s2] sm:$0x1]
      %v309 = vlaneseq
      %v310 = vshrl.u32 %v309, 7
      %v311 = vsub.s32 0, %v310
      %v312 = vrot.slane %v307, %v311
      %v314 = vadd.f32 %v275, %v312
      %v315 = vadd.f32 %v276, %v312
      %v316 = vadd.f32 %v277, %v312
      %v317 = vadd.f32 %v278, %v312
      %v318 = vadd.f32 %v279, %v312
      %v319 = vadd.f32 %v280, %v312
      %v320 = vadd.f32 %v281, %v312
      %v321 = vadd.f32 %v282, %v312
      %v322 = vadd.f32 %v283, %v312
      %v323 = vadd.f32 %v284, %v312
      %v324 = vadd.f32 %v285, %v312
      %v325 = vadd.f32 %v286, %v312
      %v326 = vadd.f32 %v287, %v312
      %v327 = vadd.f32 %v288, %v312
      %v328 = vadd.f32 %v289, %v312
      %v329 = vadd.f32 %v290, %v312
      %v330 = vadd.f32 %v291, %v312
      %v331 = vadd.f32 %v292, %v312
      %v332 = vadd.f32 %v293, %v312
      %v333 = vadd.f32 %v294, %v312
      %v334 = vadd.f32 %v295, %v312
      %v335 = vadd.f32 %v296, %v312
      %v336 = vadd.f32 %v297, %v312
      %v337 = vadd.f32 %v298, %v312
      %v338 = vadd.f32 %v299, %v312
      %v339 = vadd.f32 %v300, %v312
      %v340 = vadd.f32 %v301, %v312
      %v341 = vadd.f32 %v302, %v312
      %v342 = vadd.f32 %v303, %v312
      %v343 = vadd.f32 %v304, %v312
      %v344 = vadd.f32 %v305, %v312
      %v345 = vadd.f32 %v306, %v312
      %v346 = vmax.f32 %v314, 0.0
      %v347 = vmax.f32 %v315, 0.0
      %v348 = vmax.f32 %v316, 0.0
      %v349 = vmax.f32 %v317, 0.0
      %v350 = vmax.f32 %v318, 0.0
      %v351 = vmax.f32 %v319, 0.0
      %v352 = vmax.f32 %v320, 0.0
      %v353 = vmax.f32 %v321, 0.0
      %v354 = vmax.f32 %v322, 0.0
      %v355 = vmax.f32 %v323, 0.0
      %v356 = vmax.f32 %v324, 0.0
      %v357 = vmax.f32 %v325, 0.0
      %v358 = vmax.f32 %v326, 0.0
      %v359 = vmax.f32 %v327, 0.0
      %v360 = vmax.f32 %v328, 0.0
      %v361 = vmax.f32 %v329, 0.0
      %v362 = vmax.f32 %v330, 0.0
      %v363 = vmax.f32 %v331, 0.0
      %v364 = vmax.f32 %v332, 0.0
      %v365 = vmax.f32 %v333, 0.0
      %v366 = vmax.f32 %v334, 0.0
      %v367 = vmax.f32 %v335, 0.0
      %v368 = vmax.f32 %v336, 0.0
      %v369 = vmax.f32 %v337, 0.0
      %v370 = vmax.f32 %v338, 0.0
      %v371 = vmax.f32 %v339, 0.0
      %v372 = vmax.f32 %v340, 0.0
      %v373 = vmax.f32 %v341, 0.0
      %v374 = vmax.f32 %v342, 0.0
      %v375 = vmax.f32 %v343, 0.0
      %v376 = vmax.f32 %v344, 0.0
      %v377 = vmax.f32 %v345, 0.0
      %vm378 = vcmask 64512
      %379 = vst.msk [vmem:[#allocation2 + $0x7] sm:$0xff] %vm378, 0.0
      %380 = vst.msk [vmem:[#allocation2 + $0xf] sm:$0xff] %vm378, 0.0
      %vm381 = vcmask 58368
      %382 = vst.msk [vmem:[#allocation2 + $0x17] sm:$0x3] %vm381, 0.0
      %s383 = scalar_lea.vmem [#allocation2], 544
      %384 = vst.msk [vmem:[%s383 + $0x7] sm:$0xff] %vm378, 0.0
      %385 = vst.msk [vmem:[%s383 + $0xf] sm:$0xff] %vm378, 0.0
      %386 = vst.msk [vmem:[%s383 + $0x17] sm:$0x3] %vm381, 0.0
      %vm387 = vcmask 57344
      %388 = vst.msk [vmem:[#allocation2 + $0x7] sm:$0x1] %vm387, 0.0
      %389 = vst.msk [vmem:[#allocation2 + $0x27] sm:$0x1] %vm387, 0.0
      %390 = vst.msk [vmem:[#allocation2 + $0x47] sm:$0x1] %vm387, 0.0
      %391 = vst.msk [vmem:[#allocation2 + $0x67] sm:$0x1] %vm387, 0.0
      %392 = vst.msk [vmem:[#allocation2 + $0x87] sm:$0x1] %vm387, 0.0
      %393 = vst.msk [vmem:[#allocation2 + $0xa7] sm:$0x1] %vm387, 0.0
      %394 = vst.msk [vmem:[#allocation2 + $0xc7] sm:$0x1] %vm387, 0.0
      %395 = vst.msk [vmem:[#allocation2 + $0xe7] sm:$0x1] %vm387, 0.0
      %396 = vst.msk [vmem:[#allocation2 + $0x107] sm:$0x1] %vm387, 0.0
      %397 = vst.msk [vmem:[#allocation2 + $0x127] sm:$0x1] %vm387, 0.0
      %398 = vst.msk [vmem:[#allocation2 + $0x147] sm:$0x1] %vm387, 0.0
      %399 = vst.msk [vmem:[#allocation2 + $0x167] sm:$0x1] %vm387, 0.0
      %400 = vst.msk [vmem:[#allocation2 + $0x187] sm:$0x1] %vm387, 0.0
      %401 = vst.msk [vmem:[#allocation2 + $0x1a7] sm:$0x1] %vm387, 0.0
      %402 = vst.msk [vmem:[#allocation2 + $0x1c7] sm:$0x1] %vm387, 0.0
      %403 = vst.msk [vmem:[#allocation2 + $0x1e7] sm:$0x1] %vm387, 0.0
      %404 = vst.msk [vmem:[#allocation2 + $0x207] sm:$0x1] %vm387, 0.0
      %405 = vst.msk [vmem:[#allocation2 + $0x227] sm:$0x1] %vm387, 0.0
      %406 = vst.msk [vmem:[#allocation2 + $0x18] sm:$0x1] %vm387, 0.0
      %407 = vst.msk [vmem:[#allocation2 + $0x38] sm:$0x1] %vm387, 0.0
      %408 = vst.msk [vmem:[#allocation2 + $0x58] sm:$0x1] %vm387, 0.0
      %409 = vst.msk [vmem:[#allocation2 + $0x78] sm:$0x1] %vm387, 0.0
      %410 = vst.msk [vmem:[#allocation2 + $0x98] sm:$0x1] %vm387, 0.0
      %411 = vst.msk [vmem:[#allocation2 + $0xb8] sm:$0x1] %vm387, 0.0
      %412 = vst.msk [vmem:[#allocation2 + $0xd8] sm:$0x1] %vm387, 0.0
      %413 = vst.msk [vmem:[#allocation2 + $0xf8] sm:$0x1] %vm387, 0.0
      %414 = vst.msk [vmem:[#allocation2 + $0x118] sm:$0x1] %vm387, 0.0
      %415 = vst.msk [vmem:[#allocation2 + $0x138] sm:$0x1] %vm387, 0.0
      %416 = vst.msk [vmem:[#allocation2 + $0x158] sm:$0x1] %vm387, 0.0
      %417 = vst.msk [vmem:[#allocation2 + $0x178] sm:$0x1] %vm387, 0.0
      %418 = vst.msk [vmem:[#allocation2 + $0x198] sm:$0x1] %vm387, 0.0
      %419 = vst.msk [vmem:[#allocation2 + $0x1b8] sm:$0x1] %vm387, 0.0
      %420 = vst.msk [vmem:[#allocation2 + $0x1d8] sm:$0x1] %vm387, 0.0
      %421 = vst.msk [vmem:[#allocation2 + $0x1f8] sm:$0x1] %vm387, 0.0
      %422 = vst.msk [vmem:[#allocation2 + $0x218] sm:$0x1] %vm387, 0.0
      %423 = vst.msk [vmem:[#allocation2 + $0x238] sm:$0x1] %vm387, 0.0
      %s424 = scalar_lea.vmem [#allocation2], 32
      %425 = vst.msk [vmem:[%s424 + $0x8] sm:$0xff] %vm378, %v346
      %426 = vst.msk [vmem:[%s424 + $0x10] sm:$0xff] %vm378, %v347
      %427 = vst.msk [vmem:[%s424 + $0x28] sm:$0xff] %vm378, %v348
      %428 = vst.msk [vmem:[%s424 + $0x30] sm:$0xff] %vm378, %v349
      %429 = vst.msk [vmem:[%s424 + $0x48] sm:$0xff] %vm378, %v350
      %430 = vst.msk [vmem:[%s424 + $0x50] sm:$0xff] %vm378, %v351
      %431 = vst.msk [vmem:[%s424 + $0x68] sm:$0xff] %vm378, %v352
      %432 = vst.msk [vmem:[%s424 + $0x70] sm:$0xff] %vm378, %v353
      %433 = vst.msk [vmem:[%s424 + $0x88] sm:$0xff] %vm378, %v354
      %434 = vst.msk [vmem:[%s424 + $0x90] sm:$0xff] %vm378, %v355
      %435 = vst.msk [vmem:[%s424 + $0xa8] sm:$0xff] %vm378, %v356
      %436 = vst.msk [vmem:[%s424 + $0xb0] sm:$0xff] %vm378, %v357
      %437 = vst.msk [vmem:[%s424 + $0xc8] sm:$0xff] %vm378, %v358
      %438 = vst.msk [vmem:[%s424 + $0xd0] sm:$0xff] %vm378, %v359
      %439 = vst.msk [vmem:[%s424 + $0xe8] sm:$0xff] %vm378, %v360
      %440 = vst.msk [vmem:[%s424 + $0xf0] sm:$0xff] %vm378, %v361
      %441 = vst.msk [vmem:[%s424 + $0x108] sm:$0xff] %vm378, %v362
      %442 = vst.msk [vmem:[%s424 + $0x110] sm:$0xff] %vm378, %v363
      %443 = vst.msk [vmem:[%s424 + $0x128] sm:$0xff] %vm378, %v364
      %444 = vst.msk [vmem:[%s424 + $0x130] sm:$0xff] %vm378, %v365
      %445 = vst.msk [vmem:[%s424 + $0x148] sm:$0xff] %vm378, %v366
      %446 = vst.msk [vmem:[%s424 + $0x150] sm:$0xff] %vm378, %v367
      %447 = vst.msk [vmem:[%s424 + $0x168] sm:$0xff] %vm378, %v368
      %448 = vst.msk [vmem:[%s424 + $0x170] sm:$0xff] %vm378, %v369
      %449 = vst.msk [vmem:[%s424 + $0x188] sm:$0xff] %vm378, %v370
      %450 = vst.msk [vmem:[%s424 + $0x190] sm:$0xff] %vm378, %v371
      %451 = vst.msk [vmem:[%s424 + $0x1a8] sm:$0xff] %vm378, %v372
      %452 = vst.msk [vmem:[%s424 + $0x1b0] sm:$0xff] %vm378, %v373
      %453 = vst.msk [vmem:[%s424 + $0x1c8] sm:$0xff] %vm378, %v374
      %454 = vst.msk [vmem:[%s424 + $0x1d0] sm:$0xff] %vm378, %v375
      %455 = vst.msk [vmem:[%s424 + $0x1e8] sm:$0xff] %vm378, %v376
      %456 = vst.msk [vmem:[%s424 + $0x1f0] sm:$0xff] %vm378, %v377
      %v457 = vld [vmem:[#allocation2 + $0x7] sm:$0xff]
      %v458 = vld [vmem:[#allocation2 + $0xf] sm:$0xff]
      %v459 = vld [vmem:[#allocation2 + $0x27] sm:$0xff]
      %v460 = vld [vmem:[#allocation2 + $0x2f] sm:$0xff]
      %v461 = vld [vmem:[#allocation2 + $0x47] sm:$0xff]
      %v462 = vld [vmem:[#allocation2 + $0x4f] sm:$0xff]
      %v463 = vld [vmem:[#allocation2 + $0x67] sm:$0xff]
      %v464 = vld [vmem:[#allocation2 + $0x6f] sm:$0xff]
      %v465 = vld [vmem:[#allocation2 + $0x87] sm:$0xff]
      %v466 = vld [vmem:[#allocation2 + $0x8f] sm:$0xff]
      %v467 = vld [vmem:[#allocation2 + $0xa7] sm:$0xff]
      %v468 = vld [vmem:[#allocation2 + $0xaf] sm:$0xff]
      %v469 = vld [vmem:[#allocation2 + $0xc7] sm:$0xff]
      %v470 = vld [vmem:[#allocation2 + $0xcf] sm:$0xff]
      %v471 = vld [vmem:[#allocation2 + $0xe7] sm:$0xff]
      %v472 = vld [vmem:[#allocation2 + $0xef] sm:$0xff]
      %v473 = vld [vmem:[#allocation2 + $0x107] sm:$0xff]
      %v474 = vld [vmem:[#allocation2 + $0x10f] sm:$0xff]
      %v475 = vld [vmem:[#allocation2 + $0x127] sm:$0xff]
      %v476 = vld [vmem:[#allocation2 + $0x12f] sm:$0xff]
      %v477 = vld [vmem:[#allocation2 + $0x147] sm:$0xff]
      %v478 = vld [vmem:[#allocation2 + $0x14f] sm:$0xff]
      %v479 = vld [vmem:[#allocation2 + $0x167] sm:$0xff]
      %v480 = vld [vmem:[#allocation2 + $0x16f] sm:$0xff]
      %v481 = vld [vmem:[#allocation2 + $0x187] sm:$0xff]
      %v482 = vld [vmem:[#allocation2 + $0x18f] sm:$0xff]
      %v483 = vld [vmem:[#allocation2 + $0x1a7] sm:$0xff]
      %v484 = vld [vmem:[#allocation2 + $0x1af] sm:$0xff]
      %v485 = vld [vmem:[#allocation2 + $0x1c7] sm:$0xff]
      %v486 = vld [vmem:[#allocation2 + $0x1cf] sm:$0xff]
      %v487 = vld [vmem:[#allocation2 + $0x1e7] sm:$0xff]
      %v488 = vld [vmem:[#allocation2 + $0x1ef] sm:$0xff]
      %v489 = vld [vmem:[%s3] sm:$0xff]
      %v490 = vld [vmem:[#allocation2 + $0x8] sm:$0xff]
      %v491 = vld [vmem:[#allocation2 + $0x10] sm:$0xff]
      %v492 = vld [vmem:[#allocation2 + $0x28] sm:$0xff]
      %v493 = vld [vmem:[#allocation2 + $0x30] sm:$0xff]
      %v494 = vld [vmem:[#allocation2 + $0x48] sm:$0xff]
      %v495 = vld [vmem:[#allocation2 + $0x50] sm:$0xff]
      %v496 = vld [vmem:[#allocation2 + $0x68] sm:$0xff]
      %v497 = vld [vmem:[#allocation2 + $0x70] sm:$0xff]
      %v498 = vld [vmem:[#allocation2 + $0x88] sm:$0xff]
      %v499 = vld [vmem:[#allocation2 + $0x90] sm:$0xff]
      %v500 = vld [vmem:[#allocation2 + $0xa8] sm:$0xff]
      %v501 = vld [vmem:[#allocation2 + $0xb0] sm:$0xff]
      %v502 = vld [vmem:[#allocation2 + $0xc8] sm:$0xff]
      %v503 = vld [vmem:[#allocation2 + $0xd0] sm:$0xff]
      %v504 = vld [vmem:[#allocation2 + $0xe8] sm:$0xff]
      %v505 = vld [vmem:[#allocation2 + $0xf0] sm:$0xff]
      %v506 = vld [vmem:[#allocation2 + $0x108] sm:$0xff]
      %v507 = vld [vmem:[#allocation2 + $0x110] sm:$0xff]
      %v508 = vld [vmem:[#allocation2 + $0x128] sm:$0xff]
      %v509 = vld [vmem:[#allocation2 + $0x130] sm:$0xff]
      %v510 = vld [vmem:[#allocation2 + $0x148] sm:$0xff]
      %v511 = vld [vmem:[#allocation2 + $0x150] sm:$0xff]
      %v512 = vld [vmem:[#allocation2 + $0x168] sm:$0xff]
      %v513 = vld [vmem:[#allocation2 + $0x170] sm:$0xff]
      %v514 = vld [vmem:[#allocation2 + $0x188] sm:$0xff]
      %v515 = vld [vmem:[#allocation2 + $0x190] sm:$0xff]
      %v516 = vld [vmem:[#allocation2 + $0x1a8] sm:$0xff]
      %v517 = vld [vmem:[#allocation2 + $0x1b0] sm:$0xff]
      %v518 = vld [vmem:[#allocation2 + $0x1c8] sm:$0xff]
      %v519 = vld [vmem:[#allocation2 + $0x1d0] sm:$0xff]
      %v520 = vld [vmem:[#allocation2 + $0x1e8] sm:$0xff]
      %v521 = vld [vmem:[#allocation2 + $0x1f0] sm:$0xff]
      %s522 = scalar_lea.vmem %s3, 8
      %v523 = vld [vmem:[%s522] sm:$0xff]
      %v525 = vsel %vm378, %v490, 0
      %v528 = vsel %vm378, %v491, 0
      %v531 = vsel %vm378, %v492, 0
      %v534 = vsel %vm378, %v493, 0
      %v537 = vsel %vm378, %v494, 0
      %v540 = vsel %vm378, %v495, 0
      %v543 = vsel %vm378, %v496, 0
      %v546 = vsel %vm378, %v497, 0
      %v549 = vsel %vm378, %v498, 0
      %v552 = vsel %vm378, %v499, 0
      %v555 = vsel %vm378, %v500, 0
      %v558 = vsel %vm378, %v501, 0
      %v561 = vsel %vm378, %v502, 0
      %v564 = vsel %vm378, %v503, 0
      %v567 = vsel %vm378, %v504, 0
      %v570 = vsel %vm378, %v505, 0
      %v573 = vsel %vm378, %v506, 0
      %v576 = vsel %vm378, %v507, 0
      %v579 = vsel %vm378, %v508, 0
      %v582 = vsel %vm378, %v509, 0
      %v585 = vsel %vm378, %v510, 0
      %v588 = vsel %vm378, %v511, 0
      %v591 = vsel %vm378, %v512, 0
      %v594 = vsel %vm378, %v513, 0
      %v597 = vsel %vm378, %v514, 0
      %v600 = vsel %vm378, %v515, 0
      %v603 = vsel %vm378, %v516, 0
      %v606 = vsel %vm378, %v517, 0
      %v609 = vsel %vm378, %v518, 0
      %v612 = vsel %vm378, %v519, 0
      %v615 = vsel %vm378, %v520, 0
      %v618 = vsel %vm378, %v521, 0
      %620 = vmatprep.subr.mxu0 0.0
      %621 = vmatpush1.msra.mxu0 %v523
      %622 = vmatprep.subr.mxu0 0.0
      %623 = vmatpush1.msra.mxu0 0.0
      %624 = vmatprep.subr.mxu0 0.0
      %625 = vmatpush1.msra.mxu0 0.0
      %626 = vmatprep.subr.mxu0 0.0
      %627 = vmatpush1.msra.mxu0 0.0
      %628 = vmatprep.subr.mxu0 0.0
      %629 = vmatpush1.msra.mxu0 0.0
      %630 = vmatprep.subr.mxu0 0.0
      %631 = vmatpush1.msra.mxu0 0.0
      %632 = vmatprep.subr.mxu0 0.0
      %633 = vmatpush1.msra.mxu0 0.0
      %634 = vmatprep.subr.mxu0 0.0
      %635 = vmatpush1.msra.mxu0 0.0
      %636 = vmatprep.subr.mxu0 0.0
      %637 = vmatpush1.msra.mxu0 0.0
      %638 = vmatprep.subr.mxu0 0.0
      %639 = vmatpush1.msra.mxu0 0.0
      %640 = vmatprep.subr.mxu0 0.0
      %641 = vmatpush1.msra.mxu0 0.0
      %642 = vmatprep.subr.mxu0 0.0
      %643 = vmatpush1.msra.mxu0 0.0
      %644 = vmatprep.subr.mxu0 0.0
      %645 = vmatpush1.msra.mxu0 0.0
      %646 = vmatprep.subr.mxu0 0.0
      %647 = vmatpush1.msra.mxu0 0.0
      %648 = vmatprep.subr.mxu0 0.0
      %649 = vmatpush1.msra.mxu0 0.0
      %650 = vmatprep.subr.mxu0 0.0
      %651 = vmatpush1.msra.mxu0 0.0
      %652 = vmatprep.subr.mxu0 0.0
      %653 = vmatpush1.msra.mxu0 0.0
      %654 = vmatprep.subr.mxu0 0.0
      %655 = vmatpush1.msra.mxu0 0.0
      %656 = vmatprep.subr.mxu0 0.0
      %657 = vmatpush1.msra.mxu0 0.0
      %658 = vmatprep.subr.mxu0 0.0
      %659 = vmatpush1.msra.mxu0 0.0
      %660 = vmatprep.subr.mxu0 0.0
      %661 = vmatpush1.msra.mxu0 0.0
      %662 = vmatprep.subr.mxu0 0.0
      %663 = vmatpush1.msra.mxu0 0.0
      %664 = vmatprep.subr.mxu0 0.0
      %665 = vmatpush1.msra.mxu0 0.0
      %666 = vmatprep.subr.mxu0 0.0
      %667 = vmatpush1.msra.mxu0 0.0
      %668 = vmatprep.subr.mxu0 0.0
      %669 = vmatpush1.msra.mxu0 0.0
      %670 = vmatprep.subr.mxu0 0.0
      %671 = vmatpush1.msra.mxu0 0.0
      %672 = vmatprep.subr.mxu0 0.0
      %673 = vmatpush1.msra.mxu0 0.0
      %674 = vmatprep.subr.mxu0 0.0
      %675 = vmatpush1.msra.mxu0 0.0
      %676 = vmatprep.subr.mxu0 0.0
      %677 = vmatpush1.msra.mxu0 0.0
      %678 = vmatprep.subr.mxu0 0.0
      %679 = vmatpush1.msra.mxu0 0.0
      %680 = vmatprep.subr.mxu0 0.0
      %681 = vmatpush1.msra.mxu0 0.0
      %682 = vmatprep.subr.mxu0 0.0
      %683 = vmatpush1.msra.mxu0 0.0
      %684 = vmatprep.mubr.f32.mxu0 0.0
      %685 = vmatmul.mubr.f32.gmra.mrb[0].mxu0 %v525
      %v686 = vpop.f32.mrb[0].mxu0
      %v687 = vadd.f32 0.0, %v686
      %v688 = vpop.f32.mrb[0].mxu0
      %689 = vmatprep.mubr.f32.mxu0 0.0
      %690 = vmatmul.mubr.f32.gmra.mrb[0].mxu0 %v528
      %v691 = vpop.f32.mrb[0].mxu0
      %v692 = vadd.f32 0.0, %v691
      %v693 = vpop.f32.mrb[0].mxu0
      %694 = vmatprep.mubr.f32.mxu0 0.0
      %695 = vmatmul.mubr.f32.gmra.mrb[0].mxu0 %v531
      %v696 = vpop.f32.mrb[0].mxu0
      %v697 = vadd.f32 0.0, %v696
      %v698 = vpop.f32.mrb[0].mxu0
      %699 = vmatprep.mubr.f32.mxu0 0.0
      %700 = vmatmul.mubr.f32.gmra.mrb[0].mxu0 %v534
      %v701 = vpop.f32.mrb[0].mxu0
      %v702 = vadd.f32 0.0, %v701
      %v703 = vpop.f32.mrb[0].mxu0
      %704 = vmatprep.mubr.f32.mxu0 0.0
      %705 = vmatmul.mubr.f32.gmra.mrb[0].mxu0 %v537
      %v706 = vpop.f32.mrb[0].mxu0
      %v707 = vadd.f32 0.0, %v706
      %v708 = vpop.f32.mrb[0].mxu0
      %709 = vmatprep.mubr.f32.mxu0 0.0
      %710 = vmatmul.mubr.f32.gmra.mrb[0].mxu0 %v540
      %v711 = vpop.f32.mrb[0].mxu0
      %v712 = vadd.f32 0.0, %v711
      %v713 = vpop.f32.mrb[0].mxu0
      %714 = vmatprep.mubr.f32.mxu0 0.0
      %715 = vmatmul.mubr.f32.gmra.mrb[0].mxu0 %v543
      %v716 = vpop.f32.mrb[0].mxu0
      %v717 = vadd.f32 0.0, %v716
      %v718 = vpop.f32.mrb[0].mxu0
      %719 = vmatprep.mubr.f32.mxu0 0.0
      %720 = vmatmul.mubr.f32.gmra.mrb[0].mxu0 %v546
      %v721 = vpop.f32.mrb[0].mxu0
      %v722 = vadd.f32 0.0, %v721
      %v723 = vpop.f32.mrb[0].mxu0
      %724 = vmatprep.mubr.f32.mxu0 0.0
      %725 = vmatmul.mubr.f32.gmra.mrb[0].mxu0 %v549
      %v726 = vpop.f32.mrb[0].mxu0
      %v727 = vadd.f32 0.0, %v726
      %v728 = vpop.f32.mrb[0].mxu0
      %729 = vmatprep.mubr.f32.mxu0 0.0
      %730 = vmatmul.mubr.f32.gmra.mrb[0].mxu0 %v552
      %v731 = vpop.f32.mrb[0].mxu0
      %v732 = vadd.f32 0.0, %v731
      %v733 = vpop.f32.mrb[0].mxu0
      %734 = vmatprep.mubr.f32.mxu0 0.0
      %735 = vmatmul.mubr.f32.gmra.mrb[0].mxu0 %v555
      %v736 = vpop.f32.mrb[0].mxu0
      %v737 = vadd.f32 0.0, %v736
      %v738 = vpop.f32.mrb[0].mxu0
      %739 = vmatprep.mubr.f32.mxu0 0.0
      %740 = vmatmul.mubr.f32.gmra.mrb[0].mxu0 %v558
      %v741 = vpop.f32.mrb[0].mxu0
      %v742 = vadd.f32 0.0, %v741
      %v743 = vpop.f32.mrb[0].mxu0
      %744 = vmatprep.mubr.f32.mxu0 0.0
      %745 = vmatmul.mubr.f32.gmra.mrb[0].mxu0 %v561
      %v746 = vpop.f32.mrb[0].mxu0
      %v747 = vadd.f32 0.0, %v746
      %v748 = vpop.f32.mrb[0].mxu0
      %749 = vmatprep.mubr.f32.mxu0 0.0
      %750 = vmatmul.mubr.f32.gmra.mrb[0].mxu0 %v564
      %v751 = vpop.f32.mrb[0].mxu0
      %v752 = vadd.f32 0.0, %v751
      %v753 = vpop.f32.mrb[0].mxu0
      %754 = vmatprep.mubr.f32.mxu0 0.0
      %755 = vmatmul.mubr.f32.gmra.mrb[0].mxu0 %v567
      %v756 = vpop.f32.mrb[0].mxu0
      %v757 = vadd.f32 0.0, %v756
      %v758 = vpop.f32.mrb[0].mxu0
      %759 = vmatprep.mubr.f32.mxu0 0.0
      %760 = vmatmul.mubr.f32.gmra.mrb[0].mxu0 %v570
      %v761 = vpop.f32.mrb[0].mxu0
      %v762 = vadd.f32 0.0, %v761
      %v763 = vpop.f32.mrb[0].mxu0
      %764 = vmatprep.mubr.f32.mxu0 0.0
      %765 = vmatmul.mubr.f32.gmra.mrb[0].mxu0 %v573
      %v766 = vpop.f32.mrb[0].mxu0
      %v767 = vadd.f32 0.0, %v766
      %v768 = vpop.f32.mrb[0].mxu0
      %769 = vmatprep.mubr.f32.mxu0 0.0
      %770 = vmatmul.mubr.f32.gmra.mrb[0].mxu0 %v576
      %v771 = vpop.f32.mrb[0].mxu0
      %v772 = vadd.f32 0.0, %v771
      %v773 = vpop.f32.mrb[0].mxu0
      %774 = vmatprep.mubr.f32.mxu0 0.0
      %775 = vmatmul.mubr.f32.gmra.mrb[0].mxu0 %v579
      %v776 = vpop.f32.mrb[0].mxu0
      %v777 = vadd.f32 0.0, %v776
      %v778 = vpop.f32.mrb[0].mxu0
      %779 = vmatprep.mubr.f32.mxu0 0.0
      %780 = vmatmul.mubr.f32.gmra.mrb[0].mxu0 %v582
      %v781 = vpop.f32.mrb[0].mxu0
      %v782 = vadd.f32 0.0, %v781
      %v783 = vpop.f32.mrb[0].mxu0
      %784 = vmatprep.mubr.f32.mxu0 0.0
      %785 = vmatmul.mubr.f32.gmra.mrb[0].mxu0 %v585
      %v786 = vpop.f32.mrb[0].mxu0
      %v787 = vadd.f32 0.0, %v786
      %v788 = vpop.f32.mrb[0].mxu0
      %789 = vmatprep.mubr.f32.mxu0 0.0
      %790 = vmatmul.mubr.f32.gmra.mrb[0].mxu0 %v588
      %v791 = vpop.f32.mrb[0].mxu0
      %v792 = vadd.f32 0.0, %v791
      %v793 = vpop.f32.mrb[0].mxu0
      %794 = vmatprep.mubr.f32.mxu0 0.0
      %795 = vmatmul.mubr.f32.gmra.mrb[0].mxu0 %v591
      %v796 = vpop.f32.mrb[0].mxu0
      %v797 = vadd.f32 0.0, %v796
      %v798 = vpop.f32.mrb[0].mxu0
      %799 = vmatprep.mubr.f32.mxu0 0.0
      %800 = vmatmul.mubr.f32.gmra.mrb[0].mxu0 %v594
      %v801 = vpop.f32.mrb[0].mxu0
      %v802 = vadd.f32 0.0, %v801
      %v803 = vpop.f32.mrb[0].mxu0
      %804 = vmatprep.mubr.f32.mxu0 0.0
      %805 = vmatmul.mubr.f32.gmra.mrb[0].mxu0 %v597
      %v806 = vpop.f32.mrb[0].mxu0
      %v807 = vadd.f32 0.0, %v806
      %v808 = vpop.f32.mrb[0].mxu0
      %809 = vmatprep.mubr.f32.mxu0 0.0
      %810 = vmatmul.mubr.f32.gmra.mrb[0].mxu0 %v600
      %v811 = vpop.f32.mrb[0].mxu0
      %v812 = vadd.f32 0.0, %v811
      %v813 = vpop.f32.mrb[0].mxu0
      %814 = vmatprep.mubr.f32.mxu0 0.0
      %815 = vmatmul.mubr.f32.gmra.mrb[0].mxu0 %v603
      %v816 = vpop.f32.mrb[0].mxu0
      %v817 = vadd.f32 0.0, %v816
      %v818 = vpop.f32.mrb[0].mxu0
      %819 = vmatprep.mubr.f32.mxu0 0.0
      %820 = vmatmul.mubr.f32.gmra.mrb[0].mxu0 %v606
      %v821 = vpop.f32.mrb[0].mxu0
      %v822 = vadd.f32 0.0, %v821
      %v823 = vpop.f32.mrb[0].mxu0
      %824 = vmatprep.mubr.f32.mxu0 0.0
      %825 = vmatmul.mubr.f32.gmra.mrb[0].mxu0 %v609
      %v826 = vpop.f32.mrb[0].mxu0
      %v827 = vadd.f32 0.0, %v826
      %v828 = vpop.f32.mrb[0].mxu0
      %829 = vmatprep.mubr.f32.mxu0 0.0
      %830 = vmatmul.mubr.f32.gmra.mrb[0].mxu0 %v612
      %v831 = vpop.f32.mrb[0].mxu0
      %v832 = vadd.f32 0.0, %v831
      %v833 = vpop.f32.mrb[0].mxu0
      %834 = vmatprep.mubr.f32.mxu0 0.0
      %835 = vmatmul.mubr.f32.gmra.mrb[0].mxu0 %v615
      %v836 = vpop.f32.mrb[0].mxu0
      %v837 = vadd.f32 0.0, %v836
      %v838 = vpop.f32.mrb[0].mxu0
      %839 = vmatprep.mubr.f32.mxu0 0.0
      %840 = vmatmul.mubr.f32.gmra.mrb[0].mxu0 %v618
      %v841 = vpop.f32.mrb[0].mxu0
      %v842 = vadd.f32 0.0, %v841
      %v843 = vpop.f32.mrb[0].mxu0
      %844 = vdwg.mxu0
      %v846 = vsel %vm378, %v457, 0
      %v849 = vsel %vm378, %v458, 0
      %v852 = vsel %vm378, %v459, 0
      %v855 = vsel %vm378, %v460, 0
      %v858 = vsel %vm378, %v461, 0
      %v861 = vsel %vm378, %v462, 0
      %v864 = vsel %vm378, %v463, 0
      %v867 = vsel %vm378, %v464, 0
      %v870 = vsel %vm378, %v465, 0
      %v873 = vsel %vm378, %v466, 0
      %v876 = vsel %vm378, %v467, 0
      %v879 = vsel %vm378, %v468, 0
      %v882 = vsel %vm378, %v469, 0
      %v885 = vsel %vm378, %v470, 0
      %v888 = vsel %vm378, %v471, 0
      %v891 = vsel %vm378, %v472, 0
      %v894 = vsel %vm378, %v473, 0
      %v897 = vsel %vm378, %v474, 0
      %v900 = vsel %vm378, %v475, 0
      %v903 = vsel %vm378, %v476, 0
      %v906 = vsel %vm378, %v477, 0
      %v909 = vsel %vm378, %v478, 0
      %v912 = vsel %vm378, %v479, 0
      %v915 = vsel %vm378, %v480, 0
      %v918 = vsel %vm378, %v481, 0
      %v921 = vsel %vm378, %v482, 0
      %v924 = vsel %vm378, %v483, 0
      %v927 = vsel %vm378, %v484, 0
      %v930 = vsel %vm378, %v485, 0
      %v933 = vsel %vm378, %v486, 0
      %v936 = vsel %vm378, %v487, 0
      %v939 = vsel %vm378, %v488, 0
      %941 = vmatprep.subr.mxu0 0.0
      %942 = vmatpush1.msra.mxu0 %v489
      %943 = vmatprep.subr.mxu0 0.0
      %944 = vmatpush1.msra.mxu0 0.0
      %945 = vmatprep.subr.mxu0 0.0
      %946 = vmatpush1.msra.mxu0 0.0
      %947 = vmatprep.subr.mxu0 0.0
      %948 = vmatpush1.msra.mxu0 0.0
      %949 = vmatprep.subr.mxu0 0.0
      %950 = vmatpush1.msra.mxu0 0.0
      %951 = vmatprep.subr.mxu0 0.0
      %952 = vmatpush1.msra.mxu0 0.0
      %953 = vmatprep.subr.mxu0 0.0
      %954 = vmatpush1.msra.mxu0 0.0
      %955 = vmatprep.subr.mxu0 0.0
      %956 = vmatpush1.msra.mxu0 0.0
      %957 = vmatprep.subr.mxu0 0.0
      %958 = vmatpush1.msra.mxu0 0.0
      %959 = vmatprep.subr.mxu0 0.0
      %960 = vmatpush1.msra.mxu0 0.0
      %961 = vmatprep.subr.mxu0 0.0
      %962 = vmatpush1.msra.mxu0 0.0
      %963 = vmatprep.subr.mxu0 0.0
      %964 = vmatpush1.msra.mxu0 0.0
      %965 = vmatprep.subr.mxu0 0.0
      %966 = vmatpush1.msra.mxu0 0.0
      %967 = vmatprep.subr.mxu0 0.0
      %968 = vmatpush1.msra.mxu0 0.0
      %969 = vmatprep.subr.mxu0 0.0
      %970 = vmatpush1.msra.mxu0 0.0
      %971 = vmatprep.subr.mxu0 0.0
      %972 = vmatpush1.msra.mxu0 0.0
      %973 = vmatprep.subr.mxu0 0.0
      %974 = vmatpush1.msra.mxu0 0.0
      %975 = vmatprep.subr.mxu0 0.0
      %976 = vmatpush1.msra.mxu0 0.0
      %977 = vmatprep.subr.mxu0 0.0
      %978 = vmatpush1.msra.mxu0 0.0
      %979 = vmatprep.subr.mxu0 0.0
      %980 = vmatpush1.msra.mxu0 0.0
      %981 = vmatprep.subr.mxu0 0.0
      %982 = vmatpush1.msra.mxu0 0.0
      %983 = vmatprep.subr.mxu0 0.0
      %984 = vmatpush1.msra.mxu0 0.0
      %985 = vmatprep.subr.mxu0 0.0
      %986 = vmatpush1.msra.mxu0 0.0
      %987 = vmatprep.subr.mxu0 0.0
      %988 = vmatpush1.msra.mxu0 0.0
      %989 = vmatprep.subr.mxu0 0.0
      %990 = vmatpush1.msra.mxu0 0.0
      %991 = vmatprep.subr.mxu0 0.0
      %992 = vmatpush1.msra.mxu0 0.0
      %993 = vmatprep.subr.mxu0 0.0
      %994 = vmatpush1.msra.mxu0 0.0
      %995 = vmatprep.subr.mxu0 0.0
      %996 = vmatpush1.msra.mxu0 0.0
      %997 = vmatprep.subr.mxu0 0.0
      %998 = vmatpush1.msra.mxu0 0.0
      %999 = vmatprep.subr.mxu0 0.0
      %1000 = vmatpush1.msra.mxu0 0.0
      %1001 = vmatprep.subr.mxu0 0.0
      %1002 = vmatpush1.msra.mxu0 0.0
      %1003 = vmatprep.subr.mxu0 0.0
      %1004 = vmatpush1.msra.mxu0 0.0
      %1005 = vmatprep.mubr.f32.mxu0 0.0
      %1006 = vmatmul.mubr.f32.gmra.mrb[0].mxu0 %v846
      %v1007 = vpop.f32.mrb[0].mxu0
      %v1008 = vadd.f32 %v687, %v1007
      %v1009 = vpop.f32.mrb[0].mxu0
      %1010 = vmatprep.mubr.f32.mxu0 0.0
      %1011 = vmatmul.mubr.f32.gmra.mrb[0].mxu0 %v849
      %v1012 = vpop.f32.mrb[0].mxu0
      %v1013 = vadd.f32 %v692, %v1012
      %v1014 = vpop.f32.mrb[0].mxu0
      %1015 = vmatprep.mubr.f32.mxu0 0.0
      %1016 = vmatmul.mubr.f32.gmra.mrb[0].mxu0 %v852
      %v1017 = vpop.f32.mrb[0].mxu0
      %v1018 = vadd.f32 %v697, %v1017
      %v1019 = vpop.f32.mrb[0].mxu0
      %1020 = vmatprep.mubr.f32.mxu0 0.0
      %1021 = vmatmul.mubr.f32.gmra.mrb[0].mxu0 %v855
      %v1022 = vpop.f32.mrb[0].mxu0
      %v1023 = vadd.f32 %v702, %v1022
      %v1024 = vpop.f32.mrb[0].mxu0
      %1025 = vmatprep.mubr.f32.mxu0 0.0
      %1026 = vmatmul.mubr.f32.gmra.mrb[0].mxu0 %v858
      %v1027 = vpop.f32.mrb[0].mxu0
      %v1028 = vadd.f32 %v707, %v1027
      %v1029 = vpop.f32.mrb[0].mxu0
      %1030 = vmatprep.mubr.f32.mxu0 0.0
      %1031 = vmatmul.mubr.f32.gmra.mrb[0].mxu0 %v861
      %v1032 = vpop.f32.mrb[0].mxu0
      %v1033 = vadd.f32 %v712, %v1032
      %v1034 = vpop.f32.mrb[0].mxu0
      %1035 = vmatprep.mubr.f32.mxu0 0.0
      %1036 = vmatmul.mubr.f32.gmra.mrb[0].mxu0 %v864
      %v1037 = vpop.f32.mrb[0].mxu0
      %v1038 = vadd.f32 %v717, %v1037
      %v1039 = vpop.f32.mrb[0].mxu0
      %1040 = vmatprep.mubr.f32.mxu0 0.0
      %1041 = vmatmul.mubr.f32.gmra.mrb[0].mxu0 %v867
      %v1042 = vpop.f32.mrb[0].mxu0
      %v1043 = vadd.f32 %v722, %v1042
      %v1044 = vpop.f32.mrb[0].mxu0
      %1045 = vmatprep.mubr.f32.mxu0 0.0
      %1046 = vmatmul.mubr.f32.gmra.mrb[0].mxu0 %v870
      %v1047 = vpop.f32.mrb[0].mxu0
      %v1048 = vadd.f32 %v727, %v1047
      %v1049 = vpop.f32.mrb[0].mxu0
      %1050 = vmatprep.mubr.f32.mxu0 0.0
      %1051 = vmatmul.mubr.f32.gmra.mrb[0].mxu0 %v873
      %v1052 = vpop.f32.mrb[0].mxu0
      %v1053 = vadd.f32 %v732, %v1052
      %v1054 = vpop.f32.mrb[0].mxu0
      %1055 = vmatprep.mubr.f32.mxu0 0.0
      %1056 = vmatmul.mubr.f32.gmra.mrb[0].mxu0 %v876
      %v1057 = vpop.f32.mrb[0].mxu0
      %v1058 = vadd.f32 %v737, %v1057
      %v1059 = vpop.f32.mrb[0].mxu0
      %1060 = vmatprep.mubr.f32.mxu0 0.0
      %1061 = vmatmul.mubr.f32.gmra.mrb[0].mxu0 %v879
      %v1062 = vpop.f32.mrb[0].mxu0
      %v1063 = vadd.f32 %v742, %v1062
      %v1064 = vpop.f32.mrb[0].mxu0
      %1065 = vmatprep.mubr.f32.mxu0 0.0
      %1066 = vmatmul.mubr.f32.gmra.mrb[0].mxu0 %v882
      %v1067 = vpop.f32.mrb[0].mxu0
      %v1068 = vadd.f32 %v747, %v1067
      %v1069 = vpop.f32.mrb[0].mxu0
      %1070 = vmatprep.mubr.f32.mxu0 0.0
      %1071 = vmatmul.mubr.f32.gmra.mrb[0].mxu0 %v885
      %v1072 = vpop.f32.mrb[0].mxu0
      %v1073 = vadd.f32 %v752, %v1072
      %v1074 = vpop.f32.mrb[0].mxu0
      %1075 = vmatprep.mubr.f32.mxu0 0.0
      %1076 = vmatmul.mubr.f32.gmra.mrb[0].mxu0 %v888
      %v1077 = vpop.f32.mrb[0].mxu0
      %v1078 = vadd.f32 %v757, %v1077
      %v1079 = vpop.f32.mrb[0].mxu0
      %1080 = vmatprep.mubr.f32.mxu0 0.0
      %1081 = vmatmul.mubr.f32.gmra.mrb[0].mxu0 %v891
      %v1082 = vpop.f32.mrb[0].mxu0
      %v1083 = vadd.f32 %v762, %v1082
      %v1084 = vpop.f32.mrb[0].mxu0
      %1085 = vmatprep.mubr.f32.mxu0 0.0
      %1086 = vmatmul.mubr.f32.gmra.mrb[0].mxu0 %v894
      %v1087 = vpop.f32.mrb[0].mxu0
      %v1088 = vadd.f32 %v767, %v1087
      %v1089 = vpop.f32.mrb[0].mxu0
      %1090 = vmatprep.mubr.f32.mxu0 0.0
      %1091 = vmatmul.mubr.f32.gmra.mrb[0].mxu0 %v897
      %v1092 = vpop.f32.mrb[0].mxu0
      %v1093 = vadd.f32 %v772, %v1092
      %v1094 = vpop.f32.mrb[0].mxu0
      %1095 = vmatprep.mubr.f32.mxu0 0.0
      %1096 = vmatmul.mubr.f32.gmra.mrb[0].mxu0 %v900
      %v1097 = vpop.f32.mrb[0].mxu0
      %v1098 = vadd.f32 %v777, %v1097
      %v1099 = vpop.f32.mrb[0].mxu0
      %1100 = vmatprep.mubr.f32.mxu0 0.0
      %1101 = vmatmul.mubr.f32.gmra.mrb[0].mxu0 %v903
      %v1102 = vpop.f32.mrb[0].mxu0
      %v1103 = vadd.f32 %v782, %v1102
      %v1104 = vpop.f32.mrb[0].mxu0
      %1105 = vmatprep.mubr.f32.mxu0 0.0
      %1106 = vmatmul.mubr.f32.gmra.mrb[0].mxu0 %v906
      %v1107 = vpop.f32.mrb[0].mxu0
      %v1108 = vadd.f32 %v787, %v1107
      %v1109 = vpop.f32.mrb[0].mxu0
      %1110 = vmatprep.mubr.f32.mxu0 0.0
      %1111 = vmatmul.mubr.f32.gmra.mrb[0].mxu0 %v909
      %v1112 = vpop.f32.mrb[0].mxu0
      %v1113 = vadd.f32 %v792, %v1112
      %v1114 = vpop.f32.mrb[0].mxu0
      %1115 = vmatprep.mubr.f32.mxu0 0.0
      %1116 = vmatmul.mubr.f32.gmra.mrb[0].mxu0 %v912
      %v1117 = vpop.f32.mrb[0].mxu0
      %v1118 = vadd.f32 %v797, %v1117
      %v1119 = vpop.f32.mrb[0].mxu0
      %1120 = vmatprep.mubr.f32.mxu0 0.0
      %1121 = vmatmul.mubr.f32.gmra.mrb[0].mxu0 %v915
      %v1122 = vpop.f32.mrb[0].mxu0
      %v1123 = vadd.f32 %v802, %v1122
      %v1124 = vpop.f32.mrb[0].mxu0
      %1125 = vmatprep.mubr.f32.mxu0 0.0
      %1126 = vmatmul.mubr.f32.gmra.mrb[0].mxu0 %v918
      %v1127 = vpop.f32.mrb[0].mxu0
      %v1128 = vadd.f32 %v807, %v1127
      %v1129 = vpop.f32.mrb[0].mxu0
      %1130 = vmatprep.mubr.f32.mxu0 0.0
      %1131 = vmatmul.mubr.f32.gmra.mrb[0].mxu0 %v921
      %v1132 = vpop.f32.mrb[0].mxu0
      %v1133 = vadd.f32 %v812, %v1132
      %v1134 = vpop.f32.mrb[0].mxu0
      %1135 = vmatprep.mubr.f32.mxu0 0.0
      %1136 = vmatmul.mubr.f32.gmra.mrb[0].mxu0 %v924
      %v1137 = vpop.f32.mrb[0].mxu0
      %v1138 = vadd.f32 %v817, %v1137
      %v1139 = vpop.f32.mrb[0].mxu0
      %1140 = vmatprep.mubr.f32.mxu0 0.0
      %1141 = vmatmul.mubr.f32.gmra.mrb[0].mxu0 %v927
      %v1142 = vpop.f32.mrb[0].mxu0
      %v1143 = vadd.f32 %v822, %v1142
      %v1144 = vpop.f32.mrb[0].mxu0
      %1145 = vmatprep.mubr.f32.mxu0 0.0
      %1146 = vmatmul.mubr.f32.gmra.mrb[0].mxu0 %v930
      %v1147 = vpop.f32.mrb[0].mxu0
      %v1148 = vadd.f32 %v827, %v1147
      %v1149 = vpop.f32.mrb[0].mxu0
      %1150 = vmatprep.mubr.f32.mxu0 0.0
      %1151 = vmatmul.mubr.f32.gmra.mrb[0].mxu0 %v933
      %v1152 = vpop.f32.mrb[0].mxu0
      %v1153 = vadd.f32 %v832, %v1152
      %v1154 = vpop.f32.mrb[0].mxu0
      %1155 = vmatprep.mubr.f32.mxu0 0.0
      %1156 = vmatmul.mubr.f32.gmra.mrb[0].mxu0 %v936
      %v1157 = vpop.f32.mrb[0].mxu0
      %v1158 = vadd.f32 %v837, %v1157
      %v1159 = vpop.f32.mrb[0].mxu0
      %1160 = vmatprep.mubr.f32.mxu0 0.0
      %1161 = vmatmul.mubr.f32.gmra.mrb[0].mxu0 %v939
      %v1162 = vpop.f32.mrb[0].mxu0
      %v1163 = vadd.f32 %v842, %v1162
      %v1164 = vpop.f32.mrb[0].mxu0
      %1165 = vdwg.mxu0
      %v1166 = vld [vmem:[#allocation2 + $0x9] sm:$0xff]
      %v1167 = vld [vmem:[#allocation2 + $0x11] sm:$0xff]
      %v1168 = vld [vmem:[#allocation2 + $0x29] sm:$0xff]
      %v1169 = vld [vmem:[#allocation2 + $0x31] sm:$0xff]
      %v1170 = vld [vmem:[#allocation2 + $0x49] sm:$0xff]
      %v1171 = vld [vmem:[#allocation2 + $0x51] sm:$0xff]
      %v1172 = vld [vmem:[#allocation2 + $0x69] sm:$0xff]
      %v1173 = vld [vmem:[#allocation2 + $0x71] sm:$0xff]
      %v1174 = vld [vmem:[#allocation2 + $0x89] sm:$0xff]
      %v1175 = vld [vmem:[#allocation2 + $0x91] sm:$0xff]
      %v1176 = vld [vmem:[#allocation2 + $0xa9] sm:$0xff]
      %v1177 = vld [vmem:[#allocation2 + $0xb1] sm:$0xff]
      %v1178 = vld [vmem:[#allocation2 + $0xc9] sm:$0xff]
      %v1179 = vld [vmem:[#allocation2 + $0xd1] sm:$0xff]
      %v1180 = vld [vmem:[#allocation2 + $0xe9] sm:$0xff]
      %v1181 = vld [vmem:[#allocation2 + $0xf1] sm:$0xff]
      %v1182 = vld [vmem:[#allocation2 + $0x109] sm:$0xff]
      %v1183 = vld [vmem:[#allocation2 + $0x111] sm:$0xff]
      %v1184 = vld [vmem:[#allocation2 + $0x129] sm:$0xff]
      %v1185 = vld [vmem:[#allocation2 + $0x131] sm:$0xff]
      %v1186 = vld [vmem:[#allocation2 + $0x149] sm:$0xff]
      %v1187 = vld [vmem:[#allocation2 + $0x151] sm:$0xff]
      %v1188 = vld [vmem:[#allocation2 + $0x169] sm:$0xff]
      %v1189 = vld [vmem:[#allocation2 + $0x171] sm:$0xff]
      %v1190 = vld [vmem:[#allocation2 + $0x189] sm:$0xff]
      %v1191 = vld [vmem:[#allocation2 + $0x191] sm:$0xff]
      %v1192 = vld [vmem:[#allocation2 + $0x1a9] sm:$0xff]
      %v1193 = vld [vmem:[#allocation2 + $0x1b1] sm:$0xff]
      %v1194 = vld [vmem:[#allocation2 + $0x1c9] sm:$0xff]
      %v1195 = vld [vmem:[#allocation2 + $0x1d1] sm:$0xff]
      %v1196 = vld [vmem:[#allocation2 + $0x1e9] sm:$0xff]
      %v1197 = vld [vmem:[#allocation2 + $0x1f1] sm:$0xff]
      %s1198 = scalar_lea.vmem %s3, 16
      %v1199 = vld [vmem:[%s1198] sm:$0xff]
      %v1201 = vsel %vm378, %v1166, 0
      %v1204 = vsel %vm378, %v1167, 0
      %v1207 = vsel %vm378, %v1168, 0
      %v1210 = vsel %vm378, %v1169, 0
      %v1213 = vsel %vm378, %v1170, 0
      %v1216 = vsel %vm378, %v1171, 0
      %v1219 = vsel %vm378, %v1172, 0
      %v1222 = vsel %vm378, %v1173, 0
      %v1225 = vsel %vm378, %v1174, 0
      %v1228 = vsel %vm378, %v1175, 0
      %v1231 = vsel %vm378, %v1176, 0
      %v1234 = vsel %vm378, %v1177, 0
      %v1237 = vsel %vm378, %v1178, 0
      %v1240 = vsel %vm378, %v1179, 0
      %v1243 = vsel %vm378, %v1180, 0
      %v1246 = vsel %vm378, %v1181, 0
      %v1249 = vsel %vm378, %v1182, 0
      %v1252 = vsel %vm378, %v1183, 0
      %v1255 = vsel %vm378, %v1184, 0
      %v1258 = vsel %vm378, %v1185, 0
      %v1261 = vsel %vm378, %v1186, 0
      %v1264 = vsel %vm378, %v1187, 0
      %v1267 = vsel %vm378, %v1188, 0
      %v1270 = vsel %vm378, %v1189, 0
      %v1273 = vsel %vm378, %v1190, 0
      %v1276 = vsel %vm378, %v1191, 0
      %v1279 = vsel %vm378, %v1192, 0
      %v1282 = vsel %vm378, %v1193, 0
      %v1285 = vsel %vm378, %v1194, 0
      %v1288 = vsel %vm378, %v1195, 0
      %v1291 = vsel %vm378, %v1196, 0
      %v1294 = vsel %vm378, %v1197, 0
      %1296 = vmatprep.subr.mxu0 0.0
      %1297 = vmatpush1.msra.mxu0 %v1199
      %1298 = vmatprep.subr.mxu0 0.0
      %1299 = vmatpush1.msra.mxu0 0.0
      %1300 = vmatprep.subr.mxu0 0.0
      %1301 = vmatpush1.msra.mxu0 0.0
      %1302 = vmatprep.subr.mxu0 0.0
      %1303 = vmatpush1.msra.mxu0 0.0
      %1304 = vmatprep.subr.mxu0 0.0
      %1305 = vmatpush1.msra.mxu0 0.0
      %1306 = vmatprep.subr.mxu0 0.0
      %1307 = vmatpush1.msra.mxu0 0.0
      %1308 = vmatprep.subr.mxu0 0.0
      %1309 = vmatpush1.msra.mxu0 0.0
      %1310 = vmatprep.subr.mxu0 0.0
      %1311 = vmatpush1.msra.mxu0 0.0
      %1312 = vmatprep.subr.mxu0 0.0
      %1313 = vmatpush1.msra.mxu0 0.0
      %1314 = vmatprep.subr.mxu0 0.0
      %1315 = vmatpush1.msra.mxu0 0.0
      %1316 = vmatprep.subr.mxu0 0.0
      %1317 = vmatpush1.msra.mxu0 0.0
      %1318 = vmatprep.subr.mxu0 0.0
      %1319 = vmatpush1.msra.mxu0 0.0
      %1320 = vmatprep.subr.mxu0 0.0
      %1321 = vmatpush1.msra.mxu0 0.0
      %1322 = vmatprep.subr.mxu0 0.0
      %1323 = vmatpush1.msra.mxu0 0.0
      %1324 = vmatprep.subr.mxu0 0.0
      %1325 = vmatpush1.msra.mxu0 0.0
      %1326 = vmatprep.subr.mxu0 0.0
      %1327 = vmatpush1.msra.mxu0 0.0
      %1328 = vmatprep.subr.mxu0 0.0
      %1329 = vmatpush1.msra.mxu0 0.0
      %1330 = vmatprep.subr.mxu0 0.0
      %1331 = vmatpush1.msra.mxu0 0.0
      %1332 = vmatprep.subr.mxu0 0.0
      %1333 = vmatpush1.msra.mxu0 0.0
      %1334 = vmatprep.subr.mxu0 0.0
      %1335 = vmatpush1.msra.mxu0 0.0
      %1336 = vmatprep.subr.mxu0 0.0
      %1337 = vmatpush1.msra.mxu0 0.0
      %1338 = vmatprep.subr.mxu0 0.0
      %1339 = vmatpush1.msra.mxu0 0.0
      %1340 = vmatprep.subr.mxu0 0.0
      %1341 = vmatpush1.msra.mxu0 0.0
      %1342 = vmatprep.subr.mxu0 0.0
      %1343 = vmatpush1.msra.mxu0 0.0
      %1344 = vmatprep.subr.mxu0 0.0
      %1345 = vmatpush1.msra.mxu0 0.0
      %1346 = vmatprep.subr.mxu0 0.0
      %1347 = vmatpush1.msra.mxu0 0.0
      %1348 = vmatprep.subr.mxu0 0.0
      %1349 = vmatpush1.msra.mxu0 0.0
      %1350 = vmatprep.subr.mxu0 0.0
      %1351 = vmatpush1.msra.mxu0 0.0
      %1352 = vmatprep.subr.mxu0 0.0
      %1353 = vmatpush1.msra.mxu0 0.0
      %1354 = vmatprep.subr.mxu0 0.0
      %1355 = vmatpush1.msra.mxu0 0.0
      %1356 = vmatprep.subr.mxu0 0.0
      %1357 = vmatpush1.msra.mxu0 0.0
      %1358 = vmatprep.subr.mxu0 0.0
      %1359 = vmatpush1.msra.mxu0 0.0
      %1360 = vmatprep.mubr.f32.mxu0 0.0
      %1361 = vmatmul.mubr.f32.gmra.mrb[0].mxu0 %v1201
      %v1362 = vpop.f32.mrb[0].mxu0
      %v1363 = vadd.f32 0.0, %v1362
      %v1364 = vpop.f32.mrb[0].mxu0
      %1365 = vmatprep.mubr.f32.mxu0 0.0
      %1366 = vmatmul.mubr.f32.gmra.mrb[0].mxu0 %v1204
      %v1367 = vpop.f32.mrb[0].mxu0
      %v1368 = vadd.f32 0.0, %v1367
      %v1369 = vpop.f32.mrb[0].mxu0
      %1370 = vmatprep.mubr.f32.mxu0 0.0
      %1371 = vmatmul.mubr.f32.gmra.mrb[0].mxu0 %v1207
      %v1372 = vpop.f32.mrb[0].mxu0
      %v1373 = vadd.f32 0.0, %v1372
      %v1374 = vpop.f32.mrb[0].mxu0
      %1375 = vmatprep.mubr.f32.mxu0 0.0
      %1376 = vmatmul.mubr.f32.gmra.mrb[0].mxu0 %v1210
      %v1377 = vpop.f32.mrb[0].mxu0
      %v1378 = vadd.f32 0.0, %v1377
      %v1379 = vpop.f32.mrb[0].mxu0
      %1380 = vmatprep.mubr.f32.mxu0 0.0
      %1381 = vmatmul.mubr.f32.gmra.mrb[0].mxu0 %v1213
      %v1382 = vpop.f32.mrb[0].mxu0
      %v1383 = vadd.f32 0.0, %v1382
      %v1384 = vpop.f32.mrb[0].mxu0
      %1385 = vmatprep.mubr.f32.mxu0 0.0
      %1386 = vmatmul.mubr.f32.gmra.mrb[0].mxu0 %v1216
      %v1387 = vpop.f32.mrb[0].mxu0
      %v1388 = vadd.f32 0.0, %v1387
      %v1389 = vpop.f32.mrb[0].mxu0
      %1390 = vmatprep.mubr.f32.mxu0 0.0
      %1391 = vmatmul.mubr.f32.gmra.mrb[0].mxu0 %v1219
      %v1392 = vpop.f32.mrb[0].mxu0
      %v1393 = vadd.f32 0.0, %v1392
      %v1394 = vpop.f32.mrb[0].mxu0
      %1395 = vmatprep.mubr.f32.mxu0 0.0
      %1396 = vmatmul.mubr.f32.gmra.mrb[0].mxu0 %v1222
      %v1397 = vpop.f32.mrb[0].mxu0
      %v1398 = vadd.f32 0.0, %v1397
      %v1399 = vpop.f32.mrb[0].mxu0
      %1400 = vmatprep.mubr.f32.mxu0 0.0
      %1401 = vmatmul.mubr.f32.gmra.mrb[0].mxu0 %v1225
      %v1402 = vpop.f32.mrb[0].mxu0
      %v1403 = vadd.f32 0.0, %v1402
      %v1404 = vpop.f32.mrb[0].mxu0
      %1405 = vmatprep.mubr.f32.mxu0 0.0
      %1406 = vmatmul.mubr.f32.gmra.mrb[0].mxu0 %v1228
      %v1407 = vpop.f32.mrb[0].mxu0
      %v1408 = vadd.f32 0.0, %v1407
      %v1409 = vpop.f32.mrb[0].mxu0
      %1410 = vmatprep.mubr.f32.mxu0 0.0
      %1411 = vmatmul.mubr.f32.gmra.mrb[0].mxu0 %v1231
      %v1412 = vpop.f32.mrb[0].mxu0
      %v1413 = vadd.f32 0.0, %v1412
      %v1414 = vpop.f32.mrb[0].mxu0
      %1415 = vmatprep.mubr.f32.mxu0 0.0
      %1416 = vmatmul.mubr.f32.gmra.mrb[0].mxu0 %v1234
      %v1417 = vpop.f32.mrb[0].mxu0
      %v1418 = vadd.f32 0.0, %v1417
      %v1419 = vpop.f32.mrb[0].mxu0
      %1420 = vmatprep.mubr.f32.mxu0 0.0
      %1421 = vmatmul.mubr.f32.gmra.mrb[0].mxu0 %v1237
      %v1422 = vpop.f32.mrb[0].mxu0
      %v1423 = vadd.f32 0.0, %v1422
      %v1424 = vpop.f32.mrb[0].mxu0
      %1425 = vmatprep.mubr.f32.mxu0 0.0
      %1426 = vmatmul.mubr.f32.gmra.mrb[0].mxu0 %v1240
      %v1427 = vpop.f32.mrb[0].mxu0
      %v1428 = vadd.f32 0.0, %v1427
      %v1429 = vpop.f32.mrb[0].mxu0
      %1430 = vmatprep.mubr.f32.mxu0 0.0
      %1431 = vmatmul.mubr.f32.gmra.mrb[0].mxu0 %v1243
      %v1432 = vpop.f32.mrb[0].mxu0
      %v1433 = vadd.f32 0.0, %v1432
      %v1434 = vpop.f32.mrb[0].mxu0
      %1435 = vmatprep.mubr.f32.mxu0 0.0
      %1436 = vmatmul.mubr.f32.gmra.mrb[0].mxu0 %v1246
      %v1437 = vpop.f32.mrb[0].mxu0
      %v1438 = vadd.f32 0.0, %v1437
      %v1439 = vpop.f32.mrb[0].mxu0
      %1440 = vmatprep.mubr.f32.mxu0 0.0
      %1441 = vmatmul.mubr.f32.gmra.mrb[0].mxu0 %v1249
      %v1442 = vpop.f32.mrb[0].mxu0
      %v1443 = vadd.f32 0.0, %v1442
      %v1444 = vpop.f32.mrb[0].mxu0
      %1445 = vmatprep.mubr.f32.mxu0 0.0
      %1446 = vmatmul.mubr.f32.gmra.mrb[0].mxu0 %v1252
      %v1447 = vpop.f32.mrb[0].mxu0
      %v1448 = vadd.f32 0.0, %v1447
      %v1449 = vpop.f32.mrb[0].mxu0
      %1450 = vmatprep.mubr.f32.mxu0 0.0
      %1451 = vmatmul.mubr.f32.gmra.mrb[0].mxu0 %v1255
      %v1452 = vpop.f32.mrb[0].mxu0
      %v1453 = vadd.f32 0.0, %v1452
      %v1454 = vpop.f32.mrb[0].mxu0
      %1455 = vmatprep.mubr.f32.mxu0 0.0
      %1456 = vmatmul.mubr.f32.gmra.mrb[0].mxu0 %v1258
      %v1457 = vpop.f32.mrb[0].mxu0
      %v1458 = vadd.f32 0.0, %v1457
      %v1459 = vpop.f32.mrb[0].mxu0
      %1460 = vmatprep.mubr.f32.mxu0 0.0
      %1461 = vmatmul.mubr.f32.gmra.mrb[0].mxu0 %v1261
      %v1462 = vpop.f32.mrb[0].mxu0
      %v1463 = vadd.f32 0.0, %v1462
      %v1464 = vpop.f32.mrb[0].mxu0
      %1465 = vmatprep.mubr.f32.mxu0 0.0
      %1466 = vmatmul.mubr.f32.gmra.mrb[0].mxu0 %v1264
      %v1467 = vpop.f32.mrb[0].mxu0
      %v1468 = vadd.f32 0.0, %v1467
      %v1469 = vpop.f32.mrb[0].mxu0
      %1470 = vmatprep.mubr.f32.mxu0 0.0
      %1471 = vmatmul.mubr.f32.gmra.mrb[0].mxu0 %v1267
      %v1472 = vpop.f32.mrb[0].mxu0
      %v1473 = vadd.f32 0.0, %v1472
      %v1474 = vpop.f32.mrb[0].mxu0
      %1475 = vmatprep.mubr.f32.mxu0 0.0
      %1476 = vmatmul.mubr.f32.gmra.mrb[0].mxu0 %v1270
      %v1477 = vpop.f32.mrb[0].mxu0
      %v1478 = vadd.f32 0.0, %v1477
      %v1479 = vpop.f32.mrb[0].mxu0
      %1480 = vmatprep.mubr.f32.mxu0 0.0
      %1481 = vmatmul.mubr.f32.gmra.mrb[0].mxu0 %v1273
      %v1482 = vpop.f32.mrb[0].mxu0
      %v1483 = vadd.f32 0.0, %v1482
      %v1484 = vpop.f32.mrb[0].mxu0
      %1485 = vmatprep.mubr.f32.mxu0 0.0
      %1486 = vmatmul.mubr.f32.gmra.mrb[0].mxu0 %v1276
      %v1487 = vpop.f32.mrb[0].mxu0
      %v1488 = vadd.f32 0.0, %v1487
      %v1489 = vpop.f32.mrb[0].mxu0
      %1490 = vmatprep.mubr.f32.mxu0 0.0
      %1491 = vmatmul.mubr.f32.gmra.mrb[0].mxu0 %v1279
      %v1492 = vpop.f32.mrb[0].mxu0
      %v1493 = vadd.f32 0.0, %v1492
      %v1494 = vpop.f32.mrb[0].mxu0
      %1495 = vmatprep.mubr.f32.mxu0 0.0
      %1496 = vmatmul.mubr.f32.gmra.mrb[0].mxu0 %v1282
      %v1497 = vpop.f32.mrb[0].mxu0
      %v1498 = vadd.f32 0.0, %v1497
      %v1499 = vpop.f32.mrb[0].mxu0
      %1500 = vmatprep.mubr.f32.mxu0 0.0
      %1501 = vmatmul.mubr.f32.gmra.mrb[0].mxu0 %v1285
      %v1502 = vpop.f32.mrb[0].mxu0
      %v1503 = vadd.f32 0.0, %v1502
      %v1504 = vpop.f32.mrb[0].mxu0
      %1505 = vmatprep.mubr.f32.mxu0 0.0
      %1506 = vmatmul.mubr.f32.gmra.mrb[0].mxu0 %v1288
      %v1507 = vpop.f32.mrb[0].mxu0
      %v1508 = vadd.f32 0.0, %v1507
      %v1509 = vpop.f32.mrb[0].mxu0
      %1510 = vmatprep.mubr.f32.mxu0 0.0
      %1511 = vmatmul.mubr.f32.gmra.mrb[0].mxu0 %v1291
      %v1512 = vpop.f32.mrb[0].mxu0
      %v1513 = vadd.f32 0.0, %v1512
      %v1514 = vpop.f32.mrb[0].mxu0
      %1515 = vmatprep.mubr.f32.mxu0 0.0
      %1516 = vmatmul.mubr.f32.gmra.mrb[0].mxu0 %v1294
      %v1517 = vpop.f32.mrb[0].mxu0
      %v1518 = vadd.f32 0.0, %v1517
      %v1519 = vpop.f32.mrb[0].mxu0
      %1520 = vdwg.mxu0
      %v1521 = vadd.f32 %v1008, %v1363
      %v1522 = vadd.f32 %v1013, %v1368
      %v1523 = vadd.f32 %v1018, %v1373
      %v1524 = vadd.f32 %v1023, %v1378
      %v1525 = vadd.f32 %v1028, %v1383
      %v1526 = vadd.f32 %v1033, %v1388
      %v1527 = vadd.f32 %v1038, %v1393
      %v1528 = vadd.f32 %v1043, %v1398
      %v1529 = vadd.f32 %v1048, %v1403
      %v1530 = vadd.f32 %v1053, %v1408
      %v1531 = vadd.f32 %v1058, %v1413
      %v1532 = vadd.f32 %v1063, %v1418
      %v1533 = vadd.f32 %v1068, %v1423
      %v1534 = vadd.f32 %v1073, %v1428
      %v1535 = vadd.f32 %v1078, %v1433
      %v1536 = vadd.f32 %v1083, %v1438
      %v1537 = vadd.f32 %v1088, %v1443
      %v1538 = vadd.f32 %v1093, %v1448
      %v1539 = vadd.f32 %v1098, %v1453
      %v1540 = vadd.f32 %v1103, %v1458
      %v1541 = vadd.f32 %v1108, %v1463
      %v1542 = vadd.f32 %v1113, %v1468
      %v1543 = vadd.f32 %v1118, %v1473
      %v1544 = vadd.f32 %v1123, %v1478
      %v1545 = vadd.f32 %v1128, %v1483
      %v1546 = vadd.f32 %v1133, %v1488
      %v1547 = vadd.f32 %v1138, %v1493
      %v1548 = vadd.f32 %v1143, %v1498
      %v1549 = vadd.f32 %v1148, %v1503
      %v1550 = vadd.f32 %v1153, %v1508
      %v1551 = vadd.f32 %v1158, %v1513
      %v1552 = vadd.f32 %v1163, %v1518
      %v1553 = vld [vmem:[%s424 + $0x7] sm:$0xff]
      %v1554 = vld [vmem:[%s424 + $0xf] sm:$0xff]
      %v1555 = vld [vmem:[%s424 + $0x27] sm:$0xff]
      %v1556 = vld [vmem:[%s424 + $0x2f] sm:$0xff]
      %v1557 = vld [vmem:[%s424 + $0x47] sm:$0xff]
      %v1558 = vld [vmem:[%s424 + $0x4f] sm:$0xff]
      %v1559 = vld [vmem:[%s424 + $0x67] sm:$0xff]
      %v1560 = vld [vmem:[%s424 + $0x6f] sm:$0xff]
      %v1561 = vld [vmem:[%s424 + $0x87] sm:$0xff]
      %v1562 = vld [vmem:[%s424 + $0x8f] sm:$0xff]
      %v1563 = vld [vmem:[%s424 + $0xa7] sm:$0xff]
      %v1564 = vld [vmem:[%s424 + $0xaf] sm:$0xff]
      %v1565 = vld [vmem:[%s424 + $0xc7] sm:$0xff]
      %v1566 = vld [vmem:[%s424 + $0xcf] sm:$0xff]
      %v1567 = vld [vmem:[%s424 + $0xe7] sm:$0xff]
      %v1568 = vld [vmem:[%s424 + $0xef] sm:$0xff]
      %v1569 = vld [vmem:[%s424 + $0x107] sm:$0xff]
      %v1570 = vld [vmem:[%s424 + $0x10f] sm:$0xff]
      %v1571 = vld [vmem:[%s424 + $0x127] sm:$0xff]
      %v1572 = vld [vmem:[%s424 + $0x12f] sm:$0xff]
      %v1573 = vld [vmem:[%s424 + $0x147] sm:$0xff]
      %v1574 = vld [vmem:[%s424 + $0x14f] sm:$0xff]
      %v1575 = vld [vmem:[%s424 + $0x167] sm:$0xff]
      %v1576 = vld [vmem:[%s424 + $0x16f] sm:$0xff]
      %v1577 = vld [vmem:[%s424 + $0x187] sm:$0xff]
      %v1578 = vld [vmem:[%s424 + $0x18f] sm:$0xff]
      %v1579 = vld [vmem:[%s424 + $0x1a7] sm:$0xff]
      %v1580 = vld [vmem:[%s424 + $0x1af] sm:$0xff]
      %v1581 = vld [vmem:[%s424 + $0x1c7] sm:$0xff]
      %v1582 = vld [vmem:[%s424 + $0x1cf] sm:$0xff]
      %v1583 = vld [vmem:[%s424 + $0x1e7] sm:$0xff]
      %v1584 = vld [vmem:[%s424 + $0x1ef] sm:$0xff]
      %s1585 = scalar_lea.vmem %s3, 24
      %v1586 = vld [vmem:[%s1585] sm:$0xff]
      %v1588 = vsel %vm378, %v1553, 0
      %v1591 = vsel %vm378, %v1554, 0
      %v1594 = vsel %vm378, %v1555, 0
      %v1597 = vsel %vm378, %v1556, 0
      %v1600 = vsel %vm378, %v1557, 0
      %v1603 = vsel %vm378, %v1558, 0
      %v1606 = vsel %vm378, %v1559, 0
      %v1609 = vsel %vm378, %v1560, 0
      %v1612 = vsel %vm378, %v1561, 0
      %v1615 = vsel %vm378, %v1562, 0
      %v1618 = vsel %vm378, %v1563, 0
      %v1621 = vsel %vm378, %v1564, 0
      %v1624 = vsel %vm378, %v1565, 0
      %v1627 = vsel %vm378, %v1566, 0
      %v1630 = vsel %vm378, %v1567, 0
      %v1633 = vsel %vm378, %v1568, 0
      %v1636 = vsel %vm378, %v1569, 0
      %v1639 = vsel %vm378, %v1570, 0
      %v1642 = vsel %vm378, %v1571, 0
      %v1645 = vsel %vm378, %v1572, 0
      %v1648 = vsel %vm378, %v1573, 0
      %v1651 = vsel %vm378, %v1574, 0
      %v1654 = vsel %vm378, %v1575, 0
      %v1657 = vsel %vm378, %v1576, 0
      %v1660 = vsel %vm378, %v1577, 0
      %v1663 = vsel %vm378, %v1578, 0
      %v1666 = vsel %vm378, %v1579, 0
      %v1669 = vsel %vm378, %v1580, 0
      %v1672 = vsel %vm378, %v1581, 0
      %v1675 = vsel %vm378, %v1582, 0
      %v1678 = vsel %vm378, %v1583, 0
      %v1681 = vsel %vm378, %v1584, 0
      %1683 = vmatprep.subr.mxu0 0.0
      %1684 = vmatpush1.msra.mxu0 %v1586
      %1685 = vmatprep.subr.mxu0 0.0
      %1686 = vmatpush1.msra.mxu0 0.0
      %1687 = vmatprep.subr.mxu0 0.0
      %1688 = vmatpush1.msra.mxu0 0.0
      %1689 = vmatprep.subr.mxu0 0.0
      %1690 = vmatpush1.msra.mxu0 0.0
      %1691 = vmatprep.subr.mxu0 0.0
      %1692 = vmatpush1.msra.mxu0 0.0
      %1693 = vmatprep.subr.mxu0 0.0
      %1694 = vmatpush1.msra.mxu0 0.0
      %1695 = vmatprep.subr.mxu0 0.0
      %1696 = vmatpush1.msra.mxu0 0.0
      %1697 = vmatprep.subr.mxu0 0.0
      %1698 = vmatpush1.msra.mxu0 0.0
      %1699 = vmatprep.subr.mxu0 0.0
      %1700 = vmatpush1.msra.mxu0 0.0
      %1701 = vmatprep.subr.mxu0 0.0
      %1702 = vmatpush1.msra.mxu0 0.0
      %1703 = vmatprep.subr.mxu0 0.0
      %1704 = vmatpush1.msra.mxu0 0.0
      %1705 = vmatprep.subr.mxu0 0.0
      %1706 = vmatpush1.msra.mxu0 0.0
      %1707 = vmatprep.subr.mxu0 0.0
      %1708 = vmatpush1.msra.mxu0 0.0
      %1709 = vmatprep.subr.mxu0 0.0
      %1710 = vmatpush1.msra.mxu0 0.0
      %1711 = vmatprep.subr.mxu0 0.0
      %1712 = vmatpush1.msra.mxu0 0.0
      %1713 = vmatprep.subr.mxu0 0.0
      %1714 = vmatpush1.msra.mxu0 0.0
      %1715 = vmatprep.subr.mxu0 0.0
      %1716 = vmatpush1.msra.mxu0 0.0
      %1717 = vmatprep.subr.mxu0 0.0
      %1718 = vmatpush1.msra.mxu0 0.0
      %1719 = vmatprep.subr.mxu0 0.0
      %1720 = vmatpush1.msra.mxu0 0.0
      %1721 = vmatprep.subr.mxu0 0.0
      %1722 = vmatpush1.msra.mxu0 0.0
      %1723 = vmatprep.subr.mxu0 0.0
      %1724 = vmatpush1.msra.mxu0 0.0
      %1725 = vmatprep.subr.mxu0 0.0
      %1726 = vmatpush1.msra.mxu0 0.0
      %1727 = vmatprep.subr.mxu0 0.0
      %1728 = vmatpush1.msra.mxu0 0.0
      %1729 = vmatprep.subr.mxu0 0.0
      %1730 = vmatpush1.msra.mxu0 0.0
      %1731 = vmatprep.subr.mxu0 0.0
      %1732 = vmatpush1.msra.mxu0 0.0
      %1733 = vmatprep.subr.mxu0 0.0
      %1734 = vmatpush1.msra.mxu0 0.0
      %1735 = vmatprep.subr.mxu0 0.0
      %1736 = vmatpush1.msra.mxu0 0.0
      %1737 = vmatprep.subr.mxu0 0.0
      %1738 = vmatpush1.msra.mxu0 0.0
      %1739 = vmatprep.subr.mxu0 0.0
      %1740 = vmatpush1.msra.mxu0 0.0
      %1741 = vmatprep.subr.mxu0 0.0
      %1742 = vmatpush1.msra.mxu0 0.0
      %1743 = vmatprep.subr.mxu0 0.0
      %1744 = vmatpush1.msra.mxu0 0.0
      %1745 = vmatprep.subr.mxu0 0.0
      %1746 = vmatpush1.msra.mxu0 0.0
      %1747 = vmatprep.mubr.f32.mxu0 0.0
      %1748 = vmatmul.mubr.f32.gmra.mrb[0].mxu0 %v1588
      %v1749 = vpop.f32.mrb[0].mxu0
      %v1750 = vadd.f32 0.0, %v1749
      %v1751 = vpop.f32.mrb[0].mxu0
      %1752 = vmatprep.mubr.f32.mxu0 0.0
      %1753 = vmatmul.mubr.f32.gmra.mrb[0].mxu0 %v1591
      %v1754 = vpop.f32.mrb[0].mxu0
      %v1755 = vadd.f32 0.0, %v1754
      %v1756 = vpop.f32.mrb[0].mxu0
      %1757 = vmatprep.mubr.f32.mxu0 0.0
      %1758 = vmatmul.mubr.f32.gmra.mrb[0].mxu0 %v1594
      %v1759 = vpop.f32.mrb[0].mxu0
      %v1760 = vadd.f32 0.0, %v1759
      %v1761 = vpop.f32.mrb[0].mxu0
      %1762 = vmatprep.mubr.f32.mxu0 0.0
      %1763 = vmatmul.mubr.f32.gmra.mrb[0].mxu0 %v1597
      %v1764 = vpop.f32.mrb[0].mxu0
      %v1765 = vadd.f32 0.0, %v1764
      %v1766 = vpop.f32.mrb[0].mxu0
      %1767 = vmatprep.mubr.f32.mxu0 0.0
      %1768 = vmatmul.mubr.f32.gmra.mrb[0].mxu0 %v1600
      %v1769 = vpop.f32.mrb[0].mxu0
      %v1770 = vadd.f32 0.0, %v1769
      %v1771 = vpop.f32.mrb[0].mxu0
      %1772 = vmatprep.mubr.f32.mxu0 0.0
      %1773 = vmatmul.mubr.f32.gmra.mrb[0].mxu0 %v1603
      %v1774 = vpop.f32.mrb[0].mxu0
      %v1775 = vadd.f32 0.0, %v1774
      %v1776 = vpop.f32.mrb[0].mxu0
      %1777 = vmatprep.mubr.f32.mxu0 0.0
      %1778 = vmatmul.mubr.f32.gmra.mrb[0].mxu0 %v1606
      %v1779 = vpop.f32.mrb[0].mxu0
      %v1780 = vadd.f32 0.0, %v1779
      %v1781 = vpop.f32.mrb[0].mxu0
      %1782 = vmatprep.mubr.f32.mxu0 0.0
      %1783 = vmatmul.mubr.f32.gmra.mrb[0].mxu0 %v1609
      %v1784 = vpop.f32.mrb[0].mxu0
      %v1785 = vadd.f32 0.0, %v1784
      %v1786 = vpop.f32.mrb[0].mxu0
      %1787 = vmatprep.mubr.f32.mxu0 0.0
      %1788 = vmatmul.mubr.f32.gmra.mrb[0].mxu0 %v1612
      %v1789 = vpop.f32.mrb[0].mxu0
      %v1790 = vadd.f32 0.0, %v1789
      %v1791 = vpop.f32.mrb[0].mxu0
      %1792 = vmatprep.mubr.f32.mxu0 0.0
      %1793 = vmatmul.mubr.f32.gmra.mrb[0].mxu0 %v1615
      %v1794 = vpop.f32.mrb[0].mxu0
      %v1795 = vadd.f32 0.0, %v1794
      %v1796 = vpop.f32.mrb[0].mxu0
      %1797 = vmatprep.mubr.f32.mxu0 0.0
      %1798 = vmatmul.mubr.f32.gmra.mrb[0].mxu0 %v1618
      %v1799 = vpop.f32.mrb[0].mxu0
      %v1800 = vadd.f32 0.0, %v1799
      %v1801 = vpop.f32.mrb[0].mxu0
      %1802 = vmatprep.mubr.f32.mxu0 0.0
      %1803 = vmatmul.mubr.f32.gmra.mrb[0].mxu0 %v1621
      %v1804 = vpop.f32.mrb[0].mxu0
      %v1805 = vadd.f32 0.0, %v1804
      %v1806 = vpop.f32.mrb[0].mxu0
      %1807 = vmatprep.mubr.f32.mxu0 0.0
      %1808 = vmatmul.mubr.f32.gmra.mrb[0].mxu0 %v1624
      %v1809 = vpop.f32.mrb[0].mxu0
      %v1810 = vadd.f32 0.0, %v1809
      %v1811 = vpop.f32.mrb[0].mxu0
      %1812 = vmatprep.mubr.f32.mxu0 0.0
      %1813 = vmatmul.mubr.f32.gmra.mrb[0].mxu0 %v1627
      %v1814 = vpop.f32.mrb[0].mxu0
      %v1815 = vadd.f32 0.0, %v1814
      %v1816 = vpop.f32.mrb[0].mxu0
      %1817 = vmatprep.mubr.f32.mxu0 0.0
      %1818 = vmatmul.mubr.f32.gmra.mrb[0].mxu0 %v1630
      %v1819 = vpop.f32.mrb[0].mxu0
      %v1820 = vadd.f32 0.0, %v1819
      %v1821 = vpop.f32.mrb[0].mxu0
      %1822 = vmatprep.mubr.f32.mxu0 0.0
      %1823 = vmatmul.mubr.f32.gmra.mrb[0].mxu0 %v1633
      %v1824 = vpop.f32.mrb[0].mxu0
      %v1825 = vadd.f32 0.0, %v1824
      %v1826 = vpop.f32.mrb[0].mxu0
      %1827 = vmatprep.mubr.f32.mxu0 0.0
      %1828 = vmatmul.mubr.f32.gmra.mrb[0].mxu0 %v1636
      %v1829 = vpop.f32.mrb[0].mxu0
      %v1830 = vadd.f32 0.0, %v1829
      %v1831 = vpop.f32.mrb[0].mxu0
      %1832 = vmatprep.mubr.f32.mxu0 0.0
      %1833 = vmatmul.mubr.f32.gmra.mrb[0].mxu0 %v1639
      %v1834 = vpop.f32.mrb[0].mxu0
      %v1835 = vadd.f32 0.0, %v1834
      %v1836 = vpop.f32.mrb[0].mxu0
      %1837 = vmatprep.mubr.f32.mxu0 0.0
      %1838 = vmatmul.mubr.f32.gmra.mrb[0].mxu0 %v1642
      %v1839 = vpop.f32.mrb[0].mxu0
      %v1840 = vadd.f32 0.0, %v1839
      %v1841 = vpop.f32.mrb[0].mxu0
      %1842 = vmatprep.mubr.f32.mxu0 0.0
      %1843 = vmatmul.mubr.f32.gmra.mrb[0].mxu0 %v1645
      %v1844 = vpop.f32.mrb[0].mxu0
      %v1845 = vadd.f32 0.0, %v1844
      %v1846 = vpop.f32.mrb[0].mxu0
      %1847 = vmatprep.mubr.f32.mxu0 0.0
      %1848 = vmatmul.mubr.f32.gmra.mrb[0].mxu0 %v1648
      %v1849 = vpop.f32.mrb[0].mxu0
      %v1850 = vadd.f32 0.0, %v1849
      %v1851 = vpop.f32.mrb[0].mxu0
      %1852 = vmatprep.mubr.f32.mxu0 0.0
      %1853 = vmatmul.mubr.f32.gmra.mrb[0].mxu0 %v1651
      %v1854 = vpop.f32.mrb[0].mxu0
      %v1855 = vadd.f32 0.0, %v1854
      %v1856 = vpop.f32.mrb[0].mxu0
      %1857 = vmatprep.mubr.f32.mxu0 0.0
      %1858 = vmatmul.mubr.f32.gmra.mrb[0].mxu0 %v1654
      %v1859 = vpop.f32.mrb[0].mxu0
      %v1860 = vadd.f32 0.0, %v1859
      %v1861 = vpop.f32.mrb[0].mxu0
      %1862 = vmatprep.mubr.f32.mxu0 0.0
      %1863 = vmatmul.mubr.f32.gmra.mrb[0].mxu0 %v1657
      %v1864 = vpop.f32.mrb[0].mxu0
      %v1865 = vadd.f32 0.0, %v1864
      %v1866 = vpop.f32.mrb[0].mxu0
      %1867 = vmatprep.mubr.f32.mxu0 0.0
      %1868 = vmatmul.mubr.f32.gmra.mrb[0].mxu0 %v1660
      %v1869 = vpop.f32.mrb[0].mxu0
      %v1870 = vadd.f32 0.0, %v1869
      %v1871 = vpop.f32.mrb[0].mxu0
      %1872 = vmatprep.mubr.f32.mxu0 0.0
      %1873 = vmatmul.mubr.f32.gmra.mrb[0].mxu0 %v1663
      %v1874 = vpop.f32.mrb[0].mxu0
      %v1875 = vadd.f32 0.0, %v1874
      %v1876 = vpop.f32.mrb[0].mxu0
      %1877 = vmatprep.mubr.f32.mxu0 0.0
      %1878 = vmatmul.mubr.f32.gmra.mrb[0].mxu0 %v1666
      %v1879 = vpop.f32.mrb[0].mxu0
      %v1880 = vadd.f32 0.0, %v1879
      %v1881 = vpop.f32.mrb[0].mxu0
      %1882 = vmatprep.mubr.f32.mxu0 0.0
      %1883 = vmatmul.mubr.f32.gmra.mrb[0].mxu0 %v1669
      %v1884 = vpop.f32.mrb[0].mxu0
      %v1885 = vadd.f32 0.0, %v1884
      %v1886 = vpop.f32.mrb[0].mxu0
      %1887 = vmatprep.mubr.f32.mxu0 0.0
      %1888 = vmatmul.mubr.f32.gmra.mrb[0].mxu0 %v1672
      %v1889 = vpop.f32.mrb[0].mxu0
      %v1890 = vadd.f32 0.0, %v1889
      %v1891 = vpop.f32.mrb[0].mxu0
      %1892 = vmatprep.mubr.f32.mxu0 0.0
      %1893 = vmatmul.mubr.f32.gmra.mrb[0].mxu0 %v1675
      %v1894 = vpop.f32.mrb[0].mxu0
      %v1895 = vadd.f32 0.0, %v1894
      %v1896 = vpop.f32.mrb[0].mxu0
      %1897 = vmatprep.mubr.f32.mxu0 0.0
      %1898 = vmatmul.mubr.f32.gmra.mrb[0].mxu0 %v1678
      %v1899 = vpop.f32.mrb[0].mxu0
      %v1900 = vadd.f32 0.0, %v1899
      %v1901 = vpop.f32.mrb[0].mxu0
      %1902 = vmatprep.mubr.f32.mxu0 0.0
      %1903 = vmatmul.mubr.f32.gmra.mrb[0].mxu0 %v1681
      %v1904 = vpop.f32.mrb[0].mxu0
      %v1905 = vadd.f32 0.0, %v1904
      %v1906 = vpop.f32.mrb[0].mxu0
      %1907 = vdwg.mxu0
      %v1908 = vadd.f32 %v1521, %v1750
      %v1909 = vadd.f32 %v1522, %v1755
      %v1910 = vadd.f32 %v1523, %v1760
      %v1911 = vadd.f32 %v1524, %v1765
      %v1912 = vadd.f32 %v1525, %v1770
      %v1913 = vadd.f32 %v1526, %v1775
      %v1914 = vadd.f32 %v1527, %v1780
      %v1915 = vadd.f32 %v1528, %v1785
      %v1916 = vadd.f32 %v1529, %v1790
      %v1917 = vadd.f32 %v1530, %v1795
      %v1918 = vadd.f32 %v1531, %v1800
      %v1919 = vadd.f32 %v1532, %v1805
      %v1920 = vadd.f32 %v1533, %v1810
      %v1921 = vadd.f32 %v1534, %v1815
      %v1922 = vadd.f32 %v1535, %v1820
      %v1923 = vadd.f32 %v1536, %v1825
      %v1924 = vadd.f32 %v1537, %v1830
      %v1925 = vadd.f32 %v1538, %v1835
      %v1926 = vadd.f32 %v1539, %v1840
      %v1927 = vadd.f32 %v1540, %v1845
      %v1928 = vadd.f32 %v1541, %v1850
      %v1929 = vadd.f32 %v1542, %v1855
      %v1930 = vadd.f32 %v1543, %v1860
      %v1931 = vadd.f32 %v1544, %v1865
      %v1932 = vadd.f32 %v1545, %v1870
      %v1933 = vadd.f32 %v1546, %v1875
      %v1934 = vadd.f32 %v1547, %v1880
      %v1935 = vadd.f32 %v1548, %v1885
      %v1936 = vadd.f32 %v1549, %v1890
      %v1937 = vadd.f32 %v1550, %v1895
      %v1938 = vadd.f32 %v1551, %v1900
      %v1939 = vadd.f32 %v1552, %v1905
      %v1940 = vld [vmem:[%s424 + $0x8] sm:$0xff]
      %v1941 = vld [vmem:[%s424 + $0x10] sm:$0xff]
      %v1942 = vld [vmem:[%s424 + $0x28] sm:$0xff]
      %v1943 = vld [vmem:[%s424 + $0x30] sm:$0xff]
      %v1944 = vld [vmem:[%s424 + $0x48] sm:$0xff]
      %v1945 = vld [vmem:[%s424 + $0x50] sm:$0xff]
      %v1946 = vld [vmem:[%s424 + $0x68] sm:$0xff]
      %v1947 = vld [vmem:[%s424 + $0x70] sm:$0xff]
      %v1948 = vld [vmem:[%s424 + $0x88] sm:$0xff]
      %v1949 = vld [vmem:[%s424 + $0x90] sm:$0xff]
      %v1950 = vld [vmem:[%s424 + $0xa8] sm:$0xff]
      %v1951 = vld [vmem:[%s424 + $0xb0] sm:$0xff]
      %v1952 = vld [vmem:[%s424 + $0xc8] sm:$0xff]
      %v1953 = vld [vmem:[%s424 + $0xd0] sm:$0xff]
      %v1954 = vld [vmem:[%s424 + $0xe8] sm:$0xff]
      %v1955 = vld [vmem:[%s424 + $0xf0] sm:$0xff]
      %v1956 = vld [vmem:[%s424 + $0x108] sm:$0xff]
      %v1957 = vld [vmem:[%s424 + $0x110] sm:$0xff]
      %v1958 = vld [vmem:[%s424 + $0x128] sm:$0xff]
      %v1959 = vld [vmem:[%s424 + $0x130] sm:$0xff]
      %v1960 = vld [vmem:[%s424 + $0x148] sm:$0xff]
      %v1961 = vld [vmem:[%s424 + $0x150] sm:$0xff]
      %v1962 = vld [vmem:[%s424 + $0x168] sm:$0xff]
      %v1963 = vld [vmem:[%s424 + $0x170] sm:$0xff]
      %v1964 = vld [vmem:[%s424 + $0x188] sm:$0xff]
      %v1965 = vld [vmem:[%s424 + $0x190] sm:$0xff]
      %v1966 = vld [vmem:[%s424 + $0x1a8] sm:$0xff]
      %v1967 = vld [vmem:[%s424 + $0x1b0] sm:$0xff]
      %v1968 = vld [vmem:[%s424 + $0x1c8] sm:$0xff]
      %v1969 = vld [vmem:[%s424 + $0x1d0] sm:$0xff]
      %v1970 = vld [vmem:[%s424 + $0x1e8] sm:$0xff]
      %v1971 = vld [vmem:[%s424 + $0x1f0] sm:$0xff]
      %s1972 = scalar_lea.vmem %s3, 32
      %v1973 = vld [vmem:[%s1972] sm:$0xff]
      %v1975 = vsel %vm378, %v1940, 0
      %v1978 = vsel %vm378, %v1941, 0
      %v1981 = vsel %vm378, %v1942, 0
      %v1984 = vsel %vm378, %v1943, 0
      %v1987 = vsel %vm378, %v1944, 0
      %v1990 = vsel %vm378, %v1945, 0
      %v1993 = vsel %vm378, %v1946, 0
      %v1996 = vsel %vm378, %v1947, 0
      %v1999 = vsel %vm378, %v1948, 0
      %v2002 = vsel %vm378, %v1949, 0
      %v2005 = vsel %vm378, %v1950, 0
      %v2008 = vsel %vm378, %v1951, 0
      %v2011 = vsel %vm378, %v1952, 0
      %v2014 = vsel %vm378, %v1953, 0
      %v2017 = vsel %vm378, %v1954, 0
      %v2020 = vsel %vm378, %v1955, 0
      %v2023 = vsel %vm378, %v1956, 0
      %v2026 = vsel %vm378, %v1957, 0
      %v2029 = vsel %vm378, %v1958, 0
      %v2032 = vsel %vm378, %v1959, 0
      %v2035 = vsel %vm378, %v1960, 0
      %v2038 = vsel %vm378, %v1961, 0
      %v2041 = vsel %vm378, %v1962, 0
      %v2044 = vsel %vm378, %v1963, 0
      %v2047 = vsel %vm378, %v1964, 0
      %v2050 = vsel %vm378, %v1965, 0
      %v2053 = vsel %vm378, %v1966, 0
      %v2056 = vsel %vm378, %v1967, 0
      %v2059 = vsel %vm378, %v1968, 0
      %v2062 = vsel %vm378, %v1969, 0
      %v2065 = vsel %vm378, %v1970, 0
      %v2068 = vsel %vm378, %v1971, 0
      %2070 = vmatprep.subr.mxu0 0.0
      %2071 = vmatpush1.msra.mxu0 %v1973
      %2072 = vmatprep.subr.mxu0 0.0
      %2073 = vmatpush1.msra.mxu0 0.0
      %2074 = vmatprep.subr.mxu0 0.0
      %2075 = vmatpush1.msra.mxu0 0.0
      %2076 = vmatprep.subr.mxu0 0.0
      %2077 = vmatpush1.msra.mxu0 0.0
      %2078 = vmatprep.subr.mxu0 0.0
      %2079 = vmatpush1.msra.mxu0 0.0
      %2080 = vmatprep.subr.mxu0 0.0
      %2081 = vmatpush1.msra.mxu0 0.0
      %2082 = vmatprep.subr.mxu0 0.0
      %2083 = vmatpush1.msra.mxu0 0.0
      %2084 = vmatprep.subr.mxu0 0.0
      %2085 = vmatpush1.msra.mxu0 0.0
      %2086 = vmatprep.subr.mxu0 0.0
      %2087 = vmatpush1.msra.mxu0 0.0
      %2088 = vmatprep.subr.mxu0 0.0
      %2089 = vmatpush1.msra.mxu0 0.0
      %2090 = vmatprep.subr.mxu0 0.0
      %2091 = vmatpush1.msra.mxu0 0.0
      %2092 = vmatprep.subr.mxu0 0.0
      %2093 = vmatpush1.msra.mxu0 0.0
      %2094 = vmatprep.subr.mxu0 0.0
      %2095 = vmatpush1.msra.mxu0 0.0
      %2096 = vmatprep.subr.mxu0 0.0
      %2097 = vmatpush1.msra.mxu0 0.0
      %2098 = vmatprep.subr.mxu0 0.0
      %2099 = vmatpush1.msra.mxu0 0.0
      %2100 = vmatprep.subr.mxu0 0.0
      %2101 = vmatpush1.msra.mxu0 0.0
      %2102 = vmatprep.subr.mxu0 0.0
      %2103 = vmatpush1.msra.mxu0 0.0
      %2104 = vmatprep.subr.mxu0 0.0
      %2105 = vmatpush1.msra.mxu0 0.0
      %2106 = vmatprep.subr.mxu0 0.0
      %2107 = vmatpush1.msra.mxu0 0.0
      %2108 = vmatprep.subr.mxu0 0.0
      %2109 = vmatpush1.msra.mxu0 0.0
      %2110 = vmatprep.subr.mxu0 0.0
      %2111 = vmatpush1.msra.mxu0 0.0
      %2112 = vmatprep.subr.mxu0 0.0
      %2113 = vmatpush1.msra.mxu0 0.0
      %2114 = vmatprep.subr.mxu0 0.0
      %2115 = vmatpush1.msra.mxu0 0.0
      %2116 = vmatprep.subr.mxu0 0.0
      %2117 = vmatpush1.msra.mxu0 0.0
      %2118 = vmatprep.subr.mxu0 0.0
      %2119 = vmatpush1.msra.mxu0 0.0
      %2120 = vmatprep.subr.mxu0 0.0
      %2121 = vmatpush1.msra.mxu0 0.0
      %2122 = vmatprep.subr.mxu0 0.0
      %2123 = vmatpush1.msra.mxu0 0.0
      %2124 = vmatprep.subr.mxu0 0.0
      %2125 = vmatpush1.msra.mxu0 0.0
      %2126 = vmatprep.subr.mxu0 0.0
      %2127 = vmatpush1.msra.mxu0 0.0
      %2128 = vmatprep.subr.mxu0 0.0
      %2129 = vmatpush1.msra.mxu0 0.0
      %2130 = vmatprep.subr.mxu0 0.0
      %2131 = vmatpush1.msra.mxu0 0.0
      %2132 = vmatprep.subr.mxu0 0.0
      %2133 = vmatpush1.msra.mxu0 0.0
      %2134 = vmatprep.mubr.f32.mxu0 0.0
      %2135 = vmatmul.mubr.f32.gmra.mrb[0].mxu0 %v1975
      %v2136 = vpop.f32.mrb[0].mxu0
      %v2137 = vadd.f32 0.0, %v2136
      %v2138 = vpop.f32.mrb[0].mxu0
      %2139 = vmatprep.mubr.f32.mxu0 0.0
      %2140 = vmatmul.mubr.f32.gmra.mrb[0].mxu0 %v1978
      %v2141 = vpop.f32.mrb[0].mxu0
      %v2142 = vadd.f32 0.0, %v2141
      %v2143 = vpop.f32.mrb[0].mxu0
      %2144 = vmatprep.mubr.f32.mxu0 0.0
      %2145 = vmatmul.mubr.f32.gmra.mrb[0].mxu0 %v1981
      %v2146 = vpop.f32.mrb[0].mxu0
      %v2147 = vadd.f32 0.0, %v2146
      %v2148 = vpop.f32.mrb[0].mxu0
      %2149 = vmatprep.mubr.f32.mxu0 0.0
      %2150 = vmatmul.mubr.f32.gmra.mrb[0].mxu0 %v1984
      %v2151 = vpop.f32.mrb[0].mxu0
      %v2152 = vadd.f32 0.0, %v2151
      %v2153 = vpop.f32.mrb[0].mxu0
      %2154 = vmatprep.mubr.f32.mxu0 0.0
      %2155 = vmatmul.mubr.f32.gmra.mrb[0].mxu0 %v1987
      %v2156 = vpop.f32.mrb[0].mxu0
      %v2157 = vadd.f32 0.0, %v2156
      %v2158 = vpop.f32.mrb[0].mxu0
      %2159 = vmatprep.mubr.f32.mxu0 0.0
      %2160 = vmatmul.mubr.f32.gmra.mrb[0].mxu0 %v1990
      %v2161 = vpop.f32.mrb[0].mxu0
      %v2162 = vadd.f32 0.0, %v2161
      %v2163 = vpop.f32.mrb[0].mxu0
      %2164 = vmatprep.mubr.f32.mxu0 0.0
      %2165 = vmatmul.mubr.f32.gmra.mrb[0].mxu0 %v1993
      %v2166 = vpop.f32.mrb[0].mxu0
      %v2167 = vadd.f32 0.0, %v2166
      %v2168 = vpop.f32.mrb[0].mxu0
      %2169 = vmatprep.mubr.f32.mxu0 0.0
      %2170 = vmatmul.mubr.f32.gmra.mrb[0].mxu0 %v1996
      %v2171 = vpop.f32.mrb[0].mxu0
      %v2172 = vadd.f32 0.0, %v2171
      %v2173 = vpop.f32.mrb[0].mxu0
      %2174 = vmatprep.mubr.f32.mxu0 0.0
      %2175 = vmatmul.mubr.f32.gmra.mrb[0].mxu0 %v1999
      %v2176 = vpop.f32.mrb[0].mxu0
      %v2177 = vadd.f32 0.0, %v2176
      %v2178 = vpop.f32.mrb[0].mxu0
      %2179 = vmatprep.mubr.f32.mxu0 0.0
      %2180 = vmatmul.mubr.f32.gmra.mrb[0].mxu0 %v2002
      %v2181 = vpop.f32.mrb[0].mxu0
      %v2182 = vadd.f32 0.0, %v2181
      %v2183 = vpop.f32.mrb[0].mxu0
      %2184 = vmatprep.mubr.f32.mxu0 0.0
      %2185 = vmatmul.mubr.f32.gmra.mrb[0].mxu0 %v2005
      %v2186 = vpop.f32.mrb[0].mxu0
      %v2187 = vadd.f32 0.0, %v2186
      %v2188 = vpop.f32.mrb[0].mxu0
      %2189 = vmatprep.mubr.f32.mxu0 0.0
      %2190 = vmatmul.mubr.f32.gmra.mrb[0].mxu0 %v2008
      %v2191 = vpop.f32.mrb[0].mxu0
      %v2192 = vadd.f32 0.0, %v2191
      %v2193 = vpop.f32.mrb[0].mxu0
      %2194 = vmatprep.mubr.f32.mxu0 0.0
      %2195 = vmatmul.mubr.f32.gmra.mrb[0].mxu0 %v2011
      %v2196 = vpop.f32.mrb[0].mxu0
      %v2197 = vadd.f32 0.0, %v2196
      %v2198 = vpop.f32.mrb[0].mxu0
      %2199 = vmatprep.mubr.f32.mxu0 0.0
      %2200 = vmatmul.mubr.f32.gmra.mrb[0].mxu0 %v2014
      %v2201 = vpop.f32.mrb[0].mxu0
      %v2202 = vadd.f32 0.0, %v2201
      %v2203 = vpop.f32.mrb[0].mxu0
      %2204 = vmatprep.mubr.f32.mxu0 0.0
      %2205 = vmatmul.mubr.f32.gmra.mrb[0].mxu0 %v2017
      %v2206 = vpop.f32.mrb[0].mxu0
      %v2207 = vadd.f32 0.0, %v2206
      %v2208 = vpop.f32.mrb[0].mxu0
      %2209 = vmatprep.mubr.f32.mxu0 0.0
      %2210 = vmatmul.mubr.f32.gmra.mrb[0].mxu0 %v2020
      %v2211 = vpop.f32.mrb[0].mxu0
      %v2212 = vadd.f32 0.0, %v2211
      %v2213 = vpop.f32.mrb[0].mxu0
      %2214 = vmatprep.mubr.f32.mxu0 0.0
      %2215 = vmatmul.mubr.f32.gmra.mrb[0].mxu0 %v2023
      %v2216 = vpop.f32.mrb[0].mxu0
      %v2217 = vadd.f32 0.0, %v2216
      %v2218 = vpop.f32.mrb[0].mxu0
      %2219 = vmatprep.mubr.f32.mxu0 0.0
      %2220 = vmatmul.mubr.f32.gmra.mrb[0].mxu0 %v2026
      %v2221 = vpop.f32.mrb[0].mxu0
      %v2222 = vadd.f32 0.0, %v2221
      %v2223 = vpop.f32.mrb[0].mxu0
      %2224 = vmatprep.mubr.f32.mxu0 0.0
      %2225 = vmatmul.mubr.f32.gmra.mrb[0].mxu0 %v2029
      %v2226 = vpop.f32.mrb[0].mxu0
      %v2227 = vadd.f32 0.0, %v2226
      %v2228 = vpop.f32.mrb[0].mxu0
      %2229 = vmatprep.mubr.f32.mxu0 0.0
      %2230 = vmatmul.mubr.f32.gmra.mrb[0].mxu0 %v2032
      %v2231 = vpop.f32.mrb[0].mxu0
      %v2232 = vadd.f32 0.0, %v2231
      %v2233 = vpop.f32.mrb[0].mxu0
      %2234 = vmatprep.mubr.f32.mxu0 0.0
      %2235 = vmatmul.mubr.f32.gmra.mrb[0].mxu0 %v2035
      %v2236 = vpop.f32.mrb[0].mxu0
      %v2237 = vadd.f32 0.0, %v2236
      %v2238 = vpop.f32.mrb[0].mxu0
      %2239 = vmatprep.mubr.f32.mxu0 0.0
      %2240 = vmatmul.mubr.f32.gmra.mrb[0].mxu0 %v2038
      %v2241 = vpop.f32.mrb[0].mxu0
      %v2242 = vadd.f32 0.0, %v2241
      %v2243 = vpop.f32.mrb[0].mxu0
      %2244 = vmatprep.mubr.f32.mxu0 0.0
      %2245 = vmatmul.mubr.f32.gmra.mrb[0].mxu0 %v2041
      %v2246 = vpop.f32.mrb[0].mxu0
      %v2247 = vadd.f32 0.0, %v2246
      %v2248 = vpop.f32.mrb[0].mxu0
      %2249 = vmatprep.mubr.f32.mxu0 0.0
      %2250 = vmatmul.mubr.f32.gmra.mrb[0].mxu0 %v2044
      %v2251 = vpop.f32.mrb[0].mxu0
      %v2252 = vadd.f32 0.0, %v2251
      %v2253 = vpop.f32.mrb[0].mxu0
      %2254 = vmatprep.mubr.f32.mxu0 0.0
      %2255 = vmatmul.mubr.f32.gmra.mrb[0].mxu0 %v2047
      %v2256 = vpop.f32.mrb[0].mxu0
      %v2257 = vadd.f32 0.0, %v2256
      %v2258 = vpop.f32.mrb[0].mxu0
      %2259 = vmatprep.mubr.f32.mxu0 0.0
      %2260 = vmatmul.mubr.f32.gmra.mrb[0].mxu0 %v2050
      %v2261 = vpop.f32.mrb[0].mxu0
      %v2262 = vadd.f32 0.0, %v2261
      %v2263 = vpop.f32.mrb[0].mxu0
      %2264 = vmatprep.mubr.f32.mxu0 0.0
      %2265 = vmatmul.mubr.f32.gmra.mrb[0].mxu0 %v2053
      %v2266 = vpop.f32.mrb[0].mxu0
      %v2267 = vadd.f32 0.0, %v2266
      %v2268 = vpop.f32.mrb[0].mxu0
      %2269 = vmatprep.mubr.f32.mxu0 0.0
      %2270 = vmatmul.mubr.f32.gmra.mrb[0].mxu0 %v2056
      %v2271 = vpop.f32.mrb[0].mxu0
      %v2272 = vadd.f32 0.0, %v2271
      %v2273 = vpop.f32.mrb[0].mxu0
      %2274 = vmatprep.mubr.f32.mxu0 0.0
      %2275 = vmatmul.mubr.f32.gmra.mrb[0].mxu0 %v2059
      %v2276 = vpop.f32.mrb[0].mxu0
      %v2277 = vadd.f32 0.0, %v2276
      %v2278 = vpop.f32.mrb[0].mxu0
      %2279 = vmatprep.mubr.f32.mxu0 0.0
      %2280 = vmatmul.mubr.f32.gmra.mrb[0].mxu0 %v2062
      %v2281 = vpop.f32.mrb[0].mxu0
      %v2282 = vadd.f32 0.0, %v2281
      %v2283 = vpop.f32.mrb[0].mxu0
      %2284 = vmatprep.mubr.f32.mxu0 0.0
      %2285 = vmatmul.mubr.f32.gmra.mrb[0].mxu0 %v2065
      %v2286 = vpop.f32.mrb[0].mxu0
      %v2287 = vadd.f32 0.0, %v2286
      %v2288 = vpop.f32.mrb[0].mxu0
      %2289 = vmatprep.mubr.f32.mxu0 0.0
      %2290 = vmatmul.mubr.f32.gmra.mrb[0].mxu0 %v2068
      %v2291 = vpop.f32.mrb[0].mxu0
      %v2292 = vadd.f32 0.0, %v2291
      %v2293 = vpop.f32.mrb[0].mxu0
      %2294 = vdwg.mxu0
      %v2295 = vadd.f32 %v1908, %v2137
      %v2296 = vadd.f32 %v1909, %v2142
      %v2297 = vadd.f32 %v1910, %v2147
      %v2298 = vadd.f32 %v1911, %v2152
      %v2299 = vadd.f32 %v1912, %v2157
      %v2300 = vadd.f32 %v1913, %v2162
      %v2301 = vadd.f32 %v1914, %v2167
      %v2302 = vadd.f32 %v1915, %v2172
      %v2303 = vadd.f32 %v1916, %v2177
      %v2304 = vadd.f32 %v1917, %v2182
      %v2305 = vadd.f32 %v1918, %v2187
      %v2306 = vadd.f32 %v1919, %v2192
      %v2307 = vadd.f32 %v1920, %v2197
      %v2308 = vadd.f32 %v1921, %v2202
      %v2309 = vadd.f32 %v1922, %v2207
      %v2310 = vadd.f32 %v1923, %v2212
      %v2311 = vadd.f32 %v1924, %v2217
      %v2312 = vadd.f32 %v1925, %v2222
      %v2313 = vadd.f32 %v1926, %v2227
      %v2314 = vadd.f32 %v1927, %v2232
      %v2315 = vadd.f32 %v1928, %v2237
      %v2316 = vadd.f32 %v1929, %v2242
      %v2317 = vadd.f32 %v1930, %v2247
      %v2318 = vadd.f32 %v1931, %v2252
      %v2319 = vadd.f32 %v1932, %v2257
      %v2320 = vadd.f32 %v1933, %v2262
      %v2321 = vadd.f32 %v1934, %v2267
      %v2322 = vadd.f32 %v1935, %v2272
      %v2323 = vadd.f32 %v1936, %v2277
      %v2324 = vadd.f32 %v1937, %v2282
      %v2325 = vadd.f32 %v1938, %v2287
      %v2326 = vadd.f32 %v1939, %v2292
      %v2327 = vld [vmem:[%s424 + $0x9] sm:$0xff]
      %v2328 = vld [vmem:[%s424 + $0x11] sm:$0xff]
      %v2329 = vld [vmem:[%s424 + $0x29] sm:$0xff]
      %v2330 = vld [vmem:[%s424 + $0x31] sm:$0xff]
      %v2331 = vld [vmem:[%s424 + $0x49] sm:$0xff]
      %v2332 = vld [vmem:[%s424 + $0x51] sm:$0xff]
      %v2333 = vld [vmem:[%s424 + $0x69] sm:$0xff]
      %v2334 = vld [vmem:[%s424 + $0x71] sm:$0xff]
      %v2335 = vld [vmem:[%s424 + $0x89] sm:$0xff]
      %v2336 = vld [vmem:[%s424 + $0x91] sm:$0xff]
      %v2337 = vld [vmem:[%s424 + $0xa9] sm:$0xff]
      %v2338 = vld [vmem:[%s424 + $0xb1] sm:$0xff]
      %v2339 = vld [vmem:[%s424 + $0xc9] sm:$0xff]
      %v2340 = vld [vmem:[%s424 + $0xd1] sm:$0xff]
      %v2341 = vld [vmem:[%s424 + $0xe9] sm:$0xff]
      %v2342 = vld [vmem:[%s424 + $0xf1] sm:$0xff]
      %v2343 = vld [vmem:[%s424 + $0x109] sm:$0xff]
      %v2344 = vld [vmem:[%s424 + $0x111] sm:$0xff]
      %v2345 = vld [vmem:[%s424 + $0x129] sm:$0xff]
      %v2346 = vld [vmem:[%s424 + $0x131] sm:$0xff]
      %v2347 = vld [vmem:[%s424 + $0x149] sm:$0xff]
      %v2348 = vld [vmem:[%s424 + $0x151] sm:$0xff]
      %v2349 = vld [vmem:[%s424 + $0x169] sm:$0xff]
      %v2350 = vld [vmem:[%s424 + $0x171] sm:$0xff]
      %v2351 = vld [vmem:[%s424 + $0x189] sm:$0xff]
      %v2352 = vld [vmem:[%s424 + $0x191] sm:$0xff]
      %v2353 = vld [vmem:[%s424 + $0x1a9] sm:$0xff]
      %v2354 = vld [vmem:[%s424 + $0x1b1] sm:$0xff]
      %v2355 = vld [vmem:[%s424 + $0x1c9] sm:$0xff]
      %v2356 = vld [vmem:[%s424 + $0x1d1] sm:$0xff]
      %v2357 = vld [vmem:[%s424 + $0x1e9] sm:$0xff]
      %v2358 = vld [vmem:[%s424 + $0x1f1] sm:$0xff]
      %s2359 = scalar_lea.vmem %s3, 40
      %v2360 = vld [vmem:[%s2359] sm:$0xff]
      %v2362 = vsel %vm378, %v2327, 0
      %v2365 = vsel %vm378, %v2328, 0
      %v2368 = vsel %vm378, %v2329, 0
      %v2371 = vsel %vm378, %v2330, 0
      %v2374 = vsel %vm378, %v2331, 0
      %v2377 = vsel %vm378, %v2332, 0
      %v2380 = vsel %vm378, %v2333, 0
      %v2383 = vsel %vm378, %v2334, 0
      %v2386 = vsel %vm378, %v2335, 0
      %v2389 = vsel %vm378, %v2336, 0
      %v2392 = vsel %vm378, %v2337, 0
      %v2395 = vsel %vm378, %v2338, 0
      %v2398 = vsel %vm378, %v2339, 0
      %v2401 = vsel %vm378, %v2340, 0
      %v2404 = vsel %vm378, %v2341, 0
      %v2407 = vsel %vm378, %v2342, 0
      %v2410 = vsel %vm378, %v2343, 0
      %v2413 = vsel %vm378, %v2344, 0
      %v2416 = vsel %vm378, %v2345, 0
      %v2419 = vsel %vm378, %v2346, 0
      %v2422 = vsel %vm378, %v2347, 0
      %v2425 = vsel %vm378, %v2348, 0
      %v2428 = vsel %vm378, %v2349, 0
      %v2431 = vsel %vm378, %v2350, 0
      %v2434 = vsel %vm378, %v2351, 0
      %v2437 = vsel %vm378, %v2352, 0
      %v2440 = vsel %vm378, %v2353, 0
      %v2443 = vsel %vm378, %v2354, 0
      %v2446 = vsel %vm378, %v2355, 0
      %v2449 = vsel %vm378, %v2356, 0
      %v2452 = vsel %vm378, %v2357, 0
      %v2455 = vsel %vm378, %v2358, 0
      %2457 = vmatprep.subr.mxu0 0.0
      %2458 = vmatpush1.msra.mxu0 %v2360
      %2459 = vmatprep.subr.mxu0 0.0
      %2460 = vmatpush1.msra.mxu0 0.0
      %2461 = vmatprep.subr.mxu0 0.0
      %2462 = vmatpush1.msra.mxu0 0.0
      %2463 = vmatprep.subr.mxu0 0.0
      %2464 = vmatpush1.msra.mxu0 0.0
      %2465 = vmatprep.subr.mxu0 0.0
      %2466 = vmatpush1.msra.mxu0 0.0
      %2467 = vmatprep.subr.mxu0 0.0
      %2468 = vmatpush1.msra.mxu0 0.0
      %2469 = vmatprep.subr.mxu0 0.0
      %2470 = vmatpush1.msra.mxu0 0.0
      %2471 = vmatprep.subr.mxu0 0.0
      %2472 = vmatpush1.msra.mxu0 0.0
      %2473 = vmatprep.subr.mxu0 0.0
      %2474 = vmatpush1.msra.mxu0 0.0
      %2475 = vmatprep.subr.mxu0 0.0
      %2476 = vmatpush1.msra.mxu0 0.0
      %2477 = vmatprep.subr.mxu0 0.0
      %2478 = vmatpush1.msra.mxu0 0.0
      %2479 = vmatprep.subr.mxu0 0.0
      %2480 = vmatpush1.msra.mxu0 0.0
      %2481 = vmatprep.subr.mxu0 0.0
      %2482 = vmatpush1.msra.mxu0 0.0
      %2483 = vmatprep.subr.mxu0 0.0
      %2484 = vmatpush1.msra.mxu0 0.0
      %2485 = vmatprep.subr.mxu0 0.0
      %2486 = vmatpush1.msra.mxu0 0.0
      %2487 = vmatprep.subr.mxu0 0.0
      %2488 = vmatpush1.msra.mxu0 0.0
      %2489 = vmatprep.subr.mxu0 0.0
      %2490 = vmatpush1.msra.mxu0 0.0
      %2491 = vmatprep.subr.mxu0 0.0
      %2492 = vmatpush1.msra.mxu0 0.0
      %2493 = vmatprep.subr.mxu0 0.0
      %2494 = vmatpush1.msra.mxu0 0.0
      %2495 = vmatprep.subr.mxu0 0.0
      %2496 = vmatpush1.msra.mxu0 0.0
      %2497 = vmatprep.subr.mxu0 0.0
      %2498 = vmatpush1.msra.mxu0 0.0
      %2499 = vmatprep.subr.mxu0 0.0
      %2500 = vmatpush1.msra.mxu0 0.0
      %2501 = vmatprep.subr.mxu0 0.0
      %2502 = vmatpush1.msra.mxu0 0.0
      %2503 = vmatprep.subr.mxu0 0.0
      %2504 = vmatpush1.msra.mxu0 0.0
      %2505 = vmatprep.subr.mxu0 0.0
      %2506 = vmatpush1.msra.mxu0 0.0
      %2507 = vmatprep.subr.mxu0 0.0
      %2508 = vmatpush1.msra.mxu0 0.0
      %2509 = vmatprep.subr.mxu0 0.0
      %2510 = vmatpush1.msra.mxu0 0.0
      %2511 = vmatprep.subr.mxu0 0.0
      %2512 = vmatpush1.msra.mxu0 0.0
      %2513 = vmatprep.subr.mxu0 0.0
      %2514 = vmatpush1.msra.mxu0 0.0
      %2515 = vmatprep.subr.mxu0 0.0
      %2516 = vmatpush1.msra.mxu0 0.0
      %2517 = vmatprep.subr.mxu0 0.0
      %2518 = vmatpush1.msra.mxu0 0.0
      %2519 = vmatprep.subr.mxu0 0.0
      %2520 = vmatpush1.msra.mxu0 0.0
      %2521 = vmatprep.mubr.f32.mxu0 0.0
      %2522 = vmatmul.mubr.f32.gmra.mrb[0].mxu0 %v2362
      %v2523 = vpop.f32.mrb[0].mxu0
      %v2524 = vadd.f32 0.0, %v2523
      %v2525 = vpop.f32.mrb[0].mxu0
      %2526 = vmatprep.mubr.f32.mxu0 0.0
      %2527 = vmatmul.mubr.f32.gmra.mrb[0].mxu0 %v2365
      %v2528 = vpop.f32.mrb[0].mxu0
      %v2529 = vadd.f32 0.0, %v2528
      %v2530 = vpop.f32.mrb[0].mxu0
      %2531 = vmatprep.mubr.f32.mxu0 0.0
      %2532 = vmatmul.mubr.f32.gmra.mrb[0].mxu0 %v2368
      %v2533 = vpop.f32.mrb[0].mxu0
      %v2534 = vadd.f32 0.0, %v2533
      %v2535 = vpop.f32.mrb[0].mxu0
      %2536 = vmatprep.mubr.f32.mxu0 0.0
      %2537 = vmatmul.mubr.f32.gmra.mrb[0].mxu0 %v2371
      %v2538 = vpop.f32.mrb[0].mxu0
      %v2539 = vadd.f32 0.0, %v2538
      %v2540 = vpop.f32.mrb[0].mxu0
      %2541 = vmatprep.mubr.f32.mxu0 0.0
      %2542 = vmatmul.mubr.f32.gmra.mrb[0].mxu0 %v2374
      %v2543 = vpop.f32.mrb[0].mxu0
      %v2544 = vadd.f32 0.0, %v2543
      %v2545 = vpop.f32.mrb[0].mxu0
      %2546 = vmatprep.mubr.f32.mxu0 0.0
      %2547 = vmatmul.mubr.f32.gmra.mrb[0].mxu0 %v2377
      %v2548 = vpop.f32.mrb[0].mxu0
      %v2549 = vadd.f32 0.0, %v2548
      %v2550 = vpop.f32.mrb[0].mxu0
      %2551 = vmatprep.mubr.f32.mxu0 0.0
      %2552 = vmatmul.mubr.f32.gmra.mrb[0].mxu0 %v2380
      %v2553 = vpop.f32.mrb[0].mxu0
      %v2554 = vadd.f32 0.0, %v2553
      %v2555 = vpop.f32.mrb[0].mxu0
      %2556 = vmatprep.mubr.f32.mxu0 0.0
      %2557 = vmatmul.mubr.f32.gmra.mrb[0].mxu0 %v2383
      %v2558 = vpop.f32.mrb[0].mxu0
      %v2559 = vadd.f32 0.0, %v2558
      %v2560 = vpop.f32.mrb[0].mxu0
      %2561 = vmatprep.mubr.f32.mxu0 0.0
      %2562 = vmatmul.mubr.f32.gmra.mrb[0].mxu0 %v2386
      %v2563 = vpop.f32.mrb[0].mxu0
      %v2564 = vadd.f32 0.0, %v2563
      %v2565 = vpop.f32.mrb[0].mxu0
      %2566 = vmatprep.mubr.f32.mxu0 0.0
      %2567 = vmatmul.mubr.f32.gmra.mrb[0].mxu0 %v2389
      %v2568 = vpop.f32.mrb[0].mxu0
      %v2569 = vadd.f32 0.0, %v2568
      %v2570 = vpop.f32.mrb[0].mxu0
      %2571 = vmatprep.mubr.f32.mxu0 0.0
      %2572 = vmatmul.mubr.f32.gmra.mrb[0].mxu0 %v2392
      %v2573 = vpop.f32.mrb[0].mxu0
      %v2574 = vadd.f32 0.0, %v2573
      %v2575 = vpop.f32.mrb[0].mxu0
      %2576 = vmatprep.mubr.f32.mxu0 0.0
      %2577 = vmatmul.mubr.f32.gmra.mrb[0].mxu0 %v2395
      %v2578 = vpop.f32.mrb[0].mxu0
      %v2579 = vadd.f32 0.0, %v2578
      %v2580 = vpop.f32.mrb[0].mxu0
      %2581 = vmatprep.mubr.f32.mxu0 0.0
      %2582 = vmatmul.mubr.f32.gmra.mrb[0].mxu0 %v2398
      %v2583 = vpop.f32.mrb[0].mxu0
      %v2584 = vadd.f32 0.0, %v2583
      %v2585 = vpop.f32.mrb[0].mxu0
      %2586 = vmatprep.mubr.f32.mxu0 0.0
      %2587 = vmatmul.mubr.f32.gmra.mrb[0].mxu0 %v2401
      %v2588 = vpop.f32.mrb[0].mxu0
      %v2589 = vadd.f32 0.0, %v2588
      %v2590 = vpop.f32.mrb[0].mxu0
      %2591 = vmatprep.mubr.f32.mxu0 0.0
      %2592 = vmatmul.mubr.f32.gmra.mrb[0].mxu0 %v2404
      %v2593 = vpop.f32.mrb[0].mxu0
      %v2594 = vadd.f32 0.0, %v2593
      %v2595 = vpop.f32.mrb[0].mxu0
      %2596 = vmatprep.mubr.f32.mxu0 0.0
      %2597 = vmatmul.mubr.f32.gmra.mrb[0].mxu0 %v2407
      %v2598 = vpop.f32.mrb[0].mxu0
      %v2599 = vadd.f32 0.0, %v2598
      %v2600 = vpop.f32.mrb[0].mxu0
      %2601 = vmatprep.mubr.f32.mxu0 0.0
      %2602 = vmatmul.mubr.f32.gmra.mrb[0].mxu0 %v2410
      %v2603 = vpop.f32.mrb[0].mxu0
      %v2604 = vadd.f32 0.0, %v2603
      %v2605 = vpop.f32.mrb[0].mxu0
      %2606 = vmatprep.mubr.f32.mxu0 0.0
      %2607 = vmatmul.mubr.f32.gmra.mrb[0].mxu0 %v2413
      %v2608 = vpop.f32.mrb[0].mxu0
      %v2609 = vadd.f32 0.0, %v2608
      %v2610 = vpop.f32.mrb[0].mxu0
      %2611 = vmatprep.mubr.f32.mxu0 0.0
      %2612 = vmatmul.mubr.f32.gmra.mrb[0].mxu0 %v2416
      %v2613 = vpop.f32.mrb[0].mxu0
      %v2614 = vadd.f32 0.0, %v2613
      %v2615 = vpop.f32.mrb[0].mxu0
      %2616 = vmatprep.mubr.f32.mxu0 0.0
      %2617 = vmatmul.mubr.f32.gmra.mrb[0].mxu0 %v2419
      %v2618 = vpop.f32.mrb[0].mxu0
      %v2619 = vadd.f32 0.0, %v2618
      %v2620 = vpop.f32.mrb[0].mxu0
      %2621 = vmatprep.mubr.f32.mxu0 0.0
      %2622 = vmatmul.mubr.f32.gmra.mrb[0].mxu0 %v2422
      %v2623 = vpop.f32.mrb[0].mxu0
      %v2624 = vadd.f32 0.0, %v2623
      %v2625 = vpop.f32.mrb[0].mxu0
      %2626 = vmatprep.mubr.f32.mxu0 0.0
      %2627 = vmatmul.mubr.f32.gmra.mrb[0].mxu0 %v2425
      %v2628 = vpop.f32.mrb[0].mxu0
      %v2629 = vadd.f32 0.0, %v2628
      %v2630 = vpop.f32.mrb[0].mxu0
      %2631 = vmatprep.mubr.f32.mxu0 0.0
      %2632 = vmatmul.mubr.f32.gmra.mrb[0].mxu0 %v2428
      %v2633 = vpop.f32.mrb[0].mxu0
      %v2634 = vadd.f32 0.0, %v2633
      %v2635 = vpop.f32.mrb[0].mxu0
      %2636 = vmatprep.mubr.f32.mxu0 0.0
      %2637 = vmatmul.mubr.f32.gmra.mrb[0].mxu0 %v2431
      %v2638 = vpop.f32.mrb[0].mxu0
      %v2639 = vadd.f32 0.0, %v2638
      %v2640 = vpop.f32.mrb[0].mxu0
      %2641 = vmatprep.mubr.f32.mxu0 0.0
      %2642 = vmatmul.mubr.f32.gmra.mrb[0].mxu0 %v2434
      %v2643 = vpop.f32.mrb[0].mxu0
      %v2644 = vadd.f32 0.0, %v2643
      %v2645 = vpop.f32.mrb[0].mxu0
      %2646 = vmatprep.mubr.f32.mxu0 0.0
      %2647 = vmatmul.mubr.f32.gmra.mrb[0].mxu0 %v2437
      %v2648 = vpop.f32.mrb[0].mxu0
      %v2649 = vadd.f32 0.0, %v2648
      %v2650 = vpop.f32.mrb[0].mxu0
      %2651 = vmatprep.mubr.f32.mxu0 0.0
      %2652 = vmatmul.mubr.f32.gmra.mrb[0].mxu0 %v2440
      %v2653 = vpop.f32.mrb[0].mxu0
      %v2654 = vadd.f32 0.0, %v2653
      %v2655 = vpop.f32.mrb[0].mxu0
      %2656 = vmatprep.mubr.f32.mxu0 0.0
      %2657 = vmatmul.mubr.f32.gmra.mrb[0].mxu0 %v2443
      %v2658 = vpop.f32.mrb[0].mxu0
      %v2659 = vadd.f32 0.0, %v2658
      %v2660 = vpop.f32.mrb[0].mxu0
      %2661 = vmatprep.mubr.f32.mxu0 0.0
      %2662 = vmatmul.mubr.f32.gmra.mrb[0].mxu0 %v2446
      %v2663 = vpop.f32.mrb[0].mxu0
      %v2664 = vadd.f32 0.0, %v2663
      %v2665 = vpop.f32.mrb[0].mxu0
      %2666 = vmatprep.mubr.f32.mxu0 0.0
      %2667 = vmatmul.mubr.f32.gmra.mrb[0].mxu0 %v2449
      %v2668 = vpop.f32.mrb[0].mxu0
      %v2669 = vadd.f32 0.0, %v2668
      %v2670 = vpop.f32.mrb[0].mxu0
      %2671 = vmatprep.mubr.f32.mxu0 0.0
      %2672 = vmatmul.mubr.f32.gmra.mrb[0].mxu0 %v2452
      %v2673 = vpop.f32.mrb[0].mxu0
      %v2674 = vadd.f32 0.0, %v2673
      %v2675 = vpop.f32.mrb[0].mxu0
      %2676 = vmatprep.mubr.f32.mxu0 0.0
      %2677 = vmatmul.mubr.f32.gmra.mrb[0].mxu0 %v2455
      %v2678 = vpop.f32.mrb[0].mxu0
      %v2679 = vadd.f32 0.0, %v2678
      %v2680 = vpop.f32.mrb[0].mxu0
      %2681 = vdwg.mxu0
      %v2682 = vadd.f32 %v2295, %v2524
      %v2683 = vadd.f32 %v2296, %v2529
      %v2684 = vadd.f32 %v2297, %v2534
      %v2685 = vadd.f32 %v2298, %v2539
      %v2686 = vadd.f32 %v2299, %v2544
      %v2687 = vadd.f32 %v2300, %v2549
      %v2688 = vadd.f32 %v2301, %v2554
      %v2689 = vadd.f32 %v2302, %v2559
      %v2690 = vadd.f32 %v2303, %v2564
      %v2691 = vadd.f32 %v2304, %v2569
      %v2692 = vadd.f32 %v2305, %v2574
      %v2693 = vadd.f32 %v2306, %v2579
      %v2694 = vadd.f32 %v2307, %v2584
      %v2695 = vadd.f32 %v2308, %v2589
      %v2696 = vadd.f32 %v2309, %v2594
      %v2697 = vadd.f32 %v2310, %v2599
      %v2698 = vadd.f32 %v2311, %v2604
      %v2699 = vadd.f32 %v2312, %v2609
      %v2700 = vadd.f32 %v2313, %v2614
      %v2701 = vadd.f32 %v2314, %v2619
      %v2702 = vadd.f32 %v2315, %v2624
      %v2703 = vadd.f32 %v2316, %v2629
      %v2704 = vadd.f32 %v2317, %v2634
      %v2705 = vadd.f32 %v2318, %v2639
      %v2706 = vadd.f32 %v2319, %v2644
      %v2707 = vadd.f32 %v2320, %v2649
      %v2708 = vadd.f32 %v2321, %v2654
      %v2709 = vadd.f32 %v2322, %v2659
      %v2710 = vadd.f32 %v2323, %v2664
      %v2711 = vadd.f32 %v2324, %v2669
      %v2712 = vadd.f32 %v2325, %v2674
      %v2713 = vadd.f32 %v2326, %v2679
      %s2714 = scalar_lea.vmem [#allocation2], 64
      %v2715 = vld [vmem:[%s2714 + $0x7] sm:$0xff]
      %v2716 = vld [vmem:[%s2714 + $0xf] sm:$0xff]
      %v2717 = vld [vmem:[%s2714 + $0x27] sm:$0xff]
      %v2718 = vld [vmem:[%s2714 + $0x2f] sm:$0xff]
      %v2719 = vld [vmem:[%s2714 + $0x47] sm:$0xff]
      %v2720 = vld [vmem:[%s2714 + $0x4f] sm:$0xff]
      %v2721 = vld [vmem:[%s2714 + $0x67] sm:$0xff]
      %v2722 = vld [vmem:[%s2714 + $0x6f] sm:$0xff]
      %v2723 = vld [vmem:[%s2714 + $0x87] sm:$0xff]
      %v2724 = vld [vmem:[%s2714 + $0x8f] sm:$0xff]
      %v2725 = vld [vmem:[%s2714 + $0xa7] sm:$0xff]
      %v2726 = vld [vmem:[%s2714 + $0xaf] sm:$0xff]
      %v2727 = vld [vmem:[%s2714 + $0xc7] sm:$0xff]
      %v2728 = vld [vmem:[%s2714 + $0xcf] sm:$0xff]
      %v2729 = vld [vmem:[%s2714 + $0xe7] sm:$0xff]
      %v2730 = vld [vmem:[%s2714 + $0xef] sm:$0xff]
      %v2731 = vld [vmem:[%s2714 + $0x107] sm:$0xff]
      %v2732 = vld [vmem:[%s2714 + $0x10f] sm:$0xff]
      %v2733 = vld [vmem:[%s2714 + $0x127] sm:$0xff]
      %v2734 = vld [vmem:[%s2714 + $0x12f] sm:$0xff]
      %v2735 = vld [vmem:[%s2714 + $0x147] sm:$0xff]
      %v2736 = vld [vmem:[%s2714 + $0x14f] sm:$0xff]
      %v2737 = vld [vmem:[%s2714 + $0x167] sm:$0xff]
      %v2738 = vld [vmem:[%s2714 + $0x16f] sm:$0xff]
      %v2739 = vld [vmem:[%s2714 + $0x187] sm:$0xff]
      %v2740 = vld [vmem:[%s2714 + $0x18f] sm:$0xff]
      %v2741 = vld [vmem:[%s2714 + $0x1a7] sm:$0xff]
      %v2742 = vld [vmem:[%s2714 + $0x1af] sm:$0xff]
      %v2743 = vld [vmem:[%s2714 + $0x1c7] sm:$0xff]
      %v2744 = vld [vmem:[%s2714 + $0x1cf] sm:$0xff]
      %v2745 = vld [vmem:[%s2714 + $0x1e7] sm:$0xff]
      %v2746 = vld [vmem:[%s2714 + $0x1ef] sm:$0xff]
      %s2747 = scalar_lea.vmem %s3, 48
      %v2748 = vld [vmem:[%s2747] sm:$0xff]
      %v2750 = vsel %vm378, %v2715, 0
      %v2753 = vsel %vm378, %v2716, 0
      %v2756 = vsel %vm378, %v2717, 0
      %v2759 = vsel %vm378, %v2718, 0
      %v2762 = vsel %vm378, %v2719, 0
      %v2765 = vsel %vm378, %v2720, 0
      %v2768 = vsel %vm378, %v2721, 0
      %v2771 = vsel %vm378, %v2722, 0
      %v2774 = vsel %vm378, %v2723, 0
      %v2777 = vsel %vm378, %v2724, 0
      %v2780 = vsel %vm378, %v2725, 0
      %v2783 = vsel %vm378, %v2726, 0
      %v2786 = vsel %vm378, %v2727, 0
      %v2789 = vsel %vm378, %v2728, 0
      %v2792 = vsel %vm378, %v2729, 0
      %v2795 = vsel %vm378, %v2730, 0
      %v2798 = vsel %vm378, %v2731, 0
      %v2801 = vsel %vm378, %v2732, 0
      %v2804 = vsel %vm378, %v2733, 0
      %v2807 = vsel %vm378, %v2734, 0
      %v2810 = vsel %vm378, %v2735, 0
      %v2813 = vsel %vm378, %v2736, 0
      %v2816 = vsel %vm378, %v2737, 0
      %v2819 = vsel %vm378, %v2738, 0
      %v2822 = vsel %vm378, %v2739, 0
      %v2825 = vsel %vm378, %v2740, 0
      %v2828 = vsel %vm378, %v2741, 0
      %v2831 = vsel %vm378, %v2742, 0
      %v2834 = vsel %vm378, %v2743, 0
      %v2837 = vsel %vm378, %v2744, 0
      %v2840 = vsel %vm378, %v2745, 0
      %v2843 = vsel %vm378, %v2746, 0
      %2845 = vmatprep.subr.mxu0 0.0
      %2846 = vmatpush1.msra.mxu0 %v2748
      %2847 = vmatprep.subr.mxu0 0.0
      %2848 = vmatpush1.msra.mxu0 0.0
      %2849 = vmatprep.subr.mxu0 0.0
      %2850 = vmatpush1.msra.mxu0 0.0
      %2851 = vmatprep.subr.mxu0 0.0
      %2852 = vmatpush1.msra.mxu0 0.0
      %2853 = vmatprep.subr.mxu0 0.0
      %2854 = vmatpush1.msra.mxu0 0.0
      %2855 = vmatprep.subr.mxu0 0.0
      %2856 = vmatpush1.msra.mxu0 0.0
      %2857 = vmatprep.subr.mxu0 0.0
      %2858 = vmatpush1.msra.mxu0 0.0
      %2859 = vmatprep.subr.mxu0 0.0
      %2860 = vmatpush1.msra.mxu0 0.0
      %2861 = vmatprep.subr.mxu0 0.0
      %2862 = vmatpush1.msra.mxu0 0.0
      %2863 = vmatprep.subr.mxu0 0.0
      %2864 = vmatpush1.msra.mxu0 0.0
      %2865 = vmatprep.subr.mxu0 0.0
      %2866 = vmatpush1.msra.mxu0 0.0
      %2867 = vmatprep.subr.mxu0 0.0
      %2868 = vmatpush1.msra.mxu0 0.0
      %2869 = vmatprep.subr.mxu0 0.0
      %2870 = vmatpush1.msra.mxu0 0.0
      %2871 = vmatprep.subr.mxu0 0.0
      %2872 = vmatpush1.msra.mxu0 0.0
      %2873 = vmatprep.subr.mxu0 0.0
      %2874 = vmatpush1.msra.mxu0 0.0
      %2875 = vmatprep.subr.mxu0 0.0
      %2876 = vmatpush1.msra.mxu0 0.0
      %2877 = vmatprep.subr.mxu0 0.0
      %2878 = vmatpush1.msra.mxu0 0.0
      %2879 = vmatprep.subr.mxu0 0.0
      %2880 = vmatpush1.msra.mxu0 0.0
      %2881 = vmatprep.subr.mxu0 0.0
      %2882 = vmatpush1.msra.mxu0 0.0
      %2883 = vmatprep.subr.mxu0 0.0
      %2884 = vmatpush1.msra.mxu0 0.0
      %2885 = vmatprep.subr.mxu0 0.0
      %2886 = vmatpush1.msra.mxu0 0.0
      %2887 = vmatprep.subr.mxu0 0.0
      %2888 = vmatpush1.msra.mxu0 0.0
      %2889 = vmatprep.subr.mxu0 0.0
      %2890 = vmatpush1.msra.mxu0 0.0
      %2891 = vmatprep.subr.mxu0 0.0
      %2892 = vmatpush1.msra.mxu0 0.0
      %2893 = vmatprep.subr.mxu0 0.0
      %2894 = vmatpush1.msra.mxu0 0.0
      %2895 = vmatprep.subr.mxu0 0.0
      %2896 = vmatpush1.msra.mxu0 0.0
      %2897 = vmatprep.subr.mxu0 0.0
      %2898 = vmatpush1.msra.mxu0 0.0
      %2899 = vmatprep.subr.mxu0 0.0
      %2900 = vmatpush1.msra.mxu0 0.0
      %2901 = vmatprep.subr.mxu0 0.0
      %2902 = vmatpush1.msra.mxu0 0.0
      %2903 = vmatprep.subr.mxu0 0.0
      %2904 = vmatpush1.msra.mxu0 0.0
      %2905 = vmatprep.subr.mxu0 0.0
      %2906 = vmatpush1.msra.mxu0 0.0
      %2907 = vmatprep.subr.mxu0 0.0
      %2908 = vmatpush1.msra.mxu0 0.0
      %2909 = vmatprep.mubr.f32.mxu0 0.0
      %2910 = vmatmul.mubr.f32.gmra.mrb[0].mxu0 %v2750
      %v2911 = vpop.f32.mrb[0].mxu0
      %v2912 = vadd.f32 0.0, %v2911
      %v2913 = vpop.f32.mrb[0].mxu0
      %2914 = vmatprep.mubr.f32.mxu0 0.0
      %2915 = vmatmul.mubr.f32.gmra.mrb[0].mxu0 %v2753
      %v2916 = vpop.f32.mrb[0].mxu0
      %v2917 = vadd.f32 0.0, %v2916
      %v2918 = vpop.f32.mrb[0].mxu0
      %2919 = vmatprep.mubr.f32.mxu0 0.0
      %2920 = vmatmul.mubr.f32.gmra.mrb[0].mxu0 %v2756
      %v2921 = vpop.f32.mrb[0].mxu0
      %v2922 = vadd.f32 0.0, %v2921
      %v2923 = vpop.f32.mrb[0].mxu0
      %2924 = vmatprep.mubr.f32.mxu0 0.0
      %2925 = vmatmul.mubr.f32.gmra.mrb[0].mxu0 %v2759
      %v2926 = vpop.f32.mrb[0].mxu0
      %v2927 = vadd.f32 0.0, %v2926
      %v2928 = vpop.f32.mrb[0].mxu0
      %2929 = vmatprep.mubr.f32.mxu0 0.0
      %2930 = vmatmul.mubr.f32.gmra.mrb[0].mxu0 %v2762
      %v2931 = vpop.f32.mrb[0].mxu0
      %v2932 = vadd.f32 0.0, %v2931
      %v2933 = vpop.f32.mrb[0].mxu0
      %2934 = vmatprep.mubr.f32.mxu0 0.0
      %2935 = vmatmul.mubr.f32.gmra.mrb[0].mxu0 %v2765
      %v2936 = vpop.f32.mrb[0].mxu0
      %v2937 = vadd.f32 0.0, %v2936
      %v2938 = vpop.f32.mrb[0].mxu0
      %2939 = vmatprep.mubr.f32.mxu0 0.0
      %2940 = vmatmul.mubr.f32.gmra.mrb[0].mxu0 %v2768
      %v2941 = vpop.f32.mrb[0].mxu0
      %v2942 = vadd.f32 0.0, %v2941
      %v2943 = vpop.f32.mrb[0].mxu0
      %2944 = vmatprep.mubr.f32.mxu0 0.0
      %2945 = vmatmul.mubr.f32.gmra.mrb[0].mxu0 %v2771
      %v2946 = vpop.f32.mrb[0].mxu0
      %v2947 = vadd.f32 0.0, %v2946
      %v2948 = vpop.f32.mrb[0].mxu0
      %2949 = vmatprep.mubr.f32.mxu0 0.0
      %2950 = vmatmul.mubr.f32.gmra.mrb[0].mxu0 %v2774
      %v2951 = vpop.f32.mrb[0].mxu0
      %v2952 = vadd.f32 0.0, %v2951
      %v2953 = vpop.f32.mrb[0].mxu0
      %2954 = vmatprep.mubr.f32.mxu0 0.0
      %2955 = vmatmul.mubr.f32.gmra.mrb[0].mxu0 %v2777
      %v2956 = vpop.f32.mrb[0].mxu0
      %v2957 = vadd.f32 0.0, %v2956
      %v2958 = vpop.f32.mrb[0].mxu0
      %2959 = vmatprep.mubr.f32.mxu0 0.0
      %2960 = vmatmul.mubr.f32.gmra.mrb[0].mxu0 %v2780
      %v2961 = vpop.f32.mrb[0].mxu0
      %v2962 = vadd.f32 0.0, %v2961
      %v2963 = vpop.f32.mrb[0].mxu0
      %2964 = vmatprep.mubr.f32.mxu0 0.0
      %2965 = vmatmul.mubr.f32.gmra.mrb[0].mxu0 %v2783
      %v2966 = vpop.f32.mrb[0].mxu0
      %v2967 = vadd.f32 0.0, %v2966
      %v2968 = vpop.f32.mrb[0].mxu0
      %2969 = vmatprep.mubr.f32.mxu0 0.0
      %2970 = vmatmul.mubr.f32.gmra.mrb[0].mxu0 %v2786
      %v2971 = vpop.f32.mrb[0].mxu0
      %v2972 = vadd.f32 0.0, %v2971
      %v2973 = vpop.f32.mrb[0].mxu0
      %2974 = vmatprep.mubr.f32.mxu0 0.0
      %2975 = vmatmul.mubr.f32.gmra.mrb[0].mxu0 %v2789
      %v2976 = vpop.f32.mrb[0].mxu0
      %v2977 = vadd.f32 0.0, %v2976
      %v2978 = vpop.f32.mrb[0].mxu0
      %2979 = vmatprep.mubr.f32.mxu0 0.0
      %2980 = vmatmul.mubr.f32.gmra.mrb[0].mxu0 %v2792
      %v2981 = vpop.f32.mrb[0].mxu0
      %v2982 = vadd.f32 0.0, %v2981
      %v2983 = vpop.f32.mrb[0].mxu0
      %2984 = vmatprep.mubr.f32.mxu0 0.0
      %2985 = vmatmul.mubr.f32.gmra.mrb[0].mxu0 %v2795
      %v2986 = vpop.f32.mrb[0].mxu0
      %v2987 = vadd.f32 0.0, %v2986
      %v2988 = vpop.f32.mrb[0].mxu0
      %2989 = vmatprep.mubr.f32.mxu0 0.0
      %2990 = vmatmul.mubr.f32.gmra.mrb[0].mxu0 %v2798
      %v2991 = vpop.f32.mrb[0].mxu0
      %v2992 = vadd.f32 0.0, %v2991
      %v2993 = vpop.f32.mrb[0].mxu0
      %2994 = vmatprep.mubr.f32.mxu0 0.0
      %2995 = vmatmul.mubr.f32.gmra.mrb[0].mxu0 %v2801
      %v2996 = vpop.f32.mrb[0].mxu0
      %v2997 = vadd.f32 0.0, %v2996
      %v2998 = vpop.f32.mrb[0].mxu0
      %2999 = vmatprep.mubr.f32.mxu0 0.0
      %3000 = vmatmul.mubr.f32.gmra.mrb[0].mxu0 %v2804
      %v3001 = vpop.f32.mrb[0].mxu0
      %v3002 = vadd.f32 0.0, %v3001
      %v3003 = vpop.f32.mrb[0].mxu0
      %3004 = vmatprep.mubr.f32.mxu0 0.0
      %3005 = vmatmul.mubr.f32.gmra.mrb[0].mxu0 %v2807
      %v3006 = vpop.f32.mrb[0].mxu0
      %v3007 = vadd.f32 0.0, %v3006
      %v3008 = vpop.f32.mrb[0].mxu0
      %3009 = vmatprep.mubr.f32.mxu0 0.0
      %3010 = vmatmul.mubr.f32.gmra.mrb[0].mxu0 %v2810
      %v3011 = vpop.f32.mrb[0].mxu0
      %v3012 = vadd.f32 0.0, %v3011
      %v3013 = vpop.f32.mrb[0].mxu0
      %3014 = vmatprep.mubr.f32.mxu0 0.0
      %3015 = vmatmul.mubr.f32.gmra.mrb[0].mxu0 %v2813
      %v3016 = vpop.f32.mrb[0].mxu0
      %v3017 = vadd.f32 0.0, %v3016
      %v3018 = vpop.f32.mrb[0].mxu0
      %3019 = vmatprep.mubr.f32.mxu0 0.0
      %3020 = vmatmul.mubr.f32.gmra.mrb[0].mxu0 %v2816
      %v3021 = vpop.f32.mrb[0].mxu0
      %v3022 = vadd.f32 0.0, %v3021
      %v3023 = vpop.f32.mrb[0].mxu0
      %3024 = vmatprep.mubr.f32.mxu0 0.0
      %3025 = vmatmul.mubr.f32.gmra.mrb[0].mxu0 %v2819
      %v3026 = vpop.f32.mrb[0].mxu0
      %v3027 = vadd.f32 0.0, %v3026
      %v3028 = vpop.f32.mrb[0].mxu0
      %3029 = vmatprep.mubr.f32.mxu0 0.0
      %3030 = vmatmul.mubr.f32.gmra.mrb[0].mxu0 %v2822
      %v3031 = vpop.f32.mrb[0].mxu0
      %v3032 = vadd.f32 0.0, %v3031
      %v3033 = vpop.f32.mrb[0].mxu0
      %3034 = vmatprep.mubr.f32.mxu0 0.0
      %3035 = vmatmul.mubr.f32.gmra.mrb[0].mxu0 %v2825
      %v3036 = vpop.f32.mrb[0].mxu0
      %v3037 = vadd.f32 0.0, %v3036
      %v3038 = vpop.f32.mrb[0].mxu0
      %3039 = vmatprep.mubr.f32.mxu0 0.0
      %3040 = vmatmul.mubr.f32.gmra.mrb[0].mxu0 %v2828
      %v3041 = vpop.f32.mrb[0].mxu0
      %v3042 = vadd.f32 0.0, %v3041
      %v3043 = vpop.f32.mrb[0].mxu0
      %3044 = vmatprep.mubr.f32.mxu0 0.0
      %3045 = vmatmul.mubr.f32.gmra.mrb[0].mxu0 %v2831
      %v3046 = vpop.f32.mrb[0].mxu0
      %v3047 = vadd.f32 0.0, %v3046
      %v3048 = vpop.f32.mrb[0].mxu0
      %3049 = vmatprep.mubr.f32.mxu0 0.0
      %3050 = vmatmul.mubr.f32.gmra.mrb[0].mxu0 %v2834
      %v3051 = vpop.f32.mrb[0].mxu0
      %v3052 = vadd.f32 0.0, %v3051
      %v3053 = vpop.f32.mrb[0].mxu0
      %3054 = vmatprep.mubr.f32.mxu0 0.0
      %3055 = vmatmul.mubr.f32.gmra.mrb[0].mxu0 %v2837
      %v3056 = vpop.f32.mrb[0].mxu0
      %v3057 = vadd.f32 0.0, %v3056
      %v3058 = vpop.f32.mrb[0].mxu0
      %3059 = vmatprep.mubr.f32.mxu0 0.0
      %3060 = vmatmul.mubr.f32.gmra.mrb[0].mxu0 %v2840
      %v3061 = vpop.f32.mrb[0].mxu0
      %v3062 = vadd.f32 0.0, %v3061
      %v3063 = vpop.f32.mrb[0].mxu0
      %3064 = vmatprep.mubr.f32.mxu0 0.0
      %3065 = vmatmul.mubr.f32.gmra.mrb[0].mxu0 %v2843
      %v3066 = vpop.f32.mrb[0].mxu0
      %v3067 = vadd.f32 0.0, %v3066
      %v3068 = vpop.f32.mrb[0].mxu0
      %3069 = vdwg.mxu0
      %v3070 = vadd.f32 %v2682, %v2912
      %v3071 = vadd.f32 %v2683, %v2917
      %v3072 = vadd.f32 %v2684, %v2922
      %v3073 = vadd.f32 %v2685, %v2927
      %v3074 = vadd.f32 %v2686, %v2932
      %v3075 = vadd.f32 %v2687, %v2937
      %v3076 = vadd.f32 %v2688, %v2942
      %v3077 = vadd.f32 %v2689, %v2947
      %v3078 = vadd.f32 %v2690, %v2952
      %v3079 = vadd.f32 %v2691, %v2957
      %v3080 = vadd.f32 %v2692, %v2962
      %v3081 = vadd.f32 %v2693, %v2967
      %v3082 = vadd.f32 %v2694, %v2972
      %v3083 = vadd.f32 %v2695, %v2977
      %v3084 = vadd.f32 %v2696, %v2982
      %v3085 = vadd.f32 %v2697, %v2987
      %v3086 = vadd.f32 %v2698, %v2992
      %v3087 = vadd.f32 %v2699, %v2997
      %v3088 = vadd.f32 %v2700, %v3002
      %v3089 = vadd.f32 %v2701, %v3007
      %v3090 = vadd.f32 %v2702, %v3012
      %v3091 = vadd.f32 %v2703, %v3017
      %v3092 = vadd.f32 %v2704, %v3022
      %v3093 = vadd.f32 %v2705, %v3027
      %v3094 = vadd.f32 %v2706, %v3032
      %v3095 = vadd.f32 %v2707, %v3037
      %v3096 = vadd.f32 %v2708, %v3042
      %v3097 = vadd.f32 %v2709, %v3047
      %v3098 = vadd.f32 %v2710, %v3052
      %v3099 = vadd.f32 %v2711, %v3057
      %v3100 = vadd.f32 %v2712, %v3062
      %v3101 = vadd.f32 %v2713, %v3067
      %v3102 = vld [vmem:[%s2714 + $0x8] sm:$0xff]
      %v3103 = vld [vmem:[%s2714 + $0x10] sm:$0xff]
      %v3104 = vld [vmem:[%s2714 + $0x28] sm:$0xff]
      %v3105 = vld [vmem:[%s2714 + $0x30] sm:$0xff]
      %v3106 = vld [vmem:[%s2714 + $0x48] sm:$0xff]
      %v3107 = vld [vmem:[%s2714 + $0x50] sm:$0xff]
      %v3108 = vld [vmem:[%s2714 + $0x68] sm:$0xff]
      %v3109 = vld [vmem:[%s2714 + $0x70] sm:$0xff]
      %v3110 = vld [vmem:[%s2714 + $0x88] sm:$0xff]
      %v3111 = vld [vmem:[%s2714 + $0x90] sm:$0xff]
      %v3112 = vld [vmem:[%s2714 + $0xa8] sm:$0xff]
      %v3113 = vld [vmem:[%s2714 + $0xb0] sm:$0xff]
      %v3114 = vld [vmem:[%s2714 + $0xc8] sm:$0xff]
      %v3115 = vld [vmem:[%s2714 + $0xd0] sm:$0xff]
      %v3116 = vld [vmem:[%s2714 + $0xe8] sm:$0xff]
      %v3117 = vld [vmem:[%s2714 + $0xf0] sm:$0xff]
      %v3118 = vld [vmem:[%s2714 + $0x108] sm:$0xff]
      %v3119 = vld [vmem:[%s2714 + $0x110] sm:$0xff]
      %v3120 = vld [vmem:[%s2714 + $0x128] sm:$0xff]
      %v3121 = vld [vmem:[%s2714 + $0x130] sm:$0xff]
      %v3122 = vld [vmem:[%s2714 + $0x148] sm:$0xff]
      %v3123 = vld [vmem:[%s2714 + $0x150] sm:$0xff]
      %v3124 = vld [vmem:[%s2714 + $0x168] sm:$0xff]
      %v3125 = vld [vmem:[%s2714 + $0x170] sm:$0xff]
      %v3126 = vld [vmem:[%s2714 + $0x188] sm:$0xff]
      %v3127 = vld [vmem:[%s2714 + $0x190] sm:$0xff]
      %v3128 = vld [vmem:[%s2714 + $0x1a8] sm:$0xff]
      %v3129 = vld [vmem:[%s2714 + $0x1b0] sm:$0xff]
      %v3130 = vld [vmem:[%s2714 + $0x1c8] sm:$0xff]
      %v3131 = vld [vmem:[%s2714 + $0x1d0] sm:$0xff]
      %v3132 = vld [vmem:[%s2714 + $0x1e8] sm:$0xff]
      %v3133 = vld [vmem:[%s2714 + $0x1f0] sm:$0xff]
      %s3134 = scalar_lea.vmem %s3, 56
      %v3135 = vld [vmem:[%s3134] sm:$0xff]
      %v3137 = vsel %vm378, %v3102, 0
      %v3140 = vsel %vm378, %v3103, 0
      %v3143 = vsel %vm378, %v3104, 0
      %v3146 = vsel %vm378, %v3105, 0
      %v3149 = vsel %vm378, %v3106, 0
      %v3152 = vsel %vm378, %v3107, 0
      %v3155 = vsel %vm378, %v3108, 0
      %v3158 = vsel %vm378, %v3109, 0
      %v3161 = vsel %vm378, %v3110, 0
      %v3164 = vsel %vm378, %v3111, 0
      %v3167 = vsel %vm378, %v3112, 0
      %v3170 = vsel %vm378, %v3113, 0
      %v3173 = vsel %vm378, %v3114, 0
      %v3176 = vsel %vm378, %v3115, 0
      %v3179 = vsel %vm378, %v3116, 0
      %v3182 = vsel %vm378, %v3117, 0
      %v3185 = vsel %vm378, %v3118, 0
      %v3188 = vsel %vm378, %v3119, 0
      %v3191 = vsel %vm378, %v3120, 0
      %v3194 = vsel %vm378, %v3121, 0
      %v3197 = vsel %vm378, %v3122, 0
      %v3200 = vsel %vm378, %v3123, 0
      %v3203 = vsel %vm378, %v3124, 0
      %v3206 = vsel %vm378, %v3125, 0
      %v3209 = vsel %vm378, %v3126, 0
      %v3212 = vsel %vm378, %v3127, 0
      %v3215 = vsel %vm378, %v3128, 0
      %v3218 = vsel %vm378, %v3129, 0
      %v3221 = vsel %vm378, %v3130, 0
      %v3224 = vsel %vm378, %v3131, 0
      %v3227 = vsel %vm378, %v3132, 0
      %v3230 = vsel %vm378, %v3133, 0
      %3232 = vmatprep.subr.mxu0 0.0
      %3233 = vmatpush1.msra.mxu0 %v3135
      %3234 = vmatprep.subr.mxu0 0.0
      %3235 = vmatpush1.msra.mxu0 0.0
      %3236 = vmatprep.subr.mxu0 0.0
      %3237 = vmatpush1.msra.mxu0 0.0
      %3238 = vmatprep.subr.mxu0 0.0
      %3239 = vmatpush1.msra.mxu0 0.0
      %3240 = vmatprep.subr.mxu0 0.0
      %3241 = vmatpush1.msra.mxu0 0.0
      %3242 = vmatprep.subr.mxu0 0.0
      %3243 = vmatpush1.msra.mxu0 0.0
      %3244 = vmatprep.subr.mxu0 0.0
      %3245 = vmatpush1.msra.mxu0 0.0
      %3246 = vmatprep.subr.mxu0 0.0
      %3247 = vmatpush1.msra.mxu0 0.0
      %3248 = vmatprep.subr.mxu0 0.0
      %3249 = vmatpush1.msra.mxu0 0.0
      %3250 = vmatprep.subr.mxu0 0.0
      %3251 = vmatpush1.msra.mxu0 0.0
      %3252 = vmatprep.subr.mxu0 0.0
      %3253 = vmatpush1.msra.mxu0 0.0
      %3254 = vmatprep.subr.mxu0 0.0
      %3255 = vmatpush1.msra.mxu0 0.0
      %3256 = vmatprep.subr.mxu0 0.0
      %3257 = vmatpush1.msra.mxu0 0.0
      %3258 = vmatprep.subr.mxu0 0.0
      %3259 = vmatpush1.msra.mxu0 0.0
      %3260 = vmatprep.subr.mxu0 0.0
      %3261 = vmatpush1.msra.mxu0 0.0
      %3262 = vmatprep.subr.mxu0 0.0
      %3263 = vmatpush1.msra.mxu0 0.0
      %3264 = vmatprep.subr.mxu0 0.0
      %3265 = vmatpush1.msra.mxu0 0.0
      %3266 = vmatprep.subr.mxu0 0.0
      %3267 = vmatpush1.msra.mxu0 0.0
      %3268 = vmatprep.subr.mxu0 0.0
      %3269 = vmatpush1.msra.mxu0 0.0
      %3270 = vmatprep.subr.mxu0 0.0
      %3271 = vmatpush1.msra.mxu0 0.0
      %3272 = vmatprep.subr.mxu0 0.0
      %3273 = vmatpush1.msra.mxu0 0.0
      %3274 = vmatprep.subr.mxu0 0.0
      %3275 = vmatpush1.msra.mxu0 0.0
      %3276 = vmatprep.subr.mxu0 0.0
      %3277 = vmatpush1.msra.mxu0 0.0
      %3278 = vmatprep.subr.mxu0 0.0
      %3279 = vmatpush1.msra.mxu0 0.0
      %3280 = vmatprep.subr.mxu0 0.0
      %3281 = vmatpush1.msra.mxu0 0.0
      %3282 = vmatprep.subr.mxu0 0.0
      %3283 = vmatpush1.msra.mxu0 0.0
      %3284 = vmatprep.subr.mxu0 0.0
      %3285 = vmatpush1.msra.mxu0 0.0
      %3286 = vmatprep.subr.mxu0 0.0
      %3287 = vmatpush1.msra.mxu0 0.0
      %3288 = vmatprep.subr.mxu0 0.0
      %3289 = vmatpush1.msra.mxu0 0.0
      %3290 = vmatprep.subr.mxu0 0.0
      %3291 = vmatpush1.msra.mxu0 0.0
      %3292 = vmatprep.subr.mxu0 0.0
      %3293 = vmatpush1.msra.mxu0 0.0
      %3294 = vmatprep.subr.mxu0 0.0
      %3295 = vmatpush1.msra.mxu0 0.0
      %3296 = vmatprep.mubr.f32.mxu0 0.0
      %3297 = vmatmul.mubr.f32.gmra.mrb[0].mxu0 %v3137
      %v3298 = vpop.f32.mrb[0].mxu0
      %v3299 = vadd.f32 0.0, %v3298
      %v3300 = vpop.f32.mrb[0].mxu0
      %3301 = vmatprep.mubr.f32.mxu0 0.0
      %3302 = vmatmul.mubr.f32.gmra.mrb[0].mxu0 %v3140
      %v3303 = vpop.f32.mrb[0].mxu0
      %v3304 = vadd.f32 0.0, %v3303
      %v3305 = vpop.f32.mrb[0].mxu0
      %3306 = vmatprep.mubr.f32.mxu0 0.0
      %3307 = vmatmul.mubr.f32.gmra.mrb[0].mxu0 %v3143
      %v3308 = vpop.f32.mrb[0].mxu0
      %v3309 = vadd.f32 0.0, %v3308
      %v3310 = vpop.f32.mrb[0].mxu0
      %3311 = vmatprep.mubr.f32.mxu0 0.0
      %3312 = vmatmul.mubr.f32.gmra.mrb[0].mxu0 %v3146
      %v3313 = vpop.f32.mrb[0].mxu0
      %v3314 = vadd.f32 0.0, %v3313
      %v3315 = vpop.f32.mrb[0].mxu0
      %3316 = vmatprep.mubr.f32.mxu0 0.0
      %3317 = vmatmul.mubr.f32.gmra.mrb[0].mxu0 %v3149
      %v3318 = vpop.f32.mrb[0].mxu0
      %v3319 = vadd.f32 0.0, %v3318
      %v3320 = vpop.f32.mrb[0].mxu0
      %3321 = vmatprep.mubr.f32.mxu0 0.0
      %3322 = vmatmul.mubr.f32.gmra.mrb[0].mxu0 %v3152
      %v3323 = vpop.f32.mrb[0].mxu0
      %v3324 = vadd.f32 0.0, %v3323
      %v3325 = vpop.f32.mrb[0].mxu0
      %3326 = vmatprep.mubr.f32.mxu0 0.0
      %3327 = vmatmul.mubr.f32.gmra.mrb[0].mxu0 %v3155
      %v3328 = vpop.f32.mrb[0].mxu0
      %v3329 = vadd.f32 0.0, %v3328
      %v3330 = vpop.f32.mrb[0].mxu0
      %3331 = vmatprep.mubr.f32.mxu0 0.0
      %3332 = vmatmul.mubr.f32.gmra.mrb[0].mxu0 %v3158
      %v3333 = vpop.f32.mrb[0].mxu0
      %v3334 = vadd.f32 0.0, %v3333
      %v3335 = vpop.f32.mrb[0].mxu0
      %3336 = vmatprep.mubr.f32.mxu0 0.0
      %3337 = vmatmul.mubr.f32.gmra.mrb[0].mxu0 %v3161
      %v3338 = vpop.f32.mrb[0].mxu0
      %v3339 = vadd.f32 0.0, %v3338
      %v3340 = vpop.f32.mrb[0].mxu0
      %3341 = vmatprep.mubr.f32.mxu0 0.0
      %3342 = vmatmul.mubr.f32.gmra.mrb[0].mxu0 %v3164
      %v3343 = vpop.f32.mrb[0].mxu0
      %v3344 = vadd.f32 0.0, %v3343
      %v3345 = vpop.f32.mrb[0].mxu0
      %3346 = vmatprep.mubr.f32.mxu0 0.0
      %3347 = vmatmul.mubr.f32.gmra.mrb[0].mxu0 %v3167
      %v3348 = vpop.f32.mrb[0].mxu0
      %v3349 = vadd.f32 0.0, %v3348
      %v3350 = vpop.f32.mrb[0].mxu0
      %3351 = vmatprep.mubr.f32.mxu0 0.0
      %3352 = vmatmul.mubr.f32.gmra.mrb[0].mxu0 %v3170
      %v3353 = vpop.f32.mrb[0].mxu0
      %v3354 = vadd.f32 0.0, %v3353
      %v3355 = vpop.f32.mrb[0].mxu0
      %3356 = vmatprep.mubr.f32.mxu0 0.0
      %3357 = vmatmul.mubr.f32.gmra.mrb[0].mxu0 %v3173
      %v3358 = vpop.f32.mrb[0].mxu0
      %v3359 = vadd.f32 0.0, %v3358
      %v3360 = vpop.f32.mrb[0].mxu0
      %3361 = vmatprep.mubr.f32.mxu0 0.0
      %3362 = vmatmul.mubr.f32.gmra.mrb[0].mxu0 %v3176
      %v3363 = vpop.f32.mrb[0].mxu0
      %v3364 = vadd.f32 0.0, %v3363
      %v3365 = vpop.f32.mrb[0].mxu0
      %3366 = vmatprep.mubr.f32.mxu0 0.0
      %3367 = vmatmul.mubr.f32.gmra.mrb[0].mxu0 %v3179
      %v3368 = vpop.f32.mrb[0].mxu0
      %v3369 = vadd.f32 0.0, %v3368
      %v3370 = vpop.f32.mrb[0].mxu0
      %3371 = vmatprep.mubr.f32.mxu0 0.0
      %3372 = vmatmul.mubr.f32.gmra.mrb[0].mxu0 %v3182
      %v3373 = vpop.f32.mrb[0].mxu0
      %v3374 = vadd.f32 0.0, %v3373
      %v3375 = vpop.f32.mrb[0].mxu0
      %3376 = vmatprep.mubr.f32.mxu0 0.0
      %3377 = vmatmul.mubr.f32.gmra.mrb[0].mxu0 %v3185
      %v3378 = vpop.f32.mrb[0].mxu0
      %v3379 = vadd.f32 0.0, %v3378
      %v3380 = vpop.f32.mrb[0].mxu0
      %3381 = vmatprep.mubr.f32.mxu0 0.0
      %3382 = vmatmul.mubr.f32.gmra.mrb[0].mxu0 %v3188
      %v3383 = vpop.f32.mrb[0].mxu0
      %v3384 = vadd.f32 0.0, %v3383
      %v3385 = vpop.f32.mrb[0].mxu0
      %3386 = vmatprep.mubr.f32.mxu0 0.0
      %3387 = vmatmul.mubr.f32.gmra.mrb[0].mxu0 %v3191
      %v3388 = vpop.f32.mrb[0].mxu0
      %v3389 = vadd.f32 0.0, %v3388
      %v3390 = vpop.f32.mrb[0].mxu0
      %3391 = vmatprep.mubr.f32.mxu0 0.0
      %3392 = vmatmul.mubr.f32.gmra.mrb[0].mxu0 %v3194
      %v3393 = vpop.f32.mrb[0].mxu0
      %v3394 = vadd.f32 0.0, %v3393
      %v3395 = vpop.f32.mrb[0].mxu0
      %3396 = vmatprep.mubr.f32.mxu0 0.0
      %3397 = vmatmul.mubr.f32.gmra.mrb[0].mxu0 %v3197
      %v3398 = vpop.f32.mrb[0].mxu0
      %v3399 = vadd.f32 0.0, %v3398
      %v3400 = vpop.f32.mrb[0].mxu0
      %3401 = vmatprep.mubr.f32.mxu0 0.0
      %3402 = vmatmul.mubr.f32.gmra.mrb[0].mxu0 %v3200
      %v3403 = vpop.f32.mrb[0].mxu0
      %v3404 = vadd.f32 0.0, %v3403
      %v3405 = vpop.f32.mrb[0].mxu0
      %3406 = vmatprep.mubr.f32.mxu0 0.0
      %3407 = vmatmul.mubr.f32.gmra.mrb[0].mxu0 %v3203
      %v3408 = vpop.f32.mrb[0].mxu0
      %v3409 = vadd.f32 0.0, %v3408
      %v3410 = vpop.f32.mrb[0].mxu0
      %3411 = vmatprep.mubr.f32.mxu0 0.0
      %3412 = vmatmul.mubr.f32.gmra.mrb[0].mxu0 %v3206
      %v3413 = vpop.f32.mrb[0].mxu0
      %v3414 = vadd.f32 0.0, %v3413
      %v3415 = vpop.f32.mrb[0].mxu0
      %3416 = vmatprep.mubr.f32.mxu0 0.0
      %3417 = vmatmul.mubr.f32.gmra.mrb[0].mxu0 %v3209
      %v3418 = vpop.f32.mrb[0].mxu0
      %v3419 = vadd.f32 0.0, %v3418
      %v3420 = vpop.f32.mrb[0].mxu0
      %3421 = vmatprep.mubr.f32.mxu0 0.0
      %3422 = vmatmul.mubr.f32.gmra.mrb[0].mxu0 %v3212
      %v3423 = vpop.f32.mrb[0].mxu0
      %v3424 = vadd.f32 0.0, %v3423
      %v3425 = vpop.f32.mrb[0].mxu0
      %3426 = vmatprep.mubr.f32.mxu0 0.0
      %3427 = vmatmul.mubr.f32.gmra.mrb[0].mxu0 %v3215
      %v3428 = vpop.f32.mrb[0].mxu0
      %v3429 = vadd.f32 0.0, %v3428
      %v3430 = vpop.f32.mrb[0].mxu0
      %3431 = vmatprep.mubr.f32.mxu0 0.0
      %3432 = vmatmul.mubr.f32.gmra.mrb[0].mxu0 %v3218
      %v3433 = vpop.f32.mrb[0].mxu0
      %v3434 = vadd.f32 0.0, %v3433
      %v3435 = vpop.f32.mrb[0].mxu0
      %3436 = vmatprep.mubr.f32.mxu0 0.0
      %3437 = vmatmul.mubr.f32.gmra.mrb[0].mxu0 %v3221
      %v3438 = vpop.f32.mrb[0].mxu0
      %v3439 = vadd.f32 0.0, %v3438
      %v3440 = vpop.f32.mrb[0].mxu0
      %3441 = vmatprep.mubr.f32.mxu0 0.0
      %3442 = vmatmul.mubr.f32.gmra.mrb[0].mxu0 %v3224
      %v3443 = vpop.f32.mrb[0].mxu0
      %v3444 = vadd.f32 0.0, %v3443
      %v3445 = vpop.f32.mrb[0].mxu0
      %3446 = vmatprep.mubr.f32.mxu0 0.0
      %3447 = vmatmul.mubr.f32.gmra.mrb[0].mxu0 %v3227
      %v3448 = vpop.f32.mrb[0].mxu0
      %v3449 = vadd.f32 0.0, %v3448
      %v3450 = vpop.f32.mrb[0].mxu0
      %3451 = vmatprep.mubr.f32.mxu0 0.0
      %3452 = vmatmul.mubr.f32.gmra.mrb[0].mxu0 %v3230
      %v3453 = vpop.f32.mrb[0].mxu0
      %v3454 = vadd.f32 0.0, %v3453
      %v3455 = vpop.f32.mrb[0].mxu0
      %3456 = vdwg.mxu0
      %v3457 = vadd.f32 %v3070, %v3299
      %v3458 = vadd.f32 %v3071, %v3304
      %v3459 = vadd.f32 %v3072, %v3309
      %v3460 = vadd.f32 %v3073, %v3314
      %v3461 = vadd.f32 %v3074, %v3319
      %v3462 = vadd.f32 %v3075, %v3324
      %v3463 = vadd.f32 %v3076, %v3329
      %v3464 = vadd.f32 %v3077, %v3334
      %v3465 = vadd.f32 %v3078, %v3339
      %v3466 = vadd.f32 %v3079, %v3344
      %v3467 = vadd.f32 %v3080, %v3349
      %v3468 = vadd.f32 %v3081, %v3354
      %v3469 = vadd.f32 %v3082, %v3359
      %v3470 = vadd.f32 %v3083, %v3364
      %v3471 = vadd.f32 %v3084, %v3369
      %v3472 = vadd.f32 %v3085, %v3374
      %v3473 = vadd.f32 %v3086, %v3379
      %v3474 = vadd.f32 %v3087, %v3384
      %v3475 = vadd.f32 %v3088, %v3389
      %v3476 = vadd.f32 %v3089, %v3394
      %v3477 = vadd.f32 %v3090, %v3399
      %v3478 = vadd.f32 %v3091, %v3404
      %v3479 = vadd.f32 %v3092, %v3409
      %v3480 = vadd.f32 %v3093, %v3414
      %v3481 = vadd.f32 %v3094, %v3419
      %v3482 = vadd.f32 %v3095, %v3424
      %v3483 = vadd.f32 %v3096, %v3429
      %v3484 = vadd.f32 %v3097, %v3434
      %v3485 = vadd.f32 %v3098, %v3439
      %v3486 = vadd.f32 %v3099, %v3444
      %v3487 = vadd.f32 %v3100, %v3449
      %v3488 = vadd.f32 %v3101, %v3454
      %v3489 = vld [vmem:[%s2714 + $0x9] sm:$0xff]
      %v3490 = vld [vmem:[%s2714 + $0x11] sm:$0xff]
      %v3491 = vld [vmem:[%s2714 + $0x29] sm:$0xff]
      %v3492 = vld [vmem:[%s2714 + $0x31] sm:$0xff]
      %v3493 = vld [vmem:[%s2714 + $0x49] sm:$0xff]
      %v3494 = vld [vmem:[%s2714 + $0x51] sm:$0xff]
      %v3495 = vld [vmem:[%s2714 + $0x69] sm:$0xff]
      %v3496 = vld [vmem:[%s2714 + $0x71] sm:$0xff]
      %v3497 = vld [vmem:[%s2714 + $0x89] sm:$0xff]
      %v3498 = vld [vmem:[%s2714 + $0x91] sm:$0xff]
      %v3499 = vld [vmem:[%s2714 + $0xa9] sm:$0xff]
      %v3500 = vld [vmem:[%s2714 + $0xb1] sm:$0xff]
      %v3501 = vld [vmem:[%s2714 + $0xc9] sm:$0xff]
      %v3502 = vld [vmem:[%s2714 + $0xd1] sm:$0xff]
      %v3503 = vld [vmem:[%s2714 + $0xe9] sm:$0xff]
      %v3504 = vld [vmem:[%s2714 + $0xf1] sm:$0xff]
      %v3505 = vld [vmem:[%s2714 + $0x109] sm:$0xff]
      %v3506 = vld [vmem:[%s2714 + $0x111] sm:$0xff]
      %v3507 = vld [vmem:[%s2714 + $0x129] sm:$0xff]
      %v3508 = vld [vmem:[%s2714 + $0x131] sm:$0xff]
      %v3509 = vld [vmem:[%s2714 + $0x149] sm:$0xff]
      %v3510 = vld [vmem:[%s2714 + $0x151] sm:$0xff]
      %v3511 = vld [vmem:[%s2714 + $0x169] sm:$0xff]
      %v3512 = vld [vmem:[%s2714 + $0x171] sm:$0xff]
      %v3513 = vld [vmem:[%s2714 + $0x189] sm:$0xff]
      %v3514 = vld [vmem:[%s2714 + $0x191] sm:$0xff]
      %v3515 = vld [vmem:[%s2714 + $0x1a9] sm:$0xff]
      %v3516 = vld [vmem:[%s2714 + $0x1b1] sm:$0xff]
      %v3517 = vld [vmem:[%s2714 + $0x1c9] sm:$0xff]
      %v3518 = vld [vmem:[%s2714 + $0x1d1] sm:$0xff]
      %v3519 = vld [vmem:[%s2714 + $0x1e9] sm:$0xff]
      %v3520 = vld [vmem:[%s2714 + $0x1f1] sm:$0xff]
      %s3521 = scalar_lea.vmem %s3, 64
      %v3522 = vld [vmem:[%s3521] sm:$0xff]
      %v3524 = vsel %vm378, %v3489, 0
      %v3527 = vsel %vm378, %v3490, 0
      %v3530 = vsel %vm378, %v3491, 0
      %v3533 = vsel %vm378, %v3492, 0
      %v3536 = vsel %vm378, %v3493, 0
      %v3539 = vsel %vm378, %v3494, 0
      %v3542 = vsel %vm378, %v3495, 0
      %v3545 = vsel %vm378, %v3496, 0
      %v3548 = vsel %vm378, %v3497, 0
      %v3551 = vsel %vm378, %v3498, 0
      %v3554 = vsel %vm378, %v3499, 0
      %v3557 = vsel %vm378, %v3500, 0
      %v3560 = vsel %vm378, %v3501, 0
      %v3563 = vsel %vm378, %v3502, 0
      %v3566 = vsel %vm378, %v3503, 0
      %v3569 = vsel %vm378, %v3504, 0
      %v3572 = vsel %vm378, %v3505, 0
      %v3575 = vsel %vm378, %v3506, 0
      %v3578 = vsel %vm378, %v3507, 0
      %v3581 = vsel %vm378, %v3508, 0
      %v3584 = vsel %vm378, %v3509, 0
      %v3587 = vsel %vm378, %v3510, 0
      %v3590 = vsel %vm378, %v3511, 0
      %v3593 = vsel %vm378, %v3512, 0
      %v3596 = vsel %vm378, %v3513, 0
      %v3599 = vsel %vm378, %v3514, 0
      %v3602 = vsel %vm378, %v3515, 0
      %v3605 = vsel %vm378, %v3516, 0
      %v3608 = vsel %vm378, %v3517, 0
      %v3611 = vsel %vm378, %v3518, 0
      %v3614 = vsel %vm378, %v3519, 0
      %v3617 = vsel %vm378, %v3520, 0
      %3619 = vmatprep.subr.mxu0 0.0
      %3620 = vmatpush1.msra.mxu0 %v3522
      %3621 = vmatprep.subr.mxu0 0.0
      %3622 = vmatpush1.msra.mxu0 0.0
      %3623 = vmatprep.subr.mxu0 0.0
      %3624 = vmatpush1.msra.mxu0 0.0
      %3625 = vmatprep.subr.mxu0 0.0
      %3626 = vmatpush1.msra.mxu0 0.0
      %3627 = vmatprep.subr.mxu0 0.0
      %3628 = vmatpush1.msra.mxu0 0.0
      %3629 = vmatprep.subr.mxu0 0.0
      %3630 = vmatpush1.msra.mxu0 0.0
      %3631 = vmatprep.subr.mxu0 0.0
      %3632 = vmatpush1.msra.mxu0 0.0
      %3633 = vmatprep.subr.mxu0 0.0
      %3634 = vmatpush1.msra.mxu0 0.0
      %3635 = vmatprep.subr.mxu0 0.0
      %3636 = vmatpush1.msra.mxu0 0.0
      %3637 = vmatprep.subr.mxu0 0.0
      %3638 = vmatpush1.msra.mxu0 0.0
      %3639 = vmatprep.subr.mxu0 0.0
      %3640 = vmatpush1.msra.mxu0 0.0
      %3641 = vmatprep.subr.mxu0 0.0
      %3642 = vmatpush1.msra.mxu0 0.0
      %3643 = vmatprep.subr.mxu0 0.0
      %3644 = vmatpush1.msra.mxu0 0.0
      %3645 = vmatprep.subr.mxu0 0.0
      %3646 = vmatpush1.msra.mxu0 0.0
      %3647 = vmatprep.subr.mxu0 0.0
      %3648 = vmatpush1.msra.mxu0 0.0
      %3649 = vmatprep.subr.mxu0 0.0
      %3650 = vmatpush1.msra.mxu0 0.0
      %3651 = vmatprep.subr.mxu0 0.0
      %3652 = vmatpush1.msra.mxu0 0.0
      %3653 = vmatprep.subr.mxu0 0.0
      %3654 = vmatpush1.msra.mxu0 0.0
      %3655 = vmatprep.subr.mxu0 0.0
      %3656 = vmatpush1.msra.mxu0 0.0
      %3657 = vmatprep.subr.mxu0 0.0
      %3658 = vmatpush1.msra.mxu0 0.0
      %3659 = vmatprep.subr.mxu0 0.0
      %3660 = vmatpush1.msra.mxu0 0.0
      %3661 = vmatprep.subr.mxu0 0.0
      %3662 = vmatpush1.msra.mxu0 0.0
      %3663 = vmatprep.subr.mxu0 0.0
      %3664 = vmatpush1.msra.mxu0 0.0
      %3665 = vmatprep.subr.mxu0 0.0
      %3666 = vmatpush1.msra.mxu0 0.0
      %3667 = vmatprep.subr.mxu0 0.0
      %3668 = vmatpush1.msra.mxu0 0.0
      %3669 = vmatprep.subr.mxu0 0.0
      %3670 = vmatpush1.msra.mxu0 0.0
      %3671 = vmatprep.subr.mxu0 0.0
      %3672 = vmatpush1.msra.mxu0 0.0
      %3673 = vmatprep.subr.mxu0 0.0
      %3674 = vmatpush1.msra.mxu0 0.0
      %3675 = vmatprep.subr.mxu0 0.0
      %3676 = vmatpush1.msra.mxu0 0.0
      %3677 = vmatprep.subr.mxu0 0.0
      %3678 = vmatpush1.msra.mxu0 0.0
      %3679 = vmatprep.subr.mxu0 0.0
      %3680 = vmatpush1.msra.mxu0 0.0
      %3681 = vmatprep.subr.mxu0 0.0
      %3682 = vmatpush1.msra.mxu0 0.0
      %3683 = vmatprep.mubr.f32.mxu0 0.0
      %3684 = vmatmul.mubr.f32.gmra.mrb[0].mxu0 %v3524
      %v3685 = vpop.f32.mrb[0].mxu0
      %v3686 = vadd.f32 0.0, %v3685
      %v3687 = vpop.f32.mrb[0].mxu0
      %3688 = vmatprep.mubr.f32.mxu0 0.0
      %3689 = vmatmul.mubr.f32.gmra.mrb[0].mxu0 %v3527
      %v3690 = vpop.f32.mrb[0].mxu0
      %v3691 = vadd.f32 0.0, %v3690
      %v3692 = vpop.f32.mrb[0].mxu0
      %3693 = vmatprep.mubr.f32.mxu0 0.0
      %3694 = vmatmul.mubr.f32.gmra.mrb[0].mxu0 %v3530
      %v3695 = vpop.f32.mrb[0].mxu0
      %v3696 = vadd.f32 0.0, %v3695
      %v3697 = vpop.f32.mrb[0].mxu0
      %3698 = vmatprep.mubr.f32.mxu0 0.0
      %3699 = vmatmul.mubr.f32.gmra.mrb[0].mxu0 %v3533
      %v3700 = vpop.f32.mrb[0].mxu0
      %v3701 = vadd.f32 0.0, %v3700
      %v3702 = vpop.f32.mrb[0].mxu0
      %3703 = vmatprep.mubr.f32.mxu0 0.0
      %3704 = vmatmul.mubr.f32.gmra.mrb[0].mxu0 %v3536
      %v3705 = vpop.f32.mrb[0].mxu0
      %v3706 = vadd.f32 0.0, %v3705
      %v3707 = vpop.f32.mrb[0].mxu0
      %3708 = vmatprep.mubr.f32.mxu0 0.0
      %3709 = vmatmul.mubr.f32.gmra.mrb[0].mxu0 %v3539
      %v3710 = vpop.f32.mrb[0].mxu0
      %v3711 = vadd.f32 0.0, %v3710
      %v3712 = vpop.f32.mrb[0].mxu0
      %3713 = vmatprep.mubr.f32.mxu0 0.0
      %3714 = vmatmul.mubr.f32.gmra.mrb[0].mxu0 %v3542
      %v3715 = vpop.f32.mrb[0].mxu0
      %v3716 = vadd.f32 0.0, %v3715
      %v3717 = vpop.f32.mrb[0].mxu0
      %3718 = vmatprep.mubr.f32.mxu0 0.0
      %3719 = vmatmul.mubr.f32.gmra.mrb[0].mxu0 %v3545
      %v3720 = vpop.f32.mrb[0].mxu0
      %v3721 = vadd.f32 0.0, %v3720
      %v3722 = vpop.f32.mrb[0].mxu0
      %3723 = vmatprep.mubr.f32.mxu0 0.0
      %3724 = vmatmul.mubr.f32.gmra.mrb[0].mxu0 %v3548
      %v3725 = vpop.f32.mrb[0].mxu0
      %v3726 = vadd.f32 0.0, %v3725
      %v3727 = vpop.f32.mrb[0].mxu0
      %3728 = vmatprep.mubr.f32.mxu0 0.0
      %3729 = vmatmul.mubr.f32.gmra.mrb[0].mxu0 %v3551
      %v3730 = vpop.f32.mrb[0].mxu0
      %v3731 = vadd.f32 0.0, %v3730
      %v3732 = vpop.f32.mrb[0].mxu0
      %3733 = vmatprep.mubr.f32.mxu0 0.0
      %3734 = vmatmul.mubr.f32.gmra.mrb[0].mxu0 %v3554
      %v3735 = vpop.f32.mrb[0].mxu0
      %v3736 = vadd.f32 0.0, %v3735
      %v3737 = vpop.f32.mrb[0].mxu0
      %3738 = vmatprep.mubr.f32.mxu0 0.0
      %3739 = vmatmul.mubr.f32.gmra.mrb[0].mxu0 %v3557
      %v3740 = vpop.f32.mrb[0].mxu0
      %v3741 = vadd.f32 0.0, %v3740
      %v3742 = vpop.f32.mrb[0].mxu0
      %3743 = vmatprep.mubr.f32.mxu0 0.0
      %3744 = vmatmul.mubr.f32.gmra.mrb[0].mxu0 %v3560
      %v3745 = vpop.f32.mrb[0].mxu0
      %v3746 = vadd.f32 0.0, %v3745
      %v3747 = vpop.f32.mrb[0].mxu0
      %3748 = vmatprep.mubr.f32.mxu0 0.0
      %3749 = vmatmul.mubr.f32.gmra.mrb[0].mxu0 %v3563
      %v3750 = vpop.f32.mrb[0].mxu0
      %v3751 = vadd.f32 0.0, %v3750
      %v3752 = vpop.f32.mrb[0].mxu0
      %3753 = vmatprep.mubr.f32.mxu0 0.0
      %3754 = vmatmul.mubr.f32.gmra.mrb[0].mxu0 %v3566
      %v3755 = vpop.f32.mrb[0].mxu0
      %v3756 = vadd.f32 0.0, %v3755
      %v3757 = vpop.f32.mrb[0].mxu0
      %3758 = vmatprep.mubr.f32.mxu0 0.0
      %3759 = vmatmul.mubr.f32.gmra.mrb[0].mxu0 %v3569
      %v3760 = vpop.f32.mrb[0].mxu0
      %v3761 = vadd.f32 0.0, %v3760
      %v3762 = vpop.f32.mrb[0].mxu0
      %3763 = vmatprep.mubr.f32.mxu0 0.0
      %3764 = vmatmul.mubr.f32.gmra.mrb[0].mxu0 %v3572
      %v3765 = vpop.f32.mrb[0].mxu0
      %v3766 = vadd.f32 0.0, %v3765
      %v3767 = vpop.f32.mrb[0].mxu0
      %3768 = vmatprep.mubr.f32.mxu0 0.0
      %3769 = vmatmul.mubr.f32.gmra.mrb[0].mxu0 %v3575
      %v3770 = vpop.f32.mrb[0].mxu0
      %v3771 = vadd.f32 0.0, %v3770
      %v3772 = vpop.f32.mrb[0].mxu0
      %3773 = vmatprep.mubr.f32.mxu0 0.0
      %3774 = vmatmul.mubr.f32.gmra.mrb[0].mxu0 %v3578
      %v3775 = vpop.f32.mrb[0].mxu0
      %v3776 = vadd.f32 0.0, %v3775
      %v3777 = vpop.f32.mrb[0].mxu0
      %3778 = vmatprep.mubr.f32.mxu0 0.0
      %3779 = vmatmul.mubr.f32.gmra.mrb[0].mxu0 %v3581
      %v3780 = vpop.f32.mrb[0].mxu0
      %v3781 = vadd.f32 0.0, %v3780
      %v3782 = vpop.f32.mrb[0].mxu0
      %3783 = vmatprep.mubr.f32.mxu0 0.0
      %3784 = vmatmul.mubr.f32.gmra.mrb[0].mxu0 %v3584
      %v3785 = vpop.f32.mrb[0].mxu0
      %v3786 = vadd.f32 0.0, %v3785
      %v3787 = vpop.f32.mrb[0].mxu0
      %3788 = vmatprep.mubr.f32.mxu0 0.0
      %3789 = vmatmul.mubr.f32.gmra.mrb[0].mxu0 %v3587
      %v3790 = vpop.f32.mrb[0].mxu0
      %v3791 = vadd.f32 0.0, %v3790
      %v3792 = vpop.f32.mrb[0].mxu0
      %3793 = vmatprep.mubr.f32.mxu0 0.0
      %3794 = vmatmul.mubr.f32.gmra.mrb[0].mxu0 %v3590
      %v3795 = vpop.f32.mrb[0].mxu0
      %v3796 = vadd.f32 0.0, %v3795
      %v3797 = vpop.f32.mrb[0].mxu0
      %3798 = vmatprep.mubr.f32.mxu0 0.0
      %3799 = vmatmul.mubr.f32.gmra.mrb[0].mxu0 %v3593
      %v3800 = vpop.f32.mrb[0].mxu0
      %v3801 = vadd.f32 0.0, %v3800
      %v3802 = vpop.f32.mrb[0].mxu0
      %3803 = vmatprep.mubr.f32.mxu0 0.0
      %3804 = vmatmul.mubr.f32.gmra.mrb[0].mxu0 %v3596
      %v3805 = vpop.f32.mrb[0].mxu0
      %v3806 = vadd.f32 0.0, %v3805
      %v3807 = vpop.f32.mrb[0].mxu0
      %3808 = vmatprep.mubr.f32.mxu0 0.0
      %3809 = vmatmul.mubr.f32.gmra.mrb[0].mxu0 %v3599
      %v3810 = vpop.f32.mrb[0].mxu0
      %v3811 = vadd.f32 0.0, %v3810
      %v3812 = vpop.f32.mrb[0].mxu0
      %3813 = vmatprep.mubr.f32.mxu0 0.0
      %3814 = vmatmul.mubr.f32.gmra.mrb[0].mxu0 %v3602
      %v3815 = vpop.f32.mrb[0].mxu0
      %v3816 = vadd.f32 0.0, %v3815
      %v3817 = vpop.f32.mrb[0].mxu0
      %3818 = vmatprep.mubr.f32.mxu0 0.0
      %3819 = vmatmul.mubr.f32.gmra.mrb[0].mxu0 %v3605
      %v3820 = vpop.f32.mrb[0].mxu0
      %v3821 = vadd.f32 0.0, %v3820
      %v3822 = vpop.f32.mrb[0].mxu0
      %3823 = vmatprep.mubr.f32.mxu0 0.0
      %3824 = vmatmul.mubr.f32.gmra.mrb[0].mxu0 %v3608
      %v3825 = vpop.f32.mrb[0].mxu0
      %v3826 = vadd.f32 0.0, %v3825
      %v3827 = vpop.f32.mrb[0].mxu0
      %3828 = vmatprep.mubr.f32.mxu0 0.0
      %3829 = vmatmul.mubr.f32.gmra.mrb[0].mxu0 %v3611
      %v3830 = vpop.f32.mrb[0].mxu0
      %v3831 = vadd.f32 0.0, %v3830
      %v3832 = vpop.f32.mrb[0].mxu0
      %3833 = vmatprep.mubr.f32.mxu0 0.0
      %3834 = vmatmul.mubr.f32.gmra.mrb[0].mxu0 %v3614
      %v3835 = vpop.f32.mrb[0].mxu0
      %v3836 = vadd.f32 0.0, %v3835
      %v3837 = vpop.f32.mrb[0].mxu0
      %3838 = vmatprep.mubr.f32.mxu0 0.0
      %3839 = vmatmul.mubr.f32.gmra.mrb[0].mxu0 %v3617
      %v3840 = vpop.f32.mrb[0].mxu0
      %v3841 = vadd.f32 0.0, %v3840
      %v3842 = vpop.f32.mrb[0].mxu0
      %3843 = vdwg.mxu0
      %v3844 = vadd.f32 %v3457, %v3686
      %v3845 = vadd.f32 %v3458, %v3691
      %v3846 = vadd.f32 %v3459, %v3696
      %v3847 = vadd.f32 %v3460, %v3701
      %v3848 = vadd.f32 %v3461, %v3706
      %v3849 = vadd.f32 %v3462, %v3711
      %v3850 = vadd.f32 %v3463, %v3716
      %v3851 = vadd.f32 %v3464, %v3721
      %v3852 = vadd.f32 %v3465, %v3726
      %v3853 = vadd.f32 %v3466, %v3731
      %v3854 = vadd.f32 %v3467, %v3736
      %v3855 = vadd.f32 %v3468, %v3741
      %v3856 = vadd.f32 %v3469, %v3746
      %v3857 = vadd.f32 %v3470, %v3751
      %v3858 = vadd.f32 %v3471, %v3756
      %v3859 = vadd.f32 %v3472, %v3761
      %v3860 = vadd.f32 %v3473, %v3766
      %v3861 = vadd.f32 %v3474, %v3771
      %v3862 = vadd.f32 %v3475, %v3776
      %v3863 = vadd.f32 %v3476, %v3781
      %v3864 = vadd.f32 %v3477, %v3786
      %v3865 = vadd.f32 %v3478, %v3791
      %v3866 = vadd.f32 %v3479, %v3796
      %v3867 = vadd.f32 %v3480, %v3801
      %v3868 = vadd.f32 %v3481, %v3806
      %v3869 = vadd.f32 %v3482, %v3811
      %v3870 = vadd.f32 %v3483, %v3816
      %v3871 = vadd.f32 %v3484, %v3821
      %v3872 = vadd.f32 %v3485, %v3826
      %v3873 = vadd.f32 %v3486, %v3831
      %v3874 = vadd.f32 %v3487, %v3836
      %v3875 = vadd.f32 %v3488, %v3841
      %v3876 = vsel %vm378, %v3844, 0.0
      %v3877 = vsel %vm378, %v3845, 0.0
      %v3878 = vadd.f32 %v3876, %v3877
      %v3879 = vsel %vm378, %v3846, 0.0
      %v3880 = vadd.f32 %v3878, %v3879
      %v3881 = vsel %vm378, %v3847, 0.0
      %v3882 = vadd.f32 %v3880, %v3881
      %v3883 = vsel %vm378, %v3848, 0.0
      %v3884 = vadd.f32 %v3882, %v3883
      %v3885 = vsel %vm378, %v3849, 0.0
      %v3886 = vadd.f32 %v3884, %v3885
      %v3887 = vsel %vm378, %v3850, 0.0
      %v3888 = vadd.f32 %v3886, %v3887
      %v3889 = vsel %vm378, %v3851, 0.0
      %v3890 = vadd.f32 %v3888, %v3889
      %v3891 = vsel %vm378, %v3852, 0.0
      %v3892 = vadd.f32 %v3890, %v3891
      %v3893 = vsel %vm378, %v3853, 0.0
      %v3894 = vadd.f32 %v3892, %v3893
      %v3895 = vsel %vm378, %v3854, 0.0
      %v3896 = vadd.f32 %v3894, %v3895
      %v3897 = vsel %vm378, %v3855, 0.0
      %v3898 = vadd.f32 %v3896, %v3897
      %v3899 = vsel %vm378, %v3856, 0.0
      %v3900 = vadd.f32 %v3898, %v3899
      %v3901 = vsel %vm378, %v3857, 0.0
      %v3902 = vadd.f32 %v3900, %v3901
      %v3903 = vsel %vm378, %v3858, 0.0
      %v3904 = vadd.f32 %v3902, %v3903
      %v3905 = vsel %vm378, %v3859, 0.0
      %v3906 = vadd.f32 %v3904, %v3905
      %v3907 = vsel %vm378, %v3860, 0.0
      %v3908 = vadd.f32 %v3906, %v3907
      %v3909 = vsel %vm378, %v3861, 0.0
      %v3910 = vadd.f32 %v3908, %v3909
      %v3911 = vsel %vm378, %v3862, 0.0
      %v3912 = vadd.f32 %v3910, %v3911
      %v3913 = vsel %vm378, %v3863, 0.0
      %v3914 = vadd.f32 %v3912, %v3913
      %v3915 = vsel %vm378, %v3864, 0.0
      %v3916 = vadd.f32 %v3914, %v3915
      %v3917 = vsel %vm378, %v3865, 0.0
      %v3918 = vadd.f32 %v3916, %v3917
      %v3919 = vsel %vm378, %v3866, 0.0
      %v3920 = vadd.f32 %v3918, %v3919
      %v3921 = vsel %vm378, %v3867, 0.0
      %v3922 = vadd.f32 %v3920, %v3921
      %v3923 = vsel %vm378, %v3868, 0.0
      %v3924 = vadd.f32 %v3922, %v3923
      %v3925 = vsel %vm378, %v3869, 0.0
      %v3926 = vadd.f32 %v3924, %v3925
      %v3927 = vsel %vm378, %v3870, 0.0
      %v3928 = vadd.f32 %v3926, %v3927
      %v3929 = vsel %vm378, %v3871, 0.0
      %v3930 = vadd.f32 %v3928, %v3929
      %v3931 = vsel %vm378, %v3872, 0.0
      %v3932 = vadd.f32 %v3930, %v3931
      %v3933 = vsel %vm378, %v3873, 0.0
      %v3934 = vadd.f32 %v3932, %v3933
      %v3935 = vsel %vm378, %v3874, 0.0
      %v3936 = vadd.f32 %v3934, %v3935
      %v3937 = vsel %vm378, %v3875, 0.0
      %v3938 = vadd.f32 %v3936, %v3937
      %v3939 = vrot.slane %v3938, 4
      %v3940 = vadd.f32 %v3938, %v3939
      %v3941 = vrot.slane %v3940, 2
      %v3942 = vadd.f32 %v3940, %v3941
      %v3943 = vrot.slane %v3942, 1
      %v3944 = vadd.f32 %v3942, %v3943
      %v3945 = vmul.f32 %v3944, 0.00390625
      %v3946 = vsub.f32 %v3844, %v3945
      %v3947 = vsub.f32 %v3845, %v3945
      %v3948 = vsub.f32 %v3846, %v3945
      %v3949 = vsub.f32 %v3847, %v3945
      %v3950 = vsub.f32 %v3848, %v3945
      %v3951 = vsub.f32 %v3849, %v3945
      %v3952 = vsub.f32 %v3850, %v3945
      %v3953 = vsub.f32 %v3851, %v3945
      %v3954 = vsub.f32 %v3852, %v3945
      %v3955 = vsub.f32 %v3853, %v3945
      %v3956 = vsub.f32 %v3854, %v3945
      %v3957 = vsub.f32 %v3855, %v3945
      %v3958 = vsub.f32 %v3856, %v3945
      %v3959 = vsub.f32 %v3857, %v3945
      %v3960 = vsub.f32 %v3858, %v3945
      %v3961 = vsub.f32 %v3859, %v3945
      %v3962 = vsub.f32 %v3860, %v3945
      %v3963 = vsub.f32 %v3861, %v3945
      %v3964 = vsub.f32 %v3862, %v3945
      %v3965 = vsub.f32 %v3863, %v3945
      %v3966 = vsub.f32 %v3864, %v3945
      %v3967 = vsub.f32 %v3865, %v3945
      %v3968 = vsub.f32 %v3866, %v3945
      %v3969 = vsub.f32 %v3867, %v3945
      %v3970 = vsub.f32 %v3868, %v3945
      %v3971 = vsub.f32 %v3869, %v3945
      %v3972 = vsub.f32 %v3870, %v3945
      %v3973 = vsub.f32 %v3871, %v3945
      %v3974 = vsub.f32 %v3872, %v3945
      %v3975 = vsub.f32 %v3873, %v3945
      %v3976 = vsub.f32 %v3874, %v3945
      %v3977 = vsub.f32 %v3875, %v3945
      %v3978 = vmul.f32 %v3946, %v3946
      %v3979 = vmul.f32 %v3947, %v3947
      %v3980 = vmul.f32 %v3948, %v3948
      %v3981 = vmul.f32 %v3949, %v3949
      %v3982 = vmul.f32 %v3950, %v3950
      %v3983 = vmul.f32 %v3951, %v3951
      %v3984 = vmul.f32 %v3952, %v3952
      %v3985 = vmul.f32 %v3953, %v3953
      %v3986 = vmul.f32 %v3954, %v3954
      %v3987 = vmul.f32 %v3955, %v3955
      %v3988 = vmul.f32 %v3956, %v3956
      %v3989 = vmul.f32 %v3957, %v3957
      %v3990 = vmul.f32 %v3958, %v3958
      %v3991 = vmul.f32 %v3959, %v3959
      %v3992 = vmul.f32 %v3960, %v3960
      %v3993 = vmul.f32 %v3961, %v3961
      %v3994 = vmul.f32 %v3962, %v3962
      %v3995 = vmul.f32 %v3963, %v3963
      %v3996 = vmul.f32 %v3964, %v3964
      %v3997 = vmul.f32 %v3965, %v3965
      %v3998 = vmul.f32 %v3966, %v3966
      %v3999 = vmul.f32 %v3967, %v3967
      %v4000 = vmul.f32 %v3968, %v3968
      %v4001 = vmul.f32 %v3969, %v3969
      %v4002 = vmul.f32 %v3970, %v3970
      %v4003 = vmul.f32 %v3971, %v3971
      %v4004 = vmul.f32 %v3972, %v3972
      %v4005 = vmul.f32 %v3973, %v3973
      %v4006 = vmul.f32 %v3974, %v3974
      %v4007 = vmul.f32 %v3975, %v3975
      %v4008 = vmul.f32 %v3976, %v3976
      %v4009 = vmul.f32 %v3977, %v3977
      %v4010 = vsel %vm378, %v3978, 0.0
      %v4011 = vsel %vm378, %v3979, 0.0
      %v4012 = vadd.f32 %v4010, %v4011
      %v4013 = vsel %vm378, %v3980, 0.0
      %v4014 = vadd.f32 %v4012, %v4013
      %v4015 = vsel %vm378, %v3981, 0.0
      %v4016 = vadd.f32 %v4014, %v4015
      %v4017 = vsel %vm378, %v3982, 0.0
      %v4018 = vadd.f32 %v4016, %v4017
      %v4019 = vsel %vm378, %v3983, 0.0
      %v4020 = vadd.f32 %v4018, %v4019
      %v4021 = vsel %vm378, %v3984, 0.0
      %v4022 = vadd.f32 %v4020, %v4021
      %v4023 = vsel %vm378, %v3985, 0.0
      %v4024 = vadd.f32 %v4022, %v4023
      %v4025 = vsel %vm378, %v3986, 0.0
      %v4026 = vadd.f32 %v4024, %v4025
      %v4027 = vsel %vm378, %v3987, 0.0
      %v4028 = vadd.f32 %v4026, %v4027
      %v4029 = vsel %vm378, %v3988, 0.0
      %v4030 = vadd.f32 %v4028, %v4029
      %v4031 = vsel %vm378, %v3989, 0.0
      %v4032 = vadd.f32 %v4030, %v4031
      %v4033 = vsel %vm378, %v3990, 0.0
      %v4034 = vadd.f32 %v4032, %v4033
      %v4035 = vsel %vm378, %v3991, 0.0
      %v4036 = vadd.f32 %v4034, %v4035
      %v4037 = vsel %vm378, %v3992, 0.0
      %v4038 = vadd.f32 %v4036, %v4037
      %v4039 = vsel %vm378, %v3993, 0.0
      %v4040 = vadd.f32 %v4038, %v4039
      %v4041 = vsel %vm378, %v3994, 0.0
      %v4042 = vadd.f32 %v4040, %v4041
      %v4043 = vsel %vm378, %v3995, 0.0
      %v4044 = vadd.f32 %v4042, %v4043
      %v4045 = vsel %vm378, %v3996, 0.0
      %v4046 = vadd.f32 %v4044, %v4045
      %v4047 = vsel %vm378, %v3997, 0.0
      %v4048 = vadd.f32 %v4046, %v4047
      %v4049 = vsel %vm378, %v3998, 0.0
      %v4050 = vadd.f32 %v4048, %v4049
      %v4051 = vsel %vm378, %v3999, 0.0
      %v4052 = vadd.f32 %v4050, %v4051
      %v4053 = vsel %vm378, %v4000, 0.0
      %v4054 = vadd.f32 %v4052, %v4053
      %v4055 = vsel %vm378, %v4001, 0.0
      %v4056 = vadd.f32 %v4054, %v4055
      %v4057 = vsel %vm378, %v4002, 0.0
      %v4058 = vadd.f32 %v4056, %v4057
      %v4059 = vsel %vm378, %v4003, 0.0
      %v4060 = vadd.f32 %v4058, %v4059
      %v4061 = vsel %vm378, %v4004, 0.0
      %v4062 = vadd.f32 %v4060, %v4061
      %v4063 = vsel %vm378, %v4005, 0.0
      %v4064 = vadd.f32 %v4062, %v4063
      %v4065 = vsel %vm378, %v4006, 0.0
      %v4066 = vadd.f32 %v4064, %v4065
      %v4067 = vsel %vm378, %v4007, 0.0
      %v4068 = vadd.f32 %v4066, %v4067
      %v4069 = vsel %vm378, %v4008, 0.0
      %v4070 = vadd.f32 %v4068, %v4069
      %v4071 = vsel %vm378, %v4009, 0.0
      %v4072 = vadd.f32 %v4070, %v4071
      %v4073 = vrot.slane %v4072, 4
      %v4074 = vadd.f32 %v4072, %v4073
      %v4075 = vrot.slane %v4074, 2
      %v4076 = vadd.f32 %v4074, %v4075
      %v4077 = vrot.slane %v4076, 1
      %v4078 = vadd.f32 %v4076, %v4077
      %4079 = vst.msk [vmem:[%s235] sm:$0x1] %vm387, %v3944
      %4080 = vst.msk [vmem:[%s235 + $0x1] sm:$0x1] %vm387, %v4078
      %4081 = vst.msk [vmem:[%s231] sm:$0xff] %vm378, %v3844
      %4082 = vst.msk [vmem:[%s231 + $0x8] sm:$0xff] %vm378, %v3845
      %4083 = vst.msk [vmem:[%s231 + $0x10] sm:$0xff] %vm378, %v3846
      %4084 = vst.msk [vmem:[%s231 + $0x18] sm:$0xff] %vm378, %v3847
      %4085 = vst.msk [vmem:[%s231 + $0x20] sm:$0xff] %vm378, %v3848
      %4086 = vst.msk [vmem:[%s231 + $0x28] sm:$0xff] %vm378, %v3849
      %4087 = vst.msk [vmem:[%s231 + $0x30] sm:$0xff] %vm378, %v3850
      %4088 = vst.msk [vmem:[%s231 + $0x38] sm:$0xff] %vm378, %v3851
      %4089 = vst.msk [vmem:[%s231 + $0x40] sm:$0xff] %vm378, %v3852
      %4090 = vst.msk [vmem:[%s231 + $0x48] sm:$0xff] %vm378, %v3853
      %4091 = vst.msk [vmem:[%s231 + $0x50] sm:$0xff] %vm378, %v3854
      %4092 = vst.msk [vmem:[%s231 + $0x58] sm:$0xff] %vm378, %v3855
      %4093 = vst.msk [vmem:[%s231 + $0x60] sm:$0xff] %vm378, %v3856
      %4094 = vst.msk [vmem:[%s231 + $0x68] sm:$0xff] %vm378, %v3857
      %4095 = vst.msk [vmem:[%s231 + $0x70] sm:$0xff] %vm378, %v3858
      %4096 = vst.msk [vmem:[%s231 + $0x78] sm:$0xff] %vm378, %v3859
      %4097 = vst.msk [vmem:[%s231 + $0x80] sm:$0xff] %vm378, %v3860
      %4098 = vst.msk [vmem:[%s231 + $0x88] sm:$0xff] %vm378, %v3861
      %4099 = vst.msk [vmem:[%s231 + $0x90] sm:$0xff] %vm378, %v3862
      %4100 = vst.msk [vmem:[%s231 + $0x98] sm:$0xff] %vm378, %v3863
      %4101 = vst.msk [vmem:[%s231 + $0xa0] sm:$0xff] %vm378, %v3864
      %4102 = vst.msk [vmem:[%s231 + $0xa8] sm:$0xff] %vm378, %v3865
      %4103 = vst.msk [vmem:[%s231 + $0xb0] sm:$0xff] %vm378, %v3866
      %4104 = vst.msk [vmem:[%s231 + $0xb8] sm:$0xff] %vm378, %v3867
      %4105 = vst.msk [vmem:[%s231 + $0xc0] sm:$0xff] %vm378, %v3868
      %4106 = vst.msk [vmem:[%s231 + $0xc8] sm:$0xff] %vm378, %v3869
      %4107 = vst.msk [vmem:[%s231 + $0xd0] sm:$0xff] %vm378, %v3870
      %4108 = vst.msk [vmem:[%s231 + $0xd8] sm:$0xff] %vm378, %v3871
      %4109 = vst.msk [vmem:[%s231 + $0xe0] sm:$0xff] %vm378, %v3872
      %4110 = vst.msk [vmem:[%s231 + $0xe8] sm:$0xff] %vm378, %v3873
      %4111 = vst.msk [vmem:[%s231 + $0xf0] sm:$0xff] %vm378, %v3874
      %4112 = vst.msk [vmem:[%s231 + $0xf8] sm:$0xff] %vm378, %v3875
      %p4113 = scmp.lt.s32.totalorder %s17, 1
      %s4114 = scalar_select %p4113, %s17, 1
      %s4115 = smul.addr %s4114, 32
      %s4116 = smul.addr %s4115, 8
      %s4117 = scalar_lea.vmem %s4, %s4116
      %p4118 = scmp.lt.s32.totalorder %s17, 1
      %s4119 = scalar_select %p4118, %s17, 1
      %s4120 = smul.addr %s4119, 2
      %s4121 = scalar_lea.vmem %s5, %s4120
      // Predicated region
      $region37: #{double_conv_block.4} parent=35 // pred_check
        %p4122 = pneg %p124
      $region38: #{double_conv_block.4} parent=35 // pred_check_branch
        %4124 = sbr.rel (%p4122) target = $region40
      $region39: #{double_conv_block.4} parent=35 // pred_region
        _
      $region40: #{double_conv_block.4} parent=35 // pred_fallthru
        _
      // Predicated region
      $region41: #{double_conv_block.4} parent=35 // pred_check
        %p4125 = pneg %p150
      $region42: #{double_conv_block.4} parent=35 // pred_check_branch
        %4127 = sbr.rel (%p4125) target = $region44
      $region43: #{double_conv_block.4} parent=35 // pred_region
        _
      $region44: #{double_conv_block.4} parent=35 // pred_fallthru
        _
    $region36: #{double_conv_block.4} parent=5 // pred_fallthru
      _
    %p4128 = scmp.le.s32.totalorder 2, %s12
    // Predicated region
    $region45: #{double_conv_block.4} parent=5 // pred_check
      %p4129 = pneg %p4128
    $region46: #{double_conv_block.4} parent=5 // pred_check_branch
      %4131 = sbr.rel (%p4129) target = $region48
    $region47: #{double_conv_block.4} parent=5 // pred_region
      %s4132 = ssub.s32 %s12, 2
      // Predicated region
      $region49: #{double_conv_block.4} parent=47 // pred_check
        %p4133 = pneg %p130
      $region50: #{double_conv_block.4} parent=47 // pred_check_branch
        %4135 = sbr.rel (%p4133) target = $region52
      $region51: #{double_conv_block.4} parent=47 // pred_region
        %p4136 = scmp.lt.s32.totalorder %s18, 1
        %s4137 = scalar_select %p4136, %s18, 1
        %s4138 = smul.addr %s4137, 32
        %s4139 = smul.addr %s4138, 8
        %s4140 = scalar_lea.vmem %s4, %s4139
      $region52: #{double_conv_block.4} parent=47 // pred_fallthru
        _
      // Predicated region
      $region53: #{double_conv_block.4} parent=47 // pred_check
        %p4141 = pneg %p156
      $region54: #{double_conv_block.4} parent=47 // pred_check_branch
        %4143 = sbr.rel (%p4141) target = $region56
      $region55: #{double_conv_block.4} parent=47 // pred_region
        %p4144 = scmp.lt.s32.totalorder %s18, 1
        %s4145 = scalar_select %p4144, %s18, 1
        %s4146 = smul.addr %s4145, 2
        %s4147 = scalar_lea.vmem %s5, %s4146
      $region56: #{double_conv_block.4} parent=47 // pred_fallthru
        _
    $region48: #{double_conv_block.4} parent=5 // pred_fallthru
      _
  $region6: #{double_conv_block.4} parent=0 // loop_footer
    %s16 = sadd.s32 1, %s12
  $region7: #{double_conv_block.4} parent=0 // loop_footer_branch
    %11 = sbr.rel target = $region3
  $region8: #{double_conv_block.4} parent=0 // loop_exit
    _

</llo_original>
